<compile_context>
chip_gen: v6e
topology: v6e:2x2x1
jax: 0.10.0
libtpu: 0.0.40
codegen_flags: <defaults>
</compile_context>

<pallas_src>
import jax
import jax.numpy as jnp
import numpy as np
from jax.experimental import pallas as pl
from jax.experimental.pallas import tpu as pltpu


# bf16 matmul inputs (f32 accumulation) — ~2-4x MXU throughput on v5e/v6e/v7x.
MXU_DTYPE = jnp.bfloat16


# ----------------------------------------------------------------------------
# Fixed 8-node graph from GraphFeat.__init__ -> dense normalized adjacency
# (D^-1/2 (A + I) D^-1/2, matching torch_geometric GCNConv defaults).
# ----------------------------------------------------------------------------
def _gcn_adjacency():
    src = np.array([3, 0, 3, 1, 3, 2, 3, 7, 7, 4, 7, 5, 7, 6,
                    0, 1, 1, 6, 6, 4, 4, 5, 5, 2, 2, 0])
    dst = np.array([0, 3, 1, 3, 2, 3, 7, 3, 4, 7, 5, 7, 6, 7,
                    1, 0, 6, 1, 4, 6, 5, 4, 2, 5, 0, 2])
    A = np.zeros((8, 8), np.float32)
    A[dst, src] = 1.0
    A = A + np.eye(8, dtype=np.float32)          # add self loops
    deg = A.sum(axis=1)
    dinv = 1.0 / np.sqrt(deg)
    return (dinv[:, None] * A) * dinv[None, :]


A_NP = _gcn_adjacency()          # compile-time constant used inside the kernel

# (name, valid_length) of the small vectors packed into one (8,128) f32 array.
_BIAS_LAYOUT = (("g0b", 64), ("g1b", 96), ("g2b", 128),
                ("r1b", 64), ("r2b", 32), ("r3w", 32), ("r3b", 1))


# ----------------------------------------------------------------------------
# Kernel: TILE_B batch elements per grid step, node-major hidden state.
# ----------------------------------------------------------------------------
def graphfeat_kernel(x_ref, g0w_ref, g1w_ref, g2w_ref, r1w_ref, r2w_ref,
                     bias_ref, out_ref):
    n_nodes = x_ref.shape[0]        # 8
    tb = x_ref.shape[1]             # TILE_B (multiple of 128)
    bias = bias_ref[...]            # (8, 128) packed small params, f32

    def mm(a, w_ref):
        # bf16 x bf16 -> f32 accumulate on the MXU.
        return jnp.dot(a.astype(MXU_DTYPE), w_ref[...],
                       preferred_element_type=jnp.float32)

    def aggregate(h3):
        # h3: (8, tb, c) node-major, f32.  A_norm applied as unrolled
        # scalar-broadcast VPU FMAs on the INPUT channels (aggregate-first),
        # then packed with a leading-dim stack+reshape (layout-free) into the
        # tall matmul operand.  No post-matmul copy is ever made.
        c = h3.shape[-1]
        rows = []
        for i in range(n_nodes):
            acc = None
            for j in range(n_nodes):
                a_ij = float(A_NP[i, j])       # compile-time scalar
                if a_ij == 0.0:
                    continue
                term = h3[j] * a_ij            # leading-dim slice: free view
                acc = term if acc is None else acc + term
            rows.append(acc)
        return jnp.stack(rows, axis=0).reshape(n_nodes * tb, c)

    def gcn_layer(h3, w_ref, b):
        # relu((A_norm @ h) @ W + b)  ==  relu(A_norm @ (h @ W) + b)
        agg = aggregate(h3)                               # (8*tb, c_in)
        t = jnp.maximum(mm(agg, w_ref) + b, 0.0)          # (8*tb, c_out)
        return t.reshape(n_nodes, tb, w_ref.shape[1])     # free reshape

    h = gcn_layer(x_ref[...], g0w_ref, bias[0:1, 0:64])   # (8, tb, 64)
    h = gcn_layer(h, g1w_ref, bias[1:2, 0:96])            # (8, tb, 96)
    h = gcn_layer(h, g2w_ref, bias[2:3, 0:128])           # (8, tb, 128)

    # regression: 1x1 convs over the node axis == per-node linears
    h2 = h.reshape(n_nodes * tb, 128)                     # free reshape
    hr = jnp.maximum(mm(h2, r1w_ref) + bias[3:4, 0:64], 0.0)   # (8*tb, 64)
    hr = jnp.maximum(mm(hr, r2w_ref) + bias[4:5, 0:32], 0.0)   # (8*tb, 32)

    # final Conv1d(32,1,1) as a cross-lane reduction (XLU), then max over nodes
    r3w = bias[5:6, 0:32].reshape(1, 1, 32)
    r3b = bias[6:7, 0:1]
    s = jnp.sum(hr.reshape(n_nodes, tb, 32) * r3w, axis=-1) + r3b   # (8, tb)
    out_ref[...] = jnp.max(s, axis=0, keepdims=True)                # (1, tb)


# ----------------------------------------------------------------------------
# Parameters (deterministic synthetic init; linear/conv1x1 weights stored
# pre-transposed as (in, out)).
# ----------------------------------------------------------------------------
def init_params(key, F):
    ks = iter(jax.random.split(key, 16))

    def w(shape, scale=0.1):
        return (scale * jax.random.normal(next(ks), shape)).astype(jnp.float32)

    return {
        # GCNConv(F,64) -> (64,96) -> (96,128)
        "g0w": w((F, 64)),   "g0b": w((64,)),
        "g1w": w((64, 96)),  "g1b": w((96,)),
        "g2w": w((96, 128)), "g2b": w((128,)),
        # regression: Conv1d(128,64,1) -> Conv1d(64,32,1) -> Conv1d(32,1,1)
        "r1w": w((128, 64)), "r1b": w((64,)),
        "r2w": w((64, 32)),  "r2b": w((32,)),
        "r3w": w((32,)),     "r3b": w((1,)),
    }


def _pack_bias(params):
    rows = []
    for name, n in _BIAS_LAYOUT:
        v = params[name].astype(jnp.float32).reshape(-1)
        rows.append(jnp.pad(v, (0, 128 - n)))
    rows.append(jnp.zeros((128,), jnp.float32))    # pad to 8 rows
    return jnp.stack(rows, axis=0)                 # (8, 128)


# ----------------------------------------------------------------------------
# Pure-JAX reference (matches GraphFeat.forward semantics, full f32).
# ----------------------------------------------------------------------------
def graphfeat_reference(x, params):
    A = jnp.asarray(A_NP, jnp.float32)
    h = x.astype(jnp.float32)                                   # (B, 8, F)
    for wn, bn in (("g0w", "g0b"), ("g1w", "g1b"), ("g2w", "g2b")):
        h = jax.nn.relu(jnp.einsum("ij,bjc->bic", A, h @ params[wn]) + params[bn])
    h = jax.nn.relu(h @ params["r1w"] + params["r1b"])
    h = jax.nn.relu(h @ params["r2w"] + params["r2b"])
    s = jnp.sum(h * params["r3w"], axis=-1) + params["r3b"]     # (B, 8)
    return jnp.max(s, axis=1, keepdims=True)                    # (B, 1)


# ----------------------------------------------------------------------------
# Wrapper
# ----------------------------------------------------------------------------
def graphfeat_forward(x, params, tile_b_max=512):
    B, N, F = x.shape
    assert N == 8, "GraphFeat's fixed graph has 8 nodes"
    x = x.astype(jnp.float32)

    # Batch tile: lane-dense (multiple of 128), capped at 512 for v7x's 64 MiB
    # per-TC VMEM; for B >= 256 aim for >= 2 grid steps so both v7x
    # TensorCores get work under dimension_semantics=("parallel",).
    target = pl.cdiv(B, 2) if B >= 256 else B
    cap = max(128, (int(tile_b_max) // 128) * 128)
    tile_b = max(128, min(cap, pl.cdiv(target, 128) * 128))
    nb = pl.cdiv(B, tile_b)
    b_pad = nb * tile_b

    # node-major layout (8, B_pad, F); padded rows are discarded after the call
    x_t = jnp.transpose(x, (1, 0, 2))
    if b_pad != B:
        x_t = jnp.pad(x_t, ((0, 0), (0, b_pad - B), (0, 0)))

    bias = _pack_bias(params)
    weights = [params[k].astype(MXU_DTYPE)
               for k in ("g0w", "g1w", "g2w", "r1w", "r2w")]

    in_specs = [pl.BlockSpec((8, tile_b, F), lambda b: (0, b, 0))]
    for wmat in weights:
        in_specs.append(pl.BlockSpec(wmat.shape, lambda b: (0, 0)))
    in_specs.append(pl.BlockSpec(bias.shape, lambda b: (0, 0)))

    out = pl.pallas_call(
        graphfeat_kernel,
        out_shape=jax.ShapeDtypeStruct((1, b_pad), jnp.float32),
        grid=(nb,),
        in_specs=in_specs,
        out_specs=pl.BlockSpec((1, tile_b), lambda b: (0, b)),
        compiler_params=pltpu.CompilerParams(
            dimension_semantics=("parallel",),      # v7x: 2 TCs share the tiles
            vmem_limit_bytes=48 * 1024 * 1024,      # within v7x 64 MiB/TC
        ),
    )(x_t, *weights, bias)

    return out[0, :B].reshape(B, 1)                 # (B, 1), matches squeeze(2)


if __name__ == "__main__":
    key = jax.random.PRNGKey(0)
    kx, kp = jax.random.split(key)
    B, F = 2, 16
    x = jax.random.normal(kx, (B, 8, F), dtype=jnp.float32)
    params = init_params(kp, F)

    out = graphfeat_forward(x, params)
    out = jax.block_until_ready(out)
    assert out.shape == (B, 1), out.shape
    assert bool(jnp.all(jnp.isfinite(out)))

    ref = graphfeat_reference(x, params)
    # bf16 MXU inputs -> loosen tolerance vs. the full-f32 reference.
    assert bool(jnp.allclose(out, ref, rtol=2e-2, atol=2e-2)), (out, ref)
    print("KERNEL_OK")
</pallas_src>

<mosaic_0001>
module attributes {stable_mosaic.version = 11 : i64} {
  func.func @graphfeat_kernel(%arg0: i32, %arg1: memref<8x128x16xf32, #tpu.memory_space<vmem>>, %arg2: memref<16x64xbf16, #tpu.memory_space<vmem>>, %arg3: memref<64x96xbf16, #tpu.memory_space<vmem>>, %arg4: memref<96x128xbf16, #tpu.memory_space<vmem>>, %arg5: memref<128x64xbf16, #tpu.memory_space<vmem>>, %arg6: memref<64x32xbf16, #tpu.memory_space<vmem>>, %arg7: memref<8x128xf32, #tpu.memory_space<vmem>>, %arg8: memref<1x128xf32, #tpu.memory_space<vmem>>) attributes {dimension_semantics = [#tpu.dimension_semantics<parallel>], iteration_bounds = array<i64: 1>, scalar_prefetch = 0 : i64, scratch_operands = 0 : i64, tpu.core_type = #tpu.core_type<tc>, window_params = [{transform_indices = @transform_0, window_bounds = array<i64: 8, 128, 16>}, {pipeline_mode = #tpu.pipeline_mode<synchronous>, transform_indices = @transform_1, window_bounds = array<i64: 16, 64>}, {pipeline_mode = #tpu.pipeline_mode<synchronous>, transform_indices = @transform_2, window_bounds = array<i64: 64, 96>}, {pipeline_mode = #tpu.pipeline_mode<synchronous>, transform_indices = @transform_3, window_bounds = array<i64: 96, 128>}, {pipeline_mode = #tpu.pipeline_mode<synchronous>, transform_indices = @transform_4, window_bounds = array<i64: 128, 64>}, {pipeline_mode = #tpu.pipeline_mode<synchronous>, transform_indices = @transform_5, window_bounds = array<i64: 64, 32>}, {pipeline_mode = #tpu.pipeline_mode<synchronous>, transform_indices = @transform_6, window_bounds = array<i64: 8, 128>}, {transform_indices = @transform_7, window_bounds = array<i64: 1, 128>}]} {
    %c0 = arith.constant 0 : index
    %c0_0 = arith.constant 0 : index
    %0 = vector.load %arg7[%c0, %c0_0] : memref<8x128xf32, #tpu.memory_space<vmem>>, vector<8x128xf32>
    %c0_1 = arith.constant 0 : index
    %c0_2 = arith.constant 0 : index
    %c0_3 = arith.constant 0 : index
    %1 = vector.load %arg1[%c0_1, %c0_2, %c0_3] : memref<8x128x16xf32, #tpu.memory_space<vmem>>, vector<8x128x16xf32>
    %2 = vector.extract_strided_slice %0 {offsets = [0, 0], sizes = [1, 64], strides = [1, 1]} : vector<8x128xf32> to vector<1x64xf32>
    %3 = vector.extract_strided_slice %1 {offsets = [0, 0, 0], sizes = [1, 128, 16], strides = [1, 1, 1]} : vector<8x128x16xf32> to vector<1x128x16xf32>
    %4 = vector.shape_cast %3 : vector<1x128x16xf32> to vector<128x16xf32>
    %cst = arith.constant 2.500000e-01 : f32
    %5 = vector.broadcast %cst : f32 to vector<128x16xf32>
    %6 = arith.mulf %4, %5 : vector<128x16xf32>
    %7 = vector.extract_strided_slice %1 {offsets = [1, 0, 0], sizes = [1, 128, 16], strides = [1, 1, 1]} : vector<8x128x16xf32> to vector<1x128x16xf32>
    %8 = vector.shape_cast %7 : vector<1x128x16xf32> to vector<128x16xf32>
    %cst_4 = arith.constant 2.500000e-01 : f32
    %9 = vector.broadcast %cst_4 : f32 to vector<128x16xf32>
    %10 = arith.mulf %8, %9 : vector<128x16xf32>
    %11 = arith.addf %6, %10 : vector<128x16xf32>
    %12 = vector.extract_strided_slice %1 {offsets = [2, 0, 0], sizes = [1, 128, 16], strides = [1, 1, 1]} : vector<8x128x16xf32> to vector<1x128x16xf32>
    %13 = vector.shape_cast %12 : vector<1x128x16xf32> to vector<128x16xf32>
    %cst_5 = arith.constant 2.500000e-01 : f32
    %14 = vector.broadcast %cst_5 : f32 to vector<128x16xf32>
    %15 = arith.mulf %13, %14 : vector<128x16xf32>
    %16 = arith.addf %11, %15 : vector<128x16xf32>
    %17 = vector.extract_strided_slice %1 {offsets = [3, 0, 0], sizes = [1, 128, 16], strides = [1, 1, 1]} : vector<8x128x16xf32> to vector<1x128x16xf32>
    %18 = vector.shape_cast %17 : vector<1x128x16xf32> to vector<128x16xf32>
    %cst_6 = arith.constant 0.223606795 : f32
    %19 = vector.broadcast %cst_6 : f32 to vector<128x16xf32>
    %20 = arith.mulf %18, %19 : vector<128x16xf32>
    %21 = arith.addf %16, %20 : vector<128x16xf32>
    %22 = vector.extract_strided_slice %1 {offsets = [0, 0, 0], sizes = [1, 128, 16], strides = [1, 1, 1]} : vector<8x128x16xf32> to vector<1x128x16xf32>
    %23 = vector.shape_cast %22 : vector<1x128x16xf32> to vector<128x16xf32>
    %cst_7 = arith.constant 2.500000e-01 : f32
    %24 = vector.broadcast %cst_7 : f32 to vector<128x16xf32>
    %25 = arith.mulf %23, %24 : vector<128x16xf32>
    %26 = vector.extract_strided_slice %1 {offsets = [1, 0, 0], sizes = [1, 128, 16], strides = [1, 1, 1]} : vector<8x128x16xf32> to vector<1x128x16xf32>
    %27 = vector.shape_cast %26 : vector<1x128x16xf32> to vector<128x16xf32>
    %cst_8 = arith.constant 2.500000e-01 : f32
    %28 = vector.broadcast %cst_8 : f32 to vector<128x16xf32>
    %29 = arith.mulf %27, %28 : vector<128x16xf32>
    %30 = arith.addf %25, %29 : vector<128x16xf32>
    %31 = vector.extract_strided_slice %1 {offsets = [3, 0, 0], sizes = [1, 128, 16], strides = [1, 1, 1]} : vector<8x128x16xf32> to vector<1x128x16xf32>
    %32 = vector.shape_cast %31 : vector<1x128x16xf32> to vector<128x16xf32>
    %cst_9 = arith.constant 0.223606795 : f32
    %33 = vector.broadcast %cst_9 : f32 to vector<128x16xf32>
    %34 = arith.mulf %32, %33 : vector<128x16xf32>
    %35 = arith.addf %30, %34 : vector<128x16xf32>
    %36 = vector.extract_strided_slice %1 {offsets = [6, 0, 0], sizes = [1, 128, 16], strides = [1, 1, 1]} : vector<8x128x16xf32> to vector<1x128x16xf32>
    %37 = vector.shape_cast %36 : vector<1x128x16xf32> to vector<128x16xf32>
    %cst_10 = arith.constant 2.500000e-01 : f32
    %38 = vector.broadcast %cst_10 : f32 to vector<128x16xf32>
    %39 = arith.mulf %37, %38 : vector<128x16xf32>
    %40 = arith.addf %35, %39 : vector<128x16xf32>
    %41 = vector.extract_strided_slice %1 {offsets = [0, 0, 0], sizes = [1, 128, 16], strides = [1, 1, 1]} : vector<8x128x16xf32> to vector<1x128x16xf32>
    %42 = vector.shape_cast %41 : vector<1x128x16xf32> to vector<128x16xf32>
    %cst_11 = arith.constant 2.500000e-01 : f32
    %43 = vector.broadcast %cst_11 : f32 to vector<128x16xf32>
    %44 = arith.mulf %42, %43 : vector<128x16xf32>
    %45 = vector.extract_strided_slice %1 {offsets = [2, 0, 0], sizes = [1, 128, 16], strides = [1, 1, 1]} : vector<8x128x16xf32> to vector<1x128x16xf32>
    %46 = vector.shape_cast %45 : vector<1x128x16xf32> to vector<128x16xf32>
    %cst_12 = arith.constant 2.500000e-01 : f32
    %47 = vector.broadcast %cst_12 : f32 to vector<128x16xf32>
    %48 = arith.mulf %46, %47 : vector<128x16xf32>
    %49 = arith.addf %44, %48 : vector<128x16xf32>
    %50 = vector.extract_strided_slice %1 {offsets = [3, 0, 0], sizes = [1, 128, 16], strides = [1, 1, 1]} : vector<8x128x16xf32> to vector<1x128x16xf32>
    %51 = vector.shape_cast %50 : vector<1x128x16xf32> to vector<128x16xf32>
    %cst_13 = arith.constant 0.223606795 : f32
    %52 = vector.broadcast %cst_13 : f32 to vector<128x16xf32>
    %53 = arith.mulf %51, %52 : vector<128x16xf32>
    %54 = arith.addf %49, %53 : vector<128x16xf32>
    %55 = vector.extract_strided_slice %1 {offsets = [5, 0, 0], sizes = [1, 128, 16], strides = [1, 1, 1]} : vector<8x128x16xf32> to vector<1x128x16xf32>
    %56 = vector.shape_cast %55 : vector<1x128x16xf32> to vector<128x16xf32>
    %cst_14 = arith.constant 2.500000e-01 : f32
    %57 = vector.broadcast %cst_14 : f32 to vector<128x16xf32>
    %58 = arith.mulf %56, %57 : vector<128x16xf32>
    %59 = arith.addf %54, %58 : vector<128x16xf32>
    %60 = vector.extract_strided_slice %1 {offsets = [0, 0, 0], sizes = [1, 128, 16], strides = [1, 1, 1]} : vector<8x128x16xf32> to vector<1x128x16xf32>
    %61 = vector.shape_cast %60 : vector<1x128x16xf32> to vector<128x16xf32>
    %cst_15 = arith.constant 0.223606795 : f32
    %62 = vector.broadcast %cst_15 : f32 to vector<128x16xf32>
    %63 = arith.mulf %61, %62 : vector<128x16xf32>
    %64 = vector.extract_strided_slice %1 {offsets = [1, 0, 0], sizes = [1, 128, 16], strides = [1, 1, 1]} : vector<8x128x16xf32> to vector<1x128x16xf32>
    %65 = vector.shape_cast %64 : vector<1x128x16xf32> to vector<128x16xf32>
    %cst_16 = arith.constant 0.223606795 : f32
    %66 = vector.broadcast %cst_16 : f32 to vector<128x16xf32>
    %67 = arith.mulf %65, %66 : vector<128x16xf32>
    %68 = arith.addf %63, %67 : vector<128x16xf32>
    %69 = vector.extract_strided_slice %1 {offsets = [2, 0, 0], sizes = [1, 128, 16], strides = [1, 1, 1]} : vector<8x128x16xf32> to vector<1x128x16xf32>
    %70 = vector.shape_cast %69 : vector<1x128x16xf32> to vector<128x16xf32>
    %cst_17 = arith.constant 0.223606795 : f32
    %71 = vector.broadcast %cst_17 : f32 to vector<128x16xf32>
    %72 = arith.mulf %70, %71 : vector<128x16xf32>
    %73 = arith.addf %68, %72 : vector<128x16xf32>
    %74 = vector.extract_strided_slice %1 {offsets = [3, 0, 0], sizes = [1, 128, 16], strides = [1, 1, 1]} : vector<8x128x16xf32> to vector<1x128x16xf32>
    %75 = vector.shape_cast %74 : vector<1x128x16xf32> to vector<128x16xf32>
    %cst_18 = arith.constant 0.199999988 : f32
    %76 = vector.broadcast %cst_18 : f32 to vector<128x16xf32>
    %77 = arith.mulf %75, %76 : vector<128x16xf32>
    %78 = arith.addf %73, %77 : vector<128x16xf32>
    %79 = vector.extract_strided_slice %1 {offsets = [7, 0, 0], sizes = [1, 128, 16], strides = [1, 1, 1]} : vector<8x128x16xf32> to vector<1x128x16xf32>
    %80 = vector.shape_cast %79 : vector<1x128x16xf32> to vector<128x16xf32>
    %cst_19 = arith.constant 0.199999988 : f32
    %81 = vector.broadcast %cst_19 : f32 to vector<128x16xf32>
    %82 = arith.mulf %80, %81 : vector<128x16xf32>
    %83 = arith.addf %78, %82 : vector<128x16xf32>
    %84 = vector.extract_strided_slice %1 {offsets = [4, 0, 0], sizes = [1, 128, 16], strides = [1, 1, 1]} : vector<8x128x16xf32> to vector<1x128x16xf32>
    %85 = vector.shape_cast %84 : vector<1x128x16xf32> to vector<128x16xf32>
    %cst_20 = arith.constant 2.500000e-01 : f32
    %86 = vector.broadcast %cst_20 : f32 to vector<128x16xf32>
    %87 = arith.mulf %85, %86 : vector<128x16xf32>
    %88 = vector.extract_strided_slice %1 {offsets = [5, 0, 0], sizes = [1, 128, 16], strides = [1, 1, 1]} : vector<8x128x16xf32> to vector<1x128x16xf32>
    %89 = vector.shape_cast %88 : vector<1x128x16xf32> to vector<128x16xf32>
    %cst_21 = arith.constant 2.500000e-01 : f32
    %90 = vector.broadcast %cst_21 : f32 to vector<128x16xf32>
    %91 = arith.mulf %89, %90 : vector<128x16xf32>
    %92 = arith.addf %87, %91 : vector<128x16xf32>
    %93 = vector.extract_strided_slice %1 {offsets = [6, 0, 0], sizes = [1, 128, 16], strides = [1, 1, 1]} : vector<8x128x16xf32> to vector<1x128x16xf32>
    %94 = vector.shape_cast %93 : vector<1x128x16xf32> to vector<128x16xf32>
    %cst_22 = arith.constant 2.500000e-01 : f32
    %95 = vector.broadcast %cst_22 : f32 to vector<128x16xf32>
    %96 = arith.mulf %94, %95 : vector<128x16xf32>
    %97 = arith.addf %92, %96 : vector<128x16xf32>
    %98 = vector.extract_strided_slice %1 {offsets = [7, 0, 0], sizes = [1, 128, 16], strides = [1, 1, 1]} : vector<8x128x16xf32> to vector<1x128x16xf32>
    %99 = vector.shape_cast %98 : vector<1x128x16xf32> to vector<128x16xf32>
    %cst_23 = arith.constant 0.223606795 : f32
    %100 = vector.broadcast %cst_23 : f32 to vector<128x16xf32>
    %101 = arith.mulf %99, %100 : vector<128x16xf32>
    %102 = arith.addf %97, %101 : vector<128x16xf32>
    %103 = vector.extract_strided_slice %1 {offsets = [2, 0, 0], sizes = [1, 128, 16], strides = [1, 1, 1]} : vector<8x128x16xf32> to vector<1x128x16xf32>
    %104 = vector.shape_cast %103 : vector<1x128x16xf32> to vector<128x16xf32>
    %cst_24 = arith.constant 2.500000e-01 : f32
    %105 = vector.broadcast %cst_24 : f32 to vector<128x16xf32>
    %106 = arith.mulf %104, %105 : vector<128x16xf32>
    %107 = vector.extract_strided_slice %1 {offsets = [4, 0, 0], sizes = [1, 128, 16], strides = [1, 1, 1]} : vector<8x128x16xf32> to vector<1x128x16xf32>
    %108 = vector.shape_cast %107 : vector<1x128x16xf32> to vector<128x16xf32>
    %cst_25 = arith.constant 2.500000e-01 : f32
    %109 = vector.broadcast %cst_25 : f32 to vector<128x16xf32>
    %110 = arith.mulf %108, %109 : vector<128x16xf32>
    %111 = arith.addf %106, %110 : vector<128x16xf32>
    %112 = vector.extract_strided_slice %1 {offsets = [5, 0, 0], sizes = [1, 128, 16], strides = [1, 1, 1]} : vector<8x128x16xf32> to vector<1x128x16xf32>
    %113 = vector.shape_cast %112 : vector<1x128x16xf32> to vector<128x16xf32>
    %cst_26 = arith.constant 2.500000e-01 : f32
    %114 = vector.broadcast %cst_26 : f32 to vector<128x16xf32>
    %115 = arith.mulf %113, %114 : vector<128x16xf32>
    %116 = arith.addf %111, %115 : vector<128x16xf32>
    %117 = vector.extract_strided_slice %1 {offsets = [7, 0, 0], sizes = [1, 128, 16], strides = [1, 1, 1]} : vector<8x128x16xf32> to vector<1x128x16xf32>
    %118 = vector.shape_cast %117 : vector<1x128x16xf32> to vector<128x16xf32>
    %cst_27 = arith.constant 0.223606795 : f32
    %119 = vector.broadcast %cst_27 : f32 to vector<128x16xf32>
    %120 = arith.mulf %118, %119 : vector<128x16xf32>
    %121 = arith.addf %116, %120 : vector<128x16xf32>
    %122 = vector.extract_strided_slice %1 {offsets = [1, 0, 0], sizes = [1, 128, 16], strides = [1, 1, 1]} : vector<8x128x16xf32> to vector<1x128x16xf32>
    %123 = vector.shape_cast %122 : vector<1x128x16xf32> to vector<128x16xf32>
    %cst_28 = arith.constant 2.500000e-01 : f32
    %124 = vector.broadcast %cst_28 : f32 to vector<128x16xf32>
    %125 = arith.mulf %123, %124 : vector<128x16xf32>
    %126 = vector.extract_strided_slice %1 {offsets = [4, 0, 0], sizes = [1, 128, 16], strides = [1, 1, 1]} : vector<8x128x16xf32> to vector<1x128x16xf32>
    %127 = vector.shape_cast %126 : vector<1x128x16xf32> to vector<128x16xf32>
    %cst_29 = arith.constant 2.500000e-01 : f32
    %128 = vector.broadcast %cst_29 : f32 to vector<128x16xf32>
    %129 = arith.mulf %127, %128 : vector<128x16xf32>
    %130 = arith.addf %125, %129 : vector<128x16xf32>
    %131 = vector.extract_strided_slice %1 {offsets = [6, 0, 0], sizes = [1, 128, 16], strides = [1, 1, 1]} : vector<8x128x16xf32> to vector<1x128x16xf32>
    %132 = vector.shape_cast %131 : vector<1x128x16xf32> to vector<128x16xf32>
    %cst_30 = arith.constant 2.500000e-01 : f32
    %133 = vector.broadcast %cst_30 : f32 to vector<128x16xf32>
    %134 = arith.mulf %132, %133 : vector<128x16xf32>
    %135 = arith.addf %130, %134 : vector<128x16xf32>
    %136 = vector.extract_strided_slice %1 {offsets = [7, 0, 0], sizes = [1, 128, 16], strides = [1, 1, 1]} : vector<8x128x16xf32> to vector<1x128x16xf32>
    %137 = vector.shape_cast %136 : vector<1x128x16xf32> to vector<128x16xf32>
    %cst_31 = arith.constant 0.223606795 : f32
    %138 = vector.broadcast %cst_31 : f32 to vector<128x16xf32>
    %139 = arith.mulf %137, %138 : vector<128x16xf32>
    %140 = arith.addf %135, %139 : vector<128x16xf32>
    %141 = vector.extract_strided_slice %1 {offsets = [3, 0, 0], sizes = [1, 128, 16], strides = [1, 1, 1]} : vector<8x128x16xf32> to vector<1x128x16xf32>
    %142 = vector.shape_cast %141 : vector<1x128x16xf32> to vector<128x16xf32>
    %cst_32 = arith.constant 0.199999988 : f32
    %143 = vector.broadcast %cst_32 : f32 to vector<128x16xf32>
    %144 = arith.mulf %142, %143 : vector<128x16xf32>
    %145 = vector.extract_strided_slice %1 {offsets = [4, 0, 0], sizes = [1, 128, 16], strides = [1, 1, 1]} : vector<8x128x16xf32> to vector<1x128x16xf32>
    %146 = vector.shape_cast %145 : vector<1x128x16xf32> to vector<128x16xf32>
    %cst_33 = arith.constant 0.223606795 : f32
    %147 = vector.broadcast %cst_33 : f32 to vector<128x16xf32>
    %148 = arith.mulf %146, %147 : vector<128x16xf32>
    %149 = arith.addf %144, %148 : vector<128x16xf32>
    %150 = vector.extract_strided_slice %1 {offsets = [5, 0, 0], sizes = [1, 128, 16], strides = [1, 1, 1]} : vector<8x128x16xf32> to vector<1x128x16xf32>
    %151 = vector.shape_cast %150 : vector<1x128x16xf32> to vector<128x16xf32>
    %cst_34 = arith.constant 0.223606795 : f32
    %152 = vector.broadcast %cst_34 : f32 to vector<128x16xf32>
    %153 = arith.mulf %151, %152 : vector<128x16xf32>
    %154 = arith.addf %149, %153 : vector<128x16xf32>
    %155 = vector.extract_strided_slice %1 {offsets = [6, 0, 0], sizes = [1, 128, 16], strides = [1, 1, 1]} : vector<8x128x16xf32> to vector<1x128x16xf32>
    %156 = vector.shape_cast %155 : vector<1x128x16xf32> to vector<128x16xf32>
    %cst_35 = arith.constant 0.223606795 : f32
    %157 = vector.broadcast %cst_35 : f32 to vector<128x16xf32>
    %158 = arith.mulf %156, %157 : vector<128x16xf32>
    %159 = arith.addf %154, %158 : vector<128x16xf32>
    %160 = vector.extract_strided_slice %1 {offsets = [7, 0, 0], sizes = [1, 128, 16], strides = [1, 1, 1]} : vector<8x128x16xf32> to vector<1x128x16xf32>
    %161 = vector.shape_cast %160 : vector<1x128x16xf32> to vector<128x16xf32>
    %cst_36 = arith.constant 0.199999988 : f32
    %162 = vector.broadcast %cst_36 : f32 to vector<128x16xf32>
    %163 = arith.mulf %161, %162 : vector<128x16xf32>
    %164 = arith.addf %159, %163 : vector<128x16xf32>
    %165 = vector.shape_cast %21 : vector<128x16xf32> to vector<1x128x16xf32>
    %166 = vector.shape_cast %40 : vector<128x16xf32> to vector<1x128x16xf32>
    %167 = vector.shape_cast %59 : vector<128x16xf32> to vector<1x128x16xf32>
    %168 = vector.shape_cast %83 : vector<128x16xf32> to vector<1x128x16xf32>
    %169 = vector.shape_cast %102 : vector<128x16xf32> to vector<1x128x16xf32>
    %170 = vector.shape_cast %121 : vector<128x16xf32> to vector<1x128x16xf32>
    %171 = vector.shape_cast %140 : vector<128x16xf32> to vector<1x128x16xf32>
    %172 = vector.shape_cast %164 : vector<128x16xf32> to vector<1x128x16xf32>
    %173 = tpu.concatenate %165, %166, %167, %168, %169, %170, %171, %172 in 0 : vector<1x128x16xf32>, vector<1x128x16xf32>, vector<1x128x16xf32>, vector<1x128x16xf32>, vector<1x128x16xf32>, vector<1x128x16xf32>, vector<1x128x16xf32>, vector<1x128x16xf32> -> vector<8x128x16xf32>
    %174 = vector.shape_cast %173 : vector<8x128x16xf32> to vector<1024x16xf32>
    %175 = arith.truncf %174 : vector<1024x16xf32> to vector<1024x16xbf16>
    %c0_37 = arith.constant 0 : index
    %c0_38 = arith.constant 0 : index
    %176 = vector.load %arg2[%c0_37, %c0_38] : memref<16x64xbf16, #tpu.memory_space<vmem>>, vector<16x64xbf16>
    %cst_39 = arith.constant dense<0.000000e+00> : vector<1024x64xf32>
    %177 = tpu.matmul %175, %176, %cst_39 {dimension_numbers = #tpu.dot_dimension_numbers<[1], [0], [0], [1], [0, 0, 1, 1], [], []>} : vector<1024x16xbf16>, vector<16x64xbf16>, vector<1024x64xf32> -> vector<1024x64xf32>
    %178 = vector.broadcast %2 : vector<1x64xf32> to vector<1024x64xf32>
    %179 = arith.addf %177, %178 : vector<1024x64xf32>
    %cst_40 = arith.constant 0.000000e+00 : f32
    %180 = vector.broadcast %cst_40 : f32 to vector<1024x64xf32>
    %181 = arith.maximumf %179, %180 : vector<1024x64xf32>
    %182 = vector.shape_cast %181 : vector<1024x64xf32> to vector<8x128x64xf32>
    %183 = vector.extract_strided_slice %0 {offsets = [1, 0], sizes = [1, 96], strides = [1, 1]} : vector<8x128xf32> to vector<1x96xf32>
    %184 = vector.extract_strided_slice %182 {offsets = [0, 0, 0], sizes = [1, 128, 64], strides = [1, 1, 1]} : vector<8x128x64xf32> to vector<1x128x64xf32>
    %185 = vector.shape_cast %184 : vector<1x128x64xf32> to vector<128x64xf32>
    %cst_41 = arith.constant 2.500000e-01 : f32
    %186 = vector.broadcast %cst_41 : f32 to vector<128x64xf32>
    %187 = arith.mulf %185, %186 : vector<128x64xf32>
    %188 = vector.extract_strided_slice %182 {offsets = [1, 0, 0], sizes = [1, 128, 64], strides = [1, 1, 1]} : vector<8x128x64xf32> to vector<1x128x64xf32>
    %189 = vector.shape_cast %188 : vector<1x128x64xf32> to vector<128x64xf32>
    %cst_42 = arith.constant 2.500000e-01 : f32
    %190 = vector.broadcast %cst_42 : f32 to vector<128x64xf32>
    %191 = arith.mulf %189, %190 : vector<128x64xf32>
    %192 = arith.addf %187, %191 : vector<128x64xf32>
    %193 = vector.extract_strided_slice %182 {offsets = [2, 0, 0], sizes = [1, 128, 64], strides = [1, 1, 1]} : vector<8x128x64xf32> to vector<1x128x64xf32>
    %194 = vector.shape_cast %193 : vector<1x128x64xf32> to vector<128x64xf32>
    %cst_43 = arith.constant 2.500000e-01 : f32
    %195 = vector.broadcast %cst_43 : f32 to vector<128x64xf32>
    %196 = arith.mulf %194, %195 : vector<128x64xf32>
    %197 = arith.addf %192, %196 : vector<128x64xf32>
    %198 = vector.extract_strided_slice %182 {offsets = [3, 0, 0], sizes = [1, 128, 64], strides = [1, 1, 1]} : vector<8x128x64xf32> to vector<1x128x64xf32>
    %199 = vector.shape_cast %198 : vector<1x128x64xf32> to vector<128x64xf32>
    %cst_44 = arith.constant 0.223606795 : f32
    %200 = vector.broadcast %cst_44 : f32 to vector<128x64xf32>
    %201 = arith.mulf %199, %200 : vector<128x64xf32>
    %202 = arith.addf %197, %201 : vector<128x64xf32>
    %203 = vector.extract_strided_slice %182 {offsets = [0, 0, 0], sizes = [1, 128, 64], strides = [1, 1, 1]} : vector<8x128x64xf32> to vector<1x128x64xf32>
    %204 = vector.shape_cast %203 : vector<1x128x64xf32> to vector<128x64xf32>
    %cst_45 = arith.constant 2.500000e-01 : f32
    %205 = vector.broadcast %cst_45 : f32 to vector<128x64xf32>
    %206 = arith.mulf %204, %205 : vector<128x64xf32>
    %207 = vector.extract_strided_slice %182 {offsets = [1, 0, 0], sizes = [1, 128, 64], strides = [1, 1, 1]} : vector<8x128x64xf32> to vector<1x128x64xf32>
    %208 = vector.shape_cast %207 : vector<1x128x64xf32> to vector<128x64xf32>
    %cst_46 = arith.constant 2.500000e-01 : f32
    %209 = vector.broadcast %cst_46 : f32 to vector<128x64xf32>
    %210 = arith.mulf %208, %209 : vector<128x64xf32>
    %211 = arith.addf %206, %210 : vector<128x64xf32>
    %212 = vector.extract_strided_slice %182 {offsets = [3, 0, 0], sizes = [1, 128, 64], strides = [1, 1, 1]} : vector<8x128x64xf32> to vector<1x128x64xf32>
    %213 = vector.shape_cast %212 : vector<1x128x64xf32> to vector<128x64xf32>
    %cst_47 = arith.constant 0.223606795 : f32
    %214 = vector.broadcast %cst_47 : f32 to vector<128x64xf32>
    %215 = arith.mulf %213, %214 : vector<128x64xf32>
    %216 = arith.addf %211, %215 : vector<128x64xf32>
    %217 = vector.extract_strided_slice %182 {offsets = [6, 0, 0], sizes = [1, 128, 64], strides = [1, 1, 1]} : vector<8x128x64xf32> to vector<1x128x64xf32>
    %218 = vector.shape_cast %217 : vector<1x128x64xf32> to vector<128x64xf32>
    %cst_48 = arith.constant 2.500000e-01 : f32
    %219 = vector.broadcast %cst_48 : f32 to vector<128x64xf32>
    %220 = arith.mulf %218, %219 : vector<128x64xf32>
    %221 = arith.addf %216, %220 : vector<128x64xf32>
    %222 = vector.extract_strided_slice %182 {offsets = [0, 0, 0], sizes = [1, 128, 64], strides = [1, 1, 1]} : vector<8x128x64xf32> to vector<1x128x64xf32>
    %223 = vector.shape_cast %222 : vector<1x128x64xf32> to vector<128x64xf32>
    %cst_49 = arith.constant 2.500000e-01 : f32
    %224 = vector.broadcast %cst_49 : f32 to vector<128x64xf32>
    %225 = arith.mulf %223, %224 : vector<128x64xf32>
    %226 = vector.extract_strided_slice %182 {offsets = [2, 0, 0], sizes = [1, 128, 64], strides = [1, 1, 1]} : vector<8x128x64xf32> to vector<1x128x64xf32>
    %227 = vector.shape_cast %226 : vector<1x128x64xf32> to vector<128x64xf32>
    %cst_50 = arith.constant 2.500000e-01 : f32
    %228 = vector.broadcast %cst_50 : f32 to vector<128x64xf32>
    %229 = arith.mulf %227, %228 : vector<128x64xf32>
    %230 = arith.addf %225, %229 : vector<128x64xf32>
    %231 = vector.extract_strided_slice %182 {offsets = [3, 0, 0], sizes = [1, 128, 64], strides = [1, 1, 1]} : vector<8x128x64xf32> to vector<1x128x64xf32>
    %232 = vector.shape_cast %231 : vector<1x128x64xf32> to vector<128x64xf32>
    %cst_51 = arith.constant 0.223606795 : f32
    %233 = vector.broadcast %cst_51 : f32 to vector<128x64xf32>
    %234 = arith.mulf %232, %233 : vector<128x64xf32>
    %235 = arith.addf %230, %234 : vector<128x64xf32>
    %236 = vector.extract_strided_slice %182 {offsets = [5, 0, 0], sizes = [1, 128, 64], strides = [1, 1, 1]} : vector<8x128x64xf32> to vector<1x128x64xf32>
    %237 = vector.shape_cast %236 : vector<1x128x64xf32> to vector<128x64xf32>
    %cst_52 = arith.constant 2.500000e-01 : f32
    %238 = vector.broadcast %cst_52 : f32 to vector<128x64xf32>
    %239 = arith.mulf %237, %238 : vector<128x64xf32>
    %240 = arith.addf %235, %239 : vector<128x64xf32>
    %241 = vector.extract_strided_slice %182 {offsets = [0, 0, 0], sizes = [1, 128, 64], strides = [1, 1, 1]} : vector<8x128x64xf32> to vector<1x128x64xf32>
    %242 = vector.shape_cast %241 : vector<1x128x64xf32> to vector<128x64xf32>
    %cst_53 = arith.constant 0.223606795 : f32
    %243 = vector.broadcast %cst_53 : f32 to vector<128x64xf32>
    %244 = arith.mulf %242, %243 : vector<128x64xf32>
    %245 = vector.extract_strided_slice %182 {offsets = [1, 0, 0], sizes = [1, 128, 64], strides = [1, 1, 1]} : vector<8x128x64xf32> to vector<1x128x64xf32>
    %246 = vector.shape_cast %245 : vector<1x128x64xf32> to vector<128x64xf32>
    %cst_54 = arith.constant 0.223606795 : f32
    %247 = vector.broadcast %cst_54 : f32 to vector<128x64xf32>
    %248 = arith.mulf %246, %247 : vector<128x64xf32>
    %249 = arith.addf %244, %248 : vector<128x64xf32>
    %250 = vector.extract_strided_slice %182 {offsets = [2, 0, 0], sizes = [1, 128, 64], strides = [1, 1, 1]} : vector<8x128x64xf32> to vector<1x128x64xf32>
    %251 = vector.shape_cast %250 : vector<1x128x64xf32> to vector<128x64xf32>
    %cst_55 = arith.constant 0.223606795 : f32
    %252 = vector.broadcast %cst_55 : f32 to vector<128x64xf32>
    %253 = arith.mulf %251, %252 : vector<128x64xf32>
    %254 = arith.addf %249, %253 : vector<128x64xf32>
    %255 = vector.extract_strided_slice %182 {offsets = [3, 0, 0], sizes = [1, 128, 64], strides = [1, 1, 1]} : vector<8x128x64xf32> to vector<1x128x64xf32>
    %256 = vector.shape_cast %255 : vector<1x128x64xf32> to vector<128x64xf32>
    %cst_56 = arith.constant 0.199999988 : f32
    %257 = vector.broadcast %cst_56 : f32 to vector<128x64xf32>
    %258 = arith.mulf %256, %257 : vector<128x64xf32>
    %259 = arith.addf %254, %258 : vector<128x64xf32>
    %260 = vector.extract_strided_slice %182 {offsets = [7, 0, 0], sizes = [1, 128, 64], strides = [1, 1, 1]} : vector<8x128x64xf32> to vector<1x128x64xf32>
    %261 = vector.shape_cast %260 : vector<1x128x64xf32> to vector<128x64xf32>
    %cst_57 = arith.constant 0.199999988 : f32
    %262 = vector.broadcast %cst_57 : f32 to vector<128x64xf32>
    %263 = arith.mulf %261, %262 : vector<128x64xf32>
    %264 = arith.addf %259, %263 : vector<128x64xf32>
    %265 = vector.extract_strided_slice %182 {offsets = [4, 0, 0], sizes = [1, 128, 64], strides = [1, 1, 1]} : vector<8x128x64xf32> to vector<1x128x64xf32>
    %266 = vector.shape_cast %265 : vector<1x128x64xf32> to vector<128x64xf32>
    %cst_58 = arith.constant 2.500000e-01 : f32
    %267 = vector.broadcast %cst_58 : f32 to vector<128x64xf32>
    %268 = arith.mulf %266, %267 : vector<128x64xf32>
    %269 = vector.extract_strided_slice %182 {offsets = [5, 0, 0], sizes = [1, 128, 64], strides = [1, 1, 1]} : vector<8x128x64xf32> to vector<1x128x64xf32>
    %270 = vector.shape_cast %269 : vector<1x128x64xf32> to vector<128x64xf32>
    %cst_59 = arith.constant 2.500000e-01 : f32
    %271 = vector.broadcast %cst_59 : f32 to vector<128x64xf32>
    %272 = arith.mulf %270, %271 : vector<128x64xf32>
    %273 = arith.addf %268, %272 : vector<128x64xf32>
    %274 = vector.extract_strided_slice %182 {offsets = [6, 0, 0], sizes = [1, 128, 64], strides = [1, 1, 1]} : vector<8x128x64xf32> to vector<1x128x64xf32>
    %275 = vector.shape_cast %274 : vector<1x128x64xf32> to vector<128x64xf32>
    %cst_60 = arith.constant 2.500000e-01 : f32
    %276 = vector.broadcast %cst_60 : f32 to vector<128x64xf32>
    %277 = arith.mulf %275, %276 : vector<128x64xf32>
    %278 = arith.addf %273, %277 : vector<128x64xf32>
    %279 = vector.extract_strided_slice %182 {offsets = [7, 0, 0], sizes = [1, 128, 64], strides = [1, 1, 1]} : vector<8x128x64xf32> to vector<1x128x64xf32>
    %280 = vector.shape_cast %279 : vector<1x128x64xf32> to vector<128x64xf32>
    %cst_61 = arith.constant 0.223606795 : f32
    %281 = vector.broadcast %cst_61 : f32 to vector<128x64xf32>
    %282 = arith.mulf %280, %281 : vector<128x64xf32>
    %283 = arith.addf %278, %282 : vector<128x64xf32>
    %284 = vector.extract_strided_slice %182 {offsets = [2, 0, 0], sizes = [1, 128, 64], strides = [1, 1, 1]} : vector<8x128x64xf32> to vector<1x128x64xf32>
    %285 = vector.shape_cast %284 : vector<1x128x64xf32> to vector<128x64xf32>
    %cst_62 = arith.constant 2.500000e-01 : f32
    %286 = vector.broadcast %cst_62 : f32 to vector<128x64xf32>
    %287 = arith.mulf %285, %286 : vector<128x64xf32>
    %288 = vector.extract_strided_slice %182 {offsets = [4, 0, 0], sizes = [1, 128, 64], strides = [1, 1, 1]} : vector<8x128x64xf32> to vector<1x128x64xf32>
    %289 = vector.shape_cast %288 : vector<1x128x64xf32> to vector<128x64xf32>
    %cst_63 = arith.constant 2.500000e-01 : f32
    %290 = vector.broadcast %cst_63 : f32 to vector<128x64xf32>
    %291 = arith.mulf %289, %290 : vector<128x64xf32>
    %292 = arith.addf %287, %291 : vector<128x64xf32>
    %293 = vector.extract_strided_slice %182 {offsets = [5, 0, 0], sizes = [1, 128, 64], strides = [1, 1, 1]} : vector<8x128x64xf32> to vector<1x128x64xf32>
    %294 = vector.shape_cast %293 : vector<1x128x64xf32> to vector<128x64xf32>
    %cst_64 = arith.constant 2.500000e-01 : f32
    %295 = vector.broadcast %cst_64 : f32 to vector<128x64xf32>
    %296 = arith.mulf %294, %295 : vector<128x64xf32>
    %297 = arith.addf %292, %296 : vector<128x64xf32>
    %298 = vector.extract_strided_slice %182 {offsets = [7, 0, 0], sizes = [1, 128, 64], strides = [1, 1, 1]} : vector<8x128x64xf32> to vector<1x128x64xf32>
    %299 = vector.shape_cast %298 : vector<1x128x64xf32> to vector<128x64xf32>
    %cst_65 = arith.constant 0.223606795 : f32
    %300 = vector.broadcast %cst_65 : f32 to vector<128x64xf32>
    %301 = arith.mulf %299, %300 : vector<128x64xf32>
    %302 = arith.addf %297, %301 : vector<128x64xf32>
    %303 = vector.extract_strided_slice %182 {offsets = [1, 0, 0], sizes = [1, 128, 64], strides = [1, 1, 1]} : vector<8x128x64xf32> to vector<1x128x64xf32>
    %304 = vector.shape_cast %303 : vector<1x128x64xf32> to vector<128x64xf32>
    %cst_66 = arith.constant 2.500000e-01 : f32
    %305 = vector.broadcast %cst_66 : f32 to vector<128x64xf32>
    %306 = arith.mulf %304, %305 : vector<128x64xf32>
    %307 = vector.extract_strided_slice %182 {offsets = [4, 0, 0], sizes = [1, 128, 64], strides = [1, 1, 1]} : vector<8x128x64xf32> to vector<1x128x64xf32>
    %308 = vector.shape_cast %307 : vector<1x128x64xf32> to vector<128x64xf32>
    %cst_67 = arith.constant 2.500000e-01 : f32
    %309 = vector.broadcast %cst_67 : f32 to vector<128x64xf32>
    %310 = arith.mulf %308, %309 : vector<128x64xf32>
    %311 = arith.addf %306, %310 : vector<128x64xf32>
    %312 = vector.extract_strided_slice %182 {offsets = [6, 0, 0], sizes = [1, 128, 64], strides = [1, 1, 1]} : vector<8x128x64xf32> to vector<1x128x64xf32>
    %313 = vector.shape_cast %312 : vector<1x128x64xf32> to vector<128x64xf32>
    %cst_68 = arith.constant 2.500000e-01 : f32
    %314 = vector.broadcast %cst_68 : f32 to vector<128x64xf32>
    %315 = arith.mulf %313, %314 : vector<128x64xf32>
    %316 = arith.addf %311, %315 : vector<128x64xf32>
    %317 = vector.extract_strided_slice %182 {offsets = [7, 0, 0], sizes = [1, 128, 64], strides = [1, 1, 1]} : vector<8x128x64xf32> to vector<1x128x64xf32>
    %318 = vector.shape_cast %317 : vector<1x128x64xf32> to vector<128x64xf32>
    %cst_69 = arith.constant 0.223606795 : f32
    %319 = vector.broadcast %cst_69 : f32 to vector<128x64xf32>
    %320 = arith.mulf %318, %319 : vector<128x64xf32>
    %321 = arith.addf %316, %320 : vector<128x64xf32>
    %322 = vector.extract_strided_slice %182 {offsets = [3, 0, 0], sizes = [1, 128, 64], strides = [1, 1, 1]} : vector<8x128x64xf32> to vector<1x128x64xf32>
    %323 = vector.shape_cast %322 : vector<1x128x64xf32> to vector<128x64xf32>
    %cst_70 = arith.constant 0.199999988 : f32
    %324 = vector.broadcast %cst_70 : f32 to vector<128x64xf32>
    %325 = arith.mulf %323, %324 : vector<128x64xf32>
    %326 = vector.extract_strided_slice %182 {offsets = [4, 0, 0], sizes = [1, 128, 64], strides = [1, 1, 1]} : vector<8x128x64xf32> to vector<1x128x64xf32>
    %327 = vector.shape_cast %326 : vector<1x128x64xf32> to vector<128x64xf32>
    %cst_71 = arith.constant 0.223606795 : f32
    %328 = vector.broadcast %cst_71 : f32 to vector<128x64xf32>
    %329 = arith.mulf %327, %328 : vector<128x64xf32>
    %330 = arith.addf %325, %329 : vector<128x64xf32>
    %331 = vector.extract_strided_slice %182 {offsets = [5, 0, 0], sizes = [1, 128, 64], strides = [1, 1, 1]} : vector<8x128x64xf32> to vector<1x128x64xf32>
    %332 = vector.shape_cast %331 : vector<1x128x64xf32> to vector<128x64xf32>
    %cst_72 = arith.constant 0.223606795 : f32
    %333 = vector.broadcast %cst_72 : f32 to vector<128x64xf32>
    %334 = arith.mulf %332, %333 : vector<128x64xf32>
    %335 = arith.addf %330, %334 : vector<128x64xf32>
    %336 = vector.extract_strided_slice %182 {offsets = [6, 0, 0], sizes = [1, 128, 64], strides = [1, 1, 1]} : vector<8x128x64xf32> to vector<1x128x64xf32>
    %337 = vector.shape_cast %336 : vector<1x128x64xf32> to vector<128x64xf32>
    %cst_73 = arith.constant 0.223606795 : f32
    %338 = vector.broadcast %cst_73 : f32 to vector<128x64xf32>
    %339 = arith.mulf %337, %338 : vector<128x64xf32>
    %340 = arith.addf %335, %339 : vector<128x64xf32>
    %341 = vector.extract_strided_slice %182 {offsets = [7, 0, 0], sizes = [1, 128, 64], strides = [1, 1, 1]} : vector<8x128x64xf32> to vector<1x128x64xf32>
    %342 = vector.shape_cast %341 : vector<1x128x64xf32> to vector<128x64xf32>
    %cst_74 = arith.constant 0.199999988 : f32
    %343 = vector.broadcast %cst_74 : f32 to vector<128x64xf32>
    %344 = arith.mulf %342, %343 : vector<128x64xf32>
    %345 = arith.addf %340, %344 : vector<128x64xf32>
    %346 = vector.shape_cast %202 : vector<128x64xf32> to vector<1x128x64xf32>
    %347 = vector.shape_cast %221 : vector<128x64xf32> to vector<1x128x64xf32>
    %348 = vector.shape_cast %240 : vector<128x64xf32> to vector<1x128x64xf32>
    %349 = vector.shape_cast %264 : vector<128x64xf32> to vector<1x128x64xf32>
    %350 = vector.shape_cast %283 : vector<128x64xf32> to vector<1x128x64xf32>
    %351 = vector.shape_cast %302 : vector<128x64xf32> to vector<1x128x64xf32>
    %352 = vector.shape_cast %321 : vector<128x64xf32> to vector<1x128x64xf32>
    %353 = vector.shape_cast %345 : vector<128x64xf32> to vector<1x128x64xf32>
    %354 = tpu.concatenate %346, %347, %348, %349, %350, %351, %352, %353 in 0 : vector<1x128x64xf32>, vector<1x128x64xf32>, vector<1x128x64xf32>, vector<1x128x64xf32>, vector<1x128x64xf32>, vector<1x128x64xf32>, vector<1x128x64xf32>, vector<1x128x64xf32> -> vector<8x128x64xf32>
    %355 = vector.shape_cast %354 : vector<8x128x64xf32> to vector<1024x64xf32>
    %356 = arith.truncf %355 : vector<1024x64xf32> to vector<1024x64xbf16>
    %c0_75 = arith.constant 0 : index
    %c0_76 = arith.constant 0 : index
    %357 = vector.load %arg3[%c0_75, %c0_76] : memref<64x96xbf16, #tpu.memory_space<vmem>>, vector<64x96xbf16>
    %cst_77 = arith.constant dense<0.000000e+00> : vector<1024x96xf32>
    %358 = tpu.matmul %356, %357, %cst_77 {dimension_numbers = #tpu.dot_dimension_numbers<[1], [0], [0], [1], [0, 0, 1, 1], [], []>} : vector<1024x64xbf16>, vector<64x96xbf16>, vector<1024x96xf32> -> vector<1024x96xf32>
    %359 = vector.broadcast %183 : vector<1x96xf32> to vector<1024x96xf32>
    %360 = arith.addf %358, %359 : vector<1024x96xf32>
    %cst_78 = arith.constant 0.000000e+00 : f32
    %361 = vector.broadcast %cst_78 : f32 to vector<1024x96xf32>
    %362 = arith.maximumf %360, %361 : vector<1024x96xf32>
    %363 = vector.shape_cast %362 : vector<1024x96xf32> to vector<8x128x96xf32>
    %364 = vector.extract_strided_slice %0 {offsets = [2, 0], sizes = [1, 128], strides = [1, 1]} : vector<8x128xf32> to vector<1x128xf32>
    %365 = vector.extract_strided_slice %363 {offsets = [0, 0, 0], sizes = [1, 128, 96], strides = [1, 1, 1]} : vector<8x128x96xf32> to vector<1x128x96xf32>
    %366 = vector.shape_cast %365 : vector<1x128x96xf32> to vector<128x96xf32>
    %cst_79 = arith.constant 2.500000e-01 : f32
    %367 = vector.broadcast %cst_79 : f32 to vector<128x96xf32>
    %368 = arith.mulf %366, %367 : vector<128x96xf32>
    %369 = vector.extract_strided_slice %363 {offsets = [1, 0, 0], sizes = [1, 128, 96], strides = [1, 1, 1]} : vector<8x128x96xf32> to vector<1x128x96xf32>
    %370 = vector.shape_cast %369 : vector<1x128x96xf32> to vector<128x96xf32>
    %cst_80 = arith.constant 2.500000e-01 : f32
    %371 = vector.broadcast %cst_80 : f32 to vector<128x96xf32>
    %372 = arith.mulf %370, %371 : vector<128x96xf32>
    %373 = arith.addf %368, %372 : vector<128x96xf32>
    %374 = vector.extract_strided_slice %363 {offsets = [2, 0, 0], sizes = [1, 128, 96], strides = [1, 1, 1]} : vector<8x128x96xf32> to vector<1x128x96xf32>
    %375 = vector.shape_cast %374 : vector<1x128x96xf32> to vector<128x96xf32>
    %cst_81 = arith.constant 2.500000e-01 : f32
    %376 = vector.broadcast %cst_81 : f32 to vector<128x96xf32>
    %377 = arith.mulf %375, %376 : vector<128x96xf32>
    %378 = arith.addf %373, %377 : vector<128x96xf32>
    %379 = vector.extract_strided_slice %363 {offsets = [3, 0, 0], sizes = [1, 128, 96], strides = [1, 1, 1]} : vector<8x128x96xf32> to vector<1x128x96xf32>
    %380 = vector.shape_cast %379 : vector<1x128x96xf32> to vector<128x96xf32>
    %cst_82 = arith.constant 0.223606795 : f32
    %381 = vector.broadcast %cst_82 : f32 to vector<128x96xf32>
    %382 = arith.mulf %380, %381 : vector<128x96xf32>
    %383 = arith.addf %378, %382 : vector<128x96xf32>
    %384 = vector.extract_strided_slice %363 {offsets = [0, 0, 0], sizes = [1, 128, 96], strides = [1, 1, 1]} : vector<8x128x96xf32> to vector<1x128x96xf32>
    %385 = vector.shape_cast %384 : vector<1x128x96xf32> to vector<128x96xf32>
    %cst_83 = arith.constant 2.500000e-01 : f32
    %386 = vector.broadcast %cst_83 : f32 to vector<128x96xf32>
    %387 = arith.mulf %385, %386 : vector<128x96xf32>
    %388 = vector.extract_strided_slice %363 {offsets = [1, 0, 0], sizes = [1, 128, 96], strides = [1, 1, 1]} : vector<8x128x96xf32> to vector<1x128x96xf32>
    %389 = vector.shape_cast %388 : vector<1x128x96xf32> to vector<128x96xf32>
    %cst_84 = arith.constant 2.500000e-01 : f32
    %390 = vector.broadcast %cst_84 : f32 to vector<128x96xf32>
    %391 = arith.mulf %389, %390 : vector<128x96xf32>
    %392 = arith.addf %387, %391 : vector<128x96xf32>
    %393 = vector.extract_strided_slice %363 {offsets = [3, 0, 0], sizes = [1, 128, 96], strides = [1, 1, 1]} : vector<8x128x96xf32> to vector<1x128x96xf32>
    %394 = vector.shape_cast %393 : vector<1x128x96xf32> to vector<128x96xf32>
    %cst_85 = arith.constant 0.223606795 : f32
    %395 = vector.broadcast %cst_85 : f32 to vector<128x96xf32>
    %396 = arith.mulf %394, %395 : vector<128x96xf32>
    %397 = arith.addf %392, %396 : vector<128x96xf32>
    %398 = vector.extract_strided_slice %363 {offsets = [6, 0, 0], sizes = [1, 128, 96], strides = [1, 1, 1]} : vector<8x128x96xf32> to vector<1x128x96xf32>
    %399 = vector.shape_cast %398 : vector<1x128x96xf32> to vector<128x96xf32>
    %cst_86 = arith.constant 2.500000e-01 : f32
    %400 = vector.broadcast %cst_86 : f32 to vector<128x96xf32>
    %401 = arith.mulf %399, %400 : vector<128x96xf32>
    %402 = arith.addf %397, %401 : vector<128x96xf32>
    %403 = vector.extract_strided_slice %363 {offsets = [0, 0, 0], sizes = [1, 128, 96], strides = [1, 1, 1]} : vector<8x128x96xf32> to vector<1x128x96xf32>
    %404 = vector.shape_cast %403 : vector<1x128x96xf32> to vector<128x96xf32>
    %cst_87 = arith.constant 2.500000e-01 : f32
    %405 = vector.broadcast %cst_87 : f32 to vector<128x96xf32>
    %406 = arith.mulf %404, %405 : vector<128x96xf32>
    %407 = vector.extract_strided_slice %363 {offsets = [2, 0, 0], sizes = [1, 128, 96], strides = [1, 1, 1]} : vector<8x128x96xf32> to vector<1x128x96xf32>
    %408 = vector.shape_cast %407 : vector<1x128x96xf32> to vector<128x96xf32>
    %cst_88 = arith.constant 2.500000e-01 : f32
    %409 = vector.broadcast %cst_88 : f32 to vector<128x96xf32>
    %410 = arith.mulf %408, %409 : vector<128x96xf32>
    %411 = arith.addf %406, %410 : vector<128x96xf32>
    %412 = vector.extract_strided_slice %363 {offsets = [3, 0, 0], sizes = [1, 128, 96], strides = [1, 1, 1]} : vector<8x128x96xf32> to vector<1x128x96xf32>
    %413 = vector.shape_cast %412 : vector<1x128x96xf32> to vector<128x96xf32>
    %cst_89 = arith.constant 0.223606795 : f32
    %414 = vector.broadcast %cst_89 : f32 to vector<128x96xf32>
    %415 = arith.mulf %413, %414 : vector<128x96xf32>
    %416 = arith.addf %411, %415 : vector<128x96xf32>
    %417 = vector.extract_strided_slice %363 {offsets = [5, 0, 0], sizes = [1, 128, 96], strides = [1, 1, 1]} : vector<8x128x96xf32> to vector<1x128x96xf32>
    %418 = vector.shape_cast %417 : vector<1x128x96xf32> to vector<128x96xf32>
    %cst_90 = arith.constant 2.500000e-01 : f32
    %419 = vector.broadcast %cst_90 : f32 to vector<128x96xf32>
    %420 = arith.mulf %418, %419 : vector<128x96xf32>
    %421 = arith.addf %416, %420 : vector<128x96xf32>
    %422 = vector.extract_strided_slice %363 {offsets = [0, 0, 0], sizes = [1, 128, 96], strides = [1, 1, 1]} : vector<8x128x96xf32> to vector<1x128x96xf32>
    %423 = vector.shape_cast %422 : vector<1x128x96xf32> to vector<128x96xf32>
    %cst_91 = arith.constant 0.223606795 : f32
    %424 = vector.broadcast %cst_91 : f32 to vector<128x96xf32>
    %425 = arith.mulf %423, %424 : vector<128x96xf32>
    %426 = vector.extract_strided_slice %363 {offsets = [1, 0, 0], sizes = [1, 128, 96], strides = [1, 1, 1]} : vector<8x128x96xf32> to vector<1x128x96xf32>
    %427 = vector.shape_cast %426 : vector<1x128x96xf32> to vector<128x96xf32>
    %cst_92 = arith.constant 0.223606795 : f32
    %428 = vector.broadcast %cst_92 : f32 to vector<128x96xf32>
    %429 = arith.mulf %427, %428 : vector<128x96xf32>
    %430 = arith.addf %425, %429 : vector<128x96xf32>
    %431 = vector.extract_strided_slice %363 {offsets = [2, 0, 0], sizes = [1, 128, 96], strides = [1, 1, 1]} : vector<8x128x96xf32> to vector<1x128x96xf32>
    %432 = vector.shape_cast %431 : vector<1x128x96xf32> to vector<128x96xf32>
    %cst_93 = arith.constant 0.223606795 : f32
    %433 = vector.broadcast %cst_93 : f32 to vector<128x96xf32>
    %434 = arith.mulf %432, %433 : vector<128x96xf32>
    %435 = arith.addf %430, %434 : vector<128x96xf32>
    %436 = vector.extract_strided_slice %363 {offsets = [3, 0, 0], sizes = [1, 128, 96], strides = [1, 1, 1]} : vector<8x128x96xf32> to vector<1x128x96xf32>
    %437 = vector.shape_cast %436 : vector<1x128x96xf32> to vector<128x96xf32>
    %cst_94 = arith.constant 0.199999988 : f32
    %438 = vector.broadcast %cst_94 : f32 to vector<128x96xf32>
    %439 = arith.mulf %437, %438 : vector<128x96xf32>
    %440 = arith.addf %435, %439 : vector<128x96xf32>
    %441 = vector.extract_strided_slice %363 {offsets = [7, 0, 0], sizes = [1, 128, 96], strides = [1, 1, 1]} : vector<8x128x96xf32> to vector<1x128x96xf32>
    %442 = vector.shape_cast %441 : vector<1x128x96xf32> to vector<128x96xf32>
    %cst_95 = arith.constant 0.199999988 : f32
    %443 = vector.broadcast %cst_95 : f32 to vector<128x96xf32>
    %444 = arith.mulf %442, %443 : vector<128x96xf32>
    %445 = arith.addf %440, %444 : vector<128x96xf32>
    %446 = vector.extract_strided_slice %363 {offsets = [4, 0, 0], sizes = [1, 128, 96], strides = [1, 1, 1]} : vector<8x128x96xf32> to vector<1x128x96xf32>
    %447 = vector.shape_cast %446 : vector<1x128x96xf32> to vector<128x96xf32>
    %cst_96 = arith.constant 2.500000e-01 : f32
    %448 = vector.broadcast %cst_96 : f32 to vector<128x96xf32>
    %449 = arith.mulf %447, %448 : vector<128x96xf32>
    %450 = vector.extract_strided_slice %363 {offsets = [5, 0, 0], sizes = [1, 128, 96], strides = [1, 1, 1]} : vector<8x128x96xf32> to vector<1x128x96xf32>
    %451 = vector.shape_cast %450 : vector<1x128x96xf32> to vector<128x96xf32>
    %cst_97 = arith.constant 2.500000e-01 : f32
    %452 = vector.broadcast %cst_97 : f32 to vector<128x96xf32>
    %453 = arith.mulf %451, %452 : vector<128x96xf32>
    %454 = arith.addf %449, %453 : vector<128x96xf32>
    %455 = vector.extract_strided_slice %363 {offsets = [6, 0, 0], sizes = [1, 128, 96], strides = [1, 1, 1]} : vector<8x128x96xf32> to vector<1x128x96xf32>
    %456 = vector.shape_cast %455 : vector<1x128x96xf32> to vector<128x96xf32>
    %cst_98 = arith.constant 2.500000e-01 : f32
    %457 = vector.broadcast %cst_98 : f32 to vector<128x96xf32>
    %458 = arith.mulf %456, %457 : vector<128x96xf32>
    %459 = arith.addf %454, %458 : vector<128x96xf32>
    %460 = vector.extract_strided_slice %363 {offsets = [7, 0, 0], sizes = [1, 128, 96], strides = [1, 1, 1]} : vector<8x128x96xf32> to vector<1x128x96xf32>
    %461 = vector.shape_cast %460 : vector<1x128x96xf32> to vector<128x96xf32>
    %cst_99 = arith.constant 0.223606795 : f32
    %462 = vector.broadcast %cst_99 : f32 to vector<128x96xf32>
    %463 = arith.mulf %461, %462 : vector<128x96xf32>
    %464 = arith.addf %459, %463 : vector<128x96xf32>
    %465 = vector.extract_strided_slice %363 {offsets = [2, 0, 0], sizes = [1, 128, 96], strides = [1, 1, 1]} : vector<8x128x96xf32> to vector<1x128x96xf32>
    %466 = vector.shape_cast %465 : vector<1x128x96xf32> to vector<128x96xf32>
    %cst_100 = arith.constant 2.500000e-01 : f32
    %467 = vector.broadcast %cst_100 : f32 to vector<128x96xf32>
    %468 = arith.mulf %466, %467 : vector<128x96xf32>
    %469 = vector.extract_strided_slice %363 {offsets = [4, 0, 0], sizes = [1, 128, 96], strides = [1, 1, 1]} : vector<8x128x96xf32> to vector<1x128x96xf32>
    %470 = vector.shape_cast %469 : vector<1x128x96xf32> to vector<128x96xf32>
    %cst_101 = arith.constant 2.500000e-01 : f32
    %471 = vector.broadcast %cst_101 : f32 to vector<128x96xf32>
    %472 = arith.mulf %470, %471 : vector<128x96xf32>
    %473 = arith.addf %468, %472 : vector<128x96xf32>
    %474 = vector.extract_strided_slice %363 {offsets = [5, 0, 0], sizes = [1, 128, 96], strides = [1, 1, 1]} : vector<8x128x96xf32> to vector<1x128x96xf32>
    %475 = vector.shape_cast %474 : vector<1x128x96xf32> to vector<128x96xf32>
    %cst_102 = arith.constant 2.500000e-01 : f32
    %476 = vector.broadcast %cst_102 : f32 to vector<128x96xf32>
    %477 = arith.mulf %475, %476 : vector<128x96xf32>
    %478 = arith.addf %473, %477 : vector<128x96xf32>
    %479 = vector.extract_strided_slice %363 {offsets = [7, 0, 0], sizes = [1, 128, 96], strides = [1, 1, 1]} : vector<8x128x96xf32> to vector<1x128x96xf32>
    %480 = vector.shape_cast %479 : vector<1x128x96xf32> to vector<128x96xf32>
    %cst_103 = arith.constant 0.223606795 : f32
    %481 = vector.broadcast %cst_103 : f32 to vector<128x96xf32>
    %482 = arith.mulf %480, %481 : vector<128x96xf32>
    %483 = arith.addf %478, %482 : vector<128x96xf32>
    %484 = vector.extract_strided_slice %363 {offsets = [1, 0, 0], sizes = [1, 128, 96], strides = [1, 1, 1]} : vector<8x128x96xf32> to vector<1x128x96xf32>
    %485 = vector.shape_cast %484 : vector<1x128x96xf32> to vector<128x96xf32>
    %cst_104 = arith.constant 2.500000e-01 : f32
    %486 = vector.broadcast %cst_104 : f32 to vector<128x96xf32>
    %487 = arith.mulf %485, %486 : vector<128x96xf32>
    %488 = vector.extract_strided_slice %363 {offsets = [4, 0, 0], sizes = [1, 128, 96], strides = [1, 1, 1]} : vector<8x128x96xf32> to vector<1x128x96xf32>
    %489 = vector.shape_cast %488 : vector<1x128x96xf32> to vector<128x96xf32>
    %cst_105 = arith.constant 2.500000e-01 : f32
    %490 = vector.broadcast %cst_105 : f32 to vector<128x96xf32>
    %491 = arith.mulf %489, %490 : vector<128x96xf32>
    %492 = arith.addf %487, %491 : vector<128x96xf32>
    %493 = vector.extract_strided_slice %363 {offsets = [6, 0, 0], sizes = [1, 128, 96], strides = [1, 1, 1]} : vector<8x128x96xf32> to vector<1x128x96xf32>
    %494 = vector.shape_cast %493 : vector<1x128x96xf32> to vector<128x96xf32>
    %cst_106 = arith.constant 2.500000e-01 : f32
    %495 = vector.broadcast %cst_106 : f32 to vector<128x96xf32>
    %496 = arith.mulf %494, %495 : vector<128x96xf32>
    %497 = arith.addf %492, %496 : vector<128x96xf32>
    %498 = vector.extract_strided_slice %363 {offsets = [7, 0, 0], sizes = [1, 128, 96], strides = [1, 1, 1]} : vector<8x128x96xf32> to vector<1x128x96xf32>
    %499 = vector.shape_cast %498 : vector<1x128x96xf32> to vector<128x96xf32>
    %cst_107 = arith.constant 0.223606795 : f32
    %500 = vector.broadcast %cst_107 : f32 to vector<128x96xf32>
    %501 = arith.mulf %499, %500 : vector<128x96xf32>
    %502 = arith.addf %497, %501 : vector<128x96xf32>
    %503 = vector.extract_strided_slice %363 {offsets = [3, 0, 0], sizes = [1, 128, 96], strides = [1, 1, 1]} : vector<8x128x96xf32> to vector<1x128x96xf32>
    %504 = vector.shape_cast %503 : vector<1x128x96xf32> to vector<128x96xf32>
    %cst_108 = arith.constant 0.199999988 : f32
    %505 = vector.broadcast %cst_108 : f32 to vector<128x96xf32>
    %506 = arith.mulf %504, %505 : vector<128x96xf32>
    %507 = vector.extract_strided_slice %363 {offsets = [4, 0, 0], sizes = [1, 128, 96], strides = [1, 1, 1]} : vector<8x128x96xf32> to vector<1x128x96xf32>
    %508 = vector.shape_cast %507 : vector<1x128x96xf32> to vector<128x96xf32>
    %cst_109 = arith.constant 0.223606795 : f32
    %509 = vector.broadcast %cst_109 : f32 to vector<128x96xf32>
    %510 = arith.mulf %508, %509 : vector<128x96xf32>
    %511 = arith.addf %506, %510 : vector<128x96xf32>
    %512 = vector.extract_strided_slice %363 {offsets = [5, 0, 0], sizes = [1, 128, 96], strides = [1, 1, 1]} : vector<8x128x96xf32> to vector<1x128x96xf32>
    %513 = vector.shape_cast %512 : vector<1x128x96xf32> to vector<128x96xf32>
    %cst_110 = arith.constant 0.223606795 : f32
    %514 = vector.broadcast %cst_110 : f32 to vector<128x96xf32>
    %515 = arith.mulf %513, %514 : vector<128x96xf32>
    %516 = arith.addf %511, %515 : vector<128x96xf32>
    %517 = vector.extract_strided_slice %363 {offsets = [6, 0, 0], sizes = [1, 128, 96], strides = [1, 1, 1]} : vector<8x128x96xf32> to vector<1x128x96xf32>
    %518 = vector.shape_cast %517 : vector<1x128x96xf32> to vector<128x96xf32>
    %cst_111 = arith.constant 0.223606795 : f32
    %519 = vector.broadcast %cst_111 : f32 to vector<128x96xf32>
    %520 = arith.mulf %518, %519 : vector<128x96xf32>
    %521 = arith.addf %516, %520 : vector<128x96xf32>
    %522 = vector.extract_strided_slice %363 {offsets = [7, 0, 0], sizes = [1, 128, 96], strides = [1, 1, 1]} : vector<8x128x96xf32> to vector<1x128x96xf32>
    %523 = vector.shape_cast %522 : vector<1x128x96xf32> to vector<128x96xf32>
    %cst_112 = arith.constant 0.199999988 : f32
    %524 = vector.broadcast %cst_112 : f32 to vector<128x96xf32>
    %525 = arith.mulf %523, %524 : vector<128x96xf32>
    %526 = arith.addf %521, %525 : vector<128x96xf32>
    %527 = vector.shape_cast %383 : vector<128x96xf32> to vector<1x128x96xf32>
    %528 = vector.shape_cast %402 : vector<128x96xf32> to vector<1x128x96xf32>
    %529 = vector.shape_cast %421 : vector<128x96xf32> to vector<1x128x96xf32>
    %530 = vector.shape_cast %445 : vector<128x96xf32> to vector<1x128x96xf32>
    %531 = vector.shape_cast %464 : vector<128x96xf32> to vector<1x128x96xf32>
    %532 = vector.shape_cast %483 : vector<128x96xf32> to vector<1x128x96xf32>
    %533 = vector.shape_cast %502 : vector<128x96xf32> to vector<1x128x96xf32>
    %534 = vector.shape_cast %526 : vector<128x96xf32> to vector<1x128x96xf32>
    %535 = tpu.concatenate %527, %528, %529, %530, %531, %532, %533, %534 in 0 : vector<1x128x96xf32>, vector<1x128x96xf32>, vector<1x128x96xf32>, vector<1x128x96xf32>, vector<1x128x96xf32>, vector<1x128x96xf32>, vector<1x128x96xf32>, vector<1x128x96xf32> -> vector<8x128x96xf32>
    %536 = vector.shape_cast %535 : vector<8x128x96xf32> to vector<1024x96xf32>
    %537 = arith.truncf %536 : vector<1024x96xf32> to vector<1024x96xbf16>
    %c0_113 = arith.constant 0 : index
    %c0_114 = arith.constant 0 : index
    %538 = vector.load %arg4[%c0_113, %c0_114] : memref<96x128xbf16, #tpu.memory_space<vmem>>, vector<96x128xbf16>
    %cst_115 = arith.constant dense<0.000000e+00> : vector<1024x128xf32>
    %539 = tpu.matmul %537, %538, %cst_115 {dimension_numbers = #tpu.dot_dimension_numbers<[1], [0], [0], [1], [0, 0, 1, 1], [], []>} : vector<1024x96xbf16>, vector<96x128xbf16>, vector<1024x128xf32> -> vector<1024x128xf32>
    %540 = vector.broadcast %364 : vector<1x128xf32> to vector<1024x128xf32>
    %541 = arith.addf %539, %540 : vector<1024x128xf32>
    %cst_116 = arith.constant 0.000000e+00 : f32
    %542 = vector.broadcast %cst_116 : f32 to vector<1024x128xf32>
    %543 = arith.maximumf %541, %542 : vector<1024x128xf32>
    %544 = vector.shape_cast %543 : vector<1024x128xf32> to vector<8x128x128xf32>
    %545 = vector.shape_cast %544 : vector<8x128x128xf32> to vector<1024x128xf32>
    %546 = arith.truncf %545 : vector<1024x128xf32> to vector<1024x128xbf16>
    %c0_117 = arith.constant 0 : index
    %c0_118 = arith.constant 0 : index
    %547 = vector.load %arg5[%c0_117, %c0_118] : memref<128x64xbf16, #tpu.memory_space<vmem>>, vector<128x64xbf16>
    %cst_119 = arith.constant dense<0.000000e+00> : vector<1024x64xf32>
    %548 = tpu.matmul %546, %547, %cst_119 {dimension_numbers = #tpu.dot_dimension_numbers<[1], [0], [0], [1], [0, 0, 1, 1], [], []>} : vector<1024x128xbf16>, vector<128x64xbf16>, vector<1024x64xf32> -> vector<1024x64xf32>
    %549 = vector.extract_strided_slice %0 {offsets = [3, 0], sizes = [1, 64], strides = [1, 1]} : vector<8x128xf32> to vector<1x64xf32>
    %550 = vector.broadcast %549 : vector<1x64xf32> to vector<1024x64xf32>
    %551 = arith.addf %548, %550 : vector<1024x64xf32>
    %cst_120 = arith.constant 0.000000e+00 : f32
    %552 = vector.broadcast %cst_120 : f32 to vector<1024x64xf32>
    %553 = arith.maximumf %551, %552 : vector<1024x64xf32>
    %554 = arith.truncf %553 : vector<1024x64xf32> to vector<1024x64xbf16>
    %c0_121 = arith.constant 0 : index
    %c0_122 = arith.constant 0 : index
    %555 = vector.load %arg6[%c0_121, %c0_122] : memref<64x32xbf16, #tpu.memory_space<vmem>>, vector<64x32xbf16>
    %cst_123 = arith.constant dense<0.000000e+00> : vector<1024x32xf32>
    %556 = tpu.matmul %554, %555, %cst_123 {dimension_numbers = #tpu.dot_dimension_numbers<[1], [0], [0], [1], [0, 0, 1, 1], [], []>} : vector<1024x64xbf16>, vector<64x32xbf16>, vector<1024x32xf32> -> vector<1024x32xf32>
    %557 = vector.extract_strided_slice %0 {offsets = [4, 0], sizes = [1, 32], strides = [1, 1]} : vector<8x128xf32> to vector<1x32xf32>
    %558 = vector.broadcast %557 : vector<1x32xf32> to vector<1024x32xf32>
    %559 = arith.addf %556, %558 : vector<1024x32xf32>
    %cst_124 = arith.constant 0.000000e+00 : f32
    %560 = vector.broadcast %cst_124 : f32 to vector<1024x32xf32>
    %561 = arith.maximumf %559, %560 : vector<1024x32xf32>
    %562 = vector.extract_strided_slice %0 {offsets = [5, 0], sizes = [1, 32], strides = [1, 1]} : vector<8x128xf32> to vector<1x32xf32>
    %563 = vector.shape_cast %562 : vector<1x32xf32> to vector<1x1x32xf32>
    %564 = vector.extract_strided_slice %0 {offsets = [6, 0], sizes = [1, 1], strides = [1, 1]} : vector<8x128xf32> to vector<1x1xf32>
    %565 = vector.shape_cast %561 : vector<1024x32xf32> to vector<8x128x32xf32>
    %566 = vector.broadcast %563 : vector<1x1x32xf32> to vector<8x128x32xf32>
    %567 = arith.mulf %565, %566 : vector<8x128x32xf32>
    %cst_125 = arith.constant dense<0.000000e+00> : vector<8x128xf32>
    %568 = vector.multi_reduction <add>, %567, %cst_125 [2] : vector<8x128x32xf32> to vector<8x128xf32>
    %569 = vector.broadcast %564 : vector<1x1xf32> to vector<8x128xf32>
    %570 = arith.addf %568, %569 : vector<8x128xf32>
    %cst_126 = arith.constant dense<0xFF800000> : vector<128xf32>
    %571 = vector.multi_reduction <maximumf>, %570, %cst_126 [0] : vector<8x128xf32> to vector<128xf32>
    %572 = vector.shape_cast %571 : vector<128xf32> to vector<1x128xf32>
    %c0_127 = arith.constant 0 : index
    %c0_128 = arith.constant 0 : index
    %573 = vector.load %arg8[%c0_127, %c0_128] : memref<1x128xf32, #tpu.memory_space<vmem>>, vector<1x128xf32>
    tpu.vector_store %arg8[%c0_127, %c0_128], %572 {strides = array<i32>} : memref<1x128xf32, #tpu.memory_space<vmem>>, vector<1x128xf32>,
    return
  }
  func.func @transform_0(%arg0: i32) -> (i32, i32, i32) {
    %c0_i32 = arith.constant 0 : i32
    %c0_i32_0 = arith.constant 0 : i32
    %c0_i32_1 = arith.constant 0 : i32
    return %c0_i32, %arg0, %c0_i32_0 : i32, i32, i32
  }
  func.func @transform_1(%arg0: i32) -> (i32, i32) {
    %c0_i32 = arith.constant 0 : i32
    %c0_i32_0 = arith.constant 0 : i32
    %c0_i32_1 = arith.constant 0 : i32
    return %c0_i32, %c0_i32_0 : i32, i32
  }
  func.func @transform_2(%arg0: i32) -> (i32, i32) {
    %c0_i32 = arith.constant 0 : i32
    %c0_i32_0 = arith.constant 0 : i32
    %c0_i32_1 = arith.constant 0 : i32
    return %c0_i32, %c0_i32_0 : i32, i32
  }
  func.func @transform_3(%arg0: i32) -> (i32, i32) {
    %c0_i32 = arith.constant 0 : i32
    %c0_i32_0 = arith.constant 0 : i32
    %c0_i32_1 = arith.constant 0 : i32
    return %c0_i32, %c0_i32_0 : i32, i32
  }
  func.func @transform_4(%arg0: i32) -> (i32, i32) {
    %c0_i32 = arith.constant 0 : i32
    %c0_i32_0 = arith.constant 0 : i32
    %c0_i32_1 = arith.constant 0 : i32
    return %c0_i32, %c0_i32_0 : i32, i32
  }
  func.func @transform_5(%arg0: i32) -> (i32, i32) {
    %c0_i32 = arith.constant 0 : i32
    %c0_i32_0 = arith.constant 0 : i32
    %c0_i32_1 = arith.constant 0 : i32
    return %c0_i32, %c0_i32_0 : i32, i32
  }
  func.func @transform_6(%arg0: i32) -> (i32, i32) {
    %c0_i32 = arith.constant 0 : i32
    %c0_i32_0 = arith.constant 0 : i32
    %c0_i32_1 = arith.constant 0 : i32
    return %c0_i32, %c0_i32_0 : i32, i32
  }
  func.func @transform_7(%arg0: i32) -> (i32, i32) {
    %c0_i32 = arith.constant 0 : i32
    %c0_i32_0 = arith.constant 0 : i32
    return %c0_i32, %arg0 : i32, i32
  }
}

</mosaic_0001>

<llo_original>
// kernel: tpu_custom_call.1
$region0: #{tpu_custom_call.1}
  #allocation0 [shape = 'u32[]', space=smem, size = 0x4, offset = 0x4, fixed_abs, tag = 'smem constant byte address 0x4 - core index']
  #allocation1 [shape = 'u32[144,128]{1,0:T(1,128)}', space=vmem, size = 0x12000, scoped, tag = 'internal scratch']
  %s0 = inlined_call_operand.vmem [shape: f32[8,128,16], index: 0, kind: input, shape index: {}]
  %s1 = inlined_call_operand.vmem [shape: bf16[16,64], index: 1, kind: input, shape index: {}]
  %s2 = inlined_call_operand.vmem [shape: bf16[64,96], index: 2, kind: input, shape index: {}]
  %s3 = inlined_call_operand.vmem [shape: bf16[96,128], index: 3, kind: input, shape index: {}]
  %s4 = inlined_call_operand.vmem [shape: bf16[128,64], index: 4, kind: input, shape index: {}]
  %s5 = inlined_call_operand.vmem [shape: bf16[64,32], index: 5, kind: input, shape index: {}]
  %s6 = inlined_call_operand.vmem [shape: f32[8,128], index: 6, kind: input, shape index: {}]
  %s7 = inlined_call_operand.hbm [shape: f32[1,128], index: 7, kind: output, shape index: {}]
  %s8 = sld [smem:[#allocation0]]
  $region38: #{tpu_custom_call.1} parent=0
    _
  %s10 = ssub.s32 1, %s8
  %s11 = scalar_select 0, %s10, %s8
  $region1: #{tpu_custom_call.1} parent=0
    #allocation2 [shape = 'u8[512]{0}', space=vmem, size = 0x400, scoped, tag = 'output window, operand 0, single buffered']
    #allocation3 [shape = 's32[1]{0}', space=sflag, size = 0x4, scoped, tag = 'scoped memory for tpu_custom_call.1']
    %12 = vsyncpa [#allocation3], 0
    // Predicated region
    $region2: #{tpu_custom_call.1} parent=1 // pred_check
      _
    $region3: #{tpu_custom_call.1} parent=1 // pred_check_branch
      %14 = sbr.rel (0) target = $region5
    $region4: #{tpu_custom_call.1} parent=1 // pred_region
      _
    $region5: #{tpu_custom_call.1} parent=1 // pred_fallthru
      _
    // Predicated region
    $region6: #{tpu_custom_call.1} parent=1 // pred_check
      _
    $region7: #{tpu_custom_call.1} parent=1 // pred_check_branch
      %16 = sbr.rel (0) target = $region9
    $region8: #{tpu_custom_call.1} parent=1 // pred_region
      _
    $region9: #{tpu_custom_call.1} parent=1 // pred_fallthru
      _
    // Predicated region
    $region10: #{tpu_custom_call.1} parent=1 // pred_check
      _
    $region11: #{tpu_custom_call.1} parent=1 // pred_check_branch
      %18 = sbr.rel (0) target = $region13
    $region12: #{tpu_custom_call.1} parent=1 // pred_region
      _
    $region13: #{tpu_custom_call.1} parent=1 // pred_fallthru
      _
    // Predicated region
    $region14: #{tpu_custom_call.1} parent=1 // pred_check
      _
    $region15: #{tpu_custom_call.1} parent=1 // pred_check_branch
      %20 = sbr.rel (0) target = $region17
    $region16: #{tpu_custom_call.1} parent=1 // pred_region
      _
    $region17: #{tpu_custom_call.1} parent=1 // pred_fallthru
      _
    // Predicated region
    $region18: #{tpu_custom_call.1} parent=1 // pred_check
      _
    $region19: #{tpu_custom_call.1} parent=1 // pred_check_branch
      %22 = sbr.rel (0) target = $region21
    $region20: #{tpu_custom_call.1} parent=1 // pred_region
      _
    $region21: #{tpu_custom_call.1} parent=1 // pred_fallthru
      _
    // Predicated region
    $region22: #{tpu_custom_call.1} parent=1 // pred_check
      _
    $region23: #{tpu_custom_call.1} parent=1 // pred_check_branch
      %24 = sbr.rel (0) target = $region25
    $region24: #{tpu_custom_call.1} parent=1 // pred_region
      _
    $region25: #{tpu_custom_call.1} parent=1 // pred_fallthru
      _
    // Predicated region
    $region26: #{tpu_custom_call.1} parent=1 // pred_check
      _
    $region27: #{tpu_custom_call.1} parent=1 // pred_check_branch
      %26 = sbr.rel (0) target = $region29
    $region28: #{tpu_custom_call.1} parent=1 // pred_region
      _
    $region29: #{tpu_custom_call.1} parent=1 // pred_fallthru
      _
    %v28 = vld [vmem:[%s6] sm:$0xff]
    %v29 = vld [vmem:[%s0] sm:$0xff]
    %v30 = vld [vmem:[%s0 + $0x8] sm:$0xff]
    %v31 = vld [vmem:[%s0 + $0x10] sm:$0xff]
    %v32 = vld [vmem:[%s0 + $0x18] sm:$0xff]
    %v33 = vld [vmem:[%s0 + $0x20] sm:$0xff]
    %v34 = vld [vmem:[%s0 + $0x28] sm:$0xff]
    %v35 = vld [vmem:[%s0 + $0x30] sm:$0xff]
    %v36 = vld [vmem:[%s0 + $0x38] sm:$0xff]
    %v37 = vld [vmem:[%s0 + $0x40] sm:$0xff]
    %v38 = vld [vmem:[%s0 + $0x48] sm:$0xff]
    %v39 = vld [vmem:[%s0 + $0x50] sm:$0xff]
    %v40 = vld [vmem:[%s0 + $0x58] sm:$0xff]
    %v41 = vld [vmem:[%s0 + $0x60] sm:$0xff]
    %v42 = vld [vmem:[%s0 + $0x68] sm:$0xff]
    %v43 = vld [vmem:[%s0 + $0x70] sm:$0xff]
    %v44 = vld [vmem:[%s0 + $0x78] sm:$0xff]
    %v45 = vld [vmem:[%s0 + $0x80] sm:$0xff]
    %v46 = vld [vmem:[%s0 + $0x88] sm:$0xff]
    %v47 = vld [vmem:[%s0 + $0x90] sm:$0xff]
    %v48 = vld [vmem:[%s0 + $0x98] sm:$0xff]
    %v49 = vld [vmem:[%s0 + $0xa0] sm:$0xff]
    %v50 = vld [vmem:[%s0 + $0xa8] sm:$0xff]
    %v51 = vld [vmem:[%s0 + $0xb0] sm:$0xff]
    %v52 = vld [vmem:[%s0 + $0xb8] sm:$0xff]
    %v53 = vld [vmem:[%s0 + $0xc0] sm:$0xff]
    %v54 = vld [vmem:[%s0 + $0xc8] sm:$0xff]
    %v55 = vld [vmem:[%s0 + $0xd0] sm:$0xff]
    %v56 = vld [vmem:[%s0 + $0xd8] sm:$0xff]
    %v57 = vld [vmem:[%s0 + $0xe0] sm:$0xff]
    %v58 = vld [vmem:[%s0 + $0xe8] sm:$0xff]
    %v59 = vld [vmem:[%s0 + $0xf0] sm:$0xff]
    %v60 = vld [vmem:[%s0 + $0xf8] sm:$0xff]
    %v61 = vld [vmem:[%s0 + $0x100] sm:$0xff]
    %v62 = vld [vmem:[%s0 + $0x108] sm:$0xff]
    %v63 = vld [vmem:[%s0 + $0x110] sm:$0xff]
    %v64 = vld [vmem:[%s0 + $0x118] sm:$0xff]
    %v65 = vld [vmem:[%s0 + $0x120] sm:$0xff]
    %v66 = vld [vmem:[%s0 + $0x128] sm:$0xff]
    %v67 = vld [vmem:[%s0 + $0x130] sm:$0xff]
    %v68 = vld [vmem:[%s0 + $0x138] sm:$0xff]
    %v69 = vld [vmem:[%s0 + $0x140] sm:$0xff]
    %v70 = vld [vmem:[%s0 + $0x148] sm:$0xff]
    %v71 = vld [vmem:[%s0 + $0x150] sm:$0xff]
    %v72 = vld [vmem:[%s0 + $0x158] sm:$0xff]
    %v73 = vld [vmem:[%s0 + $0x160] sm:$0xff]
    %v74 = vld [vmem:[%s0 + $0x168] sm:$0xff]
    %v75 = vld [vmem:[%s0 + $0x170] sm:$0xff]
    %v76 = vld [vmem:[%s0 + $0x178] sm:$0xff]
    %v77 = vld [vmem:[%s0 + $0x180] sm:$0xff]
    %v78 = vld [vmem:[%s0 + $0x188] sm:$0xff]
    %v79 = vld [vmem:[%s0 + $0x190] sm:$0xff]
    %v80 = vld [vmem:[%s0 + $0x198] sm:$0xff]
    %v81 = vld [vmem:[%s0 + $0x1a0] sm:$0xff]
    %v82 = vld [vmem:[%s0 + $0x1a8] sm:$0xff]
    %v83 = vld [vmem:[%s0 + $0x1b0] sm:$0xff]
    %v84 = vld [vmem:[%s0 + $0x1b8] sm:$0xff]
    %v85 = vld [vmem:[%s0 + $0x1c0] sm:$0xff]
    %v86 = vld [vmem:[%s0 + $0x1c8] sm:$0xff]
    %v87 = vld [vmem:[%s0 + $0x1d0] sm:$0xff]
    %v88 = vld [vmem:[%s0 + $0x1d8] sm:$0xff]
    %v89 = vld [vmem:[%s0 + $0x1e0] sm:$0xff]
    %v90 = vld [vmem:[%s0 + $0x1e8] sm:$0xff]
    %v91 = vld [vmem:[%s0 + $0x1f0] sm:$0xff]
    %v92 = vld [vmem:[%s0 + $0x1f8] sm:$0xff]
    %v93 = vld [vmem:[%s0 + $0x200] sm:$0xff]
    %v94 = vld [vmem:[%s0 + $0x208] sm:$0xff]
    %v95 = vld [vmem:[%s0 + $0x210] sm:$0xff]
    %v96 = vld [vmem:[%s0 + $0x218] sm:$0xff]
    %v97 = vld [vmem:[%s0 + $0x220] sm:$0xff]
    %v98 = vld [vmem:[%s0 + $0x228] sm:$0xff]
    %v99 = vld [vmem:[%s0 + $0x230] sm:$0xff]
    %v100 = vld [vmem:[%s0 + $0x238] sm:$0xff]
    %v101 = vld [vmem:[%s0 + $0x240] sm:$0xff]
    %v102 = vld [vmem:[%s0 + $0x248] sm:$0xff]
    %v103 = vld [vmem:[%s0 + $0x250] sm:$0xff]
    %v104 = vld [vmem:[%s0 + $0x258] sm:$0xff]
    %v105 = vld [vmem:[%s0 + $0x260] sm:$0xff]
    %v106 = vld [vmem:[%s0 + $0x268] sm:$0xff]
    %v107 = vld [vmem:[%s0 + $0x270] sm:$0xff]
    %v108 = vld [vmem:[%s0 + $0x278] sm:$0xff]
    %v109 = vld [vmem:[%s0 + $0x280] sm:$0xff]
    %v110 = vld [vmem:[%s0 + $0x288] sm:$0xff]
    %v111 = vld [vmem:[%s0 + $0x290] sm:$0xff]
    %v112 = vld [vmem:[%s0 + $0x298] sm:$0xff]
    %v113 = vld [vmem:[%s0 + $0x2a0] sm:$0xff]
    %v114 = vld [vmem:[%s0 + $0x2a8] sm:$0xff]
    %v115 = vld [vmem:[%s0 + $0x2b0] sm:$0xff]
    %v116 = vld [vmem:[%s0 + $0x2b8] sm:$0xff]
    %v117 = vld [vmem:[%s0 + $0x2c0] sm:$0xff]
    %v118 = vld [vmem:[%s0 + $0x2c8] sm:$0xff]
    %v119 = vld [vmem:[%s0 + $0x2d0] sm:$0xff]
    %v120 = vld [vmem:[%s0 + $0x2d8] sm:$0xff]
    %v121 = vld [vmem:[%s0 + $0x2e0] sm:$0xff]
    %v122 = vld [vmem:[%s0 + $0x2e8] sm:$0xff]
    %v123 = vld [vmem:[%s0 + $0x2f0] sm:$0xff]
    %v124 = vld [vmem:[%s0 + $0x2f8] sm:$0xff]
    %v125 = vld [vmem:[%s0 + $0x300] sm:$0xff]
    %v126 = vld [vmem:[%s0 + $0x308] sm:$0xff]
    %v127 = vld [vmem:[%s0 + $0x310] sm:$0xff]
    %v128 = vld [vmem:[%s0 + $0x318] sm:$0xff]
    %v129 = vld [vmem:[%s0 + $0x320] sm:$0xff]
    %v130 = vld [vmem:[%s0 + $0x328] sm:$0xff]
    %v131 = vld [vmem:[%s0 + $0x330] sm:$0xff]
    %v132 = vld [vmem:[%s0 + $0x338] sm:$0xff]
    %v133 = vld [vmem:[%s0 + $0x340] sm:$0xff]
    %v134 = vld [vmem:[%s0 + $0x348] sm:$0xff]
    %v135 = vld [vmem:[%s0 + $0x350] sm:$0xff]
    %v136 = vld [vmem:[%s0 + $0x358] sm:$0xff]
    %v137 = vld [vmem:[%s0 + $0x360] sm:$0xff]
    %v138 = vld [vmem:[%s0 + $0x368] sm:$0xff]
    %v139 = vld [vmem:[%s0 + $0x370] sm:$0xff]
    %v140 = vld [vmem:[%s0 + $0x378] sm:$0xff]
    %v141 = vld [vmem:[%s0 + $0x380] sm:$0xff]
    %v142 = vld [vmem:[%s0 + $0x388] sm:$0xff]
    %v143 = vld [vmem:[%s0 + $0x390] sm:$0xff]
    %v144 = vld [vmem:[%s0 + $0x398] sm:$0xff]
    %v145 = vld [vmem:[%s0 + $0x3a0] sm:$0xff]
    %v146 = vld [vmem:[%s0 + $0x3a8] sm:$0xff]
    %v147 = vld [vmem:[%s0 + $0x3b0] sm:$0xff]
    %v148 = vld [vmem:[%s0 + $0x3b8] sm:$0xff]
    %v149 = vld [vmem:[%s0 + $0x3c0] sm:$0xff]
    %v150 = vld [vmem:[%s0 + $0x3c8] sm:$0xff]
    %v151 = vld [vmem:[%s0 + $0x3d0] sm:$0xff]
    %v152 = vld [vmem:[%s0 + $0x3d8] sm:$0xff]
    %v153 = vld [vmem:[%s0 + $0x3e0] sm:$0xff]
    %v154 = vld [vmem:[%s0 + $0x3e8] sm:$0xff]
    %v155 = vld [vmem:[%s0 + $0x3f0] sm:$0xff]
    %v156 = vld [vmem:[%s0 + $0x3f8] sm:$0xff]
    %v157 = vmul.f32 %v29, 0.25
    %v158 = vmul.f32 %v30, 0.25
    %v159 = vmul.f32 %v31, 0.25
    %v160 = vmul.f32 %v32, 0.25
    %v161 = vmul.f32 %v33, 0.25
    %v162 = vmul.f32 %v34, 0.25
    %v163 = vmul.f32 %v35, 0.25
    %v164 = vmul.f32 %v36, 0.25
    %v165 = vmul.f32 %v37, 0.25
    %v166 = vmul.f32 %v38, 0.25
    %v167 = vmul.f32 %v39, 0.25
    %v168 = vmul.f32 %v40, 0.25
    %v169 = vmul.f32 %v41, 0.25
    %v170 = vmul.f32 %v42, 0.25
    %v171 = vmul.f32 %v43, 0.25
    %v172 = vmul.f32 %v44, 0.25
    %v173 = vmul.f32 %v45, 0.25
    %v174 = vmul.f32 %v46, 0.25
    %v175 = vmul.f32 %v47, 0.25
    %v176 = vmul.f32 %v48, 0.25
    %v177 = vmul.f32 %v49, 0.25
    %v178 = vmul.f32 %v50, 0.25
    %v179 = vmul.f32 %v51, 0.25
    %v180 = vmul.f32 %v52, 0.25
    %v181 = vmul.f32 %v53, 0.25
    %v182 = vmul.f32 %v54, 0.25
    %v183 = vmul.f32 %v55, 0.25
    %v184 = vmul.f32 %v56, 0.25
    %v185 = vmul.f32 %v57, 0.25
    %v186 = vmul.f32 %v58, 0.25
    %v187 = vmul.f32 %v59, 0.25
    %v188 = vmul.f32 %v60, 0.25
    %v189 = vadd.f32 %v157, %v173
    %v190 = vadd.f32 %v158, %v174
    %v191 = vadd.f32 %v159, %v175
    %v192 = vadd.f32 %v160, %v176
    %v193 = vadd.f32 %v161, %v177
    %v194 = vadd.f32 %v162, %v178
    %v195 = vadd.f32 %v163, %v179
    %v196 = vadd.f32 %v164, %v180
    %v197 = vadd.f32 %v165, %v181
    %v198 = vadd.f32 %v166, %v182
    %v199 = vadd.f32 %v167, %v183
    %v200 = vadd.f32 %v168, %v184
    %v201 = vadd.f32 %v169, %v185
    %v202 = vadd.f32 %v170, %v186
    %v203 = vadd.f32 %v171, %v187
    %v204 = vadd.f32 %v172, %v188
    %v205 = vmul.f32 %v61, 0.25
    %v206 = vmul.f32 %v62, 0.25
    %v207 = vmul.f32 %v63, 0.25
    %v208 = vmul.f32 %v64, 0.25
    %v209 = vmul.f32 %v65, 0.25
    %v210 = vmul.f32 %v66, 0.25
    %v211 = vmul.f32 %v67, 0.25
    %v212 = vmul.f32 %v68, 0.25
    %v213 = vmul.f32 %v69, 0.25
    %v214 = vmul.f32 %v70, 0.25
    %v215 = vmul.f32 %v71, 0.25
    %v216 = vmul.f32 %v72, 0.25
    %v217 = vmul.f32 %v73, 0.25
    %v218 = vmul.f32 %v74, 0.25
    %v219 = vmul.f32 %v75, 0.25
    %v220 = vmul.f32 %v76, 0.25
    %v221 = vadd.f32 %v189, %v205
    %v222 = vadd.f32 %v190, %v206
    %v223 = vadd.f32 %v191, %v207
    %v224 = vadd.f32 %v192, %v208
    %v225 = vadd.f32 %v193, %v209
    %v226 = vadd.f32 %v194, %v210
    %v227 = vadd.f32 %v195, %v211
    %v228 = vadd.f32 %v196, %v212
    %v229 = vadd.f32 %v197, %v213
    %v230 = vadd.f32 %v198, %v214
    %v231 = vadd.f32 %v199, %v215
    %v232 = vadd.f32 %v200, %v216
    %v233 = vadd.f32 %v201, %v217
    %v234 = vadd.f32 %v202, %v218
    %v235 = vadd.f32 %v203, %v219
    %v236 = vadd.f32 %v204, %v220
    %v237 = vmul.f32 %v77, 0.2236068
    %v238 = vmul.f32 %v78, 0.2236068
    %v239 = vmul.f32 %v79, 0.2236068
    %v240 = vmul.f32 %v80, 0.2236068
    %v241 = vmul.f32 %v81, 0.2236068
    %v242 = vmul.f32 %v82, 0.2236068
    %v243 = vmul.f32 %v83, 0.2236068
    %v244 = vmul.f32 %v84, 0.2236068
    %v245 = vmul.f32 %v85, 0.2236068
    %v246 = vmul.f32 %v86, 0.2236068
    %v247 = vmul.f32 %v87, 0.2236068
    %v248 = vmul.f32 %v88, 0.2236068
    %v249 = vmul.f32 %v89, 0.2236068
    %v250 = vmul.f32 %v90, 0.2236068
    %v251 = vmul.f32 %v91, 0.2236068
    %v252 = vmul.f32 %v92, 0.2236068
    %v253 = vadd.f32 %v221, %v237
    %v254 = vadd.f32 %v222, %v238
    %v255 = vadd.f32 %v223, %v239
    %v256 = vadd.f32 %v224, %v240
    %v257 = vadd.f32 %v225, %v241
    %v258 = vadd.f32 %v226, %v242
    %v259 = vadd.f32 %v227, %v243
    %v260 = vadd.f32 %v228, %v244
    %v261 = vadd.f32 %v229, %v245
    %v262 = vadd.f32 %v230, %v246
    %v263 = vadd.f32 %v231, %v247
    %v264 = vadd.f32 %v232, %v248
    %v265 = vadd.f32 %v233, %v249
    %v266 = vadd.f32 %v234, %v250
    %v267 = vadd.f32 %v235, %v251
    %v268 = vadd.f32 %v236, %v252
    %v269 = vadd.f32 %v189, %v237
    %v270 = vadd.f32 %v190, %v238
    %v271 = vadd.f32 %v191, %v239
    %v272 = vadd.f32 %v192, %v240
    %v273 = vadd.f32 %v193, %v241
    %v274 = vadd.f32 %v194, %v242
    %v275 = vadd.f32 %v195, %v243
    %v276 = vadd.f32 %v196, %v244
    %v277 = vadd.f32 %v197, %v245
    %v278 = vadd.f32 %v198, %v246
    %v279 = vadd.f32 %v199, %v247
    %v280 = vadd.f32 %v200, %v248
    %v281 = vadd.f32 %v201, %v249
    %v282 = vadd.f32 %v202, %v250
    %v283 = vadd.f32 %v203, %v251
    %v284 = vadd.f32 %v204, %v252
    %v285 = vmul.f32 %v125, 0.25
    %v286 = vmul.f32 %v126, 0.25
    %v287 = vmul.f32 %v127, 0.25
    %v288 = vmul.f32 %v128, 0.25
    %v289 = vmul.f32 %v129, 0.25
    %v290 = vmul.f32 %v130, 0.25
    %v291 = vmul.f32 %v131, 0.25
    %v292 = vmul.f32 %v132, 0.25
    %v293 = vmul.f32 %v133, 0.25
    %v294 = vmul.f32 %v134, 0.25
    %v295 = vmul.f32 %v135, 0.25
    %v296 = vmul.f32 %v136, 0.25
    %v297 = vmul.f32 %v137, 0.25
    %v298 = vmul.f32 %v138, 0.25
    %v299 = vmul.f32 %v139, 0.25
    %v300 = vmul.f32 %v140, 0.25
    %v301 = vadd.f32 %v269, %v285
    %v302 = vadd.f32 %v270, %v286
    %v303 = vadd.f32 %v271, %v287
    %v304 = vadd.f32 %v272, %v288
    %v305 = vadd.f32 %v273, %v289
    %v306 = vadd.f32 %v274, %v290
    %v307 = vadd.f32 %v275, %v291
    %v308 = vadd.f32 %v276, %v292
    %v309 = vadd.f32 %v277, %v293
    %v310 = vadd.f32 %v278, %v294
    %v311 = vadd.f32 %v279, %v295
    %v312 = vadd.f32 %v280, %v296
    %v313 = vadd.f32 %v281, %v297
    %v314 = vadd.f32 %v282, %v298
    %v315 = vadd.f32 %v283, %v299
    %v316 = vadd.f32 %v284, %v300
    %v317 = vadd.f32 %v157, %v205
    %v318 = vadd.f32 %v158, %v206
    %v319 = vadd.f32 %v159, %v207
    %v320 = vadd.f32 %v160, %v208
    %v321 = vadd.f32 %v161, %v209
    %v322 = vadd.f32 %v162, %v210
    %v323 = vadd.f32 %v163, %v211
    %v324 = vadd.f32 %v164, %v212
    %v325 = vadd.f32 %v165, %v213
    %v326 = vadd.f32 %v166, %v214
    %v327 = vadd.f32 %v167, %v215
    %v328 = vadd.f32 %v168, %v216
    %v329 = vadd.f32 %v169, %v217
    %v330 = vadd.f32 %v170, %v218
    %v331 = vadd.f32 %v171, %v219
    %v332 = vadd.f32 %v172, %v220
    %v333 = vadd.f32 %v317, %v237
    %v334 = vadd.f32 %v318, %v238
    %v335 = vadd.f32 %v319, %v239
    %v336 = vadd.f32 %v320, %v240
    %v337 = vadd.f32 %v321, %v241
    %v338 = vadd.f32 %v322, %v242
    %v339 = vadd.f32 %v323, %v243
    %v340 = vadd.f32 %v324, %v244
    %v341 = vadd.f32 %v325, %v245
    %v342 = vadd.f32 %v326, %v246
    %v343 = vadd.f32 %v327, %v247
    %v344 = vadd.f32 %v328, %v248
    %v345 = vadd.f32 %v329, %v249
    %v346 = vadd.f32 %v330, %v250
    %v347 = vadd.f32 %v331, %v251
    %v348 = vadd.f32 %v332, %v252
    %v349 = vmul.f32 %v109, 0.25
    %v350 = vmul.f32 %v110, 0.25
    %v351 = vmul.f32 %v111, 0.25
    %v352 = vmul.f32 %v112, 0.25
    %v353 = vmul.f32 %v113, 0.25
    %v354 = vmul.f32 %v114, 0.25
    %v355 = vmul.f32 %v115, 0.25
    %v356 = vmul.f32 %v116, 0.25
    %v357 = vmul.f32 %v117, 0.25
    %v358 = vmul.f32 %v118, 0.25
    %v359 = vmul.f32 %v119, 0.25
    %v360 = vmul.f32 %v120, 0.25
    %v361 = vmul.f32 %v121, 0.25
    %v362 = vmul.f32 %v122, 0.25
    %v363 = vmul.f32 %v123, 0.25
    %v364 = vmul.f32 %v124, 0.25
    %v365 = vadd.f32 %v333, %v349
    %v366 = vadd.f32 %v334, %v350
    %v367 = vadd.f32 %v335, %v351
    %v368 = vadd.f32 %v336, %v352
    %v369 = vadd.f32 %v337, %v353
    %v370 = vadd.f32 %v338, %v354
    %v371 = vadd.f32 %v339, %v355
    %v372 = vadd.f32 %v340, %v356
    %v373 = vadd.f32 %v341, %v357
    %v374 = vadd.f32 %v342, %v358
    %v375 = vadd.f32 %v343, %v359
    %v376 = vadd.f32 %v344, %v360
    %v377 = vadd.f32 %v345, %v361
    %v378 = vadd.f32 %v346, %v362
    %v379 = vadd.f32 %v347, %v363
    %v380 = vadd.f32 %v348, %v364
    %v381 = vmul.f32 %v29, 0.2236068
    %v382 = vmul.f32 %v30, 0.2236068
    %v383 = vmul.f32 %v31, 0.2236068
    %v384 = vmul.f32 %v32, 0.2236068
    %v385 = vmul.f32 %v33, 0.2236068
    %v386 = vmul.f32 %v34, 0.2236068
    %v387 = vmul.f32 %v35, 0.2236068
    %v388 = vmul.f32 %v36, 0.2236068
    %v389 = vmul.f32 %v37, 0.2236068
    %v390 = vmul.f32 %v38, 0.2236068
    %v391 = vmul.f32 %v39, 0.2236068
    %v392 = vmul.f32 %v40, 0.2236068
    %v393 = vmul.f32 %v41, 0.2236068
    %v394 = vmul.f32 %v42, 0.2236068
    %v395 = vmul.f32 %v43, 0.2236068
    %v396 = vmul.f32 %v44, 0.2236068
    %v397 = vmul.f32 %v45, 0.2236068
    %v398 = vmul.f32 %v46, 0.2236068
    %v399 = vmul.f32 %v47, 0.2236068
    %v400 = vmul.f32 %v48, 0.2236068
    %v401 = vmul.f32 %v49, 0.2236068
    %v402 = vmul.f32 %v50, 0.2236068
    %v403 = vmul.f32 %v51, 0.2236068
    %v404 = vmul.f32 %v52, 0.2236068
    %v405 = vmul.f32 %v53, 0.2236068
    %v406 = vmul.f32 %v54, 0.2236068
    %v407 = vmul.f32 %v55, 0.2236068
    %v408 = vmul.f32 %v56, 0.2236068
    %v409 = vmul.f32 %v57, 0.2236068
    %v410 = vmul.f32 %v58, 0.2236068
    %v411 = vmul.f32 %v59, 0.2236068
    %v412 = vmul.f32 %v60, 0.2236068
    %v413 = vadd.f32 %v381, %v397
    %v414 = vadd.f32 %v382, %v398
    %v415 = vadd.f32 %v383, %v399
    %v416 = vadd.f32 %v384, %v400
    %v417 = vadd.f32 %v385, %v401
    %v418 = vadd.f32 %v386, %v402
    %v419 = vadd.f32 %v387, %v403
    %v420 = vadd.f32 %v388, %v404
    %v421 = vadd.f32 %v389, %v405
    %v422 = vadd.f32 %v390, %v406
    %v423 = vadd.f32 %v391, %v407
    %v424 = vadd.f32 %v392, %v408
    %v425 = vadd.f32 %v393, %v409
    %v426 = vadd.f32 %v394, %v410
    %v427 = vadd.f32 %v395, %v411
    %v428 = vadd.f32 %v396, %v412
    %v429 = vmul.f32 %v61, 0.2236068
    %v430 = vmul.f32 %v62, 0.2236068
    %v431 = vmul.f32 %v63, 0.2236068
    %v432 = vmul.f32 %v64, 0.2236068
    %v433 = vmul.f32 %v65, 0.2236068
    %v434 = vmul.f32 %v66, 0.2236068
    %v435 = vmul.f32 %v67, 0.2236068
    %v436 = vmul.f32 %v68, 0.2236068
    %v437 = vmul.f32 %v69, 0.2236068
    %v438 = vmul.f32 %v70, 0.2236068
    %v439 = vmul.f32 %v71, 0.2236068
    %v440 = vmul.f32 %v72, 0.2236068
    %v441 = vmul.f32 %v73, 0.2236068
    %v442 = vmul.f32 %v74, 0.2236068
    %v443 = vmul.f32 %v75, 0.2236068
    %v444 = vmul.f32 %v76, 0.2236068
    %v445 = vadd.f32 %v413, %v429
    %v446 = vadd.f32 %v414, %v430
    %v447 = vadd.f32 %v415, %v431
    %v448 = vadd.f32 %v416, %v432
    %v449 = vadd.f32 %v417, %v433
    %v450 = vadd.f32 %v418, %v434
    %v451 = vadd.f32 %v419, %v435
    %v452 = vadd.f32 %v420, %v436
    %v453 = vadd.f32 %v421, %v437
    %v454 = vadd.f32 %v422, %v438
    %v455 = vadd.f32 %v423, %v439
    %v456 = vadd.f32 %v424, %v440
    %v457 = vadd.f32 %v425, %v441
    %v458 = vadd.f32 %v426, %v442
    %v459 = vadd.f32 %v427, %v443
    %v460 = vadd.f32 %v428, %v444
    %v461 = vmul.f32 %v77, 0.19999999
    %v462 = vmul.f32 %v78, 0.19999999
    %v463 = vmul.f32 %v79, 0.19999999
    %v464 = vmul.f32 %v80, 0.19999999
    %v465 = vmul.f32 %v81, 0.19999999
    %v466 = vmul.f32 %v82, 0.19999999
    %v467 = vmul.f32 %v83, 0.19999999
    %v468 = vmul.f32 %v84, 0.19999999
    %v469 = vmul.f32 %v85, 0.19999999
    %v470 = vmul.f32 %v86, 0.19999999
    %v471 = vmul.f32 %v87, 0.19999999
    %v472 = vmul.f32 %v88, 0.19999999
    %v473 = vmul.f32 %v89, 0.19999999
    %v474 = vmul.f32 %v90, 0.19999999
    %v475 = vmul.f32 %v91, 0.19999999
    %v476 = vmul.f32 %v92, 0.19999999
    %v477 = vadd.f32 %v445, %v461
    %v478 = vadd.f32 %v446, %v462
    %v479 = vadd.f32 %v447, %v463
    %v480 = vadd.f32 %v448, %v464
    %v481 = vadd.f32 %v449, %v465
    %v482 = vadd.f32 %v450, %v466
    %v483 = vadd.f32 %v451, %v467
    %v484 = vadd.f32 %v452, %v468
    %v485 = vadd.f32 %v453, %v469
    %v486 = vadd.f32 %v454, %v470
    %v487 = vadd.f32 %v455, %v471
    %v488 = vadd.f32 %v456, %v472
    %v489 = vadd.f32 %v457, %v473
    %v490 = vadd.f32 %v458, %v474
    %v491 = vadd.f32 %v459, %v475
    %v492 = vadd.f32 %v460, %v476
    %v493 = vmul.f32 %v141, 0.19999999
    %v494 = vmul.f32 %v142, 0.19999999
    %v495 = vmul.f32 %v143, 0.19999999
    %v496 = vmul.f32 %v144, 0.19999999
    %v497 = vmul.f32 %v145, 0.19999999
    %v498 = vmul.f32 %v146, 0.19999999
    %v499 = vmul.f32 %v147, 0.19999999
    %v500 = vmul.f32 %v148, 0.19999999
    %v501 = vmul.f32 %v149, 0.19999999
    %v502 = vmul.f32 %v150, 0.19999999
    %v503 = vmul.f32 %v151, 0.19999999
    %v504 = vmul.f32 %v152, 0.19999999
    %v505 = vmul.f32 %v153, 0.19999999
    %v506 = vmul.f32 %v154, 0.19999999
    %v507 = vmul.f32 %v155, 0.19999999
    %v508 = vmul.f32 %v156, 0.19999999
    %v509 = vadd.f32 %v477, %v493
    %v510 = vadd.f32 %v478, %v494
    %v511 = vadd.f32 %v479, %v495
    %v512 = vadd.f32 %v480, %v496
    %v513 = vadd.f32 %v481, %v497
    %v514 = vadd.f32 %v482, %v498
    %v515 = vadd.f32 %v483, %v499
    %v516 = vadd.f32 %v484, %v500
    %v517 = vadd.f32 %v485, %v501
    %v518 = vadd.f32 %v486, %v502
    %v519 = vadd.f32 %v487, %v503
    %v520 = vadd.f32 %v488, %v504
    %v521 = vadd.f32 %v489, %v505
    %v522 = vadd.f32 %v490, %v506
    %v523 = vadd.f32 %v491, %v507
    %v524 = vadd.f32 %v492, %v508
    %v525 = vmul.f32 %v93, 0.25
    %v526 = vmul.f32 %v94, 0.25
    %v527 = vmul.f32 %v95, 0.25
    %v528 = vmul.f32 %v96, 0.25
    %v529 = vmul.f32 %v97, 0.25
    %v530 = vmul.f32 %v98, 0.25
    %v531 = vmul.f32 %v99, 0.25
    %v532 = vmul.f32 %v100, 0.25
    %v533 = vmul.f32 %v101, 0.25
    %v534 = vmul.f32 %v102, 0.25
    %v535 = vmul.f32 %v103, 0.25
    %v536 = vmul.f32 %v104, 0.25
    %v537 = vmul.f32 %v105, 0.25
    %v538 = vmul.f32 %v106, 0.25
    %v539 = vmul.f32 %v107, 0.25
    %v540 = vmul.f32 %v108, 0.25
    %v541 = vadd.f32 %v525, %v349
    %v542 = vadd.f32 %v526, %v350
    %v543 = vadd.f32 %v527, %v351
    %v544 = vadd.f32 %v528, %v352
    %v545 = vadd.f32 %v529, %v353
    %v546 = vadd.f32 %v530, %v354
    %v547 = vadd.f32 %v531, %v355
    %v548 = vadd.f32 %v532, %v356
    %v549 = vadd.f32 %v533, %v357
    %v550 = vadd.f32 %v534, %v358
    %v551 = vadd.f32 %v535, %v359
    %v552 = vadd.f32 %v536, %v360
    %v553 = vadd.f32 %v537, %v361
    %v554 = vadd.f32 %v538, %v362
    %v555 = vadd.f32 %v539, %v363
    %v556 = vadd.f32 %v540, %v364
    %v557 = vadd.f32 %v541, %v285
    %v558 = vadd.f32 %v542, %v286
    %v559 = vadd.f32 %v543, %v287
    %v560 = vadd.f32 %v544, %v288
    %v561 = vadd.f32 %v545, %v289
    %v562 = vadd.f32 %v546, %v290
    %v563 = vadd.f32 %v547, %v291
    %v564 = vadd.f32 %v548, %v292
    %v565 = vadd.f32 %v549, %v293
    %v566 = vadd.f32 %v550, %v294
    %v567 = vadd.f32 %v551, %v295
    %v568 = vadd.f32 %v552, %v296
    %v569 = vadd.f32 %v553, %v297
    %v570 = vadd.f32 %v554, %v298
    %v571 = vadd.f32 %v555, %v299
    %v572 = vadd.f32 %v556, %v300
    %v573 = vmul.f32 %v141, 0.2236068
    %v574 = vmul.f32 %v142, 0.2236068
    %v575 = vmul.f32 %v143, 0.2236068
    %v576 = vmul.f32 %v144, 0.2236068
    %v577 = vmul.f32 %v145, 0.2236068
    %v578 = vmul.f32 %v146, 0.2236068
    %v579 = vmul.f32 %v147, 0.2236068
    %v580 = vmul.f32 %v148, 0.2236068
    %v581 = vmul.f32 %v149, 0.2236068
    %v582 = vmul.f32 %v150, 0.2236068
    %v583 = vmul.f32 %v151, 0.2236068
    %v584 = vmul.f32 %v152, 0.2236068
    %v585 = vmul.f32 %v153, 0.2236068
    %v586 = vmul.f32 %v154, 0.2236068
    %v587 = vmul.f32 %v155, 0.2236068
    %v588 = vmul.f32 %v156, 0.2236068
    %v589 = vadd.f32 %v557, %v573
    %v590 = vadd.f32 %v558, %v574
    %v591 = vadd.f32 %v559, %v575
    %v592 = vadd.f32 %v560, %v576
    %v593 = vadd.f32 %v561, %v577
    %v594 = vadd.f32 %v562, %v578
    %v595 = vadd.f32 %v563, %v579
    %v596 = vadd.f32 %v564, %v580
    %v597 = vadd.f32 %v565, %v581
    %v598 = vadd.f32 %v566, %v582
    %v599 = vadd.f32 %v567, %v583
    %v600 = vadd.f32 %v568, %v584
    %v601 = vadd.f32 %v569, %v585
    %v602 = vadd.f32 %v570, %v586
    %v603 = vadd.f32 %v571, %v587
    %v604 = vadd.f32 %v572, %v588
    %v605 = vadd.f32 %v205, %v525
    %v606 = vadd.f32 %v206, %v526
    %v607 = vadd.f32 %v207, %v527
    %v608 = vadd.f32 %v208, %v528
    %v609 = vadd.f32 %v209, %v529
    %v610 = vadd.f32 %v210, %v530
    %v611 = vadd.f32 %v211, %v531
    %v612 = vadd.f32 %v212, %v532
    %v613 = vadd.f32 %v213, %v533
    %v614 = vadd.f32 %v214, %v534
    %v615 = vadd.f32 %v215, %v535
    %v616 = vadd.f32 %v216, %v536
    %v617 = vadd.f32 %v217, %v537
    %v618 = vadd.f32 %v218, %v538
    %v619 = vadd.f32 %v219, %v539
    %v620 = vadd.f32 %v220, %v540
    %v621 = vadd.f32 %v605, %v349
    %v622 = vadd.f32 %v606, %v350
    %v623 = vadd.f32 %v607, %v351
    %v624 = vadd.f32 %v608, %v352
    %v625 = vadd.f32 %v609, %v353
    %v626 = vadd.f32 %v610, %v354
    %v627 = vadd.f32 %v611, %v355
    %v628 = vadd.f32 %v612, %v356
    %v629 = vadd.f32 %v613, %v357
    %v630 = vadd.f32 %v614, %v358
    %v631 = vadd.f32 %v615, %v359
    %v632 = vadd.f32 %v616, %v360
    %v633 = vadd.f32 %v617, %v361
    %v634 = vadd.f32 %v618, %v362
    %v635 = vadd.f32 %v619, %v363
    %v636 = vadd.f32 %v620, %v364
    %v637 = vadd.f32 %v621, %v573
    %v638 = vadd.f32 %v622, %v574
    %v639 = vadd.f32 %v623, %v575
    %v640 = vadd.f32 %v624, %v576
    %v641 = vadd.f32 %v625, %v577
    %v642 = vadd.f32 %v626, %v578
    %v643 = vadd.f32 %v627, %v579
    %v644 = vadd.f32 %v628, %v580
    %v645 = vadd.f32 %v629, %v581
    %v646 = vadd.f32 %v630, %v582
    %v647 = vadd.f32 %v631, %v583
    %v648 = vadd.f32 %v632, %v584
    %v649 = vadd.f32 %v633, %v585
    %v650 = vadd.f32 %v634, %v586
    %v651 = vadd.f32 %v635, %v587
    %v652 = vadd.f32 %v636, %v588
    %v653 = vadd.f32 %v173, %v525
    %v654 = vadd.f32 %v174, %v526
    %v655 = vadd.f32 %v175, %v527
    %v656 = vadd.f32 %v176, %v528
    %v657 = vadd.f32 %v177, %v529
    %v658 = vadd.f32 %v178, %v530
    %v659 = vadd.f32 %v179, %v531
    %v660 = vadd.f32 %v180, %v532
    %v661 = vadd.f32 %v181, %v533
    %v662 = vadd.f32 %v182, %v534
    %v663 = vadd.f32 %v183, %v535
    %v664 = vadd.f32 %v184, %v536
    %v665 = vadd.f32 %v185, %v537
    %v666 = vadd.f32 %v186, %v538
    %v667 = vadd.f32 %v187, %v539
    %v668 = vadd.f32 %v188, %v540
    %v669 = vadd.f32 %v653, %v285
    %v670 = vadd.f32 %v654, %v286
    %v671 = vadd.f32 %v655, %v287
    %v672 = vadd.f32 %v656, %v288
    %v673 = vadd.f32 %v657, %v289
    %v674 = vadd.f32 %v658, %v290
    %v675 = vadd.f32 %v659, %v291
    %v676 = vadd.f32 %v660, %v292
    %v677 = vadd.f32 %v661, %v293
    %v678 = vadd.f32 %v662, %v294
    %v679 = vadd.f32 %v663, %v295
    %v680 = vadd.f32 %v664, %v296
    %v681 = vadd.f32 %v665, %v297
    %v682 = vadd.f32 %v666, %v298
    %v683 = vadd.f32 %v667, %v299
    %v684 = vadd.f32 %v668, %v300
    %v685 = vadd.f32 %v669, %v573
    %v686 = vadd.f32 %v670, %v574
    %v687 = vadd.f32 %v671, %v575
    %v688 = vadd.f32 %v672, %v576
    %v689 = vadd.f32 %v673, %v577
    %v690 = vadd.f32 %v674, %v578
    %v691 = vadd.f32 %v675, %v579
    %v692 = vadd.f32 %v676, %v580
    %v693 = vadd.f32 %v677, %v581
    %v694 = vadd.f32 %v678, %v582
    %v695 = vadd.f32 %v679, %v583
    %v696 = vadd.f32 %v680, %v584
    %v697 = vadd.f32 %v681, %v585
    %v698 = vadd.f32 %v682, %v586
    %v699 = vadd.f32 %v683, %v587
    %v700 = vadd.f32 %v684, %v588
    %v701 = vmul.f32 %v93, 0.2236068
    %v702 = vmul.f32 %v94, 0.2236068
    %v703 = vmul.f32 %v95, 0.2236068
    %v704 = vmul.f32 %v96, 0.2236068
    %v705 = vmul.f32 %v97, 0.2236068
    %v706 = vmul.f32 %v98, 0.2236068
    %v707 = vmul.f32 %v99, 0.2236068
    %v708 = vmul.f32 %v100, 0.2236068
    %v709 = vmul.f32 %v101, 0.2236068
    %v710 = vmul.f32 %v102, 0.2236068
    %v711 = vmul.f32 %v103, 0.2236068
    %v712 = vmul.f32 %v104, 0.2236068
    %v713 = vmul.f32 %v105, 0.2236068
    %v714 = vmul.f32 %v106, 0.2236068
    %v715 = vmul.f32 %v107, 0.2236068
    %v716 = vmul.f32 %v108, 0.2236068
    %v717 = vadd.f32 %v461, %v701
    %v718 = vadd.f32 %v462, %v702
    %v719 = vadd.f32 %v463, %v703
    %v720 = vadd.f32 %v464, %v704
    %v721 = vadd.f32 %v465, %v705
    %v722 = vadd.f32 %v466, %v706
    %v723 = vadd.f32 %v467, %v707
    %v724 = vadd.f32 %v468, %v708
    %v725 = vadd.f32 %v469, %v709
    %v726 = vadd.f32 %v470, %v710
    %v727 = vadd.f32 %v471, %v711
    %v728 = vadd.f32 %v472, %v712
    %v729 = vadd.f32 %v473, %v713
    %v730 = vadd.f32 %v474, %v714
    %v731 = vadd.f32 %v475, %v715
    %v732 = vadd.f32 %v476, %v716
    %v733 = vmul.f32 %v109, 0.2236068
    %v734 = vmul.f32 %v110, 0.2236068
    %v735 = vmul.f32 %v111, 0.2236068
    %v736 = vmul.f32 %v112, 0.2236068
    %v737 = vmul.f32 %v113, 0.2236068
    %v738 = vmul.f32 %v114, 0.2236068
    %v739 = vmul.f32 %v115, 0.2236068
    %v740 = vmul.f32 %v116, 0.2236068
    %v741 = vmul.f32 %v117, 0.2236068
    %v742 = vmul.f32 %v118, 0.2236068
    %v743 = vmul.f32 %v119, 0.2236068
    %v744 = vmul.f32 %v120, 0.2236068
    %v745 = vmul.f32 %v121, 0.2236068
    %v746 = vmul.f32 %v122, 0.2236068
    %v747 = vmul.f32 %v123, 0.2236068
    %v748 = vmul.f32 %v124, 0.2236068
    %v749 = vadd.f32 %v717, %v733
    %v750 = vadd.f32 %v718, %v734
    %v751 = vadd.f32 %v719, %v735
    %v752 = vadd.f32 %v720, %v736
    %v753 = vadd.f32 %v721, %v737
    %v754 = vadd.f32 %v722, %v738
    %v755 = vadd.f32 %v723, %v739
    %v756 = vadd.f32 %v724, %v740
    %v757 = vadd.f32 %v725, %v741
    %v758 = vadd.f32 %v726, %v742
    %v759 = vadd.f32 %v727, %v743
    %v760 = vadd.f32 %v728, %v744
    %v761 = vadd.f32 %v729, %v745
    %v762 = vadd.f32 %v730, %v746
    %v763 = vadd.f32 %v731, %v747
    %v764 = vadd.f32 %v732, %v748
    %v765 = vmul.f32 %v125, 0.2236068
    %v766 = vmul.f32 %v126, 0.2236068
    %v767 = vmul.f32 %v127, 0.2236068
    %v768 = vmul.f32 %v128, 0.2236068
    %v769 = vmul.f32 %v129, 0.2236068
    %v770 = vmul.f32 %v130, 0.2236068
    %v771 = vmul.f32 %v131, 0.2236068
    %v772 = vmul.f32 %v132, 0.2236068
    %v773 = vmul.f32 %v133, 0.2236068
    %v774 = vmul.f32 %v134, 0.2236068
    %v775 = vmul.f32 %v135, 0.2236068
    %v776 = vmul.f32 %v136, 0.2236068
    %v777 = vmul.f32 %v137, 0.2236068
    %v778 = vmul.f32 %v138, 0.2236068
    %v779 = vmul.f32 %v139, 0.2236068
    %v780 = vmul.f32 %v140, 0.2236068
    %v781 = vadd.f32 %v749, %v765
    %v782 = vadd.f32 %v750, %v766
    %v783 = vadd.f32 %v751, %v767
    %v784 = vadd.f32 %v752, %v768
    %v785 = vadd.f32 %v753, %v769
    %v786 = vadd.f32 %v754, %v770
    %v787 = vadd.f32 %v755, %v771
    %v788 = vadd.f32 %v756, %v772
    %v789 = vadd.f32 %v757, %v773
    %v790 = vadd.f32 %v758, %v774
    %v791 = vadd.f32 %v759, %v775
    %v792 = vadd.f32 %v760, %v776
    %v793 = vadd.f32 %v761, %v777
    %v794 = vadd.f32 %v762, %v778
    %v795 = vadd.f32 %v763, %v779
    %v796 = vadd.f32 %v764, %v780
    %v797 = vadd.f32 %v781, %v493
    %v798 = vadd.f32 %v782, %v494
    %v799 = vadd.f32 %v783, %v495
    %v800 = vadd.f32 %v784, %v496
    %v801 = vadd.f32 %v785, %v497
    %v802 = vadd.f32 %v786, %v498
    %v803 = vadd.f32 %v787, %v499
    %v804 = vadd.f32 %v788, %v500
    %v805 = vadd.f32 %v789, %v501
    %v806 = vadd.f32 %v790, %v502
    %v807 = vadd.f32 %v791, %v503
    %v808 = vadd.f32 %v792, %v504
    %v809 = vadd.f32 %v793, %v505
    %v810 = vadd.f32 %v794, %v506
    %v811 = vadd.f32 %v795, %v507
    %v812 = vadd.f32 %v796, %v508
    %v813 = vpack.c.bf16 %v254, %v253
    %v814 = vpack.c.bf16 %v256, %v255
    %v815 = vpack.c.bf16 %v258, %v257
    %v816 = vpack.c.bf16 %v260, %v259
    %v817 = vpack.c.bf16 %v262, %v261
    %v818 = vpack.c.bf16 %v264, %v263
    %v819 = vpack.c.bf16 %v266, %v265
    %v820 = vpack.c.bf16 %v268, %v267
    %v821 = vpack.c.bf16 %v302, %v301
    %v822 = vpack.c.bf16 %v304, %v303
    %v823 = vpack.c.bf16 %v306, %v305
    %v824 = vpack.c.bf16 %v308, %v307
    %v825 = vpack.c.bf16 %v310, %v309
    %v826 = vpack.c.bf16 %v312, %v311
    %v827 = vpack.c.bf16 %v314, %v313
    %v828 = vpack.c.bf16 %v316, %v315
    %v829 = vpack.c.bf16 %v366, %v365
    %v830 = vpack.c.bf16 %v368, %v367
    %v831 = vpack.c.bf16 %v370, %v369
    %v832 = vpack.c.bf16 %v372, %v371
    %v833 = vpack.c.bf16 %v374, %v373
    %v834 = vpack.c.bf16 %v376, %v375
    %v835 = vpack.c.bf16 %v378, %v377
    %v836 = vpack.c.bf16 %v380, %v379
    %v837 = vpack.c.bf16 %v510, %v509
    %v838 = vpack.c.bf16 %v512, %v511
    %v839 = vpack.c.bf16 %v514, %v513
    %v840 = vpack.c.bf16 %v516, %v515
    %v841 = vpack.c.bf16 %v518, %v517
    %v842 = vpack.c.bf16 %v520, %v519
    %v843 = vpack.c.bf16 %v522, %v521
    %v844 = vpack.c.bf16 %v524, %v523
    %v845 = vpack.c.bf16 %v590, %v589
    %v846 = vpack.c.bf16 %v592, %v591
    %v847 = vpack.c.bf16 %v594, %v593
    %v848 = vpack.c.bf16 %v596, %v595
    %v849 = vpack.c.bf16 %v598, %v597
    %v850 = vpack.c.bf16 %v600, %v599
    %v851 = vpack.c.bf16 %v602, %v601
    %v852 = vpack.c.bf16 %v604, %v603
    %v853 = vpack.c.bf16 %v638, %v637
    %v854 = vpack.c.bf16 %v640, %v639
    %v855 = vpack.c.bf16 %v642, %v641
    %v856 = vpack.c.bf16 %v644, %v643
    %v857 = vpack.c.bf16 %v646, %v645
    %v858 = vpack.c.bf16 %v648, %v647
    %v859 = vpack.c.bf16 %v650, %v649
    %v860 = vpack.c.bf16 %v652, %v651
    %v861 = vpack.c.bf16 %v686, %v685
    %v862 = vpack.c.bf16 %v688, %v687
    %v863 = vpack.c.bf16 %v690, %v689
    %v864 = vpack.c.bf16 %v692, %v691
    %v865 = vpack.c.bf16 %v694, %v693
    %v866 = vpack.c.bf16 %v696, %v695
    %v867 = vpack.c.bf16 %v698, %v697
    %v868 = vpack.c.bf16 %v700, %v699
    %v869 = vpack.c.bf16 %v798, %v797
    %v870 = vpack.c.bf16 %v800, %v799
    %v871 = vpack.c.bf16 %v802, %v801
    %v872 = vpack.c.bf16 %v804, %v803
    %v873 = vpack.c.bf16 %v806, %v805
    %v874 = vpack.c.bf16 %v808, %v807
    %v875 = vpack.c.bf16 %v810, %v809
    %v876 = vpack.c.bf16 %v812, %v811
    %v877 = vld [vmem:[%s1] sm:$0xf]
    %v878 = vld [vmem:[%s1 + $0x4] sm:$0xf]
    %v879 = vlaneseq
    %v880 = vshrl.u32 %v879, 7
    %v881 = vsub.s32 0, %v880
    %v882 = vrot.slane %v28, %v881
    %v885 = vunpack.c.l.b16 %v877
    %v886 = vunpack.c.l.b16 %v878
    %v887 = vpack.c.b16 %v886, %v885
    %vm889 = vcmask 130048
    %v891 = vsel %vm889, %v813, 0
    %v894 = vsel %vm889, %v814, 0
    %v897 = vsel %vm889, %v815, 0
    %v900 = vsel %vm889, %v816, 0
    %v903 = vsel %vm889, %v817, 0
    %v906 = vsel %vm889, %v818, 0
    %v909 = vsel %vm889, %v819, 0
    %v912 = vsel %vm889, %v820, 0
    %v915 = vsel %vm889, %v821, 0
    %v918 = vsel %vm889, %v822, 0
    %v921 = vsel %vm889, %v823, 0
    %v924 = vsel %vm889, %v824, 0
    %v927 = vsel %vm889, %v825, 0
    %v930 = vsel %vm889, %v826, 0
    %v933 = vsel %vm889, %v827, 0
    %v936 = vsel %vm889, %v828, 0
    %v939 = vsel %vm889, %v829, 0
    %v942 = vsel %vm889, %v830, 0
    %v945 = vsel %vm889, %v831, 0
    %v948 = vsel %vm889, %v832, 0
    %v951 = vsel %vm889, %v833, 0
    %v954 = vsel %vm889, %v834, 0
    %v957 = vsel %vm889, %v835, 0
    %v960 = vsel %vm889, %v836, 0
    %v963 = vsel %vm889, %v837, 0
    %v966 = vsel %vm889, %v838, 0
    %v969 = vsel %vm889, %v839, 0
    %v972 = vsel %vm889, %v840, 0
    %v975 = vsel %vm889, %v841, 0
    %v978 = vsel %vm889, %v842, 0
    %v981 = vsel %vm889, %v843, 0
    %v984 = vsel %vm889, %v844, 0
    %v987 = vsel %vm889, %v845, 0
    %v990 = vsel %vm889, %v846, 0
    %v993 = vsel %vm889, %v847, 0
    %v996 = vsel %vm889, %v848, 0
    %v999 = vsel %vm889, %v849, 0
    %v1002 = vsel %vm889, %v850, 0
    %v1005 = vsel %vm889, %v851, 0
    %v1008 = vsel %vm889, %v852, 0
    %v1011 = vsel %vm889, %v853, 0
    %v1014 = vsel %vm889, %v854, 0
    %v1017 = vsel %vm889, %v855, 0
    %v1020 = vsel %vm889, %v856, 0
    %v1023 = vsel %vm889, %v857, 0
    %v1026 = vsel %vm889, %v858, 0
    %v1029 = vsel %vm889, %v859, 0
    %v1032 = vsel %vm889, %v860, 0
    %v1035 = vsel %vm889, %v861, 0
    %v1038 = vsel %vm889, %v862, 0
    %v1041 = vsel %vm889, %v863, 0
    %v1044 = vsel %vm889, %v864, 0
    %v1047 = vsel %vm889, %v865, 0
    %v1050 = vsel %vm889, %v866, 0
    %v1053 = vsel %vm889, %v867, 0
    %v1056 = vsel %vm889, %v868, 0
    %v1059 = vsel %vm889, %v869, 0
    %v1062 = vsel %vm889, %v870, 0
    %v1065 = vsel %vm889, %v871, 0
    %v1068 = vsel %vm889, %v872, 0
    %v1071 = vsel %vm889, %v873, 0
    %v1074 = vsel %vm889, %v874, 0
    %v1077 = vsel %vm889, %v875, 0
    %v1080 = vsel %vm889, %v876, 0
    %1082 = vmatprep.subr.bf16.mxu0 0
    %1083 = vmatpush1.bf16.msra.mxu0 0
    %1084 = vmatprep.subr.bf16.mxu0 0
    %1085 = vmatpush1.bf16.msra.mxu0 0
    %1086 = vmatprep.subr.bf16.mxu0 0
    %1087 = vmatpush1.bf16.msra.mxu0 0
    %1088 = vmatprep.subr.bf16.mxu0 0
    %1089 = vmatpush1.bf16.msra.mxu0 0
    %1090 = vmatprep.subr.bf16.mxu0 0
    %1091 = vmatpush1.bf16.msra.mxu0 0
    %1092 = vmatprep.subr.bf16.mxu0 0
    %1093 = vmatpush1.bf16.msra.mxu0 0
    %1094 = vmatprep.subr.bf16.mxu0 0
    %1095 = vmatpush1.bf16.msra.mxu0 0
    %1096 = vmatprep.subr.bf16.mxu0 0
    %1097 = vmatpush1.bf16.msra.mxu0 %v887
    %1098 = vmatprep.subr.bf16.mxu0 0
    %1099 = vmatpush2.bf16.msra.mxu0 0
    %1100 = vmatprep.subr.bf16.mxu0 0
    %1101 = vmatpush2.bf16.msra.mxu0 0
    %1102 = vmatprep.subr.bf16.mxu0 0
    %1103 = vmatpush2.bf16.msra.mxu0 0
    %1104 = vmatprep.subr.bf16.mxu0 0
    %1105 = vmatpush2.bf16.msra.mxu0 0
    %1106 = vmatprep.subr.bf16.mxu0 0
    %1107 = vmatpush2.bf16.msra.mxu0 0
    %1108 = vmatprep.subr.bf16.mxu0 0
    %1109 = vmatpush2.bf16.msra.mxu0 0
    %1110 = vmatprep.subr.bf16.mxu0 0
    %1111 = vmatpush2.bf16.msra.mxu0 0
    %1112 = vmatprep.subr.bf16.mxu0 0
    %1113 = vmatpush2.bf16.msra.mxu0 0
    %1114 = vmatprep.mubr.bf16.mxu0 0
    %1115 = vmatmul.mubr.bf16.gmra.mxu0 %v891
    %v1116 = vpop.f32.mrf.mxu0
    %v1117 = vadd.f32 %v882, %v1116
    %v1118 = vpop.f32.mrf.mxu0
    %v1119 = vpop.f32.mrf.mxu0
    %v1120 = vadd.f32 %v882, %v1119
    %v1121 = vpop.f32.mrf.mxu0
    %1122 = vmatprep.mubr.bf16.mxu0 0
    %1123 = vmatmul.mubr.bf16.gmra.mxu0 %v894
    %v1124 = vpop.f32.mrf.mxu0
    %v1125 = vadd.f32 %v882, %v1124
    %v1126 = vpop.f32.mrf.mxu0
    %v1127 = vpop.f32.mrf.mxu0
    %v1128 = vadd.f32 %v882, %v1127
    %v1129 = vpop.f32.mrf.mxu0
    %1130 = vmatprep.mubr.bf16.mxu0 0
    %1131 = vmatmul.mubr.bf16.gmra.mxu0 %v897
    %v1132 = vpop.f32.mrf.mxu0
    %v1133 = vadd.f32 %v882, %v1132
    %v1134 = vpop.f32.mrf.mxu0
    %v1135 = vpop.f32.mrf.mxu0
    %v1136 = vadd.f32 %v882, %v1135
    %v1137 = vpop.f32.mrf.mxu0
    %1138 = vmatprep.mubr.bf16.mxu0 0
    %1139 = vmatmul.mubr.bf16.gmra.mxu0 %v900
    %v1140 = vpop.f32.mrf.mxu0
    %v1141 = vadd.f32 %v882, %v1140
    %v1142 = vpop.f32.mrf.mxu0
    %v1143 = vpop.f32.mrf.mxu0
    %v1144 = vadd.f32 %v882, %v1143
    %v1145 = vpop.f32.mrf.mxu0
    %1146 = vmatprep.mubr.bf16.mxu0 0
    %1147 = vmatmul.mubr.bf16.gmra.mxu0 %v903
    %v1148 = vpop.f32.mrf.mxu0
    %v1149 = vadd.f32 %v882, %v1148
    %v1150 = vpop.f32.mrf.mxu0
    %v1151 = vpop.f32.mrf.mxu0
    %v1152 = vadd.f32 %v882, %v1151
    %v1153 = vpop.f32.mrf.mxu0
    %1154 = vmatprep.mubr.bf16.mxu0 0
    %1155 = vmatmul.mubr.bf16.gmra.mxu0 %v906
    %v1156 = vpop.f32.mrf.mxu0
    %v1157 = vadd.f32 %v882, %v1156
    %v1158 = vpop.f32.mrf.mxu0
    %v1159 = vpop.f32.mrf.mxu0
    %v1160 = vadd.f32 %v882, %v1159
    %v1161 = vpop.f32.mrf.mxu0
    %1162 = vmatprep.mubr.bf16.mxu0 0
    %1163 = vmatmul.mubr.bf16.gmra.mxu0 %v909
    %v1164 = vpop.f32.mrf.mxu0
    %v1165 = vadd.f32 %v882, %v1164
    %v1166 = vpop.f32.mrf.mxu0
    %v1167 = vpop.f32.mrf.mxu0
    %v1168 = vadd.f32 %v882, %v1167
    %v1169 = vpop.f32.mrf.mxu0
    %1170 = vmatprep.mubr.bf16.mxu0 0
    %1171 = vmatmul.mubr.bf16.gmra.mxu0 %v912
    %v1172 = vpop.f32.mrf.mxu0
    %v1173 = vadd.f32 %v882, %v1172
    %v1174 = vpop.f32.mrf.mxu0
    %v1175 = vpop.f32.mrf.mxu0
    %v1176 = vadd.f32 %v882, %v1175
    %v1177 = vpop.f32.mrf.mxu0
    %1178 = vmatprep.mubr.bf16.mxu0 0
    %1179 = vmatmul.mubr.bf16.gmra.mxu0 %v915
    %v1180 = vpop.f32.mrf.mxu0
    %v1181 = vadd.f32 %v882, %v1180
    %v1182 = vpop.f32.mrf.mxu0
    %v1183 = vpop.f32.mrf.mxu0
    %v1184 = vadd.f32 %v882, %v1183
    %v1185 = vpop.f32.mrf.mxu0
    %1186 = vmatprep.mubr.bf16.mxu0 0
    %1187 = vmatmul.mubr.bf16.gmra.mxu0 %v918
    %v1188 = vpop.f32.mrf.mxu0
    %v1189 = vadd.f32 %v882, %v1188
    %v1190 = vpop.f32.mrf.mxu0
    %v1191 = vpop.f32.mrf.mxu0
    %v1192 = vadd.f32 %v882, %v1191
    %v1193 = vpop.f32.mrf.mxu0
    %1194 = vmatprep.mubr.bf16.mxu0 0
    %1195 = vmatmul.mubr.bf16.gmra.mxu0 %v921
    %v1196 = vpop.f32.mrf.mxu0
    %v1197 = vadd.f32 %v882, %v1196
    %v1198 = vpop.f32.mrf.mxu0
    %v1199 = vpop.f32.mrf.mxu0
    %v1200 = vadd.f32 %v882, %v1199
    %v1201 = vpop.f32.mrf.mxu0
    %1202 = vmatprep.mubr.bf16.mxu0 0
    %1203 = vmatmul.mubr.bf16.gmra.mxu0 %v924
    %v1204 = vpop.f32.mrf.mxu0
    %v1205 = vadd.f32 %v882, %v1204
    %v1206 = vpop.f32.mrf.mxu0
    %v1207 = vpop.f32.mrf.mxu0
    %v1208 = vadd.f32 %v882, %v1207
    %v1209 = vpop.f32.mrf.mxu0
    %1210 = vmatprep.mubr.bf16.mxu0 0
    %1211 = vmatmul.mubr.bf16.gmra.mxu0 %v927
    %v1212 = vpop.f32.mrf.mxu0
    %v1213 = vadd.f32 %v882, %v1212
    %v1214 = vpop.f32.mrf.mxu0
    %v1215 = vpop.f32.mrf.mxu0
    %v1216 = vadd.f32 %v882, %v1215
    %v1217 = vpop.f32.mrf.mxu0
    %1218 = vmatprep.mubr.bf16.mxu0 0
    %1219 = vmatmul.mubr.bf16.gmra.mxu0 %v930
    %v1220 = vpop.f32.mrf.mxu0
    %v1221 = vadd.f32 %v882, %v1220
    %v1222 = vpop.f32.mrf.mxu0
    %v1223 = vpop.f32.mrf.mxu0
    %v1224 = vadd.f32 %v882, %v1223
    %v1225 = vpop.f32.mrf.mxu0
    %1226 = vmatprep.mubr.bf16.mxu0 0
    %1227 = vmatmul.mubr.bf16.gmra.mxu0 %v933
    %v1228 = vpop.f32.mrf.mxu0
    %v1229 = vadd.f32 %v882, %v1228
    %v1230 = vpop.f32.mrf.mxu0
    %v1231 = vpop.f32.mrf.mxu0
    %v1232 = vadd.f32 %v882, %v1231
    %v1233 = vpop.f32.mrf.mxu0
    %1234 = vmatprep.mubr.bf16.mxu0 0
    %1235 = vmatmul.mubr.bf16.gmra.mxu0 %v936
    %v1236 = vpop.f32.mrf.mxu0
    %v1237 = vadd.f32 %v882, %v1236
    %v1238 = vpop.f32.mrf.mxu0
    %v1239 = vpop.f32.mrf.mxu0
    %v1240 = vadd.f32 %v882, %v1239
    %v1241 = vpop.f32.mrf.mxu0
    %1242 = vmatprep.mubr.bf16.mxu0 0
    %1243 = vmatmul.mubr.bf16.gmra.mxu0 %v939
    %v1244 = vpop.f32.mrf.mxu0
    %v1245 = vadd.f32 %v882, %v1244
    %v1246 = vpop.f32.mrf.mxu0
    %v1247 = vpop.f32.mrf.mxu0
    %v1248 = vadd.f32 %v882, %v1247
    %v1249 = vpop.f32.mrf.mxu0
    %1250 = vmatprep.mubr.bf16.mxu0 0
    %1251 = vmatmul.mubr.bf16.gmra.mxu0 %v942
    %v1252 = vpop.f32.mrf.mxu0
    %v1253 = vadd.f32 %v882, %v1252
    %v1254 = vpop.f32.mrf.mxu0
    %v1255 = vpop.f32.mrf.mxu0
    %v1256 = vadd.f32 %v882, %v1255
    %v1257 = vpop.f32.mrf.mxu0
    %1258 = vmatprep.mubr.bf16.mxu0 0
    %1259 = vmatmul.mubr.bf16.gmra.mxu0 %v945
    %v1260 = vpop.f32.mrf.mxu0
    %v1261 = vadd.f32 %v882, %v1260
    %v1262 = vpop.f32.mrf.mxu0
    %v1263 = vpop.f32.mrf.mxu0
    %v1264 = vadd.f32 %v882, %v1263
    %v1265 = vpop.f32.mrf.mxu0
    %1266 = vmatprep.mubr.bf16.mxu0 0
    %1267 = vmatmul.mubr.bf16.gmra.mxu0 %v948
    %v1268 = vpop.f32.mrf.mxu0
    %v1269 = vadd.f32 %v882, %v1268
    %v1270 = vpop.f32.mrf.mxu0
    %v1271 = vpop.f32.mrf.mxu0
    %v1272 = vadd.f32 %v882, %v1271
    %v1273 = vpop.f32.mrf.mxu0
    %1274 = vmatprep.mubr.bf16.mxu0 0
    %1275 = vmatmul.mubr.bf16.gmra.mxu0 %v951
    %v1276 = vpop.f32.mrf.mxu0
    %v1277 = vadd.f32 %v882, %v1276
    %v1278 = vpop.f32.mrf.mxu0
    %v1279 = vpop.f32.mrf.mxu0
    %v1280 = vadd.f32 %v882, %v1279
    %v1281 = vpop.f32.mrf.mxu0
    %1282 = vmatprep.mubr.bf16.mxu0 0
    %1283 = vmatmul.mubr.bf16.gmra.mxu0 %v954
    %v1284 = vpop.f32.mrf.mxu0
    %v1285 = vadd.f32 %v882, %v1284
    %v1286 = vpop.f32.mrf.mxu0
    %v1287 = vpop.f32.mrf.mxu0
    %v1288 = vadd.f32 %v882, %v1287
    %v1289 = vpop.f32.mrf.mxu0
    %1290 = vmatprep.mubr.bf16.mxu0 0
    %1291 = vmatmul.mubr.bf16.gmra.mxu0 %v957
    %v1292 = vpop.f32.mrf.mxu0
    %v1293 = vadd.f32 %v882, %v1292
    %v1294 = vpop.f32.mrf.mxu0
    %v1295 = vpop.f32.mrf.mxu0
    %v1296 = vadd.f32 %v882, %v1295
    %v1297 = vpop.f32.mrf.mxu0
    %1298 = vmatprep.mubr.bf16.mxu0 0
    %1299 = vmatmul.mubr.bf16.gmra.mxu0 %v960
    %v1300 = vpop.f32.mrf.mxu0
    %v1301 = vadd.f32 %v882, %v1300
    %v1302 = vpop.f32.mrf.mxu0
    %v1303 = vpop.f32.mrf.mxu0
    %v1304 = vadd.f32 %v882, %v1303
    %v1305 = vpop.f32.mrf.mxu0
    %1306 = vmatprep.mubr.bf16.mxu0 0
    %1307 = vmatmul.mubr.bf16.gmra.mxu0 %v963
    %v1308 = vpop.f32.mrf.mxu0
    %v1309 = vadd.f32 %v882, %v1308
    %v1310 = vpop.f32.mrf.mxu0
    %v1311 = vpop.f32.mrf.mxu0
    %v1312 = vadd.f32 %v882, %v1311
    %v1313 = vpop.f32.mrf.mxu0
    %1314 = vmatprep.mubr.bf16.mxu0 0
    %1315 = vmatmul.mubr.bf16.gmra.mxu0 %v966
    %v1316 = vpop.f32.mrf.mxu0
    %v1317 = vadd.f32 %v882, %v1316
    %v1318 = vpop.f32.mrf.mxu0
    %v1319 = vpop.f32.mrf.mxu0
    %v1320 = vadd.f32 %v882, %v1319
    %v1321 = vpop.f32.mrf.mxu0
    %1322 = vmatprep.mubr.bf16.mxu0 0
    %1323 = vmatmul.mubr.bf16.gmra.mxu0 %v969
    %v1324 = vpop.f32.mrf.mxu0
    %v1325 = vadd.f32 %v882, %v1324
    %v1326 = vpop.f32.mrf.mxu0
    %v1327 = vpop.f32.mrf.mxu0
    %v1328 = vadd.f32 %v882, %v1327
    %v1329 = vpop.f32.mrf.mxu0
    %1330 = vmatprep.mubr.bf16.mxu0 0
    %1331 = vmatmul.mubr.bf16.gmra.mxu0 %v972
    %v1332 = vpop.f32.mrf.mxu0
    %v1333 = vadd.f32 %v882, %v1332
    %v1334 = vpop.f32.mrf.mxu0
    %v1335 = vpop.f32.mrf.mxu0
    %v1336 = vadd.f32 %v882, %v1335
    %v1337 = vpop.f32.mrf.mxu0
    %1338 = vmatprep.mubr.bf16.mxu0 0
    %1339 = vmatmul.mubr.bf16.gmra.mxu0 %v975
    %v1340 = vpop.f32.mrf.mxu0
    %v1341 = vadd.f32 %v882, %v1340
    %v1342 = vpop.f32.mrf.mxu0
    %v1343 = vpop.f32.mrf.mxu0
    %v1344 = vadd.f32 %v882, %v1343
    %v1345 = vpop.f32.mrf.mxu0
    %1346 = vmatprep.mubr.bf16.mxu0 0
    %1347 = vmatmul.mubr.bf16.gmra.mxu0 %v978
    %v1348 = vpop.f32.mrf.mxu0
    %v1349 = vadd.f32 %v882, %v1348
    %v1350 = vpop.f32.mrf.mxu0
    %v1351 = vpop.f32.mrf.mxu0
    %v1352 = vadd.f32 %v882, %v1351
    %v1353 = vpop.f32.mrf.mxu0
    %1354 = vmatprep.mubr.bf16.mxu0 0
    %1355 = vmatmul.mubr.bf16.gmra.mxu0 %v981
    %v1356 = vpop.f32.mrf.mxu0
    %v1357 = vadd.f32 %v882, %v1356
    %v1358 = vpop.f32.mrf.mxu0
    %v1359 = vpop.f32.mrf.mxu0
    %v1360 = vadd.f32 %v882, %v1359
    %v1361 = vpop.f32.mrf.mxu0
    %1362 = vmatprep.mubr.bf16.mxu0 0
    %1363 = vmatmul.mubr.bf16.gmra.mxu0 %v984
    %v1364 = vpop.f32.mrf.mxu0
    %v1365 = vadd.f32 %v882, %v1364
    %v1366 = vpop.f32.mrf.mxu0
    %v1367 = vpop.f32.mrf.mxu0
    %v1368 = vadd.f32 %v882, %v1367
    %v1369 = vpop.f32.mrf.mxu0
    %1370 = vmatprep.mubr.bf16.mxu0 0
    %1371 = vmatmul.mubr.bf16.gmra.mxu0 %v987
    %v1372 = vpop.f32.mrf.mxu0
    %v1373 = vadd.f32 %v882, %v1372
    %v1374 = vpop.f32.mrf.mxu0
    %v1375 = vpop.f32.mrf.mxu0
    %v1376 = vadd.f32 %v882, %v1375
    %v1377 = vpop.f32.mrf.mxu0
    %1378 = vmatprep.mubr.bf16.mxu0 0
    %1379 = vmatmul.mubr.bf16.gmra.mxu0 %v990
    %v1380 = vpop.f32.mrf.mxu0
    %v1381 = vadd.f32 %v882, %v1380
    %v1382 = vpop.f32.mrf.mxu0
    %v1383 = vpop.f32.mrf.mxu0
    %v1384 = vadd.f32 %v882, %v1383
    %v1385 = vpop.f32.mrf.mxu0
    %1386 = vmatprep.mubr.bf16.mxu0 0
    %1387 = vmatmul.mubr.bf16.gmra.mxu0 %v993
    %v1388 = vpop.f32.mrf.mxu0
    %v1389 = vadd.f32 %v882, %v1388
    %v1390 = vpop.f32.mrf.mxu0
    %v1391 = vpop.f32.mrf.mxu0
    %v1392 = vadd.f32 %v882, %v1391
    %v1393 = vpop.f32.mrf.mxu0
    %1394 = vmatprep.mubr.bf16.mxu0 0
    %1395 = vmatmul.mubr.bf16.gmra.mxu0 %v996
    %v1396 = vpop.f32.mrf.mxu0
    %v1397 = vadd.f32 %v882, %v1396
    %v1398 = vpop.f32.mrf.mxu0
    %v1399 = vpop.f32.mrf.mxu0
    %v1400 = vadd.f32 %v882, %v1399
    %v1401 = vpop.f32.mrf.mxu0
    %1402 = vmatprep.mubr.bf16.mxu0 0
    %1403 = vmatmul.mubr.bf16.gmra.mxu0 %v999
    %v1404 = vpop.f32.mrf.mxu0
    %v1405 = vadd.f32 %v882, %v1404
    %v1406 = vpop.f32.mrf.mxu0
    %v1407 = vpop.f32.mrf.mxu0
    %v1408 = vadd.f32 %v882, %v1407
    %v1409 = vpop.f32.mrf.mxu0
    %1410 = vmatprep.mubr.bf16.mxu0 0
    %1411 = vmatmul.mubr.bf16.gmra.mxu0 %v1002
    %v1412 = vpop.f32.mrf.mxu0
    %v1413 = vadd.f32 %v882, %v1412
    %v1414 = vpop.f32.mrf.mxu0
    %v1415 = vpop.f32.mrf.mxu0
    %v1416 = vadd.f32 %v882, %v1415
    %v1417 = vpop.f32.mrf.mxu0
    %1418 = vmatprep.mubr.bf16.mxu0 0
    %1419 = vmatmul.mubr.bf16.gmra.mxu0 %v1005
    %v1420 = vpop.f32.mrf.mxu0
    %v1421 = vadd.f32 %v882, %v1420
    %v1422 = vpop.f32.mrf.mxu0
    %v1423 = vpop.f32.mrf.mxu0
    %v1424 = vadd.f32 %v882, %v1423
    %v1425 = vpop.f32.mrf.mxu0
    %1426 = vmatprep.mubr.bf16.mxu0 0
    %1427 = vmatmul.mubr.bf16.gmra.mxu0 %v1008
    %v1428 = vpop.f32.mrf.mxu0
    %v1429 = vadd.f32 %v882, %v1428
    %v1430 = vpop.f32.mrf.mxu0
    %v1431 = vpop.f32.mrf.mxu0
    %v1432 = vadd.f32 %v882, %v1431
    %v1433 = vpop.f32.mrf.mxu0
    %1434 = vmatprep.mubr.bf16.mxu0 0
    %1435 = vmatmul.mubr.bf16.gmra.mxu0 %v1011
    %v1436 = vpop.f32.mrf.mxu0
    %v1437 = vadd.f32 %v882, %v1436
    %v1438 = vpop.f32.mrf.mxu0
    %v1439 = vpop.f32.mrf.mxu0
    %v1440 = vadd.f32 %v882, %v1439
    %v1441 = vpop.f32.mrf.mxu0
    %1442 = vmatprep.mubr.bf16.mxu0 0
    %1443 = vmatmul.mubr.bf16.gmra.mxu0 %v1014
    %v1444 = vpop.f32.mrf.mxu0
    %v1445 = vadd.f32 %v882, %v1444
    %v1446 = vpop.f32.mrf.mxu0
    %v1447 = vpop.f32.mrf.mxu0
    %v1448 = vadd.f32 %v882, %v1447
    %v1449 = vpop.f32.mrf.mxu0
    %1450 = vmatprep.mubr.bf16.mxu0 0
    %1451 = vmatmul.mubr.bf16.gmra.mxu0 %v1017
    %v1452 = vpop.f32.mrf.mxu0
    %v1453 = vadd.f32 %v882, %v1452
    %v1454 = vpop.f32.mrf.mxu0
    %v1455 = vpop.f32.mrf.mxu0
    %v1456 = vadd.f32 %v882, %v1455
    %v1457 = vpop.f32.mrf.mxu0
    %1458 = vmatprep.mubr.bf16.mxu0 0
    %1459 = vmatmul.mubr.bf16.gmra.mxu0 %v1020
    %v1460 = vpop.f32.mrf.mxu0
    %v1461 = vadd.f32 %v882, %v1460
    %v1462 = vpop.f32.mrf.mxu0
    %v1463 = vpop.f32.mrf.mxu0
    %v1464 = vadd.f32 %v882, %v1463
    %v1465 = vpop.f32.mrf.mxu0
    %1466 = vmatprep.mubr.bf16.mxu0 0
    %1467 = vmatmul.mubr.bf16.gmra.mxu0 %v1023
    %v1468 = vpop.f32.mrf.mxu0
    %v1469 = vadd.f32 %v882, %v1468
    %v1470 = vpop.f32.mrf.mxu0
    %v1471 = vpop.f32.mrf.mxu0
    %v1472 = vadd.f32 %v882, %v1471
    %v1473 = vpop.f32.mrf.mxu0
    %1474 = vmatprep.mubr.bf16.mxu0 0
    %1475 = vmatmul.mubr.bf16.gmra.mxu0 %v1026
    %v1476 = vpop.f32.mrf.mxu0
    %v1477 = vadd.f32 %v882, %v1476
    %v1478 = vpop.f32.mrf.mxu0
    %v1479 = vpop.f32.mrf.mxu0
    %v1480 = vadd.f32 %v882, %v1479
    %v1481 = vpop.f32.mrf.mxu0
    %1482 = vmatprep.mubr.bf16.mxu0 0
    %1483 = vmatmul.mubr.bf16.gmra.mxu0 %v1029
    %v1484 = vpop.f32.mrf.mxu0
    %v1485 = vadd.f32 %v882, %v1484
    %v1486 = vpop.f32.mrf.mxu0
    %v1487 = vpop.f32.mrf.mxu0
    %v1488 = vadd.f32 %v882, %v1487
    %v1489 = vpop.f32.mrf.mxu0
    %1490 = vmatprep.mubr.bf16.mxu0 0
    %1491 = vmatmul.mubr.bf16.gmra.mxu0 %v1032
    %v1492 = vpop.f32.mrf.mxu0
    %v1493 = vadd.f32 %v882, %v1492
    %v1494 = vpop.f32.mrf.mxu0
    %v1495 = vpop.f32.mrf.mxu0
    %v1496 = vadd.f32 %v882, %v1495
    %v1497 = vpop.f32.mrf.mxu0
    %1498 = vmatprep.mubr.bf16.mxu0 0
    %1499 = vmatmul.mubr.bf16.gmra.mxu0 %v1035
    %v1500 = vpop.f32.mrf.mxu0
    %v1501 = vadd.f32 %v882, %v1500
    %v1502 = vpop.f32.mrf.mxu0
    %v1503 = vpop.f32.mrf.mxu0
    %v1504 = vadd.f32 %v882, %v1503
    %v1505 = vpop.f32.mrf.mxu0
    %1506 = vmatprep.mubr.bf16.mxu0 0
    %1507 = vmatmul.mubr.bf16.gmra.mxu0 %v1038
    %v1508 = vpop.f32.mrf.mxu0
    %v1509 = vadd.f32 %v882, %v1508
    %v1510 = vpop.f32.mrf.mxu0
    %v1511 = vpop.f32.mrf.mxu0
    %v1512 = vadd.f32 %v882, %v1511
    %v1513 = vpop.f32.mrf.mxu0
    %1514 = vmatprep.mubr.bf16.mxu0 0
    %1515 = vmatmul.mubr.bf16.gmra.mxu0 %v1041
    %v1516 = vpop.f32.mrf.mxu0
    %v1517 = vadd.f32 %v882, %v1516
    %v1518 = vpop.f32.mrf.mxu0
    %v1519 = vpop.f32.mrf.mxu0
    %v1520 = vadd.f32 %v882, %v1519
    %v1521 = vpop.f32.mrf.mxu0
    %1522 = vmatprep.mubr.bf16.mxu0 0
    %1523 = vmatmul.mubr.bf16.gmra.mxu0 %v1044
    %v1524 = vpop.f32.mrf.mxu0
    %v1525 = vadd.f32 %v882, %v1524
    %v1526 = vpop.f32.mrf.mxu0
    %v1527 = vpop.f32.mrf.mxu0
    %v1528 = vadd.f32 %v882, %v1527
    %v1529 = vpop.f32.mrf.mxu0
    %1530 = vmatprep.mubr.bf16.mxu0 0
    %1531 = vmatmul.mubr.bf16.gmra.mxu0 %v1047
    %v1532 = vpop.f32.mrf.mxu0
    %v1533 = vadd.f32 %v882, %v1532
    %v1534 = vpop.f32.mrf.mxu0
    %v1535 = vpop.f32.mrf.mxu0
    %v1536 = vadd.f32 %v882, %v1535
    %v1537 = vpop.f32.mrf.mxu0
    %1538 = vmatprep.mubr.bf16.mxu0 0
    %1539 = vmatmul.mubr.bf16.gmra.mxu0 %v1050
    %v1540 = vpop.f32.mrf.mxu0
    %v1541 = vadd.f32 %v882, %v1540
    %v1542 = vpop.f32.mrf.mxu0
    %v1543 = vpop.f32.mrf.mxu0
    %v1544 = vadd.f32 %v882, %v1543
    %v1545 = vpop.f32.mrf.mxu0
    %1546 = vmatprep.mubr.bf16.mxu0 0
    %1547 = vmatmul.mubr.bf16.gmra.mxu0 %v1053
    %v1548 = vpop.f32.mrf.mxu0
    %v1549 = vadd.f32 %v882, %v1548
    %v1550 = vpop.f32.mrf.mxu0
    %v1551 = vpop.f32.mrf.mxu0
    %v1552 = vadd.f32 %v882, %v1551
    %v1553 = vpop.f32.mrf.mxu0
    %1554 = vmatprep.mubr.bf16.mxu0 0
    %1555 = vmatmul.mubr.bf16.gmra.mxu0 %v1056
    %v1556 = vpop.f32.mrf.mxu0
    %v1557 = vadd.f32 %v882, %v1556
    %v1558 = vpop.f32.mrf.mxu0
    %v1559 = vpop.f32.mrf.mxu0
    %v1560 = vadd.f32 %v882, %v1559
    %v1561 = vpop.f32.mrf.mxu0
    %1562 = vmatprep.mubr.bf16.mxu0 0
    %1563 = vmatmul.mubr.bf16.gmra.mxu0 %v1059
    %v1564 = vpop.f32.mrf.mxu0
    %v1565 = vadd.f32 %v882, %v1564
    %v1566 = vpop.f32.mrf.mxu0
    %v1567 = vpop.f32.mrf.mxu0
    %v1568 = vadd.f32 %v882, %v1567
    %v1569 = vpop.f32.mrf.mxu0
    %1570 = vmatprep.mubr.bf16.mxu0 0
    %1571 = vmatmul.mubr.bf16.gmra.mxu0 %v1062
    %v1572 = vpop.f32.mrf.mxu0
    %v1573 = vadd.f32 %v882, %v1572
    %v1574 = vpop.f32.mrf.mxu0
    %v1575 = vpop.f32.mrf.mxu0
    %v1576 = vadd.f32 %v882, %v1575
    %v1577 = vpop.f32.mrf.mxu0
    %1578 = vmatprep.mubr.bf16.mxu0 0
    %1579 = vmatmul.mubr.bf16.gmra.mxu0 %v1065
    %v1580 = vpop.f32.mrf.mxu0
    %v1581 = vadd.f32 %v882, %v1580
    %v1582 = vpop.f32.mrf.mxu0
    %v1583 = vpop.f32.mrf.mxu0
    %v1584 = vadd.f32 %v882, %v1583
    %v1585 = vpop.f32.mrf.mxu0
    %1586 = vmatprep.mubr.bf16.mxu0 0
    %1587 = vmatmul.mubr.bf16.gmra.mxu0 %v1068
    %v1588 = vpop.f32.mrf.mxu0
    %v1589 = vadd.f32 %v882, %v1588
    %v1590 = vpop.f32.mrf.mxu0
    %v1591 = vpop.f32.mrf.mxu0
    %v1592 = vadd.f32 %v882, %v1591
    %v1593 = vpop.f32.mrf.mxu0
    %1594 = vmatprep.mubr.bf16.mxu0 0
    %1595 = vmatmul.mubr.bf16.gmra.mxu0 %v1071
    %v1596 = vpop.f32.mrf.mxu0
    %v1597 = vadd.f32 %v882, %v1596
    %v1598 = vpop.f32.mrf.mxu0
    %v1599 = vpop.f32.mrf.mxu0
    %v1600 = vadd.f32 %v882, %v1599
    %v1601 = vpop.f32.mrf.mxu0
    %1602 = vmatprep.mubr.bf16.mxu0 0
    %1603 = vmatmul.mubr.bf16.gmra.mxu0 %v1074
    %v1604 = vpop.f32.mrf.mxu0
    %v1605 = vadd.f32 %v882, %v1604
    %v1606 = vpop.f32.mrf.mxu0
    %v1607 = vpop.f32.mrf.mxu0
    %v1608 = vadd.f32 %v882, %v1607
    %v1609 = vpop.f32.mrf.mxu0
    %1610 = vmatprep.mubr.bf16.mxu0 0
    %1611 = vmatmul.mubr.bf16.gmra.mxu0 %v1077
    %v1612 = vpop.f32.mrf.mxu0
    %v1613 = vadd.f32 %v882, %v1612
    %v1614 = vpop.f32.mrf.mxu0
    %v1615 = vpop.f32.mrf.mxu0
    %v1616 = vadd.f32 %v882, %v1615
    %v1617 = vpop.f32.mrf.mxu0
    %1618 = vmatprep.mubr.bf16.mxu0 0
    %1619 = vmatmul.mubr.bf16.gmra.mxu0 %v1080
    %v1620 = vpop.f32.mrf.mxu0
    %v1621 = vadd.f32 %v882, %v1620
    %v1622 = vpop.f32.mrf.mxu0
    %v1623 = vpop.f32.mrf.mxu0
    %v1624 = vadd.f32 %v882, %v1623
    %v1625 = vpop.f32.mrf.mxu0
    %1626 = vdwg.mxu0
    %v1627 = vmax.f32 %v1117, 0.0
    %v1628 = vmax.f32 %v1120, 0.0
    %v1629 = vmax.f32 %v1125, 0.0
    %v1630 = vmax.f32 %v1128, 0.0
    %v1631 = vmax.f32 %v1133, 0.0
    %v1632 = vmax.f32 %v1136, 0.0
    %v1633 = vmax.f32 %v1141, 0.0
    %v1634 = vmax.f32 %v1144, 0.0
    %v1635 = vmax.f32 %v1149, 0.0
    %v1636 = vmax.f32 %v1152, 0.0
    %v1637 = vmax.f32 %v1157, 0.0
    %v1638 = vmax.f32 %v1160, 0.0
    %v1639 = vmax.f32 %v1165, 0.0
    %v1640 = vmax.f32 %v1168, 0.0
    %v1641 = vmax.f32 %v1173, 0.0
    %v1642 = vmax.f32 %v1176, 0.0
    %v1643 = vmax.f32 %v1181, 0.0
    %v1644 = vmax.f32 %v1184, 0.0
    %v1645 = vmax.f32 %v1189, 0.0
    %v1646 = vmax.f32 %v1192, 0.0
    %v1647 = vmax.f32 %v1197, 0.0
    %v1648 = vmax.f32 %v1200, 0.0
    %v1649 = vmax.f32 %v1205, 0.0
    %v1650 = vmax.f32 %v1208, 0.0
    %v1651 = vmax.f32 %v1213, 0.0
    %v1652 = vmax.f32 %v1216, 0.0
    %v1653 = vmax.f32 %v1221, 0.0
    %v1654 = vmax.f32 %v1224, 0.0
    %v1655 = vmax.f32 %v1229, 0.0
    %v1656 = vmax.f32 %v1232, 0.0
    %v1657 = vmax.f32 %v1237, 0.0
    %v1658 = vmax.f32 %v1240, 0.0
    %v1659 = vmax.f32 %v1245, 0.0
    %v1660 = vmax.f32 %v1248, 0.0
    %v1661 = vmax.f32 %v1253, 0.0
    %v1662 = vmax.f32 %v1256, 0.0
    %v1663 = vmax.f32 %v1261, 0.0
    %v1664 = vmax.f32 %v1264, 0.0
    %v1665 = vmax.f32 %v1269, 0.0
    %v1666 = vmax.f32 %v1272, 0.0
    %v1667 = vmax.f32 %v1277, 0.0
    %v1668 = vmax.f32 %v1280, 0.0
    %v1669 = vmax.f32 %v1285, 0.0
    %v1670 = vmax.f32 %v1288, 0.0
    %v1671 = vmax.f32 %v1293, 0.0
    %v1672 = vmax.f32 %v1296, 0.0
    %v1673 = vmax.f32 %v1301, 0.0
    %v1674 = vmax.f32 %v1304, 0.0
    %v1675 = vmax.f32 %v1309, 0.0
    %v1676 = vmax.f32 %v1312, 0.0
    %v1677 = vmax.f32 %v1317, 0.0
    %v1678 = vmax.f32 %v1320, 0.0
    %v1679 = vmax.f32 %v1325, 0.0
    %v1680 = vmax.f32 %v1328, 0.0
    %v1681 = vmax.f32 %v1333, 0.0
    %v1682 = vmax.f32 %v1336, 0.0
    %v1683 = vmax.f32 %v1341, 0.0
    %v1684 = vmax.f32 %v1344, 0.0
    %v1685 = vmax.f32 %v1349, 0.0
    %v1686 = vmax.f32 %v1352, 0.0
    %v1687 = vmax.f32 %v1357, 0.0
    %v1688 = vmax.f32 %v1360, 0.0
    %v1689 = vmax.f32 %v1365, 0.0
    %v1690 = vmax.f32 %v1368, 0.0
    %v1691 = vmax.f32 %v1373, 0.0
    %v1692 = vmax.f32 %v1376, 0.0
    %v1693 = vmax.f32 %v1381, 0.0
    %v1694 = vmax.f32 %v1384, 0.0
    %v1695 = vmax.f32 %v1389, 0.0
    %v1696 = vmax.f32 %v1392, 0.0
    %v1697 = vmax.f32 %v1397, 0.0
    %v1698 = vmax.f32 %v1400, 0.0
    %v1699 = vmax.f32 %v1405, 0.0
    %v1700 = vmax.f32 %v1408, 0.0
    %v1701 = vmax.f32 %v1413, 0.0
    %v1702 = vmax.f32 %v1416, 0.0
    %v1703 = vmax.f32 %v1421, 0.0
    %v1704 = vmax.f32 %v1424, 0.0
    %v1705 = vmax.f32 %v1429, 0.0
    %v1706 = vmax.f32 %v1432, 0.0
    %v1707 = vmax.f32 %v1437, 0.0
    %v1708 = vmax.f32 %v1440, 0.0
    %v1709 = vmax.f32 %v1445, 0.0
    %v1710 = vmax.f32 %v1448, 0.0
    %v1711 = vmax.f32 %v1453, 0.0
    %v1712 = vmax.f32 %v1456, 0.0
    %v1713 = vmax.f32 %v1461, 0.0
    %v1714 = vmax.f32 %v1464, 0.0
    %v1715 = vmax.f32 %v1469, 0.0
    %v1716 = vmax.f32 %v1472, 0.0
    %v1717 = vmax.f32 %v1477, 0.0
    %v1718 = vmax.f32 %v1480, 0.0
    %v1719 = vmax.f32 %v1485, 0.0
    %v1720 = vmax.f32 %v1488, 0.0
    %v1721 = vmax.f32 %v1493, 0.0
    %v1722 = vmax.f32 %v1496, 0.0
    %v1723 = vmax.f32 %v1501, 0.0
    %v1724 = vmax.f32 %v1504, 0.0
    %v1725 = vmax.f32 %v1509, 0.0
    %v1726 = vmax.f32 %v1512, 0.0
    %v1727 = vmax.f32 %v1517, 0.0
    %v1728 = vmax.f32 %v1520, 0.0
    %v1729 = vmax.f32 %v1525, 0.0
    %v1730 = vmax.f32 %v1528, 0.0
    %v1731 = vmax.f32 %v1533, 0.0
    %v1732 = vmax.f32 %v1536, 0.0
    %v1733 = vmax.f32 %v1541, 0.0
    %v1734 = vmax.f32 %v1544, 0.0
    %v1735 = vmax.f32 %v1549, 0.0
    %v1736 = vmax.f32 %v1552, 0.0
    %v1737 = vmax.f32 %v1557, 0.0
    %v1738 = vmax.f32 %v1560, 0.0
    %v1739 = vmax.f32 %v1565, 0.0
    %v1740 = vmax.f32 %v1568, 0.0
    %v1741 = vmax.f32 %v1573, 0.0
    %v1742 = vmax.f32 %v1576, 0.0
    %v1743 = vmax.f32 %v1581, 0.0
    %v1744 = vmax.f32 %v1584, 0.0
    %v1745 = vmax.f32 %v1589, 0.0
    %v1746 = vmax.f32 %v1592, 0.0
    %v1747 = vmax.f32 %v1597, 0.0
    %v1748 = vmax.f32 %v1600, 0.0
    %v1749 = vmax.f32 %v1605, 0.0
    %v1750 = vmax.f32 %v1608, 0.0
    %v1751 = vmax.f32 %v1613, 0.0
    %v1752 = vmax.f32 %v1616, 0.0
    %v1753 = vmax.f32 %v1621, 0.0
    %v1754 = vmax.f32 %v1624, 0.0
    %v1755 = vmul.f32 %v1627, 0.25
    %v1756 = vmul.f32 %v1628, 0.25
    %v1757 = vmul.f32 %v1629, 0.25
    %v1758 = vmul.f32 %v1630, 0.25
    %v1759 = vmul.f32 %v1631, 0.25
    %v1760 = vmul.f32 %v1632, 0.25
    %v1761 = vmul.f32 %v1633, 0.25
    %v1762 = vmul.f32 %v1634, 0.25
    %v1763 = vmul.f32 %v1635, 0.25
    %v1764 = vmul.f32 %v1636, 0.25
    %v1765 = vmul.f32 %v1637, 0.25
    %v1766 = vmul.f32 %v1638, 0.25
    %v1767 = vmul.f32 %v1639, 0.25
    %v1768 = vmul.f32 %v1640, 0.25
    %v1769 = vmul.f32 %v1641, 0.25
    %v1770 = vmul.f32 %v1642, 0.25
    %v1771 = vmul.f32 %v1643, 0.25
    %v1772 = vmul.f32 %v1644, 0.25
    %v1773 = vmul.f32 %v1645, 0.25
    %v1774 = vmul.f32 %v1646, 0.25
    %v1775 = vmul.f32 %v1647, 0.25
    %v1776 = vmul.f32 %v1648, 0.25
    %v1777 = vmul.f32 %v1649, 0.25
    %v1778 = vmul.f32 %v1650, 0.25
    %v1779 = vmul.f32 %v1651, 0.25
    %v1780 = vmul.f32 %v1652, 0.25
    %v1781 = vmul.f32 %v1653, 0.25
    %v1782 = vmul.f32 %v1654, 0.25
    %v1783 = vmul.f32 %v1655, 0.25
    %v1784 = vmul.f32 %v1656, 0.25
    %v1785 = vmul.f32 %v1657, 0.25
    %v1786 = vmul.f32 %v1658, 0.25
    %v1787 = vadd.f32 %v1755, %v1771
    %v1788 = vadd.f32 %v1756, %v1772
    %v1789 = vadd.f32 %v1757, %v1773
    %v1790 = vadd.f32 %v1758, %v1774
    %v1791 = vadd.f32 %v1759, %v1775
    %v1792 = vadd.f32 %v1760, %v1776
    %v1793 = vadd.f32 %v1761, %v1777
    %v1794 = vadd.f32 %v1762, %v1778
    %v1795 = vadd.f32 %v1763, %v1779
    %v1796 = vadd.f32 %v1764, %v1780
    %v1797 = vadd.f32 %v1765, %v1781
    %v1798 = vadd.f32 %v1766, %v1782
    %v1799 = vadd.f32 %v1767, %v1783
    %v1800 = vadd.f32 %v1768, %v1784
    %v1801 = vadd.f32 %v1769, %v1785
    %v1802 = vadd.f32 %v1770, %v1786
    %v1803 = vmul.f32 %v1659, 0.25
    %v1804 = vmul.f32 %v1660, 0.25
    %v1805 = vmul.f32 %v1661, 0.25
    %v1806 = vmul.f32 %v1662, 0.25
    %v1807 = vmul.f32 %v1663, 0.25
    %v1808 = vmul.f32 %v1664, 0.25
    %v1809 = vmul.f32 %v1665, 0.25
    %v1810 = vmul.f32 %v1666, 0.25
    %v1811 = vmul.f32 %v1667, 0.25
    %v1812 = vmul.f32 %v1668, 0.25
    %v1813 = vmul.f32 %v1669, 0.25
    %v1814 = vmul.f32 %v1670, 0.25
    %v1815 = vmul.f32 %v1671, 0.25
    %v1816 = vmul.f32 %v1672, 0.25
    %v1817 = vmul.f32 %v1673, 0.25
    %v1818 = vmul.f32 %v1674, 0.25
    %v1819 = vadd.f32 %v1787, %v1803
    %v1820 = vadd.f32 %v1788, %v1804
    %v1821 = vadd.f32 %v1789, %v1805
    %v1822 = vadd.f32 %v1790, %v1806
    %v1823 = vadd.f32 %v1791, %v1807
    %v1824 = vadd.f32 %v1792, %v1808
    %v1825 = vadd.f32 %v1793, %v1809
    %v1826 = vadd.f32 %v1794, %v1810
    %v1827 = vadd.f32 %v1795, %v1811
    %v1828 = vadd.f32 %v1796, %v1812
    %v1829 = vadd.f32 %v1797, %v1813
    %v1830 = vadd.f32 %v1798, %v1814
    %v1831 = vadd.f32 %v1799, %v1815
    %v1832 = vadd.f32 %v1800, %v1816
    %v1833 = vadd.f32 %v1801, %v1817
    %v1834 = vadd.f32 %v1802, %v1818
    %v1835 = vmul.f32 %v1675, 0.2236068
    %v1836 = vmul.f32 %v1676, 0.2236068
    %v1837 = vmul.f32 %v1677, 0.2236068
    %v1838 = vmul.f32 %v1678, 0.2236068
    %v1839 = vmul.f32 %v1679, 0.2236068
    %v1840 = vmul.f32 %v1680, 0.2236068
    %v1841 = vmul.f32 %v1681, 0.2236068
    %v1842 = vmul.f32 %v1682, 0.2236068
    %v1843 = vmul.f32 %v1683, 0.2236068
    %v1844 = vmul.f32 %v1684, 0.2236068
    %v1845 = vmul.f32 %v1685, 0.2236068
    %v1846 = vmul.f32 %v1686, 0.2236068
    %v1847 = vmul.f32 %v1687, 0.2236068
    %v1848 = vmul.f32 %v1688, 0.2236068
    %v1849 = vmul.f32 %v1689, 0.2236068
    %v1850 = vmul.f32 %v1690, 0.2236068
    %v1851 = vadd.f32 %v1819, %v1835
    %v1852 = vadd.f32 %v1820, %v1836
    %v1853 = vadd.f32 %v1821, %v1837
    %v1854 = vadd.f32 %v1822, %v1838
    %v1855 = vadd.f32 %v1823, %v1839
    %v1856 = vadd.f32 %v1824, %v1840
    %v1857 = vadd.f32 %v1825, %v1841
    %v1858 = vadd.f32 %v1826, %v1842
    %v1859 = vadd.f32 %v1827, %v1843
    %v1860 = vadd.f32 %v1828, %v1844
    %v1861 = vadd.f32 %v1829, %v1845
    %v1862 = vadd.f32 %v1830, %v1846
    %v1863 = vadd.f32 %v1831, %v1847
    %v1864 = vadd.f32 %v1832, %v1848
    %v1865 = vadd.f32 %v1833, %v1849
    %v1866 = vadd.f32 %v1834, %v1850
    %v1867 = vadd.f32 %v1787, %v1835
    %v1868 = vadd.f32 %v1788, %v1836
    %v1869 = vadd.f32 %v1789, %v1837
    %v1870 = vadd.f32 %v1790, %v1838
    %v1871 = vadd.f32 %v1791, %v1839
    %v1872 = vadd.f32 %v1792, %v1840
    %v1873 = vadd.f32 %v1793, %v1841
    %v1874 = vadd.f32 %v1794, %v1842
    %v1875 = vadd.f32 %v1795, %v1843
    %v1876 = vadd.f32 %v1796, %v1844
    %v1877 = vadd.f32 %v1797, %v1845
    %v1878 = vadd.f32 %v1798, %v1846
    %v1879 = vadd.f32 %v1799, %v1847
    %v1880 = vadd.f32 %v1800, %v1848
    %v1881 = vadd.f32 %v1801, %v1849
    %v1882 = vadd.f32 %v1802, %v1850
    %v1883 = vmul.f32 %v1723, 0.25
    %v1884 = vmul.f32 %v1724, 0.25
    %v1885 = vmul.f32 %v1725, 0.25
    %v1886 = vmul.f32 %v1726, 0.25
    %v1887 = vmul.f32 %v1727, 0.25
    %v1888 = vmul.f32 %v1728, 0.25
    %v1889 = vmul.f32 %v1729, 0.25
    %v1890 = vmul.f32 %v1730, 0.25
    %v1891 = vmul.f32 %v1731, 0.25
    %v1892 = vmul.f32 %v1732, 0.25
    %v1893 = vmul.f32 %v1733, 0.25
    %v1894 = vmul.f32 %v1734, 0.25
    %v1895 = vmul.f32 %v1735, 0.25
    %v1896 = vmul.f32 %v1736, 0.25
    %v1897 = vmul.f32 %v1737, 0.25
    %v1898 = vmul.f32 %v1738, 0.25
    %v1899 = vadd.f32 %v1867, %v1883
    %v1900 = vadd.f32 %v1868, %v1884
    %v1901 = vadd.f32 %v1869, %v1885
    %v1902 = vadd.f32 %v1870, %v1886
    %v1903 = vadd.f32 %v1871, %v1887
    %v1904 = vadd.f32 %v1872, %v1888
    %v1905 = vadd.f32 %v1873, %v1889
    %v1906 = vadd.f32 %v1874, %v1890
    %v1907 = vadd.f32 %v1875, %v1891
    %v1908 = vadd.f32 %v1876, %v1892
    %v1909 = vadd.f32 %v1877, %v1893
    %v1910 = vadd.f32 %v1878, %v1894
    %v1911 = vadd.f32 %v1879, %v1895
    %v1912 = vadd.f32 %v1880, %v1896
    %v1913 = vadd.f32 %v1881, %v1897
    %v1914 = vadd.f32 %v1882, %v1898
    %v1915 = vadd.f32 %v1755, %v1803
    %v1916 = vadd.f32 %v1756, %v1804
    %v1917 = vadd.f32 %v1757, %v1805
    %v1918 = vadd.f32 %v1758, %v1806
    %v1919 = vadd.f32 %v1759, %v1807
    %v1920 = vadd.f32 %v1760, %v1808
    %v1921 = vadd.f32 %v1761, %v1809
    %v1922 = vadd.f32 %v1762, %v1810
    %v1923 = vadd.f32 %v1763, %v1811
    %v1924 = vadd.f32 %v1764, %v1812
    %v1925 = vadd.f32 %v1765, %v1813
    %v1926 = vadd.f32 %v1766, %v1814
    %v1927 = vadd.f32 %v1767, %v1815
    %v1928 = vadd.f32 %v1768, %v1816
    %v1929 = vadd.f32 %v1769, %v1817
    %v1930 = vadd.f32 %v1770, %v1818
    %v1931 = vadd.f32 %v1915, %v1835
    %v1932 = vadd.f32 %v1916, %v1836
    %v1933 = vadd.f32 %v1917, %v1837
    %v1934 = vadd.f32 %v1918, %v1838
    %v1935 = vadd.f32 %v1919, %v1839
    %v1936 = vadd.f32 %v1920, %v1840
    %v1937 = vadd.f32 %v1921, %v1841
    %v1938 = vadd.f32 %v1922, %v1842
    %v1939 = vadd.f32 %v1923, %v1843
    %v1940 = vadd.f32 %v1924, %v1844
    %v1941 = vadd.f32 %v1925, %v1845
    %v1942 = vadd.f32 %v1926, %v1846
    %v1943 = vadd.f32 %v1927, %v1847
    %v1944 = vadd.f32 %v1928, %v1848
    %v1945 = vadd.f32 %v1929, %v1849
    %v1946 = vadd.f32 %v1930, %v1850
    %v1947 = vmul.f32 %v1707, 0.25
    %v1948 = vmul.f32 %v1708, 0.25
    %v1949 = vmul.f32 %v1709, 0.25
    %v1950 = vmul.f32 %v1710, 0.25
    %v1951 = vmul.f32 %v1711, 0.25
    %v1952 = vmul.f32 %v1712, 0.25
    %v1953 = vmul.f32 %v1713, 0.25
    %v1954 = vmul.f32 %v1714, 0.25
    %v1955 = vmul.f32 %v1715, 0.25
    %v1956 = vmul.f32 %v1716, 0.25
    %v1957 = vmul.f32 %v1717, 0.25
    %v1958 = vmul.f32 %v1718, 0.25
    %v1959 = vmul.f32 %v1719, 0.25
    %v1960 = vmul.f32 %v1720, 0.25
    %v1961 = vmul.f32 %v1721, 0.25
    %v1962 = vmul.f32 %v1722, 0.25
    %v1963 = vadd.f32 %v1931, %v1947
    %v1964 = vadd.f32 %v1932, %v1948
    %v1965 = vadd.f32 %v1933, %v1949
    %v1966 = vadd.f32 %v1934, %v1950
    %v1967 = vadd.f32 %v1935, %v1951
    %v1968 = vadd.f32 %v1936, %v1952
    %v1969 = vadd.f32 %v1937, %v1953
    %v1970 = vadd.f32 %v1938, %v1954
    %v1971 = vadd.f32 %v1939, %v1955
    %v1972 = vadd.f32 %v1940, %v1956
    %v1973 = vadd.f32 %v1941, %v1957
    %v1974 = vadd.f32 %v1942, %v1958
    %v1975 = vadd.f32 %v1943, %v1959
    %v1976 = vadd.f32 %v1944, %v1960
    %v1977 = vadd.f32 %v1945, %v1961
    %v1978 = vadd.f32 %v1946, %v1962
    %v1979 = vmul.f32 %v1627, 0.2236068
    %v1980 = vmul.f32 %v1628, 0.2236068
    %v1981 = vmul.f32 %v1629, 0.2236068
    %v1982 = vmul.f32 %v1630, 0.2236068
    %v1983 = vmul.f32 %v1631, 0.2236068
    %v1984 = vmul.f32 %v1632, 0.2236068
    %v1985 = vmul.f32 %v1633, 0.2236068
    %v1986 = vmul.f32 %v1634, 0.2236068
    %v1987 = vmul.f32 %v1635, 0.2236068
    %v1988 = vmul.f32 %v1636, 0.2236068
    %v1989 = vmul.f32 %v1637, 0.2236068
    %v1990 = vmul.f32 %v1638, 0.2236068
    %v1991 = vmul.f32 %v1639, 0.2236068
    %v1992 = vmul.f32 %v1640, 0.2236068
    %v1993 = vmul.f32 %v1641, 0.2236068
    %v1994 = vmul.f32 %v1642, 0.2236068
    %v1995 = vmul.f32 %v1643, 0.2236068
    %v1996 = vmul.f32 %v1644, 0.2236068
    %v1997 = vmul.f32 %v1645, 0.2236068
    %v1998 = vmul.f32 %v1646, 0.2236068
    %v1999 = vmul.f32 %v1647, 0.2236068
    %v2000 = vmul.f32 %v1648, 0.2236068
    %v2001 = vmul.f32 %v1649, 0.2236068
    %v2002 = vmul.f32 %v1650, 0.2236068
    %v2003 = vmul.f32 %v1651, 0.2236068
    %v2004 = vmul.f32 %v1652, 0.2236068
    %v2005 = vmul.f32 %v1653, 0.2236068
    %v2006 = vmul.f32 %v1654, 0.2236068
    %v2007 = vmul.f32 %v1655, 0.2236068
    %v2008 = vmul.f32 %v1656, 0.2236068
    %v2009 = vmul.f32 %v1657, 0.2236068
    %v2010 = vmul.f32 %v1658, 0.2236068
    %v2011 = vadd.f32 %v1979, %v1995
    %v2012 = vadd.f32 %v1980, %v1996
    %v2013 = vadd.f32 %v1981, %v1997
    %v2014 = vadd.f32 %v1982, %v1998
    %v2015 = vadd.f32 %v1983, %v1999
    %v2016 = vadd.f32 %v1984, %v2000
    %v2017 = vadd.f32 %v1985, %v2001
    %v2018 = vadd.f32 %v1986, %v2002
    %v2019 = vadd.f32 %v1987, %v2003
    %v2020 = vadd.f32 %v1988, %v2004
    %v2021 = vadd.f32 %v1989, %v2005
    %v2022 = vadd.f32 %v1990, %v2006
    %v2023 = vadd.f32 %v1991, %v2007
    %v2024 = vadd.f32 %v1992, %v2008
    %v2025 = vadd.f32 %v1993, %v2009
    %v2026 = vadd.f32 %v1994, %v2010
    %v2027 = vmul.f32 %v1659, 0.2236068
    %v2028 = vmul.f32 %v1660, 0.2236068
    %v2029 = vmul.f32 %v1661, 0.2236068
    %v2030 = vmul.f32 %v1662, 0.2236068
    %v2031 = vmul.f32 %v1663, 0.2236068
    %v2032 = vmul.f32 %v1664, 0.2236068
    %v2033 = vmul.f32 %v1665, 0.2236068
    %v2034 = vmul.f32 %v1666, 0.2236068
    %v2035 = vmul.f32 %v1667, 0.2236068
    %v2036 = vmul.f32 %v1668, 0.2236068
    %v2037 = vmul.f32 %v1669, 0.2236068
    %v2038 = vmul.f32 %v1670, 0.2236068
    %v2039 = vmul.f32 %v1671, 0.2236068
    %v2040 = vmul.f32 %v1672, 0.2236068
    %v2041 = vmul.f32 %v1673, 0.2236068
    %v2042 = vmul.f32 %v1674, 0.2236068
    %v2043 = vadd.f32 %v2011, %v2027
    %v2044 = vadd.f32 %v2012, %v2028
    %v2045 = vadd.f32 %v2013, %v2029
    %v2046 = vadd.f32 %v2014, %v2030
    %v2047 = vadd.f32 %v2015, %v2031
    %v2048 = vadd.f32 %v2016, %v2032
    %v2049 = vadd.f32 %v2017, %v2033
    %v2050 = vadd.f32 %v2018, %v2034
    %v2051 = vadd.f32 %v2019, %v2035
    %v2052 = vadd.f32 %v2020, %v2036
    %v2053 = vadd.f32 %v2021, %v2037
    %v2054 = vadd.f32 %v2022, %v2038
    %v2055 = vadd.f32 %v2023, %v2039
    %v2056 = vadd.f32 %v2024, %v2040
    %v2057 = vadd.f32 %v2025, %v2041
    %v2058 = vadd.f32 %v2026, %v2042
    %v2059 = vmul.f32 %v1675, 0.19999999
    %v2060 = vmul.f32 %v1676, 0.19999999
    %v2061 = vmul.f32 %v1677, 0.19999999
    %v2062 = vmul.f32 %v1678, 0.19999999
    %v2063 = vmul.f32 %v1679, 0.19999999
    %v2064 = vmul.f32 %v1680, 0.19999999
    %v2065 = vmul.f32 %v1681, 0.19999999
    %v2066 = vmul.f32 %v1682, 0.19999999
    %v2067 = vmul.f32 %v1683, 0.19999999
    %v2068 = vmul.f32 %v1684, 0.19999999
    %v2069 = vmul.f32 %v1685, 0.19999999
    %v2070 = vmul.f32 %v1686, 0.19999999
    %v2071 = vmul.f32 %v1687, 0.19999999
    %v2072 = vmul.f32 %v1688, 0.19999999
    %v2073 = vmul.f32 %v1689, 0.19999999
    %v2074 = vmul.f32 %v1690, 0.19999999
    %v2075 = vadd.f32 %v2043, %v2059
    %v2076 = vadd.f32 %v2044, %v2060
    %v2077 = vadd.f32 %v2045, %v2061
    %v2078 = vadd.f32 %v2046, %v2062
    %v2079 = vadd.f32 %v2047, %v2063
    %v2080 = vadd.f32 %v2048, %v2064
    %v2081 = vadd.f32 %v2049, %v2065
    %v2082 = vadd.f32 %v2050, %v2066
    %v2083 = vadd.f32 %v2051, %v2067
    %v2084 = vadd.f32 %v2052, %v2068
    %v2085 = vadd.f32 %v2053, %v2069
    %v2086 = vadd.f32 %v2054, %v2070
    %v2087 = vadd.f32 %v2055, %v2071
    %v2088 = vadd.f32 %v2056, %v2072
    %v2089 = vadd.f32 %v2057, %v2073
    %v2090 = vadd.f32 %v2058, %v2074
    %v2091 = vmul.f32 %v1739, 0.19999999
    %v2092 = vmul.f32 %v1740, 0.19999999
    %v2093 = vmul.f32 %v1741, 0.19999999
    %v2094 = vmul.f32 %v1742, 0.19999999
    %v2095 = vmul.f32 %v1743, 0.19999999
    %v2096 = vmul.f32 %v1744, 0.19999999
    %v2097 = vmul.f32 %v1745, 0.19999999
    %v2098 = vmul.f32 %v1746, 0.19999999
    %v2099 = vmul.f32 %v1747, 0.19999999
    %v2100 = vmul.f32 %v1748, 0.19999999
    %v2101 = vmul.f32 %v1749, 0.19999999
    %v2102 = vmul.f32 %v1750, 0.19999999
    %v2103 = vmul.f32 %v1751, 0.19999999
    %v2104 = vmul.f32 %v1752, 0.19999999
    %v2105 = vmul.f32 %v1753, 0.19999999
    %v2106 = vmul.f32 %v1754, 0.19999999
    %v2107 = vadd.f32 %v2075, %v2091
    %v2108 = vadd.f32 %v2076, %v2092
    %v2109 = vadd.f32 %v2077, %v2093
    %v2110 = vadd.f32 %v2078, %v2094
    %v2111 = vadd.f32 %v2079, %v2095
    %v2112 = vadd.f32 %v2080, %v2096
    %v2113 = vadd.f32 %v2081, %v2097
    %v2114 = vadd.f32 %v2082, %v2098
    %v2115 = vadd.f32 %v2083, %v2099
    %v2116 = vadd.f32 %v2084, %v2100
    %v2117 = vadd.f32 %v2085, %v2101
    %v2118 = vadd.f32 %v2086, %v2102
    %v2119 = vadd.f32 %v2087, %v2103
    %v2120 = vadd.f32 %v2088, %v2104
    %v2121 = vadd.f32 %v2089, %v2105
    %v2122 = vadd.f32 %v2090, %v2106
    %v2123 = vmul.f32 %v1691, 0.25
    %v2124 = vmul.f32 %v1692, 0.25
    %v2125 = vmul.f32 %v1693, 0.25
    %v2126 = vmul.f32 %v1694, 0.25
    %v2127 = vmul.f32 %v1695, 0.25
    %v2128 = vmul.f32 %v1696, 0.25
    %v2129 = vmul.f32 %v1697, 0.25
    %v2130 = vmul.f32 %v1698, 0.25
    %v2131 = vmul.f32 %v1699, 0.25
    %v2132 = vmul.f32 %v1700, 0.25
    %v2133 = vmul.f32 %v1701, 0.25
    %v2134 = vmul.f32 %v1702, 0.25
    %v2135 = vmul.f32 %v1703, 0.25
    %v2136 = vmul.f32 %v1704, 0.25
    %v2137 = vmul.f32 %v1705, 0.25
    %v2138 = vmul.f32 %v1706, 0.25
    %v2139 = vadd.f32 %v2123, %v1947
    %v2140 = vadd.f32 %v2124, %v1948
    %v2141 = vadd.f32 %v2125, %v1949
    %v2142 = vadd.f32 %v2126, %v1950
    %v2143 = vadd.f32 %v2127, %v1951
    %v2144 = vadd.f32 %v2128, %v1952
    %v2145 = vadd.f32 %v2129, %v1953
    %v2146 = vadd.f32 %v2130, %v1954
    %v2147 = vadd.f32 %v2131, %v1955
    %v2148 = vadd.f32 %v2132, %v1956
    %v2149 = vadd.f32 %v2133, %v1957
    %v2150 = vadd.f32 %v2134, %v1958
    %v2151 = vadd.f32 %v2135, %v1959
    %v2152 = vadd.f32 %v2136, %v1960
    %v2153 = vadd.f32 %v2137, %v1961
    %v2154 = vadd.f32 %v2138, %v1962
    %v2155 = vadd.f32 %v2139, %v1883
    %v2156 = vadd.f32 %v2140, %v1884
    %v2157 = vadd.f32 %v2141, %v1885
    %v2158 = vadd.f32 %v2142, %v1886
    %v2159 = vadd.f32 %v2143, %v1887
    %v2160 = vadd.f32 %v2144, %v1888
    %v2161 = vadd.f32 %v2145, %v1889
    %v2162 = vadd.f32 %v2146, %v1890
    %v2163 = vadd.f32 %v2147, %v1891
    %v2164 = vadd.f32 %v2148, %v1892
    %v2165 = vadd.f32 %v2149, %v1893
    %v2166 = vadd.f32 %v2150, %v1894
    %v2167 = vadd.f32 %v2151, %v1895
    %v2168 = vadd.f32 %v2152, %v1896
    %v2169 = vadd.f32 %v2153, %v1897
    %v2170 = vadd.f32 %v2154, %v1898
    %v2171 = vmul.f32 %v1739, 0.2236068
    %v2172 = vmul.f32 %v1740, 0.2236068
    %v2173 = vmul.f32 %v1741, 0.2236068
    %v2174 = vmul.f32 %v1742, 0.2236068
    %v2175 = vmul.f32 %v1743, 0.2236068
    %v2176 = vmul.f32 %v1744, 0.2236068
    %v2177 = vmul.f32 %v1745, 0.2236068
    %v2178 = vmul.f32 %v1746, 0.2236068
    %v2179 = vmul.f32 %v1747, 0.2236068
    %v2180 = vmul.f32 %v1748, 0.2236068
    %v2181 = vmul.f32 %v1749, 0.2236068
    %v2182 = vmul.f32 %v1750, 0.2236068
    %v2183 = vmul.f32 %v1751, 0.2236068
    %v2184 = vmul.f32 %v1752, 0.2236068
    %v2185 = vmul.f32 %v1753, 0.2236068
    %v2186 = vmul.f32 %v1754, 0.2236068
    %v2187 = vadd.f32 %v2155, %v2171
    %v2188 = vadd.f32 %v2156, %v2172
    %v2189 = vadd.f32 %v2157, %v2173
    %v2190 = vadd.f32 %v2158, %v2174
    %v2191 = vadd.f32 %v2159, %v2175
    %v2192 = vadd.f32 %v2160, %v2176
    %v2193 = vadd.f32 %v2161, %v2177
    %v2194 = vadd.f32 %v2162, %v2178
    %v2195 = vadd.f32 %v2163, %v2179
    %v2196 = vadd.f32 %v2164, %v2180
    %v2197 = vadd.f32 %v2165, %v2181
    %v2198 = vadd.f32 %v2166, %v2182
    %v2199 = vadd.f32 %v2167, %v2183
    %v2200 = vadd.f32 %v2168, %v2184
    %v2201 = vadd.f32 %v2169, %v2185
    %v2202 = vadd.f32 %v2170, %v2186
    %v2203 = vadd.f32 %v1803, %v2123
    %v2204 = vadd.f32 %v1804, %v2124
    %v2205 = vadd.f32 %v1805, %v2125
    %v2206 = vadd.f32 %v1806, %v2126
    %v2207 = vadd.f32 %v1807, %v2127
    %v2208 = vadd.f32 %v1808, %v2128
    %v2209 = vadd.f32 %v1809, %v2129
    %v2210 = vadd.f32 %v1810, %v2130
    %v2211 = vadd.f32 %v1811, %v2131
    %v2212 = vadd.f32 %v1812, %v2132
    %v2213 = vadd.f32 %v1813, %v2133
    %v2214 = vadd.f32 %v1814, %v2134
    %v2215 = vadd.f32 %v1815, %v2135
    %v2216 = vadd.f32 %v1816, %v2136
    %v2217 = vadd.f32 %v1817, %v2137
    %v2218 = vadd.f32 %v1818, %v2138
    %v2219 = vadd.f32 %v2203, %v1947
    %v2220 = vadd.f32 %v2204, %v1948
    %v2221 = vadd.f32 %v2205, %v1949
    %v2222 = vadd.f32 %v2206, %v1950
    %v2223 = vadd.f32 %v2207, %v1951
    %v2224 = vadd.f32 %v2208, %v1952
    %v2225 = vadd.f32 %v2209, %v1953
    %v2226 = vadd.f32 %v2210, %v1954
    %v2227 = vadd.f32 %v2211, %v1955
    %v2228 = vadd.f32 %v2212, %v1956
    %v2229 = vadd.f32 %v2213, %v1957
    %v2230 = vadd.f32 %v2214, %v1958
    %v2231 = vadd.f32 %v2215, %v1959
    %v2232 = vadd.f32 %v2216, %v1960
    %v2233 = vadd.f32 %v2217, %v1961
    %v2234 = vadd.f32 %v2218, %v1962
    %v2235 = vadd.f32 %v2219, %v2171
    %v2236 = vadd.f32 %v2220, %v2172
    %v2237 = vadd.f32 %v2221, %v2173
    %v2238 = vadd.f32 %v2222, %v2174
    %v2239 = vadd.f32 %v2223, %v2175
    %v2240 = vadd.f32 %v2224, %v2176
    %v2241 = vadd.f32 %v2225, %v2177
    %v2242 = vadd.f32 %v2226, %v2178
    %v2243 = vadd.f32 %v2227, %v2179
    %v2244 = vadd.f32 %v2228, %v2180
    %v2245 = vadd.f32 %v2229, %v2181
    %v2246 = vadd.f32 %v2230, %v2182
    %v2247 = vadd.f32 %v2231, %v2183
    %v2248 = vadd.f32 %v2232, %v2184
    %v2249 = vadd.f32 %v2233, %v2185
    %v2250 = vadd.f32 %v2234, %v2186
    %v2251 = vadd.f32 %v1771, %v2123
    %v2252 = vadd.f32 %v1772, %v2124
    %v2253 = vadd.f32 %v1773, %v2125
    %v2254 = vadd.f32 %v1774, %v2126
    %v2255 = vadd.f32 %v1775, %v2127
    %v2256 = vadd.f32 %v1776, %v2128
    %v2257 = vadd.f32 %v1777, %v2129
    %v2258 = vadd.f32 %v1778, %v2130
    %v2259 = vadd.f32 %v1779, %v2131
    %v2260 = vadd.f32 %v1780, %v2132
    %v2261 = vadd.f32 %v1781, %v2133
    %v2262 = vadd.f32 %v1782, %v2134
    %v2263 = vadd.f32 %v1783, %v2135
    %v2264 = vadd.f32 %v1784, %v2136
    %v2265 = vadd.f32 %v1785, %v2137
    %v2266 = vadd.f32 %v1786, %v2138
    %v2267 = vadd.f32 %v2251, %v1883
    %v2268 = vadd.f32 %v2252, %v1884
    %v2269 = vadd.f32 %v2253, %v1885
    %v2270 = vadd.f32 %v2254, %v1886
    %v2271 = vadd.f32 %v2255, %v1887
    %v2272 = vadd.f32 %v2256, %v1888
    %v2273 = vadd.f32 %v2257, %v1889
    %v2274 = vadd.f32 %v2258, %v1890
    %v2275 = vadd.f32 %v2259, %v1891
    %v2276 = vadd.f32 %v2260, %v1892
    %v2277 = vadd.f32 %v2261, %v1893
    %v2278 = vadd.f32 %v2262, %v1894
    %v2279 = vadd.f32 %v2263, %v1895
    %v2280 = vadd.f32 %v2264, %v1896
    %v2281 = vadd.f32 %v2265, %v1897
    %v2282 = vadd.f32 %v2266, %v1898
    %v2283 = vadd.f32 %v2267, %v2171
    %v2284 = vadd.f32 %v2268, %v2172
    %v2285 = vadd.f32 %v2269, %v2173
    %v2286 = vadd.f32 %v2270, %v2174
    %v2287 = vadd.f32 %v2271, %v2175
    %v2288 = vadd.f32 %v2272, %v2176
    %v2289 = vadd.f32 %v2273, %v2177
    %v2290 = vadd.f32 %v2274, %v2178
    %v2291 = vadd.f32 %v2275, %v2179
    %v2292 = vadd.f32 %v2276, %v2180
    %v2293 = vadd.f32 %v2277, %v2181
    %v2294 = vadd.f32 %v2278, %v2182
    %v2295 = vadd.f32 %v2279, %v2183
    %v2296 = vadd.f32 %v2280, %v2184
    %v2297 = vadd.f32 %v2281, %v2185
    %v2298 = vadd.f32 %v2282, %v2186
    %v2299 = vmul.f32 %v1691, 0.2236068
    %v2300 = vmul.f32 %v1692, 0.2236068
    %v2301 = vmul.f32 %v1693, 0.2236068
    %v2302 = vmul.f32 %v1694, 0.2236068
    %v2303 = vmul.f32 %v1695, 0.2236068
    %v2304 = vmul.f32 %v1696, 0.2236068
    %v2305 = vmul.f32 %v1697, 0.2236068
    %v2306 = vmul.f32 %v1698, 0.2236068
    %v2307 = vmul.f32 %v1699, 0.2236068
    %v2308 = vmul.f32 %v1700, 0.2236068
    %v2309 = vmul.f32 %v1701, 0.2236068
    %v2310 = vmul.f32 %v1702, 0.2236068
    %v2311 = vmul.f32 %v1703, 0.2236068
    %v2312 = vmul.f32 %v1704, 0.2236068
    %v2313 = vmul.f32 %v1705, 0.2236068
    %v2314 = vmul.f32 %v1706, 0.2236068
    %v2315 = vadd.f32 %v2059, %v2299
    %v2316 = vadd.f32 %v2060, %v2300
    %v2317 = vadd.f32 %v2061, %v2301
    %v2318 = vadd.f32 %v2062, %v2302
    %v2319 = vadd.f32 %v2063, %v2303
    %v2320 = vadd.f32 %v2064, %v2304
    %v2321 = vadd.f32 %v2065, %v2305
    %v2322 = vadd.f32 %v2066, %v2306
    %v2323 = vadd.f32 %v2067, %v2307
    %v2324 = vadd.f32 %v2068, %v2308
    %v2325 = vadd.f32 %v2069, %v2309
    %v2326 = vadd.f32 %v2070, %v2310
    %v2327 = vadd.f32 %v2071, %v2311
    %v2328 = vadd.f32 %v2072, %v2312
    %v2329 = vadd.f32 %v2073, %v2313
    %v2330 = vadd.f32 %v2074, %v2314
    %v2331 = vmul.f32 %v1707, 0.2236068
    %v2332 = vmul.f32 %v1708, 0.2236068
    %v2333 = vmul.f32 %v1709, 0.2236068
    %v2334 = vmul.f32 %v1710, 0.2236068
    %v2335 = vmul.f32 %v1711, 0.2236068
    %v2336 = vmul.f32 %v1712, 0.2236068
    %v2337 = vmul.f32 %v1713, 0.2236068
    %v2338 = vmul.f32 %v1714, 0.2236068
    %v2339 = vmul.f32 %v1715, 0.2236068
    %v2340 = vmul.f32 %v1716, 0.2236068
    %v2341 = vmul.f32 %v1717, 0.2236068
    %v2342 = vmul.f32 %v1718, 0.2236068
    %v2343 = vmul.f32 %v1719, 0.2236068
    %v2344 = vmul.f32 %v1720, 0.2236068
    %v2345 = vmul.f32 %v1721, 0.2236068
    %v2346 = vmul.f32 %v1722, 0.2236068
    %v2347 = vadd.f32 %v2315, %v2331
    %v2348 = vadd.f32 %v2316, %v2332
    %v2349 = vadd.f32 %v2317, %v2333
    %v2350 = vadd.f32 %v2318, %v2334
    %v2351 = vadd.f32 %v2319, %v2335
    %v2352 = vadd.f32 %v2320, %v2336
    %v2353 = vadd.f32 %v2321, %v2337
    %v2354 = vadd.f32 %v2322, %v2338
    %v2355 = vadd.f32 %v2323, %v2339
    %v2356 = vadd.f32 %v2324, %v2340
    %v2357 = vadd.f32 %v2325, %v2341
    %v2358 = vadd.f32 %v2326, %v2342
    %v2359 = vadd.f32 %v2327, %v2343
    %v2360 = vadd.f32 %v2328, %v2344
    %v2361 = vadd.f32 %v2329, %v2345
    %v2362 = vadd.f32 %v2330, %v2346
    %v2363 = vmul.f32 %v1723, 0.2236068
    %v2364 = vmul.f32 %v1724, 0.2236068
    %v2365 = vmul.f32 %v1725, 0.2236068
    %v2366 = vmul.f32 %v1726, 0.2236068
    %v2367 = vmul.f32 %v1727, 0.2236068
    %v2368 = vmul.f32 %v1728, 0.2236068
    %v2369 = vmul.f32 %v1729, 0.2236068
    %v2370 = vmul.f32 %v1730, 0.2236068
    %v2371 = vmul.f32 %v1731, 0.2236068
    %v2372 = vmul.f32 %v1732, 0.2236068
    %v2373 = vmul.f32 %v1733, 0.2236068
    %v2374 = vmul.f32 %v1734, 0.2236068
    %v2375 = vmul.f32 %v1735, 0.2236068
    %v2376 = vmul.f32 %v1736, 0.2236068
    %v2377 = vmul.f32 %v1737, 0.2236068
    %v2378 = vmul.f32 %v1738, 0.2236068
    %v2379 = vadd.f32 %v2347, %v2363
    %v2380 = vadd.f32 %v2348, %v2364
    %v2381 = vadd.f32 %v2349, %v2365
    %v2382 = vadd.f32 %v2350, %v2366
    %v2383 = vadd.f32 %v2351, %v2367
    %v2384 = vadd.f32 %v2352, %v2368
    %v2385 = vadd.f32 %v2353, %v2369
    %v2386 = vadd.f32 %v2354, %v2370
    %v2387 = vadd.f32 %v2355, %v2371
    %v2388 = vadd.f32 %v2356, %v2372
    %v2389 = vadd.f32 %v2357, %v2373
    %v2390 = vadd.f32 %v2358, %v2374
    %v2391 = vadd.f32 %v2359, %v2375
    %v2392 = vadd.f32 %v2360, %v2376
    %v2393 = vadd.f32 %v2361, %v2377
    %v2394 = vadd.f32 %v2362, %v2378
    %v2395 = vadd.f32 %v2379, %v2091
    %v2396 = vadd.f32 %v2380, %v2092
    %v2397 = vadd.f32 %v2381, %v2093
    %v2398 = vadd.f32 %v2382, %v2094
    %v2399 = vadd.f32 %v2383, %v2095
    %v2400 = vadd.f32 %v2384, %v2096
    %v2401 = vadd.f32 %v2385, %v2097
    %v2402 = vadd.f32 %v2386, %v2098
    %v2403 = vadd.f32 %v2387, %v2099
    %v2404 = vadd.f32 %v2388, %v2100
    %v2405 = vadd.f32 %v2389, %v2101
    %v2406 = vadd.f32 %v2390, %v2102
    %v2407 = vadd.f32 %v2391, %v2103
    %v2408 = vadd.f32 %v2392, %v2104
    %v2409 = vadd.f32 %v2393, %v2105
    %v2410 = vadd.f32 %v2394, %v2106
    %v2411 = vpack.c.bf16 %v1852, %v1851
    %v2412 = vpack.c.bf16 %v1854, %v1853
    %v2413 = vpack.c.bf16 %v1856, %v1855
    %v2414 = vpack.c.bf16 %v1858, %v1857
    %v2415 = vpack.c.bf16 %v1860, %v1859
    %v2416 = vpack.c.bf16 %v1862, %v1861
    %v2417 = vpack.c.bf16 %v1864, %v1863
    %v2418 = vpack.c.bf16 %v1866, %v1865
    %v2419 = vpack.c.bf16 %v1900, %v1899
    %v2420 = vpack.c.bf16 %v1902, %v1901
    %v2421 = vpack.c.bf16 %v1904, %v1903
    %v2422 = vpack.c.bf16 %v1906, %v1905
    %v2423 = vpack.c.bf16 %v1908, %v1907
    %v2424 = vpack.c.bf16 %v1910, %v1909
    %v2425 = vpack.c.bf16 %v1912, %v1911
    %v2426 = vpack.c.bf16 %v1914, %v1913
    %v2427 = vpack.c.bf16 %v1964, %v1963
    %v2428 = vpack.c.bf16 %v1966, %v1965
    %v2429 = vpack.c.bf16 %v1968, %v1967
    %v2430 = vpack.c.bf16 %v1970, %v1969
    %v2431 = vpack.c.bf16 %v1972, %v1971
    %v2432 = vpack.c.bf16 %v1974, %v1973
    %v2433 = vpack.c.bf16 %v1976, %v1975
    %v2434 = vpack.c.bf16 %v1978, %v1977
    %v2435 = vpack.c.bf16 %v2108, %v2107
    %v2436 = vpack.c.bf16 %v2110, %v2109
    %v2437 = vpack.c.bf16 %v2112, %v2111
    %v2438 = vpack.c.bf16 %v2114, %v2113
    %v2439 = vpack.c.bf16 %v2116, %v2115
    %v2440 = vpack.c.bf16 %v2118, %v2117
    %v2441 = vpack.c.bf16 %v2120, %v2119
    %v2442 = vpack.c.bf16 %v2122, %v2121
    %v2443 = vpack.c.bf16 %v2188, %v2187
    %v2444 = vpack.c.bf16 %v2190, %v2189
    %v2445 = vpack.c.bf16 %v2192, %v2191
    %v2446 = vpack.c.bf16 %v2194, %v2193
    %v2447 = vpack.c.bf16 %v2196, %v2195
    %v2448 = vpack.c.bf16 %v2198, %v2197
    %v2449 = vpack.c.bf16 %v2200, %v2199
    %v2450 = vpack.c.bf16 %v2202, %v2201
    %v2451 = vpack.c.bf16 %v2236, %v2235
    %v2452 = vpack.c.bf16 %v2238, %v2237
    %v2453 = vpack.c.bf16 %v2240, %v2239
    %v2454 = vpack.c.bf16 %v2242, %v2241
    %v2455 = vpack.c.bf16 %v2244, %v2243
    %v2456 = vpack.c.bf16 %v2246, %v2245
    %v2457 = vpack.c.bf16 %v2248, %v2247
    %v2458 = vpack.c.bf16 %v2250, %v2249
    %v2459 = vpack.c.bf16 %v2284, %v2283
    %v2460 = vpack.c.bf16 %v2286, %v2285
    %v2461 = vpack.c.bf16 %v2288, %v2287
    %v2462 = vpack.c.bf16 %v2290, %v2289
    %v2463 = vpack.c.bf16 %v2292, %v2291
    %v2464 = vpack.c.bf16 %v2294, %v2293
    %v2465 = vpack.c.bf16 %v2296, %v2295
    %v2466 = vpack.c.bf16 %v2298, %v2297
    %v2467 = vpack.c.bf16 %v2396, %v2395
    %v2468 = vpack.c.bf16 %v2398, %v2397
    %v2469 = vpack.c.bf16 %v2400, %v2399
    %v2470 = vpack.c.bf16 %v2402, %v2401
    %v2471 = vpack.c.bf16 %v2404, %v2403
    %v2472 = vpack.c.bf16 %v2406, %v2405
    %v2473 = vpack.c.bf16 %v2408, %v2407
    %v2474 = vpack.c.bf16 %v2410, %v2409
    %v2475 = vld [vmem:[%s2] sm:$0xf]
    %v2476 = vld [vmem:[%s2 + $0x4] sm:$0xf]
    %v2477 = vld [vmem:[%s2 + $0x8] sm:$0xf]
    %v2478 = vld [vmem:[%s2 + $0xc] sm:$0xf]
    %v2479 = vld [vmem:[%s2 + $0x10] sm:$0xf]
    %v2480 = vld [vmem:[%s2 + $0x14] sm:$0xf]
    %v2481 = vld [vmem:[%s2 + $0x18] sm:$0xf]
    %v2482 = vld [vmem:[%s2 + $0x1c] sm:$0xf]
    %v2483 = vlaneseq
    %v2484 = vshrl.u32 %v2483, 7
    %v2485 = vsub.s32 1, %v2484
    %v2486 = vrot.slane %v28, %v2485
    %v2495 = vunpack.c.l.b16 %v2475
    %v2496 = vunpack.c.l.b16 %v2476
    %v2497 = vunpack.c.l.b16 %v2477
    %v2498 = vunpack.c.l.b16 %v2478
    %v2499 = vunpack.c.l.b16 %v2479
    %v2500 = vunpack.c.l.b16 %v2480
    %v2501 = vunpack.c.l.b16 %v2481
    %v2502 = vunpack.c.l.b16 %v2482
    %v2503 = vpack.c.b16 %v2496, %v2495
    %v2504 = vpack.c.b16 %v2498, %v2497
    %v2505 = vpack.c.b16 %v2500, %v2499
    %v2506 = vpack.c.b16 %v2502, %v2501
    %vm2511 = vcmask 523264
    %v2513 = vsel %vm2511, %v2411, 0
    %v2516 = vsel %vm2511, %v2412, 0
    %v2519 = vsel %vm2511, %v2413, 0
    %v2522 = vsel %vm2511, %v2414, 0
    %v2525 = vsel %vm2511, %v2415, 0
    %v2528 = vsel %vm2511, %v2416, 0
    %v2531 = vsel %vm2511, %v2417, 0
    %v2534 = vsel %vm2511, %v2418, 0
    %v2537 = vsel %vm2511, %v2419, 0
    %v2540 = vsel %vm2511, %v2420, 0
    %v2543 = vsel %vm2511, %v2421, 0
    %v2546 = vsel %vm2511, %v2422, 0
    %v2549 = vsel %vm2511, %v2423, 0
    %v2552 = vsel %vm2511, %v2424, 0
    %v2555 = vsel %vm2511, %v2425, 0
    %v2558 = vsel %vm2511, %v2426, 0
    %v2561 = vsel %vm2511, %v2427, 0
    %v2564 = vsel %vm2511, %v2428, 0
    %v2567 = vsel %vm2511, %v2429, 0
    %v2570 = vsel %vm2511, %v2430, 0
    %v2573 = vsel %vm2511, %v2431, 0
    %v2576 = vsel %vm2511, %v2432, 0
    %v2579 = vsel %vm2511, %v2433, 0
    %v2582 = vsel %vm2511, %v2434, 0
    %v2585 = vsel %vm2511, %v2435, 0
    %v2588 = vsel %vm2511, %v2436, 0
    %v2591 = vsel %vm2511, %v2437, 0
    %v2594 = vsel %vm2511, %v2438, 0
    %v2597 = vsel %vm2511, %v2439, 0
    %v2600 = vsel %vm2511, %v2440, 0
    %v2603 = vsel %vm2511, %v2441, 0
    %v2606 = vsel %vm2511, %v2442, 0
    %v2609 = vsel %vm2511, %v2443, 0
    %v2612 = vsel %vm2511, %v2444, 0
    %v2615 = vsel %vm2511, %v2445, 0
    %v2618 = vsel %vm2511, %v2446, 0
    %v2621 = vsel %vm2511, %v2447, 0
    %v2624 = vsel %vm2511, %v2448, 0
    %v2627 = vsel %vm2511, %v2449, 0
    %v2630 = vsel %vm2511, %v2450, 0
    %v2633 = vsel %vm2511, %v2451, 0
    %v2636 = vsel %vm2511, %v2452, 0
    %v2639 = vsel %vm2511, %v2453, 0
    %v2642 = vsel %vm2511, %v2454, 0
    %v2645 = vsel %vm2511, %v2455, 0
    %v2648 = vsel %vm2511, %v2456, 0
    %v2651 = vsel %vm2511, %v2457, 0
    %v2654 = vsel %vm2511, %v2458, 0
    %v2657 = vsel %vm2511, %v2459, 0
    %v2660 = vsel %vm2511, %v2460, 0
    %v2663 = vsel %vm2511, %v2461, 0
    %v2666 = vsel %vm2511, %v2462, 0
    %v2669 = vsel %vm2511, %v2463, 0
    %v2672 = vsel %vm2511, %v2464, 0
    %v2675 = vsel %vm2511, %v2465, 0
    %v2678 = vsel %vm2511, %v2466, 0
    %v2681 = vsel %vm2511, %v2467, 0
    %v2684 = vsel %vm2511, %v2468, 0
    %v2687 = vsel %vm2511, %v2469, 0
    %v2690 = vsel %vm2511, %v2470, 0
    %v2693 = vsel %vm2511, %v2471, 0
    %v2696 = vsel %vm2511, %v2472, 0
    %v2699 = vsel %vm2511, %v2473, 0
    %v2702 = vsel %vm2511, %v2474, 0
    %2704 = vmatprep.subr.bf16.mxu0 0
    %2705 = vmatpush1.bf16.msra.mxu0 0
    %2706 = vmatprep.subr.bf16.mxu0 0
    %2707 = vmatpush1.bf16.msra.mxu0 0
    %2708 = vmatprep.subr.bf16.mxu0 0
    %2709 = vmatpush1.bf16.msra.mxu0 0
    %2710 = vmatprep.subr.bf16.mxu0 0
    %2711 = vmatpush1.bf16.msra.mxu0 0
    %2712 = vmatprep.subr.bf16.mxu0 0
    %2713 = vmatpush1.bf16.msra.mxu0 %v2506
    %2714 = vmatprep.subr.bf16.mxu0 0
    %2715 = vmatpush1.bf16.msra.mxu0 %v2505
    %2716 = vmatprep.subr.bf16.mxu0 0
    %2717 = vmatpush1.bf16.msra.mxu0 %v2504
    %2718 = vmatprep.subr.bf16.mxu0 0
    %2719 = vmatpush1.bf16.msra.mxu0 %v2503
    %2720 = vmatprep.subr.bf16.mxu0 0
    %2721 = vmatpush2.bf16.msra.mxu0 0
    %2722 = vmatprep.subr.bf16.mxu0 0
    %2723 = vmatpush2.bf16.msra.mxu0 0
    %2724 = vmatprep.subr.bf16.mxu0 0
    %2725 = vmatpush2.bf16.msra.mxu0 0
    %2726 = vmatprep.subr.bf16.mxu0 0
    %2727 = vmatpush2.bf16.msra.mxu0 0
    %2728 = vmatprep.subr.bf16.mxu0 0
    %2729 = vmatpush2.bf16.msra.mxu0 0
    %2730 = vmatprep.subr.bf16.mxu0 0
    %2731 = vmatpush2.bf16.msra.mxu0 0
    %2732 = vmatprep.subr.bf16.mxu0 0
    %2733 = vmatpush2.bf16.msra.mxu0 0
    %2734 = vmatprep.subr.bf16.mxu0 0
    %2735 = vmatpush2.bf16.msra.mxu0 0
    %2736 = vmatprep.mubr.bf16.mxu0 0
    %2737 = vmatmul.mubr.bf16.gmra.mxu0 %v2513
    %v2738 = vpop.f32.mrf.mxu0
    %v2739 = vadd.f32 %v2486, %v2738
    %v2740 = vpop.f32.mrf.mxu0
    %v2741 = vpop.f32.mrf.mxu0
    %v2742 = vadd.f32 %v2486, %v2741
    %v2743 = vpop.f32.mrf.mxu0
    %2744 = vmatprep.mubr.bf16.mxu0 0
    %2745 = vmatmul.mubr.bf16.gmra.mxu0 %v2516
    %v2746 = vpop.f32.mrf.mxu0
    %v2747 = vadd.f32 %v2486, %v2746
    %v2748 = vpop.f32.mrf.mxu0
    %v2749 = vpop.f32.mrf.mxu0
    %v2750 = vadd.f32 %v2486, %v2749
    %v2751 = vpop.f32.mrf.mxu0
    %2752 = vmatprep.mubr.bf16.mxu0 0
    %2753 = vmatmul.mubr.bf16.gmra.mxu0 %v2519
    %v2754 = vpop.f32.mrf.mxu0
    %v2755 = vadd.f32 %v2486, %v2754
    %v2756 = vpop.f32.mrf.mxu0
    %v2757 = vpop.f32.mrf.mxu0
    %v2758 = vadd.f32 %v2486, %v2757
    %v2759 = vpop.f32.mrf.mxu0
    %2760 = vmatprep.mubr.bf16.mxu0 0
    %2761 = vmatmul.mubr.bf16.gmra.mxu0 %v2522
    %v2762 = vpop.f32.mrf.mxu0
    %v2763 = vadd.f32 %v2486, %v2762
    %v2764 = vpop.f32.mrf.mxu0
    %v2765 = vpop.f32.mrf.mxu0
    %v2766 = vadd.f32 %v2486, %v2765
    %v2767 = vpop.f32.mrf.mxu0
    %2768 = vmatprep.mubr.bf16.mxu0 0
    %2769 = vmatmul.mubr.bf16.gmra.mxu0 %v2525
    %v2770 = vpop.f32.mrf.mxu0
    %v2771 = vadd.f32 %v2486, %v2770
    %v2772 = vpop.f32.mrf.mxu0
    %v2773 = vpop.f32.mrf.mxu0
    %v2774 = vadd.f32 %v2486, %v2773
    %v2775 = vpop.f32.mrf.mxu0
    %2776 = vmatprep.mubr.bf16.mxu0 0
    %2777 = vmatmul.mubr.bf16.gmra.mxu0 %v2528
    %v2778 = vpop.f32.mrf.mxu0
    %v2779 = vadd.f32 %v2486, %v2778
    %v2780 = vpop.f32.mrf.mxu0
    %v2781 = vpop.f32.mrf.mxu0
    %v2782 = vadd.f32 %v2486, %v2781
    %v2783 = vpop.f32.mrf.mxu0
    %2784 = vmatprep.mubr.bf16.mxu0 0
    %2785 = vmatmul.mubr.bf16.gmra.mxu0 %v2531
    %v2786 = vpop.f32.mrf.mxu0
    %v2787 = vadd.f32 %v2486, %v2786
    %v2788 = vpop.f32.mrf.mxu0
    %v2789 = vpop.f32.mrf.mxu0
    %v2790 = vadd.f32 %v2486, %v2789
    %v2791 = vpop.f32.mrf.mxu0
    %2792 = vmatprep.mubr.bf16.mxu0 0
    %2793 = vmatmul.mubr.bf16.gmra.mxu0 %v2534
    %v2794 = vpop.f32.mrf.mxu0
    %v2795 = vadd.f32 %v2486, %v2794
    %v2796 = vpop.f32.mrf.mxu0
    %v2797 = vpop.f32.mrf.mxu0
    %v2798 = vadd.f32 %v2486, %v2797
    %v2799 = vpop.f32.mrf.mxu0
    %2800 = vmatprep.mubr.bf16.mxu0 0
    %2801 = vmatmul.mubr.bf16.gmra.mxu0 %v2537
    %v2802 = vpop.f32.mrf.mxu0
    %v2803 = vadd.f32 %v2486, %v2802
    %v2804 = vpop.f32.mrf.mxu0
    %v2805 = vpop.f32.mrf.mxu0
    %v2806 = vadd.f32 %v2486, %v2805
    %v2807 = vpop.f32.mrf.mxu0
    %2808 = vmatprep.mubr.bf16.mxu0 0
    %2809 = vmatmul.mubr.bf16.gmra.mxu0 %v2540
    %v2810 = vpop.f32.mrf.mxu0
    %v2811 = vadd.f32 %v2486, %v2810
    %v2812 = vpop.f32.mrf.mxu0
    %v2813 = vpop.f32.mrf.mxu0
    %v2814 = vadd.f32 %v2486, %v2813
    %v2815 = vpop.f32.mrf.mxu0
    %2816 = vmatprep.mubr.bf16.mxu0 0
    %2817 = vmatmul.mubr.bf16.gmra.mxu0 %v2543
    %v2818 = vpop.f32.mrf.mxu0
    %v2819 = vadd.f32 %v2486, %v2818
    %v2820 = vpop.f32.mrf.mxu0
    %v2821 = vpop.f32.mrf.mxu0
    %v2822 = vadd.f32 %v2486, %v2821
    %v2823 = vpop.f32.mrf.mxu0
    %2824 = vmatprep.mubr.bf16.mxu0 0
    %2825 = vmatmul.mubr.bf16.gmra.mxu0 %v2546
    %v2826 = vpop.f32.mrf.mxu0
    %v2827 = vadd.f32 %v2486, %v2826
    %v2828 = vpop.f32.mrf.mxu0
    %v2829 = vpop.f32.mrf.mxu0
    %v2830 = vadd.f32 %v2486, %v2829
    %v2831 = vpop.f32.mrf.mxu0
    %2832 = vmatprep.mubr.bf16.mxu0 0
    %2833 = vmatmul.mubr.bf16.gmra.mxu0 %v2549
    %v2834 = vpop.f32.mrf.mxu0
    %v2835 = vadd.f32 %v2486, %v2834
    %v2836 = vpop.f32.mrf.mxu0
    %v2837 = vpop.f32.mrf.mxu0
    %v2838 = vadd.f32 %v2486, %v2837
    %v2839 = vpop.f32.mrf.mxu0
    %2840 = vmatprep.mubr.bf16.mxu0 0
    %2841 = vmatmul.mubr.bf16.gmra.mxu0 %v2552
    %v2842 = vpop.f32.mrf.mxu0
    %v2843 = vadd.f32 %v2486, %v2842
    %v2844 = vpop.f32.mrf.mxu0
    %v2845 = vpop.f32.mrf.mxu0
    %v2846 = vadd.f32 %v2486, %v2845
    %v2847 = vpop.f32.mrf.mxu0
    %2848 = vmatprep.mubr.bf16.mxu0 0
    %2849 = vmatmul.mubr.bf16.gmra.mxu0 %v2555
    %v2850 = vpop.f32.mrf.mxu0
    %v2851 = vadd.f32 %v2486, %v2850
    %v2852 = vpop.f32.mrf.mxu0
    %v2853 = vpop.f32.mrf.mxu0
    %v2854 = vadd.f32 %v2486, %v2853
    %v2855 = vpop.f32.mrf.mxu0
    %2856 = vmatprep.mubr.bf16.mxu0 0
    %2857 = vmatmul.mubr.bf16.gmra.mxu0 %v2558
    %v2858 = vpop.f32.mrf.mxu0
    %v2859 = vadd.f32 %v2486, %v2858
    %v2860 = vpop.f32.mrf.mxu0
    %v2861 = vpop.f32.mrf.mxu0
    %v2862 = vadd.f32 %v2486, %v2861
    %v2863 = vpop.f32.mrf.mxu0
    %2864 = vmatprep.mubr.bf16.mxu0 0
    %2865 = vmatmul.mubr.bf16.gmra.mxu0 %v2561
    %v2866 = vpop.f32.mrf.mxu0
    %v2867 = vadd.f32 %v2486, %v2866
    %v2868 = vpop.f32.mrf.mxu0
    %v2869 = vpop.f32.mrf.mxu0
    %v2870 = vadd.f32 %v2486, %v2869
    %v2871 = vpop.f32.mrf.mxu0
    %2872 = vmatprep.mubr.bf16.mxu0 0
    %2873 = vmatmul.mubr.bf16.gmra.mxu0 %v2564
    %v2874 = vpop.f32.mrf.mxu0
    %v2875 = vadd.f32 %v2486, %v2874
    %v2876 = vpop.f32.mrf.mxu0
    %v2877 = vpop.f32.mrf.mxu0
    %v2878 = vadd.f32 %v2486, %v2877
    %v2879 = vpop.f32.mrf.mxu0
    %2880 = vmatprep.mubr.bf16.mxu0 0
    %2881 = vmatmul.mubr.bf16.gmra.mxu0 %v2567
    %v2882 = vpop.f32.mrf.mxu0
    %v2883 = vadd.f32 %v2486, %v2882
    %v2884 = vpop.f32.mrf.mxu0
    %v2885 = vpop.f32.mrf.mxu0
    %v2886 = vadd.f32 %v2486, %v2885
    %v2887 = vpop.f32.mrf.mxu0
    %2888 = vmatprep.mubr.bf16.mxu0 0
    %2889 = vmatmul.mubr.bf16.gmra.mxu0 %v2570
    %v2890 = vpop.f32.mrf.mxu0
    %v2891 = vadd.f32 %v2486, %v2890
    %v2892 = vpop.f32.mrf.mxu0
    %v2893 = vpop.f32.mrf.mxu0
    %v2894 = vadd.f32 %v2486, %v2893
    %v2895 = vpop.f32.mrf.mxu0
    %2896 = vmatprep.mubr.bf16.mxu0 0
    %2897 = vmatmul.mubr.bf16.gmra.mxu0 %v2573
    %v2898 = vpop.f32.mrf.mxu0
    %v2899 = vadd.f32 %v2486, %v2898
    %v2900 = vpop.f32.mrf.mxu0
    %v2901 = vpop.f32.mrf.mxu0
    %v2902 = vadd.f32 %v2486, %v2901
    %v2903 = vpop.f32.mrf.mxu0
    %2904 = vmatprep.mubr.bf16.mxu0 0
    %2905 = vmatmul.mubr.bf16.gmra.mxu0 %v2576
    %v2906 = vpop.f32.mrf.mxu0
    %v2907 = vadd.f32 %v2486, %v2906
    %v2908 = vpop.f32.mrf.mxu0
    %v2909 = vpop.f32.mrf.mxu0
    %v2910 = vadd.f32 %v2486, %v2909
    %v2911 = vpop.f32.mrf.mxu0
    %2912 = vmatprep.mubr.bf16.mxu0 0
    %2913 = vmatmul.mubr.bf16.gmra.mxu0 %v2579
    %v2914 = vpop.f32.mrf.mxu0
    %v2915 = vadd.f32 %v2486, %v2914
    %v2916 = vpop.f32.mrf.mxu0
    %v2917 = vpop.f32.mrf.mxu0
    %v2918 = vadd.f32 %v2486, %v2917
    %v2919 = vpop.f32.mrf.mxu0
    %2920 = vmatprep.mubr.bf16.mxu0 0
    %2921 = vmatmul.mubr.bf16.gmra.mxu0 %v2582
    %v2922 = vpop.f32.mrf.mxu0
    %v2923 = vadd.f32 %v2486, %v2922
    %v2924 = vpop.f32.mrf.mxu0
    %v2925 = vpop.f32.mrf.mxu0
    %v2926 = vadd.f32 %v2486, %v2925
    %v2927 = vpop.f32.mrf.mxu0
    %2928 = vmatprep.mubr.bf16.mxu0 0
    %2929 = vmatmul.mubr.bf16.gmra.mxu0 %v2585
    %v2930 = vpop.f32.mrf.mxu0
    %v2931 = vadd.f32 %v2486, %v2930
    %v2932 = vpop.f32.mrf.mxu0
    %v2933 = vpop.f32.mrf.mxu0
    %v2934 = vadd.f32 %v2486, %v2933
    %v2935 = vpop.f32.mrf.mxu0
    %2936 = vmatprep.mubr.bf16.mxu0 0
    %2937 = vmatmul.mubr.bf16.gmra.mxu0 %v2588
    %v2938 = vpop.f32.mrf.mxu0
    %v2939 = vadd.f32 %v2486, %v2938
    %v2940 = vpop.f32.mrf.mxu0
    %v2941 = vpop.f32.mrf.mxu0
    %v2942 = vadd.f32 %v2486, %v2941
    %v2943 = vpop.f32.mrf.mxu0
    %2944 = vmatprep.mubr.bf16.mxu0 0
    %2945 = vmatmul.mubr.bf16.gmra.mxu0 %v2591
    %v2946 = vpop.f32.mrf.mxu0
    %v2947 = vadd.f32 %v2486, %v2946
    %v2948 = vpop.f32.mrf.mxu0
    %v2949 = vpop.f32.mrf.mxu0
    %v2950 = vadd.f32 %v2486, %v2949
    %v2951 = vpop.f32.mrf.mxu0
    %2952 = vmatprep.mubr.bf16.mxu0 0
    %2953 = vmatmul.mubr.bf16.gmra.mxu0 %v2594
    %v2954 = vpop.f32.mrf.mxu0
    %v2955 = vadd.f32 %v2486, %v2954
    %v2956 = vpop.f32.mrf.mxu0
    %v2957 = vpop.f32.mrf.mxu0
    %v2958 = vadd.f32 %v2486, %v2957
    %v2959 = vpop.f32.mrf.mxu0
    %2960 = vmatprep.mubr.bf16.mxu0 0
    %2961 = vmatmul.mubr.bf16.gmra.mxu0 %v2597
    %v2962 = vpop.f32.mrf.mxu0
    %v2963 = vadd.f32 %v2486, %v2962
    %v2964 = vpop.f32.mrf.mxu0
    %v2965 = vpop.f32.mrf.mxu0
    %v2966 = vadd.f32 %v2486, %v2965
    %v2967 = vpop.f32.mrf.mxu0
    %2968 = vmatprep.mubr.bf16.mxu0 0
    %2969 = vmatmul.mubr.bf16.gmra.mxu0 %v2600
    %v2970 = vpop.f32.mrf.mxu0
    %v2971 = vadd.f32 %v2486, %v2970
    %v2972 = vpop.f32.mrf.mxu0
    %v2973 = vpop.f32.mrf.mxu0
    %v2974 = vadd.f32 %v2486, %v2973
    %v2975 = vpop.f32.mrf.mxu0
    %2976 = vmatprep.mubr.bf16.mxu0 0
    %2977 = vmatmul.mubr.bf16.gmra.mxu0 %v2603
    %v2978 = vpop.f32.mrf.mxu0
    %v2979 = vadd.f32 %v2486, %v2978
    %v2980 = vpop.f32.mrf.mxu0
    %v2981 = vpop.f32.mrf.mxu0
    %v2982 = vadd.f32 %v2486, %v2981
    %v2983 = vpop.f32.mrf.mxu0
    %2984 = vmatprep.mubr.bf16.mxu0 0
    %2985 = vmatmul.mubr.bf16.gmra.mxu0 %v2606
    %v2986 = vpop.f32.mrf.mxu0
    %v2987 = vadd.f32 %v2486, %v2986
    %v2988 = vpop.f32.mrf.mxu0
    %v2989 = vpop.f32.mrf.mxu0
    %v2990 = vadd.f32 %v2486, %v2989
    %v2991 = vpop.f32.mrf.mxu0
    %2992 = vmatprep.mubr.bf16.mxu0 0
    %2993 = vmatmul.mubr.bf16.gmra.mxu0 %v2609
    %v2994 = vpop.f32.mrf.mxu0
    %v2995 = vadd.f32 %v2486, %v2994
    %v2996 = vpop.f32.mrf.mxu0
    %v2997 = vpop.f32.mrf.mxu0
    %v2998 = vadd.f32 %v2486, %v2997
    %v2999 = vpop.f32.mrf.mxu0
    %3000 = vmatprep.mubr.bf16.mxu0 0
    %3001 = vmatmul.mubr.bf16.gmra.mxu0 %v2612
    %v3002 = vpop.f32.mrf.mxu0
    %v3003 = vadd.f32 %v2486, %v3002
    %v3004 = vpop.f32.mrf.mxu0
    %v3005 = vpop.f32.mrf.mxu0
    %v3006 = vadd.f32 %v2486, %v3005
    %v3007 = vpop.f32.mrf.mxu0
    %3008 = vmatprep.mubr.bf16.mxu0 0
    %3009 = vmatmul.mubr.bf16.gmra.mxu0 %v2615
    %v3010 = vpop.f32.mrf.mxu0
    %v3011 = vadd.f32 %v2486, %v3010
    %v3012 = vpop.f32.mrf.mxu0
    %v3013 = vpop.f32.mrf.mxu0
    %v3014 = vadd.f32 %v2486, %v3013
    %v3015 = vpop.f32.mrf.mxu0
    %3016 = vmatprep.mubr.bf16.mxu0 0
    %3017 = vmatmul.mubr.bf16.gmra.mxu0 %v2618
    %v3018 = vpop.f32.mrf.mxu0
    %v3019 = vadd.f32 %v2486, %v3018
    %v3020 = vpop.f32.mrf.mxu0
    %v3021 = vpop.f32.mrf.mxu0
    %v3022 = vadd.f32 %v2486, %v3021
    %v3023 = vpop.f32.mrf.mxu0
    %3024 = vmatprep.mubr.bf16.mxu0 0
    %3025 = vmatmul.mubr.bf16.gmra.mxu0 %v2621
    %v3026 = vpop.f32.mrf.mxu0
    %v3027 = vadd.f32 %v2486, %v3026
    %v3028 = vpop.f32.mrf.mxu0
    %v3029 = vpop.f32.mrf.mxu0
    %v3030 = vadd.f32 %v2486, %v3029
    %v3031 = vpop.f32.mrf.mxu0
    %3032 = vmatprep.mubr.bf16.mxu0 0
    %3033 = vmatmul.mubr.bf16.gmra.mxu0 %v2624
    %v3034 = vpop.f32.mrf.mxu0
    %v3035 = vadd.f32 %v2486, %v3034
    %v3036 = vpop.f32.mrf.mxu0
    %v3037 = vpop.f32.mrf.mxu0
    %v3038 = vadd.f32 %v2486, %v3037
    %v3039 = vpop.f32.mrf.mxu0
    %3040 = vmatprep.mubr.bf16.mxu0 0
    %3041 = vmatmul.mubr.bf16.gmra.mxu0 %v2627
    %v3042 = vpop.f32.mrf.mxu0
    %v3043 = vadd.f32 %v2486, %v3042
    %v3044 = vpop.f32.mrf.mxu0
    %v3045 = vpop.f32.mrf.mxu0
    %v3046 = vadd.f32 %v2486, %v3045
    %v3047 = vpop.f32.mrf.mxu0
    %3048 = vmatprep.mubr.bf16.mxu0 0
    %3049 = vmatmul.mubr.bf16.gmra.mxu0 %v2630
    %v3050 = vpop.f32.mrf.mxu0
    %v3051 = vadd.f32 %v2486, %v3050
    %v3052 = vpop.f32.mrf.mxu0
    %v3053 = vpop.f32.mrf.mxu0
    %v3054 = vadd.f32 %v2486, %v3053
    %v3055 = vpop.f32.mrf.mxu0
    %3056 = vmatprep.mubr.bf16.mxu0 0
    %3057 = vmatmul.mubr.bf16.gmra.mxu0 %v2633
    %v3058 = vpop.f32.mrf.mxu0
    %v3059 = vadd.f32 %v2486, %v3058
    %v3060 = vpop.f32.mrf.mxu0
    %v3061 = vpop.f32.mrf.mxu0
    %v3062 = vadd.f32 %v2486, %v3061
    %v3063 = vpop.f32.mrf.mxu0
    %3064 = vmatprep.mubr.bf16.mxu0 0
    %3065 = vmatmul.mubr.bf16.gmra.mxu0 %v2636
    %v3066 = vpop.f32.mrf.mxu0
    %v3067 = vadd.f32 %v2486, %v3066
    %v3068 = vpop.f32.mrf.mxu0
    %v3069 = vpop.f32.mrf.mxu0
    %v3070 = vadd.f32 %v2486, %v3069
    %v3071 = vpop.f32.mrf.mxu0
    %3072 = vmatprep.mubr.bf16.mxu0 0
    %3073 = vmatmul.mubr.bf16.gmra.mxu0 %v2639
    %v3074 = vpop.f32.mrf.mxu0
    %v3075 = vadd.f32 %v2486, %v3074
    %v3076 = vpop.f32.mrf.mxu0
    %v3077 = vpop.f32.mrf.mxu0
    %v3078 = vadd.f32 %v2486, %v3077
    %v3079 = vpop.f32.mrf.mxu0
    %3080 = vmatprep.mubr.bf16.mxu0 0
    %3081 = vmatmul.mubr.bf16.gmra.mxu0 %v2642
    %v3082 = vpop.f32.mrf.mxu0
    %v3083 = vadd.f32 %v2486, %v3082
    %v3084 = vpop.f32.mrf.mxu0
    %v3085 = vpop.f32.mrf.mxu0
    %v3086 = vadd.f32 %v2486, %v3085
    %v3087 = vpop.f32.mrf.mxu0
    %3088 = vmatprep.mubr.bf16.mxu0 0
    %3089 = vmatmul.mubr.bf16.gmra.mxu0 %v2645
    %v3090 = vpop.f32.mrf.mxu0
    %v3091 = vadd.f32 %v2486, %v3090
    %v3092 = vpop.f32.mrf.mxu0
    %v3093 = vpop.f32.mrf.mxu0
    %v3094 = vadd.f32 %v2486, %v3093
    %v3095 = vpop.f32.mrf.mxu0
    %3096 = vmatprep.mubr.bf16.mxu0 0
    %3097 = vmatmul.mubr.bf16.gmra.mxu0 %v2648
    %v3098 = vpop.f32.mrf.mxu0
    %v3099 = vadd.f32 %v2486, %v3098
    %v3100 = vpop.f32.mrf.mxu0
    %v3101 = vpop.f32.mrf.mxu0
    %v3102 = vadd.f32 %v2486, %v3101
    %v3103 = vpop.f32.mrf.mxu0
    %3104 = vmatprep.mubr.bf16.mxu0 0
    %3105 = vmatmul.mubr.bf16.gmra.mxu0 %v2651
    %v3106 = vpop.f32.mrf.mxu0
    %v3107 = vadd.f32 %v2486, %v3106
    %v3108 = vpop.f32.mrf.mxu0
    %v3109 = vpop.f32.mrf.mxu0
    %v3110 = vadd.f32 %v2486, %v3109
    %v3111 = vpop.f32.mrf.mxu0
    %3112 = vmatprep.mubr.bf16.mxu0 0
    %3113 = vmatmul.mubr.bf16.gmra.mxu0 %v2654
    %v3114 = vpop.f32.mrf.mxu0
    %v3115 = vadd.f32 %v2486, %v3114
    %v3116 = vpop.f32.mrf.mxu0
    %v3117 = vpop.f32.mrf.mxu0
    %v3118 = vadd.f32 %v2486, %v3117
    %v3119 = vpop.f32.mrf.mxu0
    %3120 = vmatprep.mubr.bf16.mxu0 0
    %3121 = vmatmul.mubr.bf16.gmra.mxu0 %v2657
    %v3122 = vpop.f32.mrf.mxu0
    %v3123 = vadd.f32 %v2486, %v3122
    %v3124 = vpop.f32.mrf.mxu0
    %v3125 = vpop.f32.mrf.mxu0
    %v3126 = vadd.f32 %v2486, %v3125
    %v3127 = vpop.f32.mrf.mxu0
    %3128 = vmatprep.mubr.bf16.mxu0 0
    %3129 = vmatmul.mubr.bf16.gmra.mxu0 %v2660
    %v3130 = vpop.f32.mrf.mxu0
    %v3131 = vadd.f32 %v2486, %v3130
    %v3132 = vpop.f32.mrf.mxu0
    %v3133 = vpop.f32.mrf.mxu0
    %v3134 = vadd.f32 %v2486, %v3133
    %v3135 = vpop.f32.mrf.mxu0
    %3136 = vmatprep.mubr.bf16.mxu0 0
    %3137 = vmatmul.mubr.bf16.gmra.mxu0 %v2663
    %v3138 = vpop.f32.mrf.mxu0
    %v3139 = vadd.f32 %v2486, %v3138
    %v3140 = vpop.f32.mrf.mxu0
    %v3141 = vpop.f32.mrf.mxu0
    %v3142 = vadd.f32 %v2486, %v3141
    %v3143 = vpop.f32.mrf.mxu0
    %3144 = vmatprep.mubr.bf16.mxu0 0
    %3145 = vmatmul.mubr.bf16.gmra.mxu0 %v2666
    %v3146 = vpop.f32.mrf.mxu0
    %v3147 = vadd.f32 %v2486, %v3146
    %v3148 = vpop.f32.mrf.mxu0
    %v3149 = vpop.f32.mrf.mxu0
    %v3150 = vadd.f32 %v2486, %v3149
    %v3151 = vpop.f32.mrf.mxu0
    %3152 = vmatprep.mubr.bf16.mxu0 0
    %3153 = vmatmul.mubr.bf16.gmra.mxu0 %v2669
    %v3154 = vpop.f32.mrf.mxu0
    %v3155 = vadd.f32 %v2486, %v3154
    %v3156 = vpop.f32.mrf.mxu0
    %v3157 = vpop.f32.mrf.mxu0
    %v3158 = vadd.f32 %v2486, %v3157
    %v3159 = vpop.f32.mrf.mxu0
    %3160 = vmatprep.mubr.bf16.mxu0 0
    %3161 = vmatmul.mubr.bf16.gmra.mxu0 %v2672
    %v3162 = vpop.f32.mrf.mxu0
    %v3163 = vadd.f32 %v2486, %v3162
    %v3164 = vpop.f32.mrf.mxu0
    %v3165 = vpop.f32.mrf.mxu0
    %v3166 = vadd.f32 %v2486, %v3165
    %v3167 = vpop.f32.mrf.mxu0
    %3168 = vmatprep.mubr.bf16.mxu0 0
    %3169 = vmatmul.mubr.bf16.gmra.mxu0 %v2675
    %v3170 = vpop.f32.mrf.mxu0
    %v3171 = vadd.f32 %v2486, %v3170
    %v3172 = vpop.f32.mrf.mxu0
    %v3173 = vpop.f32.mrf.mxu0
    %v3174 = vadd.f32 %v2486, %v3173
    %v3175 = vpop.f32.mrf.mxu0
    %3176 = vmatprep.mubr.bf16.mxu0 0
    %3177 = vmatmul.mubr.bf16.gmra.mxu0 %v2678
    %v3178 = vpop.f32.mrf.mxu0
    %v3179 = vadd.f32 %v2486, %v3178
    %v3180 = vpop.f32.mrf.mxu0
    %v3181 = vpop.f32.mrf.mxu0
    %v3182 = vadd.f32 %v2486, %v3181
    %v3183 = vpop.f32.mrf.mxu0
    %3184 = vmatprep.mubr.bf16.mxu0 0
    %3185 = vmatmul.mubr.bf16.gmra.mxu0 %v2681
    %v3186 = vpop.f32.mrf.mxu0
    %v3187 = vadd.f32 %v2486, %v3186
    %v3188 = vpop.f32.mrf.mxu0
    %v3189 = vpop.f32.mrf.mxu0
    %v3190 = vadd.f32 %v2486, %v3189
    %v3191 = vpop.f32.mrf.mxu0
    %3192 = vmatprep.mubr.bf16.mxu0 0
    %3193 = vmatmul.mubr.bf16.gmra.mxu0 %v2684
    %v3194 = vpop.f32.mrf.mxu0
    %v3195 = vadd.f32 %v2486, %v3194
    %v3196 = vpop.f32.mrf.mxu0
    %v3197 = vpop.f32.mrf.mxu0
    %v3198 = vadd.f32 %v2486, %v3197
    %v3199 = vpop.f32.mrf.mxu0
    %3200 = vmatprep.mubr.bf16.mxu0 0
    %3201 = vmatmul.mubr.bf16.gmra.mxu0 %v2687
    %v3202 = vpop.f32.mrf.mxu0
    %v3203 = vadd.f32 %v2486, %v3202
    %v3204 = vpop.f32.mrf.mxu0
    %v3205 = vpop.f32.mrf.mxu0
    %v3206 = vadd.f32 %v2486, %v3205
    %v3207 = vpop.f32.mrf.mxu0
    %3208 = vmatprep.mubr.bf16.mxu0 0
    %3209 = vmatmul.mubr.bf16.gmra.mxu0 %v2690
    %v3210 = vpop.f32.mrf.mxu0
    %v3211 = vadd.f32 %v2486, %v3210
    %v3212 = vpop.f32.mrf.mxu0
    %v3213 = vpop.f32.mrf.mxu0
    %v3214 = vadd.f32 %v2486, %v3213
    %v3215 = vpop.f32.mrf.mxu0
    %3216 = vmatprep.mubr.bf16.mxu0 0
    %3217 = vmatmul.mubr.bf16.gmra.mxu0 %v2693
    %v3218 = vpop.f32.mrf.mxu0
    %v3219 = vadd.f32 %v2486, %v3218
    %v3220 = vpop.f32.mrf.mxu0
    %v3221 = vpop.f32.mrf.mxu0
    %v3222 = vadd.f32 %v2486, %v3221
    %v3223 = vpop.f32.mrf.mxu0
    %3224 = vmatprep.mubr.bf16.mxu0 0
    %3225 = vmatmul.mubr.bf16.gmra.mxu0 %v2696
    %v3226 = vpop.f32.mrf.mxu0
    %v3227 = vadd.f32 %v2486, %v3226
    %v3228 = vpop.f32.mrf.mxu0
    %v3229 = vpop.f32.mrf.mxu0
    %v3230 = vadd.f32 %v2486, %v3229
    %v3231 = vpop.f32.mrf.mxu0
    %3232 = vmatprep.mubr.bf16.mxu0 0
    %3233 = vmatmul.mubr.bf16.gmra.mxu0 %v2699
    %v3234 = vpop.f32.mrf.mxu0
    %v3235 = vadd.f32 %v2486, %v3234
    %v3236 = vpop.f32.mrf.mxu0
    %v3237 = vpop.f32.mrf.mxu0
    %v3238 = vadd.f32 %v2486, %v3237
    %v3239 = vpop.f32.mrf.mxu0
    %3240 = vmatprep.mubr.bf16.mxu0 0
    %3241 = vmatmul.mubr.bf16.gmra.mxu0 %v2702
    %v3242 = vpop.f32.mrf.mxu0
    %v3243 = vadd.f32 %v2486, %v3242
    %v3244 = vpop.f32.mrf.mxu0
    %v3245 = vpop.f32.mrf.mxu0
    %v3246 = vadd.f32 %v2486, %v3245
    %v3247 = vpop.f32.mrf.mxu0
    %3248 = vdwg.mxu0
    %v3249 = vmax.f32 %v2739, 0.0
    %v3250 = vmax.f32 %v2742, 0.0
    %v3251 = vmax.f32 %v2747, 0.0
    %v3252 = vmax.f32 %v2750, 0.0
    %v3253 = vmax.f32 %v2755, 0.0
    %v3254 = vmax.f32 %v2758, 0.0
    %v3255 = vmax.f32 %v2763, 0.0
    %v3256 = vmax.f32 %v2766, 0.0
    %v3257 = vmax.f32 %v2771, 0.0
    %v3258 = vmax.f32 %v2774, 0.0
    %v3259 = vmax.f32 %v2779, 0.0
    %v3260 = vmax.f32 %v2782, 0.0
    %v3261 = vmax.f32 %v2787, 0.0
    %v3262 = vmax.f32 %v2790, 0.0
    %v3263 = vmax.f32 %v2795, 0.0
    %v3264 = vmax.f32 %v2798, 0.0
    %v3265 = vmax.f32 %v2803, 0.0
    %v3266 = vmax.f32 %v2806, 0.0
    %v3267 = vmax.f32 %v2811, 0.0
    %v3268 = vmax.f32 %v2814, 0.0
    %v3269 = vmax.f32 %v2819, 0.0
    %v3270 = vmax.f32 %v2822, 0.0
    %v3271 = vmax.f32 %v2827, 0.0
    %v3272 = vmax.f32 %v2830, 0.0
    %v3273 = vmax.f32 %v2835, 0.0
    %v3274 = vmax.f32 %v2838, 0.0
    %v3275 = vmax.f32 %v2843, 0.0
    %v3276 = vmax.f32 %v2846, 0.0
    %v3277 = vmax.f32 %v2851, 0.0
    %v3278 = vmax.f32 %v2854, 0.0
    %v3279 = vmax.f32 %v2859, 0.0
    %v3280 = vmax.f32 %v2862, 0.0
    %v3281 = vmax.f32 %v2867, 0.0
    %v3282 = vmax.f32 %v2870, 0.0
    %v3283 = vmax.f32 %v2875, 0.0
    %v3284 = vmax.f32 %v2878, 0.0
    %v3285 = vmax.f32 %v2883, 0.0
    %v3286 = vmax.f32 %v2886, 0.0
    %v3287 = vmax.f32 %v2891, 0.0
    %v3288 = vmax.f32 %v2894, 0.0
    %v3289 = vmax.f32 %v2899, 0.0
    %v3290 = vmax.f32 %v2902, 0.0
    %v3291 = vmax.f32 %v2907, 0.0
    %v3292 = vmax.f32 %v2910, 0.0
    %v3293 = vmax.f32 %v2915, 0.0
    %v3294 = vmax.f32 %v2918, 0.0
    %v3295 = vmax.f32 %v2923, 0.0
    %v3296 = vmax.f32 %v2926, 0.0
    %v3297 = vmax.f32 %v2931, 0.0
    %v3298 = vmax.f32 %v2934, 0.0
    %v3299 = vmax.f32 %v2939, 0.0
    %v3300 = vmax.f32 %v2942, 0.0
    %v3301 = vmax.f32 %v2947, 0.0
    %v3302 = vmax.f32 %v2950, 0.0
    %v3303 = vmax.f32 %v2955, 0.0
    %v3304 = vmax.f32 %v2958, 0.0
    %v3305 = vmax.f32 %v2963, 0.0
    %v3306 = vmax.f32 %v2966, 0.0
    %v3307 = vmax.f32 %v2971, 0.0
    %v3308 = vmax.f32 %v2974, 0.0
    %v3309 = vmax.f32 %v2979, 0.0
    %v3310 = vmax.f32 %v2982, 0.0
    %v3311 = vmax.f32 %v2987, 0.0
    %v3312 = vmax.f32 %v2990, 0.0
    %v3313 = vmax.f32 %v2995, 0.0
    %v3314 = vmax.f32 %v2998, 0.0
    %v3315 = vmax.f32 %v3003, 0.0
    %v3316 = vmax.f32 %v3006, 0.0
    %v3317 = vmax.f32 %v3011, 0.0
    %v3318 = vmax.f32 %v3014, 0.0
    %v3319 = vmax.f32 %v3019, 0.0
    %v3320 = vmax.f32 %v3022, 0.0
    %v3321 = vmax.f32 %v3027, 0.0
    %v3322 = vmax.f32 %v3030, 0.0
    %v3323 = vmax.f32 %v3035, 0.0
    %v3324 = vmax.f32 %v3038, 0.0
    %v3325 = vmax.f32 %v3043, 0.0
    %v3326 = vmax.f32 %v3046, 0.0
    %v3327 = vmax.f32 %v3051, 0.0
    %v3328 = vmax.f32 %v3054, 0.0
    %v3329 = vmax.f32 %v3059, 0.0
    %v3330 = vmax.f32 %v3062, 0.0
    %v3331 = vmax.f32 %v3067, 0.0
    %v3332 = vmax.f32 %v3070, 0.0
    %v3333 = vmax.f32 %v3075, 0.0
    %v3334 = vmax.f32 %v3078, 0.0
    %v3335 = vmax.f32 %v3083, 0.0
    %v3336 = vmax.f32 %v3086, 0.0
    %v3337 = vmax.f32 %v3091, 0.0
    %v3338 = vmax.f32 %v3094, 0.0
    %v3339 = vmax.f32 %v3099, 0.0
    %v3340 = vmax.f32 %v3102, 0.0
    %v3341 = vmax.f32 %v3107, 0.0
    %v3342 = vmax.f32 %v3110, 0.0
    %v3343 = vmax.f32 %v3115, 0.0
    %v3344 = vmax.f32 %v3118, 0.0
    %v3345 = vmax.f32 %v3123, 0.0
    %v3346 = vmax.f32 %v3126, 0.0
    %v3347 = vmax.f32 %v3131, 0.0
    %v3348 = vmax.f32 %v3134, 0.0
    %v3349 = vmax.f32 %v3139, 0.0
    %v3350 = vmax.f32 %v3142, 0.0
    %v3351 = vmax.f32 %v3147, 0.0
    %v3352 = vmax.f32 %v3150, 0.0
    %v3353 = vmax.f32 %v3155, 0.0
    %v3354 = vmax.f32 %v3158, 0.0
    %v3355 = vmax.f32 %v3163, 0.0
    %v3356 = vmax.f32 %v3166, 0.0
    %v3357 = vmax.f32 %v3171, 0.0
    %v3358 = vmax.f32 %v3174, 0.0
    %v3359 = vmax.f32 %v3179, 0.0
    %v3360 = vmax.f32 %v3182, 0.0
    %v3361 = vmax.f32 %v3187, 0.0
    %v3362 = vmax.f32 %v3190, 0.0
    %v3363 = vmax.f32 %v3195, 0.0
    %v3364 = vmax.f32 %v3198, 0.0
    %v3365 = vmax.f32 %v3203, 0.0
    %v3366 = vmax.f32 %v3206, 0.0
    %v3367 = vmax.f32 %v3211, 0.0
    %v3368 = vmax.f32 %v3214, 0.0
    %v3369 = vmax.f32 %v3219, 0.0
    %v3370 = vmax.f32 %v3222, 0.0
    %v3371 = vmax.f32 %v3227, 0.0
    %v3372 = vmax.f32 %v3230, 0.0
    %v3373 = vmax.f32 %v3235, 0.0
    %v3374 = vmax.f32 %v3238, 0.0
    %v3375 = vmax.f32 %v3243, 0.0
    %v3376 = vmax.f32 %v3246, 0.0
    %v3377 = vmul.f32 %v3249, 0.25
    %v3378 = vmul.f32 %v3250, 0.25
    %v3379 = vmul.f32 %v3251, 0.25
    %v3380 = vmul.f32 %v3252, 0.25
    %v3381 = vmul.f32 %v3253, 0.25
    %v3382 = vmul.f32 %v3254, 0.25
    %v3383 = vmul.f32 %v3255, 0.25
    %v3384 = vmul.f32 %v3256, 0.25
    %v3385 = vmul.f32 %v3257, 0.25
    %v3386 = vmul.f32 %v3258, 0.25
    %v3387 = vmul.f32 %v3259, 0.25
    %v3388 = vmul.f32 %v3260, 0.25
    %v3389 = vmul.f32 %v3261, 0.25
    %v3390 = vmul.f32 %v3262, 0.25
    %v3391 = vmul.f32 %v3263, 0.25
    %v3392 = vmul.f32 %v3264, 0.25
    %v3393 = vmul.f32 %v3265, 0.25
    %v3394 = vmul.f32 %v3266, 0.25
    %v3395 = vmul.f32 %v3267, 0.25
    %v3396 = vmul.f32 %v3268, 0.25
    %v3397 = vmul.f32 %v3269, 0.25
    %v3398 = vmul.f32 %v3270, 0.25
    %v3399 = vmul.f32 %v3271, 0.25
    %v3400 = vmul.f32 %v3272, 0.25
    %v3401 = vmul.f32 %v3273, 0.25
    %v3402 = vmul.f32 %v3274, 0.25
    %v3403 = vmul.f32 %v3275, 0.25
    %v3404 = vmul.f32 %v3276, 0.25
    %v3405 = vmul.f32 %v3277, 0.25
    %v3406 = vmul.f32 %v3278, 0.25
    %v3407 = vmul.f32 %v3279, 0.25
    %v3408 = vmul.f32 %v3280, 0.25
    %v3409 = vadd.f32 %v3377, %v3393
    %v3410 = vadd.f32 %v3378, %v3394
    %v3411 = vadd.f32 %v3379, %v3395
    %v3412 = vadd.f32 %v3380, %v3396
    %v3413 = vadd.f32 %v3381, %v3397
    %v3414 = vadd.f32 %v3382, %v3398
    %v3415 = vadd.f32 %v3383, %v3399
    %v3416 = vadd.f32 %v3384, %v3400
    %v3417 = vadd.f32 %v3385, %v3401
    %v3418 = vadd.f32 %v3386, %v3402
    %v3419 = vadd.f32 %v3387, %v3403
    %v3420 = vadd.f32 %v3388, %v3404
    %v3421 = vadd.f32 %v3389, %v3405
    %v3422 = vadd.f32 %v3390, %v3406
    %v3423 = vadd.f32 %v3391, %v3407
    %v3424 = vadd.f32 %v3392, %v3408
    %v3425 = vmul.f32 %v3281, 0.25
    %v3426 = vmul.f32 %v3282, 0.25
    %v3427 = vmul.f32 %v3283, 0.25
    %v3428 = vmul.f32 %v3284, 0.25
    %v3429 = vmul.f32 %v3285, 0.25
    %v3430 = vmul.f32 %v3286, 0.25
    %v3431 = vmul.f32 %v3287, 0.25
    %v3432 = vmul.f32 %v3288, 0.25
    %v3433 = vmul.f32 %v3289, 0.25
    %v3434 = vmul.f32 %v3290, 0.25
    %v3435 = vmul.f32 %v3291, 0.25
    %v3436 = vmul.f32 %v3292, 0.25
    %v3437 = vmul.f32 %v3293, 0.25
    %v3438 = vmul.f32 %v3294, 0.25
    %v3439 = vmul.f32 %v3295, 0.25
    %v3440 = vmul.f32 %v3296, 0.25
    %v3441 = vadd.f32 %v3409, %v3425
    %v3442 = vadd.f32 %v3410, %v3426
    %v3443 = vadd.f32 %v3411, %v3427
    %v3444 = vadd.f32 %v3412, %v3428
    %v3445 = vadd.f32 %v3413, %v3429
    %v3446 = vadd.f32 %v3414, %v3430
    %v3447 = vadd.f32 %v3415, %v3431
    %v3448 = vadd.f32 %v3416, %v3432
    %v3449 = vadd.f32 %v3417, %v3433
    %v3450 = vadd.f32 %v3418, %v3434
    %v3451 = vadd.f32 %v3419, %v3435
    %v3452 = vadd.f32 %v3420, %v3436
    %v3453 = vadd.f32 %v3421, %v3437
    %v3454 = vadd.f32 %v3422, %v3438
    %v3455 = vadd.f32 %v3423, %v3439
    %v3456 = vadd.f32 %v3424, %v3440
    %v3457 = vmul.f32 %v3297, 0.2236068
    %v3458 = vmul.f32 %v3298, 0.2236068
    %v3459 = vmul.f32 %v3299, 0.2236068
    %v3460 = vmul.f32 %v3300, 0.2236068
    %v3461 = vmul.f32 %v3301, 0.2236068
    %v3462 = vmul.f32 %v3302, 0.2236068
    %v3463 = vmul.f32 %v3303, 0.2236068
    %v3464 = vmul.f32 %v3304, 0.2236068
    %v3465 = vmul.f32 %v3305, 0.2236068
    %v3466 = vmul.f32 %v3306, 0.2236068
    %v3467 = vmul.f32 %v3307, 0.2236068
    %v3468 = vmul.f32 %v3308, 0.2236068
    %v3469 = vmul.f32 %v3309, 0.2236068
    %v3470 = vmul.f32 %v3310, 0.2236068
    %v3471 = vmul.f32 %v3311, 0.2236068
    %v3472 = vmul.f32 %v3312, 0.2236068
    %v3473 = vadd.f32 %v3441, %v3457
    %v3474 = vadd.f32 %v3442, %v3458
    %v3475 = vadd.f32 %v3443, %v3459
    %v3476 = vadd.f32 %v3444, %v3460
    %v3477 = vadd.f32 %v3445, %v3461
    %v3478 = vadd.f32 %v3446, %v3462
    %v3479 = vadd.f32 %v3447, %v3463
    %v3480 = vadd.f32 %v3448, %v3464
    %v3481 = vadd.f32 %v3449, %v3465
    %v3482 = vadd.f32 %v3450, %v3466
    %v3483 = vadd.f32 %v3451, %v3467
    %v3484 = vadd.f32 %v3452, %v3468
    %v3485 = vadd.f32 %v3453, %v3469
    %v3486 = vadd.f32 %v3454, %v3470
    %v3487 = vadd.f32 %v3455, %v3471
    %v3488 = vadd.f32 %v3456, %v3472
    %v3489 = vadd.f32 %v3409, %v3457
    %v3490 = vadd.f32 %v3410, %v3458
    %v3491 = vadd.f32 %v3411, %v3459
    %v3492 = vadd.f32 %v3412, %v3460
    %v3493 = vadd.f32 %v3413, %v3461
    %v3494 = vadd.f32 %v3414, %v3462
    %v3495 = vadd.f32 %v3415, %v3463
    %v3496 = vadd.f32 %v3416, %v3464
    %v3497 = vadd.f32 %v3417, %v3465
    %v3498 = vadd.f32 %v3418, %v3466
    %v3499 = vadd.f32 %v3419, %v3467
    %v3500 = vadd.f32 %v3420, %v3468
    %v3501 = vadd.f32 %v3421, %v3469
    %v3502 = vadd.f32 %v3422, %v3470
    %v3503 = vadd.f32 %v3423, %v3471
    %v3504 = vadd.f32 %v3424, %v3472
    %v3505 = vmul.f32 %v3345, 0.25
    %v3506 = vmul.f32 %v3346, 0.25
    %v3507 = vmul.f32 %v3347, 0.25
    %v3508 = vmul.f32 %v3348, 0.25
    %v3509 = vmul.f32 %v3349, 0.25
    %v3510 = vmul.f32 %v3350, 0.25
    %v3511 = vmul.f32 %v3351, 0.25
    %v3512 = vmul.f32 %v3352, 0.25
    %v3513 = vmul.f32 %v3353, 0.25
    %v3514 = vmul.f32 %v3354, 0.25
    %v3515 = vmul.f32 %v3355, 0.25
    %v3516 = vmul.f32 %v3356, 0.25
    %v3517 = vmul.f32 %v3357, 0.25
    %v3518 = vmul.f32 %v3358, 0.25
    %v3519 = vmul.f32 %v3359, 0.25
    %v3520 = vmul.f32 %v3360, 0.25
    %v3521 = vadd.f32 %v3489, %v3505
    %v3522 = vadd.f32 %v3490, %v3506
    %v3523 = vadd.f32 %v3491, %v3507
    %v3524 = vadd.f32 %v3492, %v3508
    %v3525 = vadd.f32 %v3493, %v3509
    %v3526 = vadd.f32 %v3494, %v3510
    %v3527 = vadd.f32 %v3495, %v3511
    %v3528 = vadd.f32 %v3496, %v3512
    %v3529 = vadd.f32 %v3497, %v3513
    %v3530 = vadd.f32 %v3498, %v3514
    %v3531 = vadd.f32 %v3499, %v3515
    %v3532 = vadd.f32 %v3500, %v3516
    %v3533 = vadd.f32 %v3501, %v3517
    %v3534 = vadd.f32 %v3502, %v3518
    %v3535 = vadd.f32 %v3503, %v3519
    %v3536 = vadd.f32 %v3504, %v3520
    %v3537 = vadd.f32 %v3377, %v3425
    %v3538 = vadd.f32 %v3378, %v3426
    %v3539 = vadd.f32 %v3379, %v3427
    %v3540 = vadd.f32 %v3380, %v3428
    %v3541 = vadd.f32 %v3381, %v3429
    %v3542 = vadd.f32 %v3382, %v3430
    %v3543 = vadd.f32 %v3383, %v3431
    %v3544 = vadd.f32 %v3384, %v3432
    %v3545 = vadd.f32 %v3385, %v3433
    %v3546 = vadd.f32 %v3386, %v3434
    %v3547 = vadd.f32 %v3387, %v3435
    %v3548 = vadd.f32 %v3388, %v3436
    %v3549 = vadd.f32 %v3389, %v3437
    %v3550 = vadd.f32 %v3390, %v3438
    %v3551 = vadd.f32 %v3391, %v3439
    %v3552 = vadd.f32 %v3392, %v3440
    %v3553 = vadd.f32 %v3537, %v3457
    %v3554 = vadd.f32 %v3538, %v3458
    %v3555 = vadd.f32 %v3539, %v3459
    %v3556 = vadd.f32 %v3540, %v3460
    %v3557 = vadd.f32 %v3541, %v3461
    %v3558 = vadd.f32 %v3542, %v3462
    %v3559 = vadd.f32 %v3543, %v3463
    %v3560 = vadd.f32 %v3544, %v3464
    %v3561 = vadd.f32 %v3545, %v3465
    %v3562 = vadd.f32 %v3546, %v3466
    %v3563 = vadd.f32 %v3547, %v3467
    %v3564 = vadd.f32 %v3548, %v3468
    %v3565 = vadd.f32 %v3549, %v3469
    %v3566 = vadd.f32 %v3550, %v3470
    %v3567 = vadd.f32 %v3551, %v3471
    %v3568 = vadd.f32 %v3552, %v3472
    %v3569 = vmul.f32 %v3329, 0.25
    %v3570 = vmul.f32 %v3330, 0.25
    %v3571 = vmul.f32 %v3331, 0.25
    %v3572 = vmul.f32 %v3332, 0.25
    %v3573 = vmul.f32 %v3333, 0.25
    %v3574 = vmul.f32 %v3334, 0.25
    %v3575 = vmul.f32 %v3335, 0.25
    %v3576 = vmul.f32 %v3336, 0.25
    %v3577 = vmul.f32 %v3337, 0.25
    %v3578 = vmul.f32 %v3338, 0.25
    %v3579 = vmul.f32 %v3339, 0.25
    %v3580 = vmul.f32 %v3340, 0.25
    %v3581 = vmul.f32 %v3341, 0.25
    %v3582 = vmul.f32 %v3342, 0.25
    %v3583 = vmul.f32 %v3343, 0.25
    %v3584 = vmul.f32 %v3344, 0.25
    %v3585 = vadd.f32 %v3553, %v3569
    %v3586 = vadd.f32 %v3554, %v3570
    %v3587 = vadd.f32 %v3555, %v3571
    %v3588 = vadd.f32 %v3556, %v3572
    %v3589 = vadd.f32 %v3557, %v3573
    %v3590 = vadd.f32 %v3558, %v3574
    %v3591 = vadd.f32 %v3559, %v3575
    %v3592 = vadd.f32 %v3560, %v3576
    %v3593 = vadd.f32 %v3561, %v3577
    %v3594 = vadd.f32 %v3562, %v3578
    %v3595 = vadd.f32 %v3563, %v3579
    %v3596 = vadd.f32 %v3564, %v3580
    %v3597 = vadd.f32 %v3565, %v3581
    %v3598 = vadd.f32 %v3566, %v3582
    %v3599 = vadd.f32 %v3567, %v3583
    %v3600 = vadd.f32 %v3568, %v3584
    %v3601 = vmul.f32 %v3249, 0.2236068
    %v3602 = vmul.f32 %v3250, 0.2236068
    %v3603 = vmul.f32 %v3251, 0.2236068
    %v3604 = vmul.f32 %v3252, 0.2236068
    %v3605 = vmul.f32 %v3253, 0.2236068
    %v3606 = vmul.f32 %v3254, 0.2236068
    %v3607 = vmul.f32 %v3255, 0.2236068
    %v3608 = vmul.f32 %v3256, 0.2236068
    %v3609 = vmul.f32 %v3257, 0.2236068
    %v3610 = vmul.f32 %v3258, 0.2236068
    %v3611 = vmul.f32 %v3259, 0.2236068
    %v3612 = vmul.f32 %v3260, 0.2236068
    %v3613 = vmul.f32 %v3261, 0.2236068
    %v3614 = vmul.f32 %v3262, 0.2236068
    %v3615 = vmul.f32 %v3263, 0.2236068
    %v3616 = vmul.f32 %v3264, 0.2236068
    %v3617 = vmul.f32 %v3265, 0.2236068
    %v3618 = vmul.f32 %v3266, 0.2236068
    %v3619 = vmul.f32 %v3267, 0.2236068
    %v3620 = vmul.f32 %v3268, 0.2236068
    %v3621 = vmul.f32 %v3269, 0.2236068
    %v3622 = vmul.f32 %v3270, 0.2236068
    %v3623 = vmul.f32 %v3271, 0.2236068
    %v3624 = vmul.f32 %v3272, 0.2236068
    %v3625 = vmul.f32 %v3273, 0.2236068
    %v3626 = vmul.f32 %v3274, 0.2236068
    %v3627 = vmul.f32 %v3275, 0.2236068
    %v3628 = vmul.f32 %v3276, 0.2236068
    %v3629 = vmul.f32 %v3277, 0.2236068
    %v3630 = vmul.f32 %v3278, 0.2236068
    %v3631 = vmul.f32 %v3279, 0.2236068
    %v3632 = vmul.f32 %v3280, 0.2236068
    %v3633 = vadd.f32 %v3601, %v3617
    %v3634 = vadd.f32 %v3602, %v3618
    %v3635 = vadd.f32 %v3603, %v3619
    %v3636 = vadd.f32 %v3604, %v3620
    %v3637 = vadd.f32 %v3605, %v3621
    %v3638 = vadd.f32 %v3606, %v3622
    %v3639 = vadd.f32 %v3607, %v3623
    %v3640 = vadd.f32 %v3608, %v3624
    %v3641 = vadd.f32 %v3609, %v3625
    %v3642 = vadd.f32 %v3610, %v3626
    %v3643 = vadd.f32 %v3611, %v3627
    %v3644 = vadd.f32 %v3612, %v3628
    %v3645 = vadd.f32 %v3613, %v3629
    %v3646 = vadd.f32 %v3614, %v3630
    %v3647 = vadd.f32 %v3615, %v3631
    %v3648 = vadd.f32 %v3616, %v3632
    %v3649 = vmul.f32 %v3281, 0.2236068
    %v3650 = vmul.f32 %v3282, 0.2236068
    %v3651 = vmul.f32 %v3283, 0.2236068
    %v3652 = vmul.f32 %v3284, 0.2236068
    %v3653 = vmul.f32 %v3285, 0.2236068
    %v3654 = vmul.f32 %v3286, 0.2236068
    %v3655 = vmul.f32 %v3287, 0.2236068
    %v3656 = vmul.f32 %v3288, 0.2236068
    %v3657 = vmul.f32 %v3289, 0.2236068
    %v3658 = vmul.f32 %v3290, 0.2236068
    %v3659 = vmul.f32 %v3291, 0.2236068
    %v3660 = vmul.f32 %v3292, 0.2236068
    %v3661 = vmul.f32 %v3293, 0.2236068
    %v3662 = vmul.f32 %v3294, 0.2236068
    %v3663 = vmul.f32 %v3295, 0.2236068
    %v3664 = vmul.f32 %v3296, 0.2236068
    %v3665 = vadd.f32 %v3633, %v3649
    %v3666 = vadd.f32 %v3634, %v3650
    %v3667 = vadd.f32 %v3635, %v3651
    %v3668 = vadd.f32 %v3636, %v3652
    %v3669 = vadd.f32 %v3637, %v3653
    %v3670 = vadd.f32 %v3638, %v3654
    %v3671 = vadd.f32 %v3639, %v3655
    %v3672 = vadd.f32 %v3640, %v3656
    %v3673 = vadd.f32 %v3641, %v3657
    %v3674 = vadd.f32 %v3642, %v3658
    %v3675 = vadd.f32 %v3643, %v3659
    %v3676 = vadd.f32 %v3644, %v3660
    %v3677 = vadd.f32 %v3645, %v3661
    %v3678 = vadd.f32 %v3646, %v3662
    %v3679 = vadd.f32 %v3647, %v3663
    %v3680 = vadd.f32 %v3648, %v3664
    %v3681 = vmul.f32 %v3297, 0.19999999
    %v3682 = vmul.f32 %v3298, 0.19999999
    %v3683 = vmul.f32 %v3299, 0.19999999
    %v3684 = vmul.f32 %v3300, 0.19999999
    %v3685 = vmul.f32 %v3301, 0.19999999
    %v3686 = vmul.f32 %v3302, 0.19999999
    %v3687 = vmul.f32 %v3303, 0.19999999
    %v3688 = vmul.f32 %v3304, 0.19999999
    %v3689 = vmul.f32 %v3305, 0.19999999
    %v3690 = vmul.f32 %v3306, 0.19999999
    %v3691 = vmul.f32 %v3307, 0.19999999
    %v3692 = vmul.f32 %v3308, 0.19999999
    %v3693 = vmul.f32 %v3309, 0.19999999
    %v3694 = vmul.f32 %v3310, 0.19999999
    %v3695 = vmul.f32 %v3311, 0.19999999
    %v3696 = vmul.f32 %v3312, 0.19999999
    %v3697 = vadd.f32 %v3665, %v3681
    %v3698 = vadd.f32 %v3666, %v3682
    %v3699 = vadd.f32 %v3667, %v3683
    %v3700 = vadd.f32 %v3668, %v3684
    %v3701 = vadd.f32 %v3669, %v3685
    %v3702 = vadd.f32 %v3670, %v3686
    %v3703 = vadd.f32 %v3671, %v3687
    %v3704 = vadd.f32 %v3672, %v3688
    %v3705 = vadd.f32 %v3673, %v3689
    %v3706 = vadd.f32 %v3674, %v3690
    %v3707 = vadd.f32 %v3675, %v3691
    %v3708 = vadd.f32 %v3676, %v3692
    %v3709 = vadd.f32 %v3677, %v3693
    %v3710 = vadd.f32 %v3678, %v3694
    %v3711 = vadd.f32 %v3679, %v3695
    %v3712 = vadd.f32 %v3680, %v3696
    %v3713 = vmul.f32 %v3361, 0.19999999
    %v3714 = vmul.f32 %v3362, 0.19999999
    %v3715 = vmul.f32 %v3363, 0.19999999
    %v3716 = vmul.f32 %v3364, 0.19999999
    %v3717 = vmul.f32 %v3365, 0.19999999
    %v3718 = vmul.f32 %v3366, 0.19999999
    %v3719 = vmul.f32 %v3367, 0.19999999
    %v3720 = vmul.f32 %v3368, 0.19999999
    %v3721 = vmul.f32 %v3369, 0.19999999
    %v3722 = vmul.f32 %v3370, 0.19999999
    %v3723 = vmul.f32 %v3371, 0.19999999
    %v3724 = vmul.f32 %v3372, 0.19999999
    %v3725 = vmul.f32 %v3373, 0.19999999
    %v3726 = vmul.f32 %v3374, 0.19999999
    %v3727 = vmul.f32 %v3375, 0.19999999
    %v3728 = vmul.f32 %v3376, 0.19999999
    %v3729 = vadd.f32 %v3697, %v3713
    %v3730 = vadd.f32 %v3698, %v3714
    %v3731 = vadd.f32 %v3699, %v3715
    %v3732 = vadd.f32 %v3700, %v3716
    %v3733 = vadd.f32 %v3701, %v3717
    %v3734 = vadd.f32 %v3702, %v3718
    %v3735 = vadd.f32 %v3703, %v3719
    %v3736 = vadd.f32 %v3704, %v3720
    %v3737 = vadd.f32 %v3705, %v3721
    %v3738 = vadd.f32 %v3706, %v3722
    %v3739 = vadd.f32 %v3707, %v3723
    %v3740 = vadd.f32 %v3708, %v3724
    %v3741 = vadd.f32 %v3709, %v3725
    %v3742 = vadd.f32 %v3710, %v3726
    %v3743 = vadd.f32 %v3711, %v3727
    %v3744 = vadd.f32 %v3712, %v3728
    %v3745 = vmul.f32 %v3313, 0.25
    %v3746 = vmul.f32 %v3314, 0.25
    %v3747 = vmul.f32 %v3315, 0.25
    %v3748 = vmul.f32 %v3316, 0.25
    %v3749 = vmul.f32 %v3317, 0.25
    %v3750 = vmul.f32 %v3318, 0.25
    %v3751 = vmul.f32 %v3319, 0.25
    %v3752 = vmul.f32 %v3320, 0.25
    %v3753 = vmul.f32 %v3321, 0.25
    %v3754 = vmul.f32 %v3322, 0.25
    %v3755 = vmul.f32 %v3323, 0.25
    %v3756 = vmul.f32 %v3324, 0.25
    %v3757 = vmul.f32 %v3325, 0.25
    %v3758 = vmul.f32 %v3326, 0.25
    %v3759 = vmul.f32 %v3327, 0.25
    %v3760 = vmul.f32 %v3328, 0.25
    %v3761 = vadd.f32 %v3745, %v3569
    %v3762 = vadd.f32 %v3746, %v3570
    %v3763 = vadd.f32 %v3747, %v3571
    %v3764 = vadd.f32 %v3748, %v3572
    %v3765 = vadd.f32 %v3749, %v3573
    %v3766 = vadd.f32 %v3750, %v3574
    %v3767 = vadd.f32 %v3751, %v3575
    %v3768 = vadd.f32 %v3752, %v3576
    %v3769 = vadd.f32 %v3753, %v3577
    %v3770 = vadd.f32 %v3754, %v3578
    %v3771 = vadd.f32 %v3755, %v3579
    %v3772 = vadd.f32 %v3756, %v3580
    %v3773 = vadd.f32 %v3757, %v3581
    %v3774 = vadd.f32 %v3758, %v3582
    %v3775 = vadd.f32 %v3759, %v3583
    %v3776 = vadd.f32 %v3760, %v3584
    %v3777 = vadd.f32 %v3761, %v3505
    %v3778 = vadd.f32 %v3762, %v3506
    %v3779 = vadd.f32 %v3763, %v3507
    %v3780 = vadd.f32 %v3764, %v3508
    %v3781 = vadd.f32 %v3765, %v3509
    %v3782 = vadd.f32 %v3766, %v3510
    %v3783 = vadd.f32 %v3767, %v3511
    %v3784 = vadd.f32 %v3768, %v3512
    %v3785 = vadd.f32 %v3769, %v3513
    %v3786 = vadd.f32 %v3770, %v3514
    %v3787 = vadd.f32 %v3771, %v3515
    %v3788 = vadd.f32 %v3772, %v3516
    %v3789 = vadd.f32 %v3773, %v3517
    %v3790 = vadd.f32 %v3774, %v3518
    %v3791 = vadd.f32 %v3775, %v3519
    %v3792 = vadd.f32 %v3776, %v3520
    %v3793 = vmul.f32 %v3361, 0.2236068
    %v3794 = vmul.f32 %v3362, 0.2236068
    %v3795 = vmul.f32 %v3363, 0.2236068
    %v3796 = vmul.f32 %v3364, 0.2236068
    %v3797 = vmul.f32 %v3365, 0.2236068
    %v3798 = vmul.f32 %v3366, 0.2236068
    %v3799 = vmul.f32 %v3367, 0.2236068
    %v3800 = vmul.f32 %v3368, 0.2236068
    %v3801 = vmul.f32 %v3369, 0.2236068
    %v3802 = vmul.f32 %v3370, 0.2236068
    %v3803 = vmul.f32 %v3371, 0.2236068
    %v3804 = vmul.f32 %v3372, 0.2236068
    %v3805 = vmul.f32 %v3373, 0.2236068
    %v3806 = vmul.f32 %v3374, 0.2236068
    %v3807 = vmul.f32 %v3375, 0.2236068
    %v3808 = vmul.f32 %v3376, 0.2236068
    %v3809 = vadd.f32 %v3777, %v3793
    %v3810 = vadd.f32 %v3778, %v3794
    %v3811 = vadd.f32 %v3779, %v3795
    %v3812 = vadd.f32 %v3780, %v3796
    %v3813 = vadd.f32 %v3781, %v3797
    %v3814 = vadd.f32 %v3782, %v3798
    %v3815 = vadd.f32 %v3783, %v3799
    %v3816 = vadd.f32 %v3784, %v3800
    %v3817 = vadd.f32 %v3785, %v3801
    %v3818 = vadd.f32 %v3786, %v3802
    %v3819 = vadd.f32 %v3787, %v3803
    %v3820 = vadd.f32 %v3788, %v3804
    %v3821 = vadd.f32 %v3789, %v3805
    %v3822 = vadd.f32 %v3790, %v3806
    %v3823 = vadd.f32 %v3791, %v3807
    %v3824 = vadd.f32 %v3792, %v3808
    %v3825 = vadd.f32 %v3425, %v3745
    %v3826 = vadd.f32 %v3426, %v3746
    %v3827 = vadd.f32 %v3427, %v3747
    %v3828 = vadd.f32 %v3428, %v3748
    %v3829 = vadd.f32 %v3429, %v3749
    %v3830 = vadd.f32 %v3430, %v3750
    %v3831 = vadd.f32 %v3431, %v3751
    %v3832 = vadd.f32 %v3432, %v3752
    %v3833 = vadd.f32 %v3433, %v3753
    %v3834 = vadd.f32 %v3434, %v3754
    %v3835 = vadd.f32 %v3435, %v3755
    %v3836 = vadd.f32 %v3436, %v3756
    %v3837 = vadd.f32 %v3437, %v3757
    %v3838 = vadd.f32 %v3438, %v3758
    %v3839 = vadd.f32 %v3439, %v3759
    %v3840 = vadd.f32 %v3440, %v3760
    %v3841 = vadd.f32 %v3825, %v3569
    %v3842 = vadd.f32 %v3826, %v3570
    %v3843 = vadd.f32 %v3827, %v3571
    %v3844 = vadd.f32 %v3828, %v3572
    %v3845 = vadd.f32 %v3829, %v3573
    %v3846 = vadd.f32 %v3830, %v3574
    %v3847 = vadd.f32 %v3831, %v3575
    %v3848 = vadd.f32 %v3832, %v3576
    %v3849 = vadd.f32 %v3833, %v3577
    %v3850 = vadd.f32 %v3834, %v3578
    %v3851 = vadd.f32 %v3835, %v3579
    %v3852 = vadd.f32 %v3836, %v3580
    %v3853 = vadd.f32 %v3837, %v3581
    %v3854 = vadd.f32 %v3838, %v3582
    %v3855 = vadd.f32 %v3839, %v3583
    %v3856 = vadd.f32 %v3840, %v3584
    %v3857 = vadd.f32 %v3841, %v3793
    %v3858 = vadd.f32 %v3842, %v3794
    %v3859 = vadd.f32 %v3843, %v3795
    %v3860 = vadd.f32 %v3844, %v3796
    %v3861 = vadd.f32 %v3845, %v3797
    %v3862 = vadd.f32 %v3846, %v3798
    %v3863 = vadd.f32 %v3847, %v3799
    %v3864 = vadd.f32 %v3848, %v3800
    %v3865 = vadd.f32 %v3849, %v3801
    %v3866 = vadd.f32 %v3850, %v3802
    %v3867 = vadd.f32 %v3851, %v3803
    %v3868 = vadd.f32 %v3852, %v3804
    %v3869 = vadd.f32 %v3853, %v3805
    %v3870 = vadd.f32 %v3854, %v3806
    %v3871 = vadd.f32 %v3855, %v3807
    %v3872 = vadd.f32 %v3856, %v3808
    %v3873 = vadd.f32 %v3393, %v3745
    %v3874 = vadd.f32 %v3394, %v3746
    %v3875 = vadd.f32 %v3395, %v3747
    %v3876 = vadd.f32 %v3396, %v3748
    %v3877 = vadd.f32 %v3397, %v3749
    %v3878 = vadd.f32 %v3398, %v3750
    %v3879 = vadd.f32 %v3399, %v3751
    %v3880 = vadd.f32 %v3400, %v3752
    %v3881 = vadd.f32 %v3401, %v3753
    %v3882 = vadd.f32 %v3402, %v3754
    %v3883 = vadd.f32 %v3403, %v3755
    %v3884 = vadd.f32 %v3404, %v3756
    %v3885 = vadd.f32 %v3405, %v3757
    %v3886 = vadd.f32 %v3406, %v3758
    %v3887 = vadd.f32 %v3407, %v3759
    %v3888 = vadd.f32 %v3408, %v3760
    %v3889 = vadd.f32 %v3873, %v3505
    %v3890 = vadd.f32 %v3874, %v3506
    %v3891 = vadd.f32 %v3875, %v3507
    %v3892 = vadd.f32 %v3876, %v3508
    %v3893 = vadd.f32 %v3877, %v3509
    %v3894 = vadd.f32 %v3878, %v3510
    %v3895 = vadd.f32 %v3879, %v3511
    %v3896 = vadd.f32 %v3880, %v3512
    %v3897 = vadd.f32 %v3881, %v3513
    %v3898 = vadd.f32 %v3882, %v3514
    %v3899 = vadd.f32 %v3883, %v3515
    %v3900 = vadd.f32 %v3884, %v3516
    %v3901 = vadd.f32 %v3885, %v3517
    %v3902 = vadd.f32 %v3886, %v3518
    %v3903 = vadd.f32 %v3887, %v3519
    %v3904 = vadd.f32 %v3888, %v3520
    %v3905 = vadd.f32 %v3889, %v3793
    %v3906 = vadd.f32 %v3890, %v3794
    %v3907 = vadd.f32 %v3891, %v3795
    %v3908 = vadd.f32 %v3892, %v3796
    %v3909 = vadd.f32 %v3893, %v3797
    %v3910 = vadd.f32 %v3894, %v3798
    %v3911 = vadd.f32 %v3895, %v3799
    %v3912 = vadd.f32 %v3896, %v3800
    %v3913 = vadd.f32 %v3897, %v3801
    %v3914 = vadd.f32 %v3898, %v3802
    %v3915 = vadd.f32 %v3899, %v3803
    %v3916 = vadd.f32 %v3900, %v3804
    %v3917 = vadd.f32 %v3901, %v3805
    %v3918 = vadd.f32 %v3902, %v3806
    %v3919 = vadd.f32 %v3903, %v3807
    %v3920 = vadd.f32 %v3904, %v3808
    %v3921 = vmul.f32 %v3313, 0.2236068
    %v3922 = vmul.f32 %v3314, 0.2236068
    %v3923 = vmul.f32 %v3315, 0.2236068
    %v3924 = vmul.f32 %v3316, 0.2236068
    %v3925 = vmul.f32 %v3317, 0.2236068
    %v3926 = vmul.f32 %v3318, 0.2236068
    %v3927 = vmul.f32 %v3319, 0.2236068
    %v3928 = vmul.f32 %v3320, 0.2236068
    %v3929 = vmul.f32 %v3321, 0.2236068
    %v3930 = vmul.f32 %v3322, 0.2236068
    %v3931 = vmul.f32 %v3323, 0.2236068
    %v3932 = vmul.f32 %v3324, 0.2236068
    %v3933 = vmul.f32 %v3325, 0.2236068
    %v3934 = vmul.f32 %v3326, 0.2236068
    %v3935 = vmul.f32 %v3327, 0.2236068
    %v3936 = vmul.f32 %v3328, 0.2236068
    %v3937 = vadd.f32 %v3681, %v3921
    %v3938 = vadd.f32 %v3682, %v3922
    %v3939 = vadd.f32 %v3683, %v3923
    %v3940 = vadd.f32 %v3684, %v3924
    %v3941 = vadd.f32 %v3685, %v3925
    %v3942 = vadd.f32 %v3686, %v3926
    %v3943 = vadd.f32 %v3687, %v3927
    %v3944 = vadd.f32 %v3688, %v3928
    %v3945 = vadd.f32 %v3689, %v3929
    %v3946 = vadd.f32 %v3690, %v3930
    %v3947 = vadd.f32 %v3691, %v3931
    %v3948 = vadd.f32 %v3692, %v3932
    %v3949 = vadd.f32 %v3693, %v3933
    %v3950 = vadd.f32 %v3694, %v3934
    %v3951 = vadd.f32 %v3695, %v3935
    %v3952 = vadd.f32 %v3696, %v3936
    %v3953 = vmul.f32 %v3329, 0.2236068
    %v3954 = vmul.f32 %v3330, 0.2236068
    %v3955 = vmul.f32 %v3331, 0.2236068
    %v3956 = vmul.f32 %v3332, 0.2236068
    %v3957 = vmul.f32 %v3333, 0.2236068
    %v3958 = vmul.f32 %v3334, 0.2236068
    %v3959 = vmul.f32 %v3335, 0.2236068
    %v3960 = vmul.f32 %v3336, 0.2236068
    %v3961 = vmul.f32 %v3337, 0.2236068
    %v3962 = vmul.f32 %v3338, 0.2236068
    %v3963 = vmul.f32 %v3339, 0.2236068
    %v3964 = vmul.f32 %v3340, 0.2236068
    %v3965 = vmul.f32 %v3341, 0.2236068
    %v3966 = vmul.f32 %v3342, 0.2236068
    %v3967 = vmul.f32 %v3343, 0.2236068
    %v3968 = vmul.f32 %v3344, 0.2236068
    %v3969 = vadd.f32 %v3937, %v3953
    %v3970 = vadd.f32 %v3938, %v3954
    %v3971 = vadd.f32 %v3939, %v3955
    %v3972 = vadd.f32 %v3940, %v3956
    %v3973 = vadd.f32 %v3941, %v3957
    %v3974 = vadd.f32 %v3942, %v3958
    %v3975 = vadd.f32 %v3943, %v3959
    %v3976 = vadd.f32 %v3944, %v3960
    %v3977 = vadd.f32 %v3945, %v3961
    %v3978 = vadd.f32 %v3946, %v3962
    %v3979 = vadd.f32 %v3947, %v3963
    %v3980 = vadd.f32 %v3948, %v3964
    %v3981 = vadd.f32 %v3949, %v3965
    %v3982 = vadd.f32 %v3950, %v3966
    %v3983 = vadd.f32 %v3951, %v3967
    %v3984 = vadd.f32 %v3952, %v3968
    %v3985 = vmul.f32 %v3345, 0.2236068
    %v3986 = vmul.f32 %v3346, 0.2236068
    %v3987 = vmul.f32 %v3347, 0.2236068
    %v3988 = vmul.f32 %v3348, 0.2236068
    %v3989 = vmul.f32 %v3349, 0.2236068
    %v3990 = vmul.f32 %v3350, 0.2236068
    %v3991 = vmul.f32 %v3351, 0.2236068
    %v3992 = vmul.f32 %v3352, 0.2236068
    %v3993 = vmul.f32 %v3353, 0.2236068
    %v3994 = vmul.f32 %v3354, 0.2236068
    %v3995 = vmul.f32 %v3355, 0.2236068
    %v3996 = vmul.f32 %v3356, 0.2236068
    %v3997 = vmul.f32 %v3357, 0.2236068
    %v3998 = vmul.f32 %v3358, 0.2236068
    %v3999 = vmul.f32 %v3359, 0.2236068
    %v4000 = vmul.f32 %v3360, 0.2236068
    %v4001 = vadd.f32 %v3969, %v3985
    %v4002 = vadd.f32 %v3970, %v3986
    %v4003 = vadd.f32 %v3971, %v3987
    %v4004 = vadd.f32 %v3972, %v3988
    %v4005 = vadd.f32 %v3973, %v3989
    %v4006 = vadd.f32 %v3974, %v3990
    %v4007 = vadd.f32 %v3975, %v3991
    %v4008 = vadd.f32 %v3976, %v3992
    %v4009 = vadd.f32 %v3977, %v3993
    %v4010 = vadd.f32 %v3978, %v3994
    %v4011 = vadd.f32 %v3979, %v3995
    %v4012 = vadd.f32 %v3980, %v3996
    %v4013 = vadd.f32 %v3981, %v3997
    %v4014 = vadd.f32 %v3982, %v3998
    %v4015 = vadd.f32 %v3983, %v3999
    %v4016 = vadd.f32 %v3984, %v4000
    %v4017 = vadd.f32 %v4001, %v3713
    %v4018 = vadd.f32 %v4002, %v3714
    %v4019 = vadd.f32 %v4003, %v3715
    %v4020 = vadd.f32 %v4004, %v3716
    %v4021 = vadd.f32 %v4005, %v3717
    %v4022 = vadd.f32 %v4006, %v3718
    %v4023 = vadd.f32 %v4007, %v3719
    %v4024 = vadd.f32 %v4008, %v3720
    %v4025 = vadd.f32 %v4009, %v3721
    %v4026 = vadd.f32 %v4010, %v3722
    %v4027 = vadd.f32 %v4011, %v3723
    %v4028 = vadd.f32 %v4012, %v3724
    %v4029 = vadd.f32 %v4013, %v3725
    %v4030 = vadd.f32 %v4014, %v3726
    %v4031 = vadd.f32 %v4015, %v3727
    %v4032 = vadd.f32 %v4016, %v3728
    %v4033 = vpack.c.bf16 %v3474, %v3473
    %v4034 = vpack.c.bf16 %v3476, %v3475
    %v4035 = vpack.c.bf16 %v3478, %v3477
    %v4036 = vpack.c.bf16 %v3480, %v3479
    %v4037 = vpack.c.bf16 %v3482, %v3481
    %v4038 = vpack.c.bf16 %v3484, %v3483
    %v4039 = vpack.c.bf16 %v3486, %v3485
    %v4040 = vpack.c.bf16 %v3488, %v3487
    %v4041 = vpack.c.bf16 %v3522, %v3521
    %v4042 = vpack.c.bf16 %v3524, %v3523
    %v4043 = vpack.c.bf16 %v3526, %v3525
    %v4044 = vpack.c.bf16 %v3528, %v3527
    %v4045 = vpack.c.bf16 %v3530, %v3529
    %v4046 = vpack.c.bf16 %v3532, %v3531
    %v4047 = vpack.c.bf16 %v3534, %v3533
    %v4048 = vpack.c.bf16 %v3536, %v3535
    %v4049 = vpack.c.bf16 %v3586, %v3585
    %v4050 = vpack.c.bf16 %v3588, %v3587
    %v4051 = vpack.c.bf16 %v3590, %v3589
    %v4052 = vpack.c.bf16 %v3592, %v3591
    %v4053 = vpack.c.bf16 %v3594, %v3593
    %v4054 = vpack.c.bf16 %v3596, %v3595
    %v4055 = vpack.c.bf16 %v3598, %v3597
    %v4056 = vpack.c.bf16 %v3600, %v3599
    %v4057 = vpack.c.bf16 %v3730, %v3729
    %v4058 = vpack.c.bf16 %v3732, %v3731
    %v4059 = vpack.c.bf16 %v3734, %v3733
    %v4060 = vpack.c.bf16 %v3736, %v3735
    %v4061 = vpack.c.bf16 %v3738, %v3737
    %v4062 = vpack.c.bf16 %v3740, %v3739
    %v4063 = vpack.c.bf16 %v3742, %v3741
    %v4064 = vpack.c.bf16 %v3744, %v3743
    %v4065 = vpack.c.bf16 %v3810, %v3809
    %v4066 = vpack.c.bf16 %v3812, %v3811
    %v4067 = vpack.c.bf16 %v3814, %v3813
    %v4068 = vpack.c.bf16 %v3816, %v3815
    %v4069 = vpack.c.bf16 %v3818, %v3817
    %v4070 = vpack.c.bf16 %v3820, %v3819
    %v4071 = vpack.c.bf16 %v3822, %v3821
    %v4072 = vpack.c.bf16 %v3824, %v3823
    %v4073 = vpack.c.bf16 %v3858, %v3857
    %v4074 = vpack.c.bf16 %v3860, %v3859
    %v4075 = vpack.c.bf16 %v3862, %v3861
    %v4076 = vpack.c.bf16 %v3864, %v3863
    %v4077 = vpack.c.bf16 %v3866, %v3865
    %v4078 = vpack.c.bf16 %v3868, %v3867
    %v4079 = vpack.c.bf16 %v3870, %v3869
    %v4080 = vpack.c.bf16 %v3872, %v3871
    %v4081 = vpack.c.bf16 %v3906, %v3905
    %v4082 = vpack.c.bf16 %v3908, %v3907
    %v4083 = vpack.c.bf16 %v3910, %v3909
    %v4084 = vpack.c.bf16 %v3912, %v3911
    %v4085 = vpack.c.bf16 %v3914, %v3913
    %v4086 = vpack.c.bf16 %v3916, %v3915
    %v4087 = vpack.c.bf16 %v3918, %v3917
    %v4088 = vpack.c.bf16 %v3920, %v3919
    %v4089 = vpack.c.bf16 %v4018, %v4017
    %v4090 = vpack.c.bf16 %v4020, %v4019
    %v4091 = vpack.c.bf16 %v4022, %v4021
    %v4092 = vpack.c.bf16 %v4024, %v4023
    %v4093 = vpack.c.bf16 %v4026, %v4025
    %v4094 = vpack.c.bf16 %v4028, %v4027
    %v4095 = vpack.c.bf16 %v4030, %v4029
    %v4096 = vpack.c.bf16 %v4032, %v4031
    %v4097 = vld [vmem:[%s3] sm:$0xf]
    %v4098 = vld [vmem:[%s3 + $0x4] sm:$0xf]
    %v4099 = vld [vmem:[%s3 + $0x8] sm:$0xf]
    %v4100 = vld [vmem:[%s3 + $0xc] sm:$0xf]
    %v4101 = vld [vmem:[%s3 + $0x10] sm:$0xf]
    %v4102 = vld [vmem:[%s3 + $0x14] sm:$0xf]
    %v4103 = vld [vmem:[%s3 + $0x18] sm:$0xf]
    %v4104 = vld [vmem:[%s3 + $0x1c] sm:$0xf]
    %v4105 = vld [vmem:[%s3 + $0x20] sm:$0xf]
    %v4106 = vld [vmem:[%s3 + $0x24] sm:$0xf]
    %v4107 = vld [vmem:[%s3 + $0x28] sm:$0xf]
    %v4108 = vld [vmem:[%s3 + $0x2c] sm:$0xf]
    %v4109 = vlaneseq
    %v4110 = vshrl.u32 %v4109, 7
    %v4111 = vsub.s32 2, %v4110
    %v4112 = vrot.slane %v28, %v4111
    %v4125 = vunpack.c.l.b16 %v4097
    %v4126 = vunpack.c.l.b16 %v4098
    %v4127 = vunpack.c.l.b16 %v4099
    %v4128 = vunpack.c.l.b16 %v4100
    %v4129 = vunpack.c.l.b16 %v4101
    %v4130 = vunpack.c.l.b16 %v4102
    %v4131 = vunpack.c.l.b16 %v4103
    %v4132 = vunpack.c.l.b16 %v4104
    %v4133 = vunpack.c.l.b16 %v4105
    %v4134 = vunpack.c.l.b16 %v4106
    %v4135 = vunpack.c.l.b16 %v4107
    %v4136 = vunpack.c.l.b16 %v4108
    %v4137 = vpack.c.b16 %v4126, %v4125
    %v4138 = vpack.c.b16 %v4128, %v4127
    %v4139 = vpack.c.b16 %v4130, %v4129
    %v4140 = vpack.c.b16 %v4132, %v4131
    %v4141 = vpack.c.b16 %v4134, %v4133
    %v4142 = vpack.c.b16 %v4136, %v4135
    %vm4149 = vcmask 785408
    %v4151 = vsel %vm4149, %v4033, 0
    %v4154 = vsel %vm4149, %v4034, 0
    %v4157 = vsel %vm4149, %v4035, 0
    %v4160 = vsel %vm4149, %v4036, 0
    %v4163 = vsel %vm4149, %v4037, 0
    %v4166 = vsel %vm4149, %v4038, 0
    %v4169 = vsel %vm4149, %v4039, 0
    %v4172 = vsel %vm4149, %v4040, 0
    %v4175 = vsel %vm4149, %v4041, 0
    %v4178 = vsel %vm4149, %v4042, 0
    %v4181 = vsel %vm4149, %v4043, 0
    %v4184 = vsel %vm4149, %v4044, 0
    %v4187 = vsel %vm4149, %v4045, 0
    %v4190 = vsel %vm4149, %v4046, 0
    %v4193 = vsel %vm4149, %v4047, 0
    %v4196 = vsel %vm4149, %v4048, 0
    %v4199 = vsel %vm4149, %v4049, 0
    %v4202 = vsel %vm4149, %v4050, 0
    %v4205 = vsel %vm4149, %v4051, 0
    %v4208 = vsel %vm4149, %v4052, 0
    %v4211 = vsel %vm4149, %v4053, 0
    %v4214 = vsel %vm4149, %v4054, 0
    %v4217 = vsel %vm4149, %v4055, 0
    %v4220 = vsel %vm4149, %v4056, 0
    %v4223 = vsel %vm4149, %v4057, 0
    %v4226 = vsel %vm4149, %v4058, 0
    %v4229 = vsel %vm4149, %v4059, 0
    %v4232 = vsel %vm4149, %v4060, 0
    %v4235 = vsel %vm4149, %v4061, 0
    %v4238 = vsel %vm4149, %v4062, 0
    %v4241 = vsel %vm4149, %v4063, 0
    %v4244 = vsel %vm4149, %v4064, 0
    %v4247 = vsel %vm4149, %v4065, 0
    %v4250 = vsel %vm4149, %v4066, 0
    %v4253 = vsel %vm4149, %v4067, 0
    %v4256 = vsel %vm4149, %v4068, 0
    %v4259 = vsel %vm4149, %v4069, 0
    %v4262 = vsel %vm4149, %v4070, 0
    %v4265 = vsel %vm4149, %v4071, 0
    %v4268 = vsel %vm4149, %v4072, 0
    %v4271 = vsel %vm4149, %v4073, 0
    %v4274 = vsel %vm4149, %v4074, 0
    %v4277 = vsel %vm4149, %v4075, 0
    %v4280 = vsel %vm4149, %v4076, 0
    %v4283 = vsel %vm4149, %v4077, 0
    %v4286 = vsel %vm4149, %v4078, 0
    %v4289 = vsel %vm4149, %v4079, 0
    %v4292 = vsel %vm4149, %v4080, 0
    %v4295 = vsel %vm4149, %v4081, 0
    %v4298 = vsel %vm4149, %v4082, 0
    %v4301 = vsel %vm4149, %v4083, 0
    %v4304 = vsel %vm4149, %v4084, 0
    %v4307 = vsel %vm4149, %v4085, 0
    %v4310 = vsel %vm4149, %v4086, 0
    %v4313 = vsel %vm4149, %v4087, 0
    %v4316 = vsel %vm4149, %v4088, 0
    %v4319 = vsel %vm4149, %v4089, 0
    %v4322 = vsel %vm4149, %v4090, 0
    %v4325 = vsel %vm4149, %v4091, 0
    %v4328 = vsel %vm4149, %v4092, 0
    %v4331 = vsel %vm4149, %v4093, 0
    %v4334 = vsel %vm4149, %v4094, 0
    %v4337 = vsel %vm4149, %v4095, 0
    %v4340 = vsel %vm4149, %v4096, 0
    %4342 = vmatprep.subr.bf16.mxu0 0
    %4343 = vmatpush1.bf16.msra.mxu0 0
    %4344 = vmatprep.subr.bf16.mxu0 0
    %4345 = vmatpush1.bf16.msra.mxu0 0
    %4346 = vmatprep.subr.bf16.mxu0 0
    %4347 = vmatpush1.bf16.msra.mxu0 %v4142
    %4348 = vmatprep.subr.bf16.mxu0 0
    %4349 = vmatpush1.bf16.msra.mxu0 %v4141
    %4350 = vmatprep.subr.bf16.mxu0 0
    %4351 = vmatpush1.bf16.msra.mxu0 %v4140
    %4352 = vmatprep.subr.bf16.mxu0 0
    %4353 = vmatpush1.bf16.msra.mxu0 %v4139
    %4354 = vmatprep.subr.bf16.mxu0 0
    %4355 = vmatpush1.bf16.msra.mxu0 %v4138
    %4356 = vmatprep.subr.bf16.mxu0 0
    %4357 = vmatpush1.bf16.msra.mxu0 %v4137
    %4358 = vmatprep.subr.bf16.mxu0 0
    %4359 = vmatpush2.bf16.msra.mxu0 0
    %4360 = vmatprep.subr.bf16.mxu0 0
    %4361 = vmatpush2.bf16.msra.mxu0 0
    %4362 = vmatprep.subr.bf16.mxu0 0
    %4363 = vmatpush2.bf16.msra.mxu0 0
    %4364 = vmatprep.subr.bf16.mxu0 0
    %4365 = vmatpush2.bf16.msra.mxu0 0
    %4366 = vmatprep.subr.bf16.mxu0 0
    %4367 = vmatpush2.bf16.msra.mxu0 0
    %4368 = vmatprep.subr.bf16.mxu0 0
    %4369 = vmatpush2.bf16.msra.mxu0 0
    %4370 = vmatprep.subr.bf16.mxu0 0
    %4371 = vmatpush2.bf16.msra.mxu0 0
    %4372 = vmatprep.subr.bf16.mxu0 0
    %4373 = vmatpush2.bf16.msra.mxu0 0
    %4374 = vmatprep.mubr.bf16.mxu0 0
    %4375 = vmatmul.mubr.bf16.gmra.mxu0 %v4151
    %v4376 = vpop.f32.mrf.mxu0
    %v4377 = vadd.f32 %v4112, %v4376
    %v4378 = vpop.f32.mrf.mxu0
    %v4379 = vpop.f32.mrf.mxu0
    %v4380 = vadd.f32 %v4112, %v4379
    %v4381 = vpop.f32.mrf.mxu0
    %4382 = vmatprep.mubr.bf16.mxu0 0
    %4383 = vmatmul.mubr.bf16.gmra.mxu0 %v4154
    %v4384 = vpop.f32.mrf.mxu0
    %v4385 = vadd.f32 %v4112, %v4384
    %v4386 = vpop.f32.mrf.mxu0
    %v4387 = vpop.f32.mrf.mxu0
    %v4388 = vadd.f32 %v4112, %v4387
    %v4389 = vpop.f32.mrf.mxu0
    %4390 = vmatprep.mubr.bf16.mxu0 0
    %4391 = vmatmul.mubr.bf16.gmra.mxu0 %v4157
    %v4392 = vpop.f32.mrf.mxu0
    %v4393 = vadd.f32 %v4112, %v4392
    %v4394 = vpop.f32.mrf.mxu0
    %v4395 = vpop.f32.mrf.mxu0
    %v4396 = vadd.f32 %v4112, %v4395
    %v4397 = vpop.f32.mrf.mxu0
    %4398 = vmatprep.mubr.bf16.mxu0 0
    %4399 = vmatmul.mubr.bf16.gmra.mxu0 %v4160
    %v4400 = vpop.f32.mrf.mxu0
    %v4401 = vadd.f32 %v4112, %v4400
    %v4402 = vpop.f32.mrf.mxu0
    %v4403 = vpop.f32.mrf.mxu0
    %v4404 = vadd.f32 %v4112, %v4403
    %v4405 = vpop.f32.mrf.mxu0
    %4406 = vmatprep.mubr.bf16.mxu0 0
    %4407 = vmatmul.mubr.bf16.gmra.mxu0 %v4163
    %v4408 = vpop.f32.mrf.mxu0
    %v4409 = vadd.f32 %v4112, %v4408
    %v4410 = vpop.f32.mrf.mxu0
    %v4411 = vpop.f32.mrf.mxu0
    %v4412 = vadd.f32 %v4112, %v4411
    %v4413 = vpop.f32.mrf.mxu0
    %4414 = vmatprep.mubr.bf16.mxu0 0
    %4415 = vmatmul.mubr.bf16.gmra.mxu0 %v4166
    %v4416 = vpop.f32.mrf.mxu0
    %v4417 = vadd.f32 %v4112, %v4416
    %v4418 = vpop.f32.mrf.mxu0
    %v4419 = vpop.f32.mrf.mxu0
    %v4420 = vadd.f32 %v4112, %v4419
    %v4421 = vpop.f32.mrf.mxu0
    %4422 = vmatprep.mubr.bf16.mxu0 0
    %4423 = vmatmul.mubr.bf16.gmra.mxu0 %v4169
    %v4424 = vpop.f32.mrf.mxu0
    %v4425 = vadd.f32 %v4112, %v4424
    %v4426 = vpop.f32.mrf.mxu0
    %v4427 = vpop.f32.mrf.mxu0
    %v4428 = vadd.f32 %v4112, %v4427
    %v4429 = vpop.f32.mrf.mxu0
    %4430 = vmatprep.mubr.bf16.mxu0 0
    %4431 = vmatmul.mubr.bf16.gmra.mxu0 %v4172
    %v4432 = vpop.f32.mrf.mxu0
    %v4433 = vadd.f32 %v4112, %v4432
    %v4434 = vpop.f32.mrf.mxu0
    %v4435 = vpop.f32.mrf.mxu0
    %v4436 = vadd.f32 %v4112, %v4435
    %v4437 = vpop.f32.mrf.mxu0
    %4438 = vmatprep.mubr.bf16.mxu0 0
    %4439 = vmatmul.mubr.bf16.gmra.mxu0 %v4175
    %v4440 = vpop.f32.mrf.mxu0
    %v4441 = vadd.f32 %v4112, %v4440
    %v4442 = vpop.f32.mrf.mxu0
    %v4443 = vpop.f32.mrf.mxu0
    %v4444 = vadd.f32 %v4112, %v4443
    %v4445 = vpop.f32.mrf.mxu0
    %4446 = vmatprep.mubr.bf16.mxu0 0
    %4447 = vmatmul.mubr.bf16.gmra.mxu0 %v4178
    %v4448 = vpop.f32.mrf.mxu0
    %v4449 = vadd.f32 %v4112, %v4448
    %v4450 = vpop.f32.mrf.mxu0
    %v4451 = vpop.f32.mrf.mxu0
    %v4452 = vadd.f32 %v4112, %v4451
    %v4453 = vpop.f32.mrf.mxu0
    %4454 = vmatprep.mubr.bf16.mxu0 0
    %4455 = vmatmul.mubr.bf16.gmra.mxu0 %v4181
    %v4456 = vpop.f32.mrf.mxu0
    %v4457 = vadd.f32 %v4112, %v4456
    %v4458 = vpop.f32.mrf.mxu0
    %v4459 = vpop.f32.mrf.mxu0
    %v4460 = vadd.f32 %v4112, %v4459
    %v4461 = vpop.f32.mrf.mxu0
    %4462 = vmatprep.mubr.bf16.mxu0 0
    %4463 = vmatmul.mubr.bf16.gmra.mxu0 %v4184
    %v4464 = vpop.f32.mrf.mxu0
    %v4465 = vadd.f32 %v4112, %v4464
    %v4466 = vpop.f32.mrf.mxu0
    %v4467 = vpop.f32.mrf.mxu0
    %v4468 = vadd.f32 %v4112, %v4467
    %v4469 = vpop.f32.mrf.mxu0
    %4470 = vmatprep.mubr.bf16.mxu0 0
    %4471 = vmatmul.mubr.bf16.gmra.mxu0 %v4187
    %v4472 = vpop.f32.mrf.mxu0
    %v4473 = vadd.f32 %v4112, %v4472
    %v4474 = vpop.f32.mrf.mxu0
    %v4475 = vpop.f32.mrf.mxu0
    %v4476 = vadd.f32 %v4112, %v4475
    %v4477 = vpop.f32.mrf.mxu0
    %4478 = vmatprep.mubr.bf16.mxu0 0
    %4479 = vmatmul.mubr.bf16.gmra.mxu0 %v4190
    %v4480 = vpop.f32.mrf.mxu0
    %v4481 = vadd.f32 %v4112, %v4480
    %v4482 = vpop.f32.mrf.mxu0
    %v4483 = vpop.f32.mrf.mxu0
    %v4484 = vadd.f32 %v4112, %v4483
    %v4485 = vpop.f32.mrf.mxu0
    %4486 = vmatprep.mubr.bf16.mxu0 0
    %4487 = vmatmul.mubr.bf16.gmra.mxu0 %v4193
    %v4488 = vpop.f32.mrf.mxu0
    %v4489 = vadd.f32 %v4112, %v4488
    %v4490 = vpop.f32.mrf.mxu0
    %v4491 = vpop.f32.mrf.mxu0
    %v4492 = vadd.f32 %v4112, %v4491
    %v4493 = vpop.f32.mrf.mxu0
    %4494 = vmatprep.mubr.bf16.mxu0 0
    %4495 = vmatmul.mubr.bf16.gmra.mxu0 %v4196
    %v4496 = vpop.f32.mrf.mxu0
    %v4497 = vadd.f32 %v4112, %v4496
    %v4498 = vpop.f32.mrf.mxu0
    %v4499 = vpop.f32.mrf.mxu0
    %v4500 = vadd.f32 %v4112, %v4499
    %v4501 = vpop.f32.mrf.mxu0
    %4502 = vmatprep.mubr.bf16.mxu0 0
    %4503 = vmatmul.mubr.bf16.gmra.mxu0 %v4199
    %v4504 = vpop.f32.mrf.mxu0
    %v4505 = vadd.f32 %v4112, %v4504
    %v4506 = vpop.f32.mrf.mxu0
    %v4507 = vpop.f32.mrf.mxu0
    %v4508 = vadd.f32 %v4112, %v4507
    %v4509 = vpop.f32.mrf.mxu0
    %4510 = vmatprep.mubr.bf16.mxu0 0
    %4511 = vmatmul.mubr.bf16.gmra.mxu0 %v4202
    %v4512 = vpop.f32.mrf.mxu0
    %v4513 = vadd.f32 %v4112, %v4512
    %v4514 = vpop.f32.mrf.mxu0
    %v4515 = vpop.f32.mrf.mxu0
    %v4516 = vadd.f32 %v4112, %v4515
    %v4517 = vpop.f32.mrf.mxu0
    %4518 = vmatprep.mubr.bf16.mxu0 0
    %4519 = vmatmul.mubr.bf16.gmra.mxu0 %v4205
    %v4520 = vpop.f32.mrf.mxu0
    %v4521 = vadd.f32 %v4112, %v4520
    %v4522 = vpop.f32.mrf.mxu0
    %v4523 = vpop.f32.mrf.mxu0
    %v4524 = vadd.f32 %v4112, %v4523
    %v4525 = vpop.f32.mrf.mxu0
    %4526 = vmatprep.mubr.bf16.mxu0 0
    %4527 = vmatmul.mubr.bf16.gmra.mxu0 %v4208
    %v4528 = vpop.f32.mrf.mxu0
    %v4529 = vadd.f32 %v4112, %v4528
    %v4530 = vpop.f32.mrf.mxu0
    %v4531 = vpop.f32.mrf.mxu0
    %v4532 = vadd.f32 %v4112, %v4531
    %v4533 = vpop.f32.mrf.mxu0
    %4534 = vmatprep.mubr.bf16.mxu0 0
    %4535 = vmatmul.mubr.bf16.gmra.mxu0 %v4211
    %v4536 = vpop.f32.mrf.mxu0
    %v4537 = vadd.f32 %v4112, %v4536
    %v4538 = vpop.f32.mrf.mxu0
    %v4539 = vpop.f32.mrf.mxu0
    %v4540 = vadd.f32 %v4112, %v4539
    %v4541 = vpop.f32.mrf.mxu0
    %4542 = vmatprep.mubr.bf16.mxu0 0
    %4543 = vmatmul.mubr.bf16.gmra.mxu0 %v4214
    %v4544 = vpop.f32.mrf.mxu0
    %v4545 = vadd.f32 %v4112, %v4544
    %v4546 = vpop.f32.mrf.mxu0
    %v4547 = vpop.f32.mrf.mxu0
    %v4548 = vadd.f32 %v4112, %v4547
    %v4549 = vpop.f32.mrf.mxu0
    %4550 = vmatprep.mubr.bf16.mxu0 0
    %4551 = vmatmul.mubr.bf16.gmra.mxu0 %v4217
    %v4552 = vpop.f32.mrf.mxu0
    %v4553 = vadd.f32 %v4112, %v4552
    %v4554 = vpop.f32.mrf.mxu0
    %v4555 = vpop.f32.mrf.mxu0
    %v4556 = vadd.f32 %v4112, %v4555
    %v4557 = vpop.f32.mrf.mxu0
    %4558 = vmatprep.mubr.bf16.mxu0 0
    %4559 = vmatmul.mubr.bf16.gmra.mxu0 %v4220
    %v4560 = vpop.f32.mrf.mxu0
    %v4561 = vadd.f32 %v4112, %v4560
    %v4562 = vpop.f32.mrf.mxu0
    %v4563 = vpop.f32.mrf.mxu0
    %v4564 = vadd.f32 %v4112, %v4563
    %v4565 = vpop.f32.mrf.mxu0
    %4566 = vmatprep.mubr.bf16.mxu0 0
    %4567 = vmatmul.mubr.bf16.gmra.mxu0 %v4223
    %v4568 = vpop.f32.mrf.mxu0
    %v4569 = vadd.f32 %v4112, %v4568
    %v4570 = vpop.f32.mrf.mxu0
    %v4571 = vpop.f32.mrf.mxu0
    %v4572 = vadd.f32 %v4112, %v4571
    %v4573 = vpop.f32.mrf.mxu0
    %4574 = vmatprep.mubr.bf16.mxu0 0
    %4575 = vmatmul.mubr.bf16.gmra.mxu0 %v4226
    %v4576 = vpop.f32.mrf.mxu0
    %v4577 = vadd.f32 %v4112, %v4576
    %v4578 = vpop.f32.mrf.mxu0
    %v4579 = vpop.f32.mrf.mxu0
    %v4580 = vadd.f32 %v4112, %v4579
    %v4581 = vpop.f32.mrf.mxu0
    %4582 = vmatprep.mubr.bf16.mxu0 0
    %4583 = vmatmul.mubr.bf16.gmra.mxu0 %v4229
    %v4584 = vpop.f32.mrf.mxu0
    %v4585 = vadd.f32 %v4112, %v4584
    %v4586 = vpop.f32.mrf.mxu0
    %v4587 = vpop.f32.mrf.mxu0
    %v4588 = vadd.f32 %v4112, %v4587
    %v4589 = vpop.f32.mrf.mxu0
    %4590 = vmatprep.mubr.bf16.mxu0 0
    %4591 = vmatmul.mubr.bf16.gmra.mxu0 %v4232
    %v4592 = vpop.f32.mrf.mxu0
    %v4593 = vadd.f32 %v4112, %v4592
    %v4594 = vpop.f32.mrf.mxu0
    %v4595 = vpop.f32.mrf.mxu0
    %v4596 = vadd.f32 %v4112, %v4595
    %v4597 = vpop.f32.mrf.mxu0
    %4598 = vmatprep.mubr.bf16.mxu0 0
    %4599 = vmatmul.mubr.bf16.gmra.mxu0 %v4235
    %v4600 = vpop.f32.mrf.mxu0
    %v4601 = vadd.f32 %v4112, %v4600
    %v4602 = vpop.f32.mrf.mxu0
    %v4603 = vpop.f32.mrf.mxu0
    %v4604 = vadd.f32 %v4112, %v4603
    %v4605 = vpop.f32.mrf.mxu0
    %4606 = vmatprep.mubr.bf16.mxu0 0
    %4607 = vmatmul.mubr.bf16.gmra.mxu0 %v4238
    %v4608 = vpop.f32.mrf.mxu0
    %v4609 = vadd.f32 %v4112, %v4608
    %v4610 = vpop.f32.mrf.mxu0
    %v4611 = vpop.f32.mrf.mxu0
    %v4612 = vadd.f32 %v4112, %v4611
    %v4613 = vpop.f32.mrf.mxu0
    %4614 = vmatprep.mubr.bf16.mxu0 0
    %4615 = vmatmul.mubr.bf16.gmra.mxu0 %v4241
    %v4616 = vpop.f32.mrf.mxu0
    %v4617 = vadd.f32 %v4112, %v4616
    %v4618 = vpop.f32.mrf.mxu0
    %v4619 = vpop.f32.mrf.mxu0
    %v4620 = vadd.f32 %v4112, %v4619
    %v4621 = vpop.f32.mrf.mxu0
    %4622 = vmatprep.mubr.bf16.mxu0 0
    %4623 = vmatmul.mubr.bf16.gmra.mxu0 %v4244
    %v4624 = vpop.f32.mrf.mxu0
    %v4625 = vadd.f32 %v4112, %v4624
    %v4626 = vpop.f32.mrf.mxu0
    %v4627 = vpop.f32.mrf.mxu0
    %v4628 = vadd.f32 %v4112, %v4627
    %v4629 = vpop.f32.mrf.mxu0
    %4630 = vmatprep.mubr.bf16.mxu0 0
    %4631 = vmatmul.mubr.bf16.gmra.mxu0 %v4247
    %v4632 = vpop.f32.mrf.mxu0
    %v4633 = vadd.f32 %v4112, %v4632
    %v4634 = vpop.f32.mrf.mxu0
    %v4635 = vpop.f32.mrf.mxu0
    %v4636 = vadd.f32 %v4112, %v4635
    %v4637 = vpop.f32.mrf.mxu0
    %4638 = vmatprep.mubr.bf16.mxu0 0
    %4639 = vmatmul.mubr.bf16.gmra.mxu0 %v4250
    %v4640 = vpop.f32.mrf.mxu0
    %v4641 = vadd.f32 %v4112, %v4640
    %v4642 = vpop.f32.mrf.mxu0
    %v4643 = vpop.f32.mrf.mxu0
    %v4644 = vadd.f32 %v4112, %v4643
    %v4645 = vpop.f32.mrf.mxu0
    %4646 = vmatprep.mubr.bf16.mxu0 0
    %4647 = vmatmul.mubr.bf16.gmra.mxu0 %v4253
    %v4648 = vpop.f32.mrf.mxu0
    %v4649 = vadd.f32 %v4112, %v4648
    %v4650 = vpop.f32.mrf.mxu0
    %v4651 = vpop.f32.mrf.mxu0
    %v4652 = vadd.f32 %v4112, %v4651
    %v4653 = vpop.f32.mrf.mxu0
    %4654 = vmatprep.mubr.bf16.mxu0 0
    %4655 = vmatmul.mubr.bf16.gmra.mxu0 %v4256
    %v4656 = vpop.f32.mrf.mxu0
    %v4657 = vadd.f32 %v4112, %v4656
    %v4658 = vpop.f32.mrf.mxu0
    %v4659 = vpop.f32.mrf.mxu0
    %v4660 = vadd.f32 %v4112, %v4659
    %v4661 = vpop.f32.mrf.mxu0
    %4662 = vmatprep.mubr.bf16.mxu0 0
    %4663 = vmatmul.mubr.bf16.gmra.mxu0 %v4259
    %v4664 = vpop.f32.mrf.mxu0
    %v4665 = vadd.f32 %v4112, %v4664
    %v4666 = vpop.f32.mrf.mxu0
    %v4667 = vpop.f32.mrf.mxu0
    %v4668 = vadd.f32 %v4112, %v4667
    %v4669 = vpop.f32.mrf.mxu0
    %4670 = vmatprep.mubr.bf16.mxu0 0
    %4671 = vmatmul.mubr.bf16.gmra.mxu0 %v4262
    %v4672 = vpop.f32.mrf.mxu0
    %v4673 = vadd.f32 %v4112, %v4672
    %v4674 = vpop.f32.mrf.mxu0
    %v4675 = vpop.f32.mrf.mxu0
    %v4676 = vadd.f32 %v4112, %v4675
    %v4677 = vpop.f32.mrf.mxu0
    %4678 = vmatprep.mubr.bf16.mxu0 0
    %4679 = vmatmul.mubr.bf16.gmra.mxu0 %v4265
    %v4680 = vpop.f32.mrf.mxu0
    %v4681 = vadd.f32 %v4112, %v4680
    %v4682 = vpop.f32.mrf.mxu0
    %v4683 = vpop.f32.mrf.mxu0
    %v4684 = vadd.f32 %v4112, %v4683
    %v4685 = vpop.f32.mrf.mxu0
    %4686 = vmatprep.mubr.bf16.mxu0 0
    %4687 = vmatmul.mubr.bf16.gmra.mxu0 %v4268
    %v4688 = vpop.f32.mrf.mxu0
    %v4689 = vadd.f32 %v4112, %v4688
    %v4690 = vpop.f32.mrf.mxu0
    %v4691 = vpop.f32.mrf.mxu0
    %v4692 = vadd.f32 %v4112, %v4691
    %v4693 = vpop.f32.mrf.mxu0
    %4694 = vmatprep.mubr.bf16.mxu0 0
    %4695 = vmatmul.mubr.bf16.gmra.mxu0 %v4271
    %v4696 = vpop.f32.mrf.mxu0
    %v4697 = vadd.f32 %v4112, %v4696
    %v4698 = vpop.f32.mrf.mxu0
    %v4699 = vpop.f32.mrf.mxu0
    %v4700 = vadd.f32 %v4112, %v4699
    %v4701 = vpop.f32.mrf.mxu0
    %4702 = vmatprep.mubr.bf16.mxu0 0
    %4703 = vmatmul.mubr.bf16.gmra.mxu0 %v4274
    %v4704 = vpop.f32.mrf.mxu0
    %v4705 = vadd.f32 %v4112, %v4704
    %v4706 = vpop.f32.mrf.mxu0
    %v4707 = vpop.f32.mrf.mxu0
    %v4708 = vadd.f32 %v4112, %v4707
    %v4709 = vpop.f32.mrf.mxu0
    %4710 = vmatprep.mubr.bf16.mxu0 0
    %4711 = vmatmul.mubr.bf16.gmra.mxu0 %v4277
    %v4712 = vpop.f32.mrf.mxu0
    %v4713 = vadd.f32 %v4112, %v4712
    %v4714 = vpop.f32.mrf.mxu0
    %v4715 = vpop.f32.mrf.mxu0
    %v4716 = vadd.f32 %v4112, %v4715
    %v4717 = vpop.f32.mrf.mxu0
    %4718 = vmatprep.mubr.bf16.mxu0 0
    %4719 = vmatmul.mubr.bf16.gmra.mxu0 %v4280
    %v4720 = vpop.f32.mrf.mxu0
    %v4721 = vadd.f32 %v4112, %v4720
    %v4722 = vpop.f32.mrf.mxu0
    %v4723 = vpop.f32.mrf.mxu0
    %v4724 = vadd.f32 %v4112, %v4723
    %v4725 = vpop.f32.mrf.mxu0
    %4726 = vmatprep.mubr.bf16.mxu0 0
    %4727 = vmatmul.mubr.bf16.gmra.mxu0 %v4283
    %v4728 = vpop.f32.mrf.mxu0
    %v4729 = vadd.f32 %v4112, %v4728
    %v4730 = vpop.f32.mrf.mxu0
    %v4731 = vpop.f32.mrf.mxu0
    %v4732 = vadd.f32 %v4112, %v4731
    %v4733 = vpop.f32.mrf.mxu0
    %4734 = vmatprep.mubr.bf16.mxu0 0
    %4735 = vmatmul.mubr.bf16.gmra.mxu0 %v4286
    %v4736 = vpop.f32.mrf.mxu0
    %v4737 = vadd.f32 %v4112, %v4736
    %v4738 = vpop.f32.mrf.mxu0
    %v4739 = vpop.f32.mrf.mxu0
    %v4740 = vadd.f32 %v4112, %v4739
    %v4741 = vpop.f32.mrf.mxu0
    %4742 = vmatprep.mubr.bf16.mxu0 0
    %4743 = vmatmul.mubr.bf16.gmra.mxu0 %v4289
    %v4744 = vpop.f32.mrf.mxu0
    %v4745 = vadd.f32 %v4112, %v4744
    %v4746 = vpop.f32.mrf.mxu0
    %v4747 = vpop.f32.mrf.mxu0
    %v4748 = vadd.f32 %v4112, %v4747
    %v4749 = vpop.f32.mrf.mxu0
    %4750 = vmatprep.mubr.bf16.mxu0 0
    %4751 = vmatmul.mubr.bf16.gmra.mxu0 %v4292
    %v4752 = vpop.f32.mrf.mxu0
    %v4753 = vadd.f32 %v4112, %v4752
    %v4754 = vpop.f32.mrf.mxu0
    %v4755 = vpop.f32.mrf.mxu0
    %v4756 = vadd.f32 %v4112, %v4755
    %v4757 = vpop.f32.mrf.mxu0
    %4758 = vmatprep.mubr.bf16.mxu0 0
    %4759 = vmatmul.mubr.bf16.gmra.mxu0 %v4295
    %v4760 = vpop.f32.mrf.mxu0
    %v4761 = vadd.f32 %v4112, %v4760
    %v4762 = vpop.f32.mrf.mxu0
    %v4763 = vpop.f32.mrf.mxu0
    %v4764 = vadd.f32 %v4112, %v4763
    %v4765 = vpop.f32.mrf.mxu0
    %4766 = vmatprep.mubr.bf16.mxu0 0
    %4767 = vmatmul.mubr.bf16.gmra.mxu0 %v4298
    %v4768 = vpop.f32.mrf.mxu0
    %v4769 = vadd.f32 %v4112, %v4768
    %v4770 = vpop.f32.mrf.mxu0
    %v4771 = vpop.f32.mrf.mxu0
    %v4772 = vadd.f32 %v4112, %v4771
    %v4773 = vpop.f32.mrf.mxu0
    %4774 = vmatprep.mubr.bf16.mxu0 0
    %4775 = vmatmul.mubr.bf16.gmra.mxu0 %v4301
    %v4776 = vpop.f32.mrf.mxu0
    %v4777 = vadd.f32 %v4112, %v4776
    %v4778 = vpop.f32.mrf.mxu0
    %v4779 = vpop.f32.mrf.mxu0
    %v4780 = vadd.f32 %v4112, %v4779
    %v4781 = vpop.f32.mrf.mxu0
    %4782 = vmatprep.mubr.bf16.mxu0 0
    %4783 = vmatmul.mubr.bf16.gmra.mxu0 %v4304
    %v4784 = vpop.f32.mrf.mxu0
    %v4785 = vadd.f32 %v4112, %v4784
    %v4786 = vpop.f32.mrf.mxu0
    %v4787 = vpop.f32.mrf.mxu0
    %v4788 = vadd.f32 %v4112, %v4787
    %v4789 = vpop.f32.mrf.mxu0
    %4790 = vmatprep.mubr.bf16.mxu0 0
    %4791 = vmatmul.mubr.bf16.gmra.mxu0 %v4307
    %v4792 = vpop.f32.mrf.mxu0
    %v4793 = vadd.f32 %v4112, %v4792
    %v4794 = vpop.f32.mrf.mxu0
    %v4795 = vpop.f32.mrf.mxu0
    %v4796 = vadd.f32 %v4112, %v4795
    %v4797 = vpop.f32.mrf.mxu0
    %4798 = vmatprep.mubr.bf16.mxu0 0
    %4799 = vmatmul.mubr.bf16.gmra.mxu0 %v4310
    %v4800 = vpop.f32.mrf.mxu0
    %v4801 = vadd.f32 %v4112, %v4800
    %v4802 = vpop.f32.mrf.mxu0
    %v4803 = vpop.f32.mrf.mxu0
    %v4804 = vadd.f32 %v4112, %v4803
    %v4805 = vpop.f32.mrf.mxu0
    %4806 = vmatprep.mubr.bf16.mxu0 0
    %4807 = vmatmul.mubr.bf16.gmra.mxu0 %v4313
    %v4808 = vpop.f32.mrf.mxu0
    %v4809 = vadd.f32 %v4112, %v4808
    %v4810 = vpop.f32.mrf.mxu0
    %v4811 = vpop.f32.mrf.mxu0
    %v4812 = vadd.f32 %v4112, %v4811
    %v4813 = vpop.f32.mrf.mxu0
    %4814 = vmatprep.mubr.bf16.mxu0 0
    %4815 = vmatmul.mubr.bf16.gmra.mxu0 %v4316
    %v4816 = vpop.f32.mrf.mxu0
    %v4817 = vadd.f32 %v4112, %v4816
    %v4818 = vpop.f32.mrf.mxu0
    %v4819 = vpop.f32.mrf.mxu0
    %v4820 = vadd.f32 %v4112, %v4819
    %v4821 = vpop.f32.mrf.mxu0
    %4822 = vmatprep.mubr.bf16.mxu0 0
    %4823 = vmatmul.mubr.bf16.gmra.mxu0 %v4319
    %v4824 = vpop.f32.mrf.mxu0
    %v4825 = vadd.f32 %v4112, %v4824
    %v4826 = vpop.f32.mrf.mxu0
    %v4827 = vpop.f32.mrf.mxu0
    %v4828 = vadd.f32 %v4112, %v4827
    %v4829 = vpop.f32.mrf.mxu0
    %4830 = vmatprep.mubr.bf16.mxu0 0
    %4831 = vmatmul.mubr.bf16.gmra.mxu0 %v4322
    %v4832 = vpop.f32.mrf.mxu0
    %v4833 = vadd.f32 %v4112, %v4832
    %v4834 = vpop.f32.mrf.mxu0
    %v4835 = vpop.f32.mrf.mxu0
    %v4836 = vadd.f32 %v4112, %v4835
    %v4837 = vpop.f32.mrf.mxu0
    %4838 = vmatprep.mubr.bf16.mxu0 0
    %4839 = vmatmul.mubr.bf16.gmra.mxu0 %v4325
    %v4840 = vpop.f32.mrf.mxu0
    %v4841 = vadd.f32 %v4112, %v4840
    %v4842 = vpop.f32.mrf.mxu0
    %v4843 = vpop.f32.mrf.mxu0
    %v4844 = vadd.f32 %v4112, %v4843
    %v4845 = vpop.f32.mrf.mxu0
    %4846 = vmatprep.mubr.bf16.mxu0 0
    %4847 = vmatmul.mubr.bf16.gmra.mxu0 %v4328
    %v4848 = vpop.f32.mrf.mxu0
    %v4849 = vadd.f32 %v4112, %v4848
    %v4850 = vpop.f32.mrf.mxu0
    %v4851 = vpop.f32.mrf.mxu0
    %v4852 = vadd.f32 %v4112, %v4851
    %v4853 = vpop.f32.mrf.mxu0
    %4854 = vmatprep.mubr.bf16.mxu0 0
    %4855 = vmatmul.mubr.bf16.gmra.mxu0 %v4331
    %v4856 = vpop.f32.mrf.mxu0
    %v4857 = vadd.f32 %v4112, %v4856
    %v4858 = vpop.f32.mrf.mxu0
    %v4859 = vpop.f32.mrf.mxu0
    %v4860 = vadd.f32 %v4112, %v4859
    %v4861 = vpop.f32.mrf.mxu0
    %4862 = vmatprep.mubr.bf16.mxu0 0
    %4863 = vmatmul.mubr.bf16.gmra.mxu0 %v4334
    %v4864 = vpop.f32.mrf.mxu0
    %v4865 = vadd.f32 %v4112, %v4864
    %v4866 = vpop.f32.mrf.mxu0
    %v4867 = vpop.f32.mrf.mxu0
    %v4868 = vadd.f32 %v4112, %v4867
    %v4869 = vpop.f32.mrf.mxu0
    %4870 = vmatprep.mubr.bf16.mxu0 0
    %4871 = vmatmul.mubr.bf16.gmra.mxu0 %v4337
    %v4872 = vpop.f32.mrf.mxu0
    %v4873 = vadd.f32 %v4112, %v4872
    %v4874 = vpop.f32.mrf.mxu0
    %v4875 = vpop.f32.mrf.mxu0
    %v4876 = vadd.f32 %v4112, %v4875
    %v4877 = vpop.f32.mrf.mxu0
    %4878 = vmatprep.mubr.bf16.mxu0 0
    %4879 = vmatmul.mubr.bf16.gmra.mxu0 %v4340
    %v4880 = vpop.f32.mrf.mxu0
    %v4881 = vadd.f32 %v4112, %v4880
    %v4882 = vpop.f32.mrf.mxu0
    %v4883 = vpop.f32.mrf.mxu0
    %v4884 = vadd.f32 %v4112, %v4883
    %v4885 = vpop.f32.mrf.mxu0
    %4886 = vdwg.mxu0
    %v4887 = vmax.f32 %v4377, 0.0
    %v4888 = vmax.f32 %v4380, 0.0
    %v4889 = vmax.f32 %v4385, 0.0
    %v4890 = vmax.f32 %v4388, 0.0
    %v4891 = vmax.f32 %v4393, 0.0
    %v4892 = vmax.f32 %v4396, 0.0
    %v4893 = vmax.f32 %v4401, 0.0
    %v4894 = vmax.f32 %v4404, 0.0
    %v4895 = vmax.f32 %v4409, 0.0
    %v4896 = vmax.f32 %v4412, 0.0
    %v4897 = vmax.f32 %v4417, 0.0
    %v4898 = vmax.f32 %v4420, 0.0
    %v4899 = vmax.f32 %v4425, 0.0
    %v4900 = vmax.f32 %v4428, 0.0
    %v4901 = vmax.f32 %v4433, 0.0
    %v4902 = vmax.f32 %v4436, 0.0
    %v4903 = vmax.f32 %v4441, 0.0
    %v4904 = vmax.f32 %v4444, 0.0
    %v4905 = vmax.f32 %v4449, 0.0
    %v4906 = vmax.f32 %v4452, 0.0
    %v4907 = vmax.f32 %v4457, 0.0
    %v4908 = vmax.f32 %v4460, 0.0
    %v4909 = vmax.f32 %v4465, 0.0
    %v4910 = vmax.f32 %v4468, 0.0
    %v4911 = vmax.f32 %v4473, 0.0
    %v4912 = vmax.f32 %v4476, 0.0
    %v4913 = vmax.f32 %v4481, 0.0
    %v4914 = vmax.f32 %v4484, 0.0
    %v4915 = vmax.f32 %v4489, 0.0
    %v4916 = vmax.f32 %v4492, 0.0
    %v4917 = vmax.f32 %v4497, 0.0
    %v4918 = vmax.f32 %v4500, 0.0
    %v4919 = vmax.f32 %v4505, 0.0
    %v4920 = vmax.f32 %v4508, 0.0
    %v4921 = vmax.f32 %v4513, 0.0
    %v4922 = vmax.f32 %v4516, 0.0
    %v4923 = vmax.f32 %v4521, 0.0
    %v4924 = vmax.f32 %v4524, 0.0
    %v4925 = vmax.f32 %v4529, 0.0
    %v4926 = vmax.f32 %v4532, 0.0
    %v4927 = vmax.f32 %v4537, 0.0
    %v4928 = vmax.f32 %v4540, 0.0
    %v4929 = vmax.f32 %v4545, 0.0
    %v4930 = vmax.f32 %v4548, 0.0
    %v4931 = vmax.f32 %v4553, 0.0
    %v4932 = vmax.f32 %v4556, 0.0
    %v4933 = vmax.f32 %v4561, 0.0
    %v4934 = vmax.f32 %v4564, 0.0
    %v4935 = vmax.f32 %v4569, 0.0
    %v4936 = vmax.f32 %v4572, 0.0
    %v4937 = vmax.f32 %v4577, 0.0
    %v4938 = vmax.f32 %v4580, 0.0
    %v4939 = vmax.f32 %v4585, 0.0
    %v4940 = vmax.f32 %v4588, 0.0
    %v4941 = vmax.f32 %v4593, 0.0
    %v4942 = vmax.f32 %v4596, 0.0
    %v4943 = vmax.f32 %v4601, 0.0
    %v4944 = vmax.f32 %v4604, 0.0
    %v4945 = vmax.f32 %v4609, 0.0
    %v4946 = vmax.f32 %v4612, 0.0
    %v4947 = vmax.f32 %v4617, 0.0
    %v4948 = vmax.f32 %v4620, 0.0
    %v4949 = vmax.f32 %v4625, 0.0
    %v4950 = vmax.f32 %v4628, 0.0
    %v4951 = vmax.f32 %v4633, 0.0
    %v4952 = vmax.f32 %v4636, 0.0
    %v4953 = vmax.f32 %v4641, 0.0
    %v4954 = vmax.f32 %v4644, 0.0
    %v4955 = vmax.f32 %v4649, 0.0
    %v4956 = vmax.f32 %v4652, 0.0
    %v4957 = vmax.f32 %v4657, 0.0
    %v4958 = vmax.f32 %v4660, 0.0
    %v4959 = vmax.f32 %v4665, 0.0
    %v4960 = vmax.f32 %v4668, 0.0
    %v4961 = vmax.f32 %v4673, 0.0
    %v4962 = vmax.f32 %v4676, 0.0
    %v4963 = vmax.f32 %v4681, 0.0
    %v4964 = vmax.f32 %v4684, 0.0
    %v4965 = vmax.f32 %v4689, 0.0
    %v4966 = vmax.f32 %v4692, 0.0
    %v4967 = vmax.f32 %v4697, 0.0
    %v4968 = vmax.f32 %v4700, 0.0
    %v4969 = vmax.f32 %v4705, 0.0
    %v4970 = vmax.f32 %v4708, 0.0
    %v4971 = vmax.f32 %v4713, 0.0
    %v4972 = vmax.f32 %v4716, 0.0
    %v4973 = vmax.f32 %v4721, 0.0
    %v4974 = vmax.f32 %v4724, 0.0
    %v4975 = vmax.f32 %v4729, 0.0
    %v4976 = vmax.f32 %v4732, 0.0
    %v4977 = vmax.f32 %v4737, 0.0
    %v4978 = vmax.f32 %v4740, 0.0
    %v4979 = vmax.f32 %v4745, 0.0
    %v4980 = vmax.f32 %v4748, 0.0
    %v4981 = vmax.f32 %v4753, 0.0
    %v4982 = vmax.f32 %v4756, 0.0
    %v4983 = vmax.f32 %v4761, 0.0
    %v4984 = vmax.f32 %v4764, 0.0
    %v4985 = vmax.f32 %v4769, 0.0
    %v4986 = vmax.f32 %v4772, 0.0
    %v4987 = vmax.f32 %v4777, 0.0
    %v4988 = vmax.f32 %v4780, 0.0
    %v4989 = vmax.f32 %v4785, 0.0
    %v4990 = vmax.f32 %v4788, 0.0
    %v4991 = vmax.f32 %v4793, 0.0
    %v4992 = vmax.f32 %v4796, 0.0
    %v4993 = vmax.f32 %v4801, 0.0
    %v4994 = vmax.f32 %v4804, 0.0
    %v4995 = vmax.f32 %v4809, 0.0
    %v4996 = vmax.f32 %v4812, 0.0
    %v4997 = vmax.f32 %v4817, 0.0
    %v4998 = vmax.f32 %v4820, 0.0
    %v4999 = vmax.f32 %v4825, 0.0
    %v5000 = vmax.f32 %v4828, 0.0
    %v5001 = vmax.f32 %v4833, 0.0
    %v5002 = vmax.f32 %v4836, 0.0
    %v5003 = vmax.f32 %v4841, 0.0
    %v5004 = vmax.f32 %v4844, 0.0
    %v5005 = vmax.f32 %v4849, 0.0
    %v5006 = vmax.f32 %v4852, 0.0
    %v5007 = vmax.f32 %v4857, 0.0
    %v5008 = vmax.f32 %v4860, 0.0
    %v5009 = vmax.f32 %v4865, 0.0
    %v5010 = vmax.f32 %v4868, 0.0
    %v5011 = vmax.f32 %v4873, 0.0
    %v5012 = vmax.f32 %v4876, 0.0
    %v5013 = vmax.f32 %v4881, 0.0
    %v5014 = vmax.f32 %v4884, 0.0
    %v5015 = vpack.c.bf16 %v4888, %v4887
    %v5016 = vpack.c.bf16 %v4890, %v4889
    %v5017 = vpack.c.bf16 %v4892, %v4891
    %v5018 = vpack.c.bf16 %v4894, %v4893
    %v5019 = vpack.c.bf16 %v4896, %v4895
    %v5020 = vpack.c.bf16 %v4898, %v4897
    %v5021 = vpack.c.bf16 %v4900, %v4899
    %v5022 = vpack.c.bf16 %v4902, %v4901
    %v5023 = vpack.c.bf16 %v4904, %v4903
    %v5024 = vpack.c.bf16 %v4906, %v4905
    %v5025 = vpack.c.bf16 %v4908, %v4907
    %v5026 = vpack.c.bf16 %v4910, %v4909
    %v5027 = vpack.c.bf16 %v4912, %v4911
    %v5028 = vpack.c.bf16 %v4914, %v4913
    %v5029 = vpack.c.bf16 %v4916, %v4915
    %v5030 = vpack.c.bf16 %v4918, %v4917
    %v5031 = vpack.c.bf16 %v4920, %v4919
    %v5032 = vpack.c.bf16 %v4922, %v4921
    %v5033 = vpack.c.bf16 %v4924, %v4923
    %v5034 = vpack.c.bf16 %v4926, %v4925
    %v5035 = vpack.c.bf16 %v4928, %v4927
    %v5036 = vpack.c.bf16 %v4930, %v4929
    %v5037 = vpack.c.bf16 %v4932, %v4931
    %v5038 = vpack.c.bf16 %v4934, %v4933
    %v5039 = vpack.c.bf16 %v4936, %v4935
    %v5040 = vpack.c.bf16 %v4938, %v4937
    %v5041 = vpack.c.bf16 %v4940, %v4939
    %v5042 = vpack.c.bf16 %v4942, %v4941
    %v5043 = vpack.c.bf16 %v4944, %v4943
    %v5044 = vpack.c.bf16 %v4946, %v4945
    %v5045 = vpack.c.bf16 %v4948, %v4947
    %v5046 = vpack.c.bf16 %v4950, %v4949
    %v5047 = vpack.c.bf16 %v4952, %v4951
    %v5048 = vpack.c.bf16 %v4954, %v4953
    %v5049 = vpack.c.bf16 %v4956, %v4955
    %v5050 = vpack.c.bf16 %v4958, %v4957
    %v5051 = vpack.c.bf16 %v4960, %v4959
    %v5052 = vpack.c.bf16 %v4962, %v4961
    %v5053 = vpack.c.bf16 %v4964, %v4963
    %v5054 = vpack.c.bf16 %v4966, %v4965
    %v5055 = vpack.c.bf16 %v4968, %v4967
    %v5056 = vpack.c.bf16 %v4970, %v4969
    %v5057 = vpack.c.bf16 %v4972, %v4971
    %v5058 = vpack.c.bf16 %v4974, %v4973
    %v5059 = vpack.c.bf16 %v4976, %v4975
    %v5060 = vpack.c.bf16 %v4978, %v4977
    %v5061 = vpack.c.bf16 %v4980, %v4979
    %v5062 = vpack.c.bf16 %v4982, %v4981
    %v5063 = vpack.c.bf16 %v4984, %v4983
    %v5064 = vpack.c.bf16 %v4986, %v4985
    %v5065 = vpack.c.bf16 %v4988, %v4987
    %v5066 = vpack.c.bf16 %v4990, %v4989
    %v5067 = vpack.c.bf16 %v4992, %v4991
    %v5068 = vpack.c.bf16 %v4994, %v4993
    %v5069 = vpack.c.bf16 %v4996, %v4995
    %v5070 = vpack.c.bf16 %v4998, %v4997
    %v5071 = vpack.c.bf16 %v5000, %v4999
    %v5072 = vpack.c.bf16 %v5002, %v5001
    %v5073 = vpack.c.bf16 %v5004, %v5003
    %v5074 = vpack.c.bf16 %v5006, %v5005
    %v5075 = vpack.c.bf16 %v5008, %v5007
    %v5076 = vpack.c.bf16 %v5010, %v5009
    %v5077 = vpack.c.bf16 %v5012, %v5011
    %v5078 = vpack.c.bf16 %v5014, %v5013
    %v5079 = vld [vmem:[%s4] sm:$0xf]
    %v5080 = vld [vmem:[%s4 + $0x4] sm:$0xf]
    %v5081 = vld [vmem:[%s4 + $0x8] sm:$0xf]
    %v5082 = vld [vmem:[%s4 + $0xc] sm:$0xf]
    %v5083 = vld [vmem:[%s4 + $0x10] sm:$0xf]
    %v5084 = vld [vmem:[%s4 + $0x14] sm:$0xf]
    %v5085 = vld [vmem:[%s4 + $0x18] sm:$0xf]
    %v5086 = vld [vmem:[%s4 + $0x1c] sm:$0xf]
    %v5087 = vld [vmem:[%s4 + $0x20] sm:$0xf]
    %v5088 = vld [vmem:[%s4 + $0x24] sm:$0xf]
    %v5089 = vld [vmem:[%s4 + $0x28] sm:$0xf]
    %v5090 = vld [vmem:[%s4 + $0x2c] sm:$0xf]
    %v5091 = vld [vmem:[%s4 + $0x30] sm:$0xf]
    %v5092 = vld [vmem:[%s4 + $0x34] sm:$0xf]
    %v5093 = vld [vmem:[%s4 + $0x38] sm:$0xf]
    %v5094 = vld [vmem:[%s4 + $0x3c] sm:$0xf]
    %v5095 = vlaneseq
    %v5096 = vshrl.u32 %v5095, 7
    %v5097 = vsub.s32 3, %v5096
    %v5098 = vrot.slane %v28, %v5097
    %v5115 = vunpack.c.l.b16 %v5079
    %v5116 = vunpack.c.l.b16 %v5080
    %v5117 = vunpack.c.l.b16 %v5081
    %v5118 = vunpack.c.l.b16 %v5082
    %v5119 = vunpack.c.l.b16 %v5083
    %v5120 = vunpack.c.l.b16 %v5084
    %v5121 = vunpack.c.l.b16 %v5085
    %v5122 = vunpack.c.l.b16 %v5086
    %v5123 = vunpack.c.l.b16 %v5087
    %v5124 = vunpack.c.l.b16 %v5088
    %v5125 = vunpack.c.l.b16 %v5089
    %v5126 = vunpack.c.l.b16 %v5090
    %v5127 = vunpack.c.l.b16 %v5091
    %v5128 = vunpack.c.l.b16 %v5092
    %v5129 = vunpack.c.l.b16 %v5093
    %v5130 = vunpack.c.l.b16 %v5094
    %v5131 = vpack.c.b16 %v5116, %v5115
    %v5132 = vpack.c.b16 %v5118, %v5117
    %v5133 = vpack.c.b16 %v5120, %v5119
    %v5134 = vpack.c.b16 %v5122, %v5121
    %v5135 = vpack.c.b16 %v5124, %v5123
    %v5136 = vpack.c.b16 %v5126, %v5125
    %v5137 = vpack.c.b16 %v5128, %v5127
    %v5138 = vpack.c.b16 %v5130, %v5129
    %5147 = vmatprep.subr.bf16.mxu0 0
    %5148 = vmatpush1.bf16.msra.mxu0 %v5138
    %5149 = vmatprep.subr.bf16.mxu0 0
    %5150 = vmatpush1.bf16.msra.mxu0 %v5137
    %5151 = vmatprep.subr.bf16.mxu0 0
    %5152 = vmatpush1.bf16.msra.mxu0 %v5136
    %5153 = vmatprep.subr.bf16.mxu0 0
    %5154 = vmatpush1.bf16.msra.mxu0 %v5135
    %5155 = vmatprep.subr.bf16.mxu0 0
    %5156 = vmatpush1.bf16.msra.mxu0 %v5134
    %5157 = vmatprep.subr.bf16.mxu0 0
    %5158 = vmatpush1.bf16.msra.mxu0 %v5133
    %5159 = vmatprep.subr.bf16.mxu0 0
    %5160 = vmatpush1.bf16.msra.mxu0 %v5132
    %5161 = vmatprep.subr.bf16.mxu0 0
    %5162 = vmatpush1.bf16.msra.mxu0 %v5131
    %5163 = vmatprep.subr.bf16.mxu0 0
    %5164 = vmatpush2.bf16.msra.mxu0 0
    %5165 = vmatprep.subr.bf16.mxu0 0
    %5166 = vmatpush2.bf16.msra.mxu0 0
    %5167 = vmatprep.subr.bf16.mxu0 0
    %5168 = vmatpush2.bf16.msra.mxu0 0
    %5169 = vmatprep.subr.bf16.mxu0 0
    %5170 = vmatpush2.bf16.msra.mxu0 0
    %5171 = vmatprep.subr.bf16.mxu0 0
    %5172 = vmatpush2.bf16.msra.mxu0 0
    %5173 = vmatprep.subr.bf16.mxu0 0
    %5174 = vmatpush2.bf16.msra.mxu0 0
    %5175 = vmatprep.subr.bf16.mxu0 0
    %5176 = vmatpush2.bf16.msra.mxu0 0
    %5177 = vmatprep.subr.bf16.mxu0 0
    %5178 = vmatpush2.bf16.msra.mxu0 0
    %5179 = vmatprep.mubr.bf16.mxu0 0
    %5180 = vmatmul.mubr.bf16.gmra.mxu0 %v5015
    %v5181 = vpop.f32.mrf.mxu0
    %v5182 = vadd.f32 %v5098, %v5181
    %v5183 = vpop.f32.mrf.mxu0
    %v5184 = vpop.f32.mrf.mxu0
    %v5185 = vadd.f32 %v5098, %v5184
    %v5186 = vpop.f32.mrf.mxu0
    %5187 = vmatprep.mubr.bf16.mxu0 0
    %5188 = vmatmul.mubr.bf16.gmra.mxu0 %v5016
    %v5189 = vpop.f32.mrf.mxu0
    %v5190 = vadd.f32 %v5098, %v5189
    %v5191 = vpop.f32.mrf.mxu0
    %v5192 = vpop.f32.mrf.mxu0
    %v5193 = vadd.f32 %v5098, %v5192
    %v5194 = vpop.f32.mrf.mxu0
    %5195 = vmatprep.mubr.bf16.mxu0 0
    %5196 = vmatmul.mubr.bf16.gmra.mxu0 %v5017
    %v5197 = vpop.f32.mrf.mxu0
    %v5198 = vadd.f32 %v5098, %v5197
    %v5199 = vpop.f32.mrf.mxu0
    %v5200 = vpop.f32.mrf.mxu0
    %v5201 = vadd.f32 %v5098, %v5200
    %v5202 = vpop.f32.mrf.mxu0
    %5203 = vmatprep.mubr.bf16.mxu0 0
    %5204 = vmatmul.mubr.bf16.gmra.mxu0 %v5018
    %v5205 = vpop.f32.mrf.mxu0
    %v5206 = vadd.f32 %v5098, %v5205
    %v5207 = vpop.f32.mrf.mxu0
    %v5208 = vpop.f32.mrf.mxu0
    %v5209 = vadd.f32 %v5098, %v5208
    %v5210 = vpop.f32.mrf.mxu0
    %5211 = vmatprep.mubr.bf16.mxu0 0
    %5212 = vmatmul.mubr.bf16.gmra.mxu0 %v5019
    %v5213 = vpop.f32.mrf.mxu0
    %v5214 = vadd.f32 %v5098, %v5213
    %v5215 = vpop.f32.mrf.mxu0
    %v5216 = vpop.f32.mrf.mxu0
    %v5217 = vadd.f32 %v5098, %v5216
    %v5218 = vpop.f32.mrf.mxu0
    %5219 = vmatprep.mubr.bf16.mxu0 0
    %5220 = vmatmul.mubr.bf16.gmra.mxu0 %v5020
    %v5221 = vpop.f32.mrf.mxu0
    %v5222 = vadd.f32 %v5098, %v5221
    %v5223 = vpop.f32.mrf.mxu0
    %v5224 = vpop.f32.mrf.mxu0
    %v5225 = vadd.f32 %v5098, %v5224
    %v5226 = vpop.f32.mrf.mxu0
    %5227 = vmatprep.mubr.bf16.mxu0 0
    %5228 = vmatmul.mubr.bf16.gmra.mxu0 %v5021
    %v5229 = vpop.f32.mrf.mxu0
    %v5230 = vadd.f32 %v5098, %v5229
    %v5231 = vpop.f32.mrf.mxu0
    %v5232 = vpop.f32.mrf.mxu0
    %v5233 = vadd.f32 %v5098, %v5232
    %v5234 = vpop.f32.mrf.mxu0
    %5235 = vmatprep.mubr.bf16.mxu0 0
    %5236 = vmatmul.mubr.bf16.gmra.mxu0 %v5022
    %v5237 = vpop.f32.mrf.mxu0
    %v5238 = vadd.f32 %v5098, %v5237
    %v5239 = vpop.f32.mrf.mxu0
    %v5240 = vpop.f32.mrf.mxu0
    %v5241 = vadd.f32 %v5098, %v5240
    %v5242 = vpop.f32.mrf.mxu0
    %5243 = vmatprep.mubr.bf16.mxu0 0
    %5244 = vmatmul.mubr.bf16.gmra.mxu0 %v5023
    %v5245 = vpop.f32.mrf.mxu0
    %v5246 = vadd.f32 %v5098, %v5245
    %v5247 = vpop.f32.mrf.mxu0
    %v5248 = vpop.f32.mrf.mxu0
    %v5249 = vadd.f32 %v5098, %v5248
    %v5250 = vpop.f32.mrf.mxu0
    %5251 = vmatprep.mubr.bf16.mxu0 0
    %5252 = vmatmul.mubr.bf16.gmra.mxu0 %v5024
    %v5253 = vpop.f32.mrf.mxu0
    %v5254 = vadd.f32 %v5098, %v5253
    %v5255 = vpop.f32.mrf.mxu0
    %v5256 = vpop.f32.mrf.mxu0
    %v5257 = vadd.f32 %v5098, %v5256
    %v5258 = vpop.f32.mrf.mxu0
    %5259 = vmatprep.mubr.bf16.mxu0 0
    %5260 = vmatmul.mubr.bf16.gmra.mxu0 %v5025
    %v5261 = vpop.f32.mrf.mxu0
    %v5262 = vadd.f32 %v5098, %v5261
    %v5263 = vpop.f32.mrf.mxu0
    %v5264 = vpop.f32.mrf.mxu0
    %v5265 = vadd.f32 %v5098, %v5264
    %v5266 = vpop.f32.mrf.mxu0
    %5267 = vmatprep.mubr.bf16.mxu0 0
    %5268 = vmatmul.mubr.bf16.gmra.mxu0 %v5026
    %v5269 = vpop.f32.mrf.mxu0
    %v5270 = vadd.f32 %v5098, %v5269
    %v5271 = vpop.f32.mrf.mxu0
    %v5272 = vpop.f32.mrf.mxu0
    %v5273 = vadd.f32 %v5098, %v5272
    %v5274 = vpop.f32.mrf.mxu0
    %5275 = vmatprep.mubr.bf16.mxu0 0
    %5276 = vmatmul.mubr.bf16.gmra.mxu0 %v5027
    %v5277 = vpop.f32.mrf.mxu0
    %v5278 = vadd.f32 %v5098, %v5277
    %v5279 = vpop.f32.mrf.mxu0
    %v5280 = vpop.f32.mrf.mxu0
    %v5281 = vadd.f32 %v5098, %v5280
    %v5282 = vpop.f32.mrf.mxu0
    %5283 = vmatprep.mubr.bf16.mxu0 0
    %5284 = vmatmul.mubr.bf16.gmra.mxu0 %v5028
    %v5285 = vpop.f32.mrf.mxu0
    %v5286 = vadd.f32 %v5098, %v5285
    %v5287 = vpop.f32.mrf.mxu0
    %v5288 = vpop.f32.mrf.mxu0
    %v5289 = vadd.f32 %v5098, %v5288
    %v5290 = vpop.f32.mrf.mxu0
    %5291 = vmatprep.mubr.bf16.mxu0 0
    %5292 = vmatmul.mubr.bf16.gmra.mxu0 %v5029
    %v5293 = vpop.f32.mrf.mxu0
    %v5294 = vadd.f32 %v5098, %v5293
    %v5295 = vpop.f32.mrf.mxu0
    %v5296 = vpop.f32.mrf.mxu0
    %v5297 = vadd.f32 %v5098, %v5296
    %v5298 = vpop.f32.mrf.mxu0
    %5299 = vmatprep.mubr.bf16.mxu0 0
    %5300 = vmatmul.mubr.bf16.gmra.mxu0 %v5030
    %v5301 = vpop.f32.mrf.mxu0
    %v5302 = vadd.f32 %v5098, %v5301
    %v5303 = vpop.f32.mrf.mxu0
    %v5304 = vpop.f32.mrf.mxu0
    %v5305 = vadd.f32 %v5098, %v5304
    %v5306 = vpop.f32.mrf.mxu0
    %5307 = vmatprep.mubr.bf16.mxu0 0
    %5308 = vmatmul.mubr.bf16.gmra.mxu0 %v5031
    %v5309 = vpop.f32.mrf.mxu0
    %v5310 = vadd.f32 %v5098, %v5309
    %v5311 = vpop.f32.mrf.mxu0
    %v5312 = vpop.f32.mrf.mxu0
    %v5313 = vadd.f32 %v5098, %v5312
    %v5314 = vpop.f32.mrf.mxu0
    %5315 = vmatprep.mubr.bf16.mxu0 0
    %5316 = vmatmul.mubr.bf16.gmra.mxu0 %v5032
    %v5317 = vpop.f32.mrf.mxu0
    %v5318 = vadd.f32 %v5098, %v5317
    %v5319 = vpop.f32.mrf.mxu0
    %v5320 = vpop.f32.mrf.mxu0
    %v5321 = vadd.f32 %v5098, %v5320
    %v5322 = vpop.f32.mrf.mxu0
    %5323 = vmatprep.mubr.bf16.mxu0 0
    %5324 = vmatmul.mubr.bf16.gmra.mxu0 %v5033
    %v5325 = vpop.f32.mrf.mxu0
    %v5326 = vadd.f32 %v5098, %v5325
    %v5327 = vpop.f32.mrf.mxu0
    %v5328 = vpop.f32.mrf.mxu0
    %v5329 = vadd.f32 %v5098, %v5328
    %v5330 = vpop.f32.mrf.mxu0
    %5331 = vmatprep.mubr.bf16.mxu0 0
    %5332 = vmatmul.mubr.bf16.gmra.mxu0 %v5034
    %v5333 = vpop.f32.mrf.mxu0
    %v5334 = vadd.f32 %v5098, %v5333
    %v5335 = vpop.f32.mrf.mxu0
    %v5336 = vpop.f32.mrf.mxu0
    %v5337 = vadd.f32 %v5098, %v5336
    %v5338 = vpop.f32.mrf.mxu0
    %5339 = vmatprep.mubr.bf16.mxu0 0
    %5340 = vmatmul.mubr.bf16.gmra.mxu0 %v5035
    %v5341 = vpop.f32.mrf.mxu0
    %v5342 = vadd.f32 %v5098, %v5341
    %v5343 = vpop.f32.mrf.mxu0
    %v5344 = vpop.f32.mrf.mxu0
    %v5345 = vadd.f32 %v5098, %v5344
    %v5346 = vpop.f32.mrf.mxu0
    %5347 = vmatprep.mubr.bf16.mxu0 0
    %5348 = vmatmul.mubr.bf16.gmra.mxu0 %v5036
    %v5349 = vpop.f32.mrf.mxu0
    %v5350 = vadd.f32 %v5098, %v5349
    %v5351 = vpop.f32.mrf.mxu0
    %v5352 = vpop.f32.mrf.mxu0
    %v5353 = vadd.f32 %v5098, %v5352
    %v5354 = vpop.f32.mrf.mxu0
    %5355 = vmatprep.mubr.bf16.mxu0 0
    %5356 = vmatmul.mubr.bf16.gmra.mxu0 %v5037
    %v5357 = vpop.f32.mrf.mxu0
    %v5358 = vadd.f32 %v5098, %v5357
    %v5359 = vpop.f32.mrf.mxu0
    %v5360 = vpop.f32.mrf.mxu0
    %v5361 = vadd.f32 %v5098, %v5360
    %v5362 = vpop.f32.mrf.mxu0
    %5363 = vmatprep.mubr.bf16.mxu0 0
    %5364 = vmatmul.mubr.bf16.gmra.mxu0 %v5038
    %v5365 = vpop.f32.mrf.mxu0
    %v5366 = vadd.f32 %v5098, %v5365
    %v5367 = vpop.f32.mrf.mxu0
    %v5368 = vpop.f32.mrf.mxu0
    %v5369 = vadd.f32 %v5098, %v5368
    %v5370 = vpop.f32.mrf.mxu0
    %5371 = vmatprep.mubr.bf16.mxu0 0
    %5372 = vmatmul.mubr.bf16.gmra.mxu0 %v5039
    %v5373 = vpop.f32.mrf.mxu0
    %v5374 = vadd.f32 %v5098, %v5373
    %v5375 = vpop.f32.mrf.mxu0
    %v5376 = vpop.f32.mrf.mxu0
    %v5377 = vadd.f32 %v5098, %v5376
    %v5378 = vpop.f32.mrf.mxu0
    %5379 = vmatprep.mubr.bf16.mxu0 0
    %5380 = vmatmul.mubr.bf16.gmra.mxu0 %v5040
    %v5381 = vpop.f32.mrf.mxu0
    %v5382 = vadd.f32 %v5098, %v5381
    %v5383 = vpop.f32.mrf.mxu0
    %v5384 = vpop.f32.mrf.mxu0
    %v5385 = vadd.f32 %v5098, %v5384
    %v5386 = vpop.f32.mrf.mxu0
    %5387 = vmatprep.mubr.bf16.mxu0 0
    %5388 = vmatmul.mubr.bf16.gmra.mxu0 %v5041
    %v5389 = vpop.f32.mrf.mxu0
    %v5390 = vadd.f32 %v5098, %v5389
    %v5391 = vpop.f32.mrf.mxu0
    %v5392 = vpop.f32.mrf.mxu0
    %v5393 = vadd.f32 %v5098, %v5392
    %v5394 = vpop.f32.mrf.mxu0
    %5395 = vmatprep.mubr.bf16.mxu0 0
    %5396 = vmatmul.mubr.bf16.gmra.mxu0 %v5042
    %v5397 = vpop.f32.mrf.mxu0
    %v5398 = vadd.f32 %v5098, %v5397
    %v5399 = vpop.f32.mrf.mxu0
    %v5400 = vpop.f32.mrf.mxu0
    %v5401 = vadd.f32 %v5098, %v5400
    %v5402 = vpop.f32.mrf.mxu0
    %5403 = vmatprep.mubr.bf16.mxu0 0
    %5404 = vmatmul.mubr.bf16.gmra.mxu0 %v5043
    %v5405 = vpop.f32.mrf.mxu0
    %v5406 = vadd.f32 %v5098, %v5405
    %v5407 = vpop.f32.mrf.mxu0
    %v5408 = vpop.f32.mrf.mxu0
    %v5409 = vadd.f32 %v5098, %v5408
    %v5410 = vpop.f32.mrf.mxu0
    %5411 = vmatprep.mubr.bf16.mxu0 0
    %5412 = vmatmul.mubr.bf16.gmra.mxu0 %v5044
    %v5413 = vpop.f32.mrf.mxu0
    %v5414 = vadd.f32 %v5098, %v5413
    %v5415 = vpop.f32.mrf.mxu0
    %v5416 = vpop.f32.mrf.mxu0
    %v5417 = vadd.f32 %v5098, %v5416
    %v5418 = vpop.f32.mrf.mxu0
    %5419 = vmatprep.mubr.bf16.mxu0 0
    %5420 = vmatmul.mubr.bf16.gmra.mxu0 %v5045
    %v5421 = vpop.f32.mrf.mxu0
    %v5422 = vadd.f32 %v5098, %v5421
    %v5423 = vpop.f32.mrf.mxu0
    %v5424 = vpop.f32.mrf.mxu0
    %v5425 = vadd.f32 %v5098, %v5424
    %v5426 = vpop.f32.mrf.mxu0
    %5427 = vmatprep.mubr.bf16.mxu0 0
    %5428 = vmatmul.mubr.bf16.gmra.mxu0 %v5046
    %v5429 = vpop.f32.mrf.mxu0
    %v5430 = vadd.f32 %v5098, %v5429
    %v5431 = vpop.f32.mrf.mxu0
    %v5432 = vpop.f32.mrf.mxu0
    %v5433 = vadd.f32 %v5098, %v5432
    %v5434 = vpop.f32.mrf.mxu0
    %5435 = vmatprep.mubr.bf16.mxu0 0
    %5436 = vmatmul.mubr.bf16.gmra.mxu0 %v5047
    %v5437 = vpop.f32.mrf.mxu0
    %v5438 = vadd.f32 %v5098, %v5437
    %v5439 = vpop.f32.mrf.mxu0
    %v5440 = vpop.f32.mrf.mxu0
    %v5441 = vadd.f32 %v5098, %v5440
    %v5442 = vpop.f32.mrf.mxu0
    %5443 = vmatprep.mubr.bf16.mxu0 0
    %5444 = vmatmul.mubr.bf16.gmra.mxu0 %v5048
    %v5445 = vpop.f32.mrf.mxu0
    %v5446 = vadd.f32 %v5098, %v5445
    %v5447 = vpop.f32.mrf.mxu0
    %v5448 = vpop.f32.mrf.mxu0
    %v5449 = vadd.f32 %v5098, %v5448
    %v5450 = vpop.f32.mrf.mxu0
    %5451 = vmatprep.mubr.bf16.mxu0 0
    %5452 = vmatmul.mubr.bf16.gmra.mxu0 %v5049
    %v5453 = vpop.f32.mrf.mxu0
    %v5454 = vadd.f32 %v5098, %v5453
    %v5455 = vpop.f32.mrf.mxu0
    %v5456 = vpop.f32.mrf.mxu0
    %v5457 = vadd.f32 %v5098, %v5456
    %v5458 = vpop.f32.mrf.mxu0
    %5459 = vmatprep.mubr.bf16.mxu0 0
    %5460 = vmatmul.mubr.bf16.gmra.mxu0 %v5050
    %v5461 = vpop.f32.mrf.mxu0
    %v5462 = vadd.f32 %v5098, %v5461
    %v5463 = vpop.f32.mrf.mxu0
    %v5464 = vpop.f32.mrf.mxu0
    %v5465 = vadd.f32 %v5098, %v5464
    %v5466 = vpop.f32.mrf.mxu0
    %5467 = vmatprep.mubr.bf16.mxu0 0
    %5468 = vmatmul.mubr.bf16.gmra.mxu0 %v5051
    %v5469 = vpop.f32.mrf.mxu0
    %v5470 = vadd.f32 %v5098, %v5469
    %v5471 = vpop.f32.mrf.mxu0
    %v5472 = vpop.f32.mrf.mxu0
    %v5473 = vadd.f32 %v5098, %v5472
    %v5474 = vpop.f32.mrf.mxu0
    %5475 = vmatprep.mubr.bf16.mxu0 0
    %5476 = vmatmul.mubr.bf16.gmra.mxu0 %v5052
    %v5477 = vpop.f32.mrf.mxu0
    %v5478 = vadd.f32 %v5098, %v5477
    %v5479 = vpop.f32.mrf.mxu0
    %v5480 = vpop.f32.mrf.mxu0
    %v5481 = vadd.f32 %v5098, %v5480
    %v5482 = vpop.f32.mrf.mxu0
    %5483 = vmatprep.mubr.bf16.mxu0 0
    %5484 = vmatmul.mubr.bf16.gmra.mxu0 %v5053
    %v5485 = vpop.f32.mrf.mxu0
    %v5486 = vadd.f32 %v5098, %v5485
    %v5487 = vpop.f32.mrf.mxu0
    %v5488 = vpop.f32.mrf.mxu0
    %v5489 = vadd.f32 %v5098, %v5488
    %v5490 = vpop.f32.mrf.mxu0
    %5491 = vmatprep.mubr.bf16.mxu0 0
    %5492 = vmatmul.mubr.bf16.gmra.mxu0 %v5054
    %v5493 = vpop.f32.mrf.mxu0
    %v5494 = vadd.f32 %v5098, %v5493
    %v5495 = vpop.f32.mrf.mxu0
    %v5496 = vpop.f32.mrf.mxu0
    %v5497 = vadd.f32 %v5098, %v5496
    %v5498 = vpop.f32.mrf.mxu0
    %5499 = vmatprep.mubr.bf16.mxu0 0
    %5500 = vmatmul.mubr.bf16.gmra.mxu0 %v5055
    %v5501 = vpop.f32.mrf.mxu0
    %v5502 = vadd.f32 %v5098, %v5501
    %v5503 = vpop.f32.mrf.mxu0
    %v5504 = vpop.f32.mrf.mxu0
    %v5505 = vadd.f32 %v5098, %v5504
    %v5506 = vpop.f32.mrf.mxu0
    %5507 = vmatprep.mubr.bf16.mxu0 0
    %5508 = vmatmul.mubr.bf16.gmra.mxu0 %v5056
    %v5509 = vpop.f32.mrf.mxu0
    %v5510 = vadd.f32 %v5098, %v5509
    %v5511 = vpop.f32.mrf.mxu0
    %v5512 = vpop.f32.mrf.mxu0
    %v5513 = vadd.f32 %v5098, %v5512
    %v5514 = vpop.f32.mrf.mxu0
    %5515 = vmatprep.mubr.bf16.mxu0 0
    %5516 = vmatmul.mubr.bf16.gmra.mxu0 %v5057
    %v5517 = vpop.f32.mrf.mxu0
    %v5518 = vadd.f32 %v5098, %v5517
    %v5519 = vpop.f32.mrf.mxu0
    %v5520 = vpop.f32.mrf.mxu0
    %v5521 = vadd.f32 %v5098, %v5520
    %v5522 = vpop.f32.mrf.mxu0
    %5523 = vmatprep.mubr.bf16.mxu0 0
    %5524 = vmatmul.mubr.bf16.gmra.mxu0 %v5058
    %v5525 = vpop.f32.mrf.mxu0
    %v5526 = vadd.f32 %v5098, %v5525
    %v5527 = vpop.f32.mrf.mxu0
    %v5528 = vpop.f32.mrf.mxu0
    %v5529 = vadd.f32 %v5098, %v5528
    %v5530 = vpop.f32.mrf.mxu0
    %5531 = vmatprep.mubr.bf16.mxu0 0
    %5532 = vmatmul.mubr.bf16.gmra.mxu0 %v5059
    %v5533 = vpop.f32.mrf.mxu0
    %v5534 = vadd.f32 %v5098, %v5533
    %v5535 = vpop.f32.mrf.mxu0
    %v5536 = vpop.f32.mrf.mxu0
    %v5537 = vadd.f32 %v5098, %v5536
    %v5538 = vpop.f32.mrf.mxu0
    %5539 = vmatprep.mubr.bf16.mxu0 0
    %5540 = vmatmul.mubr.bf16.gmra.mxu0 %v5060
    %v5541 = vpop.f32.mrf.mxu0
    %v5542 = vadd.f32 %v5098, %v5541
    %v5543 = vpop.f32.mrf.mxu0
    %v5544 = vpop.f32.mrf.mxu0
    %v5545 = vadd.f32 %v5098, %v5544
    %v5546 = vpop.f32.mrf.mxu0
    %5547 = vmatprep.mubr.bf16.mxu0 0
    %5548 = vmatmul.mubr.bf16.gmra.mxu0 %v5061
    %v5549 = vpop.f32.mrf.mxu0
    %v5550 = vadd.f32 %v5098, %v5549
    %v5551 = vpop.f32.mrf.mxu0
    %v5552 = vpop.f32.mrf.mxu0
    %v5553 = vadd.f32 %v5098, %v5552
    %v5554 = vpop.f32.mrf.mxu0
    %5555 = vmatprep.mubr.bf16.mxu0 0
    %5556 = vmatmul.mubr.bf16.gmra.mxu0 %v5062
    %v5557 = vpop.f32.mrf.mxu0
    %v5558 = vadd.f32 %v5098, %v5557
    %v5559 = vpop.f32.mrf.mxu0
    %v5560 = vpop.f32.mrf.mxu0
    %v5561 = vadd.f32 %v5098, %v5560
    %v5562 = vpop.f32.mrf.mxu0
    %5563 = vmatprep.mubr.bf16.mxu0 0
    %5564 = vmatmul.mubr.bf16.gmra.mxu0 %v5063
    %v5565 = vpop.f32.mrf.mxu0
    %v5566 = vadd.f32 %v5098, %v5565
    %v5567 = vpop.f32.mrf.mxu0
    %v5568 = vpop.f32.mrf.mxu0
    %v5569 = vadd.f32 %v5098, %v5568
    %v5570 = vpop.f32.mrf.mxu0
    %5571 = vmatprep.mubr.bf16.mxu0 0
    %5572 = vmatmul.mubr.bf16.gmra.mxu0 %v5064
    %v5573 = vpop.f32.mrf.mxu0
    %v5574 = vadd.f32 %v5098, %v5573
    %v5575 = vpop.f32.mrf.mxu0
    %v5576 = vpop.f32.mrf.mxu0
    %v5577 = vadd.f32 %v5098, %v5576
    %v5578 = vpop.f32.mrf.mxu0
    %5579 = vmatprep.mubr.bf16.mxu0 0
    %5580 = vmatmul.mubr.bf16.gmra.mxu0 %v5065
    %v5581 = vpop.f32.mrf.mxu0
    %v5582 = vadd.f32 %v5098, %v5581
    %v5583 = vpop.f32.mrf.mxu0
    %v5584 = vpop.f32.mrf.mxu0
    %v5585 = vadd.f32 %v5098, %v5584
    %v5586 = vpop.f32.mrf.mxu0
    %5587 = vmatprep.mubr.bf16.mxu0 0
    %5588 = vmatmul.mubr.bf16.gmra.mxu0 %v5066
    %v5589 = vpop.f32.mrf.mxu0
    %v5590 = vadd.f32 %v5098, %v5589
    %v5591 = vpop.f32.mrf.mxu0
    %v5592 = vpop.f32.mrf.mxu0
    %v5593 = vadd.f32 %v5098, %v5592
    %v5594 = vpop.f32.mrf.mxu0
    %5595 = vmatprep.mubr.bf16.mxu0 0
    %5596 = vmatmul.mubr.bf16.gmra.mxu0 %v5067
    %v5597 = vpop.f32.mrf.mxu0
    %v5598 = vadd.f32 %v5098, %v5597
    %v5599 = vpop.f32.mrf.mxu0
    %v5600 = vpop.f32.mrf.mxu0
    %v5601 = vadd.f32 %v5098, %v5600
    %v5602 = vpop.f32.mrf.mxu0
    %5603 = vmatprep.mubr.bf16.mxu0 0
    %5604 = vmatmul.mubr.bf16.gmra.mxu0 %v5068
    %v5605 = vpop.f32.mrf.mxu0
    %v5606 = vadd.f32 %v5098, %v5605
    %v5607 = vpop.f32.mrf.mxu0
    %v5608 = vpop.f32.mrf.mxu0
    %v5609 = vadd.f32 %v5098, %v5608
    %v5610 = vpop.f32.mrf.mxu0
    %5611 = vmatprep.mubr.bf16.mxu0 0
    %5612 = vmatmul.mubr.bf16.gmra.mxu0 %v5069
    %v5613 = vpop.f32.mrf.mxu0
    %v5614 = vadd.f32 %v5098, %v5613
    %v5615 = vpop.f32.mrf.mxu0
    %v5616 = vpop.f32.mrf.mxu0
    %v5617 = vadd.f32 %v5098, %v5616
    %v5618 = vpop.f32.mrf.mxu0
    %5619 = vmatprep.mubr.bf16.mxu0 0
    %5620 = vmatmul.mubr.bf16.gmra.mxu0 %v5070
    %v5621 = vpop.f32.mrf.mxu0
    %v5622 = vadd.f32 %v5098, %v5621
    %v5623 = vpop.f32.mrf.mxu0
    %v5624 = vpop.f32.mrf.mxu0
    %v5625 = vadd.f32 %v5098, %v5624
    %v5626 = vpop.f32.mrf.mxu0
    %5627 = vmatprep.mubr.bf16.mxu0 0
    %5628 = vmatmul.mubr.bf16.gmra.mxu0 %v5071
    %v5629 = vpop.f32.mrf.mxu0
    %v5630 = vadd.f32 %v5098, %v5629
    %v5631 = vpop.f32.mrf.mxu0
    %v5632 = vpop.f32.mrf.mxu0
    %v5633 = vadd.f32 %v5098, %v5632
    %v5634 = vpop.f32.mrf.mxu0
    %5635 = vmatprep.mubr.bf16.mxu0 0
    %5636 = vmatmul.mubr.bf16.gmra.mxu0 %v5072
    %v5637 = vpop.f32.mrf.mxu0
    %v5638 = vadd.f32 %v5098, %v5637
    %v5639 = vpop.f32.mrf.mxu0
    %v5640 = vpop.f32.mrf.mxu0
    %v5641 = vadd.f32 %v5098, %v5640
    %v5642 = vpop.f32.mrf.mxu0
    %5643 = vmatprep.mubr.bf16.mxu0 0
    %5644 = vmatmul.mubr.bf16.gmra.mxu0 %v5073
    %v5645 = vpop.f32.mrf.mxu0
    %v5646 = vadd.f32 %v5098, %v5645
    %v5647 = vpop.f32.mrf.mxu0
    %v5648 = vpop.f32.mrf.mxu0
    %v5649 = vadd.f32 %v5098, %v5648
    %v5650 = vpop.f32.mrf.mxu0
    %5651 = vmatprep.mubr.bf16.mxu0 0
    %5652 = vmatmul.mubr.bf16.gmra.mxu0 %v5074
    %v5653 = vpop.f32.mrf.mxu0
    %v5654 = vadd.f32 %v5098, %v5653
    %v5655 = vpop.f32.mrf.mxu0
    %v5656 = vpop.f32.mrf.mxu0
    %v5657 = vadd.f32 %v5098, %v5656
    %v5658 = vpop.f32.mrf.mxu0
    %5659 = vmatprep.mubr.bf16.mxu0 0
    %5660 = vmatmul.mubr.bf16.gmra.mxu0 %v5075
    %v5661 = vpop.f32.mrf.mxu0
    %v5662 = vadd.f32 %v5098, %v5661
    %v5663 = vpop.f32.mrf.mxu0
    %v5664 = vpop.f32.mrf.mxu0
    %v5665 = vadd.f32 %v5098, %v5664
    %v5666 = vpop.f32.mrf.mxu0
    %5667 = vmatprep.mubr.bf16.mxu0 0
    %5668 = vmatmul.mubr.bf16.gmra.mxu0 %v5076
    %v5669 = vpop.f32.mrf.mxu0
    %v5670 = vadd.f32 %v5098, %v5669
    %v5671 = vpop.f32.mrf.mxu0
    %v5672 = vpop.f32.mrf.mxu0
    %v5673 = vadd.f32 %v5098, %v5672
    %v5674 = vpop.f32.mrf.mxu0
    %5675 = vmatprep.mubr.bf16.mxu0 0
    %5676 = vmatmul.mubr.bf16.gmra.mxu0 %v5077
    %v5677 = vpop.f32.mrf.mxu0
    %v5678 = vadd.f32 %v5098, %v5677
    %v5679 = vpop.f32.mrf.mxu0
    %v5680 = vpop.f32.mrf.mxu0
    %v5681 = vadd.f32 %v5098, %v5680
    %v5682 = vpop.f32.mrf.mxu0
    %5683 = vmatprep.mubr.bf16.mxu0 0
    %5684 = vmatmul.mubr.bf16.gmra.mxu0 %v5078
    %v5685 = vpop.f32.mrf.mxu0
    %v5686 = vadd.f32 %v5098, %v5685
    %v5687 = vpop.f32.mrf.mxu0
    %v5688 = vpop.f32.mrf.mxu0
    %v5689 = vadd.f32 %v5098, %v5688
    %v5690 = vpop.f32.mrf.mxu0
    %5691 = vdwg.mxu0
    %v5692 = vmax.f32 %v5182, 0.0
    %v5693 = vmax.f32 %v5185, 0.0
    %v5694 = vmax.f32 %v5190, 0.0
    %v5695 = vmax.f32 %v5193, 0.0
    %v5696 = vmax.f32 %v5198, 0.0
    %v5697 = vmax.f32 %v5201, 0.0
    %v5698 = vmax.f32 %v5206, 0.0
    %v5699 = vmax.f32 %v5209, 0.0
    %v5700 = vmax.f32 %v5214, 0.0
    %v5701 = vmax.f32 %v5217, 0.0
    %v5702 = vmax.f32 %v5222, 0.0
    %v5703 = vmax.f32 %v5225, 0.0
    %v5704 = vmax.f32 %v5230, 0.0
    %v5705 = vmax.f32 %v5233, 0.0
    %v5706 = vmax.f32 %v5238, 0.0
    %v5707 = vmax.f32 %v5241, 0.0
    %v5708 = vmax.f32 %v5246, 0.0
    %v5709 = vmax.f32 %v5249, 0.0
    %v5710 = vmax.f32 %v5254, 0.0
    %v5711 = vmax.f32 %v5257, 0.0
    %v5712 = vmax.f32 %v5262, 0.0
    %v5713 = vmax.f32 %v5265, 0.0
    %v5714 = vmax.f32 %v5270, 0.0
    %v5715 = vmax.f32 %v5273, 0.0
    %v5716 = vmax.f32 %v5278, 0.0
    %v5717 = vmax.f32 %v5281, 0.0
    %v5718 = vmax.f32 %v5286, 0.0
    %v5719 = vmax.f32 %v5289, 0.0
    %v5720 = vmax.f32 %v5294, 0.0
    %v5721 = vmax.f32 %v5297, 0.0
    %v5722 = vmax.f32 %v5302, 0.0
    %v5723 = vmax.f32 %v5305, 0.0
    %v5724 = vmax.f32 %v5310, 0.0
    %v5725 = vmax.f32 %v5313, 0.0
    %v5726 = vmax.f32 %v5318, 0.0
    %v5727 = vmax.f32 %v5321, 0.0
    %v5728 = vmax.f32 %v5326, 0.0
    %v5729 = vmax.f32 %v5329, 0.0
    %v5730 = vmax.f32 %v5334, 0.0
    %v5731 = vmax.f32 %v5337, 0.0
    %v5732 = vmax.f32 %v5342, 0.0
    %v5733 = vmax.f32 %v5345, 0.0
    %v5734 = vmax.f32 %v5350, 0.0
    %v5735 = vmax.f32 %v5353, 0.0
    %v5736 = vmax.f32 %v5358, 0.0
    %v5737 = vmax.f32 %v5361, 0.0
    %v5738 = vmax.f32 %v5366, 0.0
    %v5739 = vmax.f32 %v5369, 0.0
    %v5740 = vmax.f32 %v5374, 0.0
    %v5741 = vmax.f32 %v5377, 0.0
    %v5742 = vmax.f32 %v5382, 0.0
    %v5743 = vmax.f32 %v5385, 0.0
    %v5744 = vmax.f32 %v5390, 0.0
    %v5745 = vmax.f32 %v5393, 0.0
    %v5746 = vmax.f32 %v5398, 0.0
    %v5747 = vmax.f32 %v5401, 0.0
    %v5748 = vmax.f32 %v5406, 0.0
    %v5749 = vmax.f32 %v5409, 0.0
    %v5750 = vmax.f32 %v5414, 0.0
    %v5751 = vmax.f32 %v5417, 0.0
    %v5752 = vmax.f32 %v5422, 0.0
    %v5753 = vmax.f32 %v5425, 0.0
    %v5754 = vmax.f32 %v5430, 0.0
    %v5755 = vmax.f32 %v5433, 0.0
    %v5756 = vmax.f32 %v5438, 0.0
    %v5757 = vmax.f32 %v5441, 0.0
    %v5758 = vmax.f32 %v5446, 0.0
    %v5759 = vmax.f32 %v5449, 0.0
    %v5760 = vmax.f32 %v5454, 0.0
    %v5761 = vmax.f32 %v5457, 0.0
    %v5762 = vmax.f32 %v5462, 0.0
    %v5763 = vmax.f32 %v5465, 0.0
    %v5764 = vmax.f32 %v5470, 0.0
    %v5765 = vmax.f32 %v5473, 0.0
    %v5766 = vmax.f32 %v5478, 0.0
    %v5767 = vmax.f32 %v5481, 0.0
    %v5768 = vmax.f32 %v5486, 0.0
    %v5769 = vmax.f32 %v5489, 0.0
    %v5770 = vmax.f32 %v5494, 0.0
    %v5771 = vmax.f32 %v5497, 0.0
    %v5772 = vmax.f32 %v5502, 0.0
    %v5773 = vmax.f32 %v5505, 0.0
    %v5774 = vmax.f32 %v5510, 0.0
    %v5775 = vmax.f32 %v5513, 0.0
    %v5776 = vmax.f32 %v5518, 0.0
    %v5777 = vmax.f32 %v5521, 0.0
    %v5778 = vmax.f32 %v5526, 0.0
    %v5779 = vmax.f32 %v5529, 0.0
    %v5780 = vmax.f32 %v5534, 0.0
    %v5781 = vmax.f32 %v5537, 0.0
    %v5782 = vmax.f32 %v5542, 0.0
    %v5783 = vmax.f32 %v5545, 0.0
    %v5784 = vmax.f32 %v5550, 0.0
    %v5785 = vmax.f32 %v5553, 0.0
    %v5786 = vmax.f32 %v5558, 0.0
    %v5787 = vmax.f32 %v5561, 0.0
    %v5788 = vmax.f32 %v5566, 0.0
    %v5789 = vmax.f32 %v5569, 0.0
    %v5790 = vmax.f32 %v5574, 0.0
    %v5791 = vmax.f32 %v5577, 0.0
    %v5792 = vmax.f32 %v5582, 0.0
    %v5793 = vmax.f32 %v5585, 0.0
    %v5794 = vmax.f32 %v5590, 0.0
    %v5795 = vmax.f32 %v5593, 0.0
    %v5796 = vmax.f32 %v5598, 0.0
    %v5797 = vmax.f32 %v5601, 0.0
    %v5798 = vmax.f32 %v5606, 0.0
    %v5799 = vmax.f32 %v5609, 0.0
    %v5800 = vmax.f32 %v5614, 0.0
    %v5801 = vmax.f32 %v5617, 0.0
    %v5802 = vmax.f32 %v5622, 0.0
    %v5803 = vmax.f32 %v5625, 0.0
    %v5804 = vmax.f32 %v5630, 0.0
    %v5805 = vmax.f32 %v5633, 0.0
    %v5806 = vmax.f32 %v5638, 0.0
    %v5807 = vmax.f32 %v5641, 0.0
    %v5808 = vmax.f32 %v5646, 0.0
    %v5809 = vmax.f32 %v5649, 0.0
    %v5810 = vmax.f32 %v5654, 0.0
    %v5811 = vmax.f32 %v5657, 0.0
    %v5812 = vmax.f32 %v5662, 0.0
    %v5813 = vmax.f32 %v5665, 0.0
    %v5814 = vmax.f32 %v5670, 0.0
    %v5815 = vmax.f32 %v5673, 0.0
    %v5816 = vmax.f32 %v5678, 0.0
    %v5817 = vmax.f32 %v5681, 0.0
    %v5818 = vmax.f32 %v5686, 0.0
    %v5819 = vmax.f32 %v5689, 0.0
    %v5820 = vpack.c.bf16 %v5693, %v5692
    %v5821 = vpack.c.bf16 %v5695, %v5694
    %v5822 = vpack.c.bf16 %v5697, %v5696
    %v5823 = vpack.c.bf16 %v5699, %v5698
    %v5824 = vpack.c.bf16 %v5701, %v5700
    %v5825 = vpack.c.bf16 %v5703, %v5702
    %v5826 = vpack.c.bf16 %v5705, %v5704
    %v5827 = vpack.c.bf16 %v5707, %v5706
    %v5828 = vpack.c.bf16 %v5709, %v5708
    %v5829 = vpack.c.bf16 %v5711, %v5710
    %v5830 = vpack.c.bf16 %v5713, %v5712
    %v5831 = vpack.c.bf16 %v5715, %v5714
    %v5832 = vpack.c.bf16 %v5717, %v5716
    %v5833 = vpack.c.bf16 %v5719, %v5718
    %v5834 = vpack.c.bf16 %v5721, %v5720
    %v5835 = vpack.c.bf16 %v5723, %v5722
    %v5836 = vpack.c.bf16 %v5725, %v5724
    %v5837 = vpack.c.bf16 %v5727, %v5726
    %v5838 = vpack.c.bf16 %v5729, %v5728
    %v5839 = vpack.c.bf16 %v5731, %v5730
    %v5840 = vpack.c.bf16 %v5733, %v5732
    %v5841 = vpack.c.bf16 %v5735, %v5734
    %v5842 = vpack.c.bf16 %v5737, %v5736
    %v5843 = vpack.c.bf16 %v5739, %v5738
    %v5844 = vpack.c.bf16 %v5741, %v5740
    %v5845 = vpack.c.bf16 %v5743, %v5742
    %v5846 = vpack.c.bf16 %v5745, %v5744
    %v5847 = vpack.c.bf16 %v5747, %v5746
    %v5848 = vpack.c.bf16 %v5749, %v5748
    %v5849 = vpack.c.bf16 %v5751, %v5750
    %v5850 = vpack.c.bf16 %v5753, %v5752
    %v5851 = vpack.c.bf16 %v5755, %v5754
    %v5852 = vpack.c.bf16 %v5757, %v5756
    %v5853 = vpack.c.bf16 %v5759, %v5758
    %v5854 = vpack.c.bf16 %v5761, %v5760
    %v5855 = vpack.c.bf16 %v5763, %v5762
    %v5856 = vpack.c.bf16 %v5765, %v5764
    %v5857 = vpack.c.bf16 %v5767, %v5766
    %v5858 = vpack.c.bf16 %v5769, %v5768
    %v5859 = vpack.c.bf16 %v5771, %v5770
    %v5860 = vpack.c.bf16 %v5773, %v5772
    %v5861 = vpack.c.bf16 %v5775, %v5774
    %v5862 = vpack.c.bf16 %v5777, %v5776
    %v5863 = vpack.c.bf16 %v5779, %v5778
    %v5864 = vpack.c.bf16 %v5781, %v5780
    %v5865 = vpack.c.bf16 %v5783, %v5782
    %v5866 = vpack.c.bf16 %v5785, %v5784
    %v5867 = vpack.c.bf16 %v5787, %v5786
    %v5868 = vpack.c.bf16 %v5789, %v5788
    %v5869 = vpack.c.bf16 %v5791, %v5790
    %v5870 = vpack.c.bf16 %v5793, %v5792
    %v5871 = vpack.c.bf16 %v5795, %v5794
    %v5872 = vpack.c.bf16 %v5797, %v5796
    %v5873 = vpack.c.bf16 %v5799, %v5798
    %v5874 = vpack.c.bf16 %v5801, %v5800
    %v5875 = vpack.c.bf16 %v5803, %v5802
    %v5876 = vpack.c.bf16 %v5805, %v5804
    %v5877 = vpack.c.bf16 %v5807, %v5806
    %v5878 = vpack.c.bf16 %v5809, %v5808
    %v5879 = vpack.c.bf16 %v5811, %v5810
    %v5880 = vpack.c.bf16 %v5813, %v5812
    %v5881 = vpack.c.bf16 %v5815, %v5814
    %v5882 = vpack.c.bf16 %v5817, %v5816
    %v5883 = vpack.c.bf16 %v5819, %v5818
    %v5884 = vld [vmem:[%s5] sm:$0xf]
    %v5885 = vld [vmem:[%s5 + $0x4] sm:$0xf]
    %v5886 = vld [vmem:[%s5 + $0x8] sm:$0xf]
    %v5887 = vld [vmem:[%s5 + $0xc] sm:$0xf]
    %v5888 = vld [vmem:[%s5 + $0x10] sm:$0xf]
    %v5889 = vld [vmem:[%s5 + $0x14] sm:$0xf]
    %v5890 = vld [vmem:[%s5 + $0x18] sm:$0xf]
    %v5891 = vld [vmem:[%s5 + $0x1c] sm:$0xf]
    %v5892 = vlaneseq
    %v5893 = vshrl.u32 %v5892, 7
    %v5894 = vsub.s32 4, %v5893
    %v5895 = vrot.slane %v28, %v5894
    %v5904 = vunpack.c.l.b16 %v5884
    %v5905 = vunpack.c.l.b16 %v5885
    %v5906 = vunpack.c.l.b16 %v5886
    %v5907 = vunpack.c.l.b16 %v5887
    %v5908 = vunpack.c.l.b16 %v5888
    %v5909 = vunpack.c.l.b16 %v5889
    %v5910 = vunpack.c.l.b16 %v5890
    %v5911 = vunpack.c.l.b16 %v5891
    %v5912 = vpack.c.b16 %v5905, %v5904
    %v5913 = vpack.c.b16 %v5907, %v5906
    %v5914 = vpack.c.b16 %v5909, %v5908
    %v5915 = vpack.c.b16 %v5911, %v5910
    %v5921 = vsel %vm2511, %v5820, 0
    %v5924 = vsel %vm2511, %v5821, 0
    %v5927 = vsel %vm2511, %v5822, 0
    %v5930 = vsel %vm2511, %v5823, 0
    %v5933 = vsel %vm2511, %v5824, 0
    %v5936 = vsel %vm2511, %v5825, 0
    %v5939 = vsel %vm2511, %v5826, 0
    %v5942 = vsel %vm2511, %v5827, 0
    %v5945 = vsel %vm2511, %v5828, 0
    %v5948 = vsel %vm2511, %v5829, 0
    %v5951 = vsel %vm2511, %v5830, 0
    %v5954 = vsel %vm2511, %v5831, 0
    %v5957 = vsel %vm2511, %v5832, 0
    %v5960 = vsel %vm2511, %v5833, 0
    %v5963 = vsel %vm2511, %v5834, 0
    %v5966 = vsel %vm2511, %v5835, 0
    %v5969 = vsel %vm2511, %v5836, 0
    %v5972 = vsel %vm2511, %v5837, 0
    %v5975 = vsel %vm2511, %v5838, 0
    %v5978 = vsel %vm2511, %v5839, 0
    %v5981 = vsel %vm2511, %v5840, 0
    %v5984 = vsel %vm2511, %v5841, 0
    %v5987 = vsel %vm2511, %v5842, 0
    %v5990 = vsel %vm2511, %v5843, 0
    %v5993 = vsel %vm2511, %v5844, 0
    %v5996 = vsel %vm2511, %v5845, 0
    %v5999 = vsel %vm2511, %v5846, 0
    %v6002 = vsel %vm2511, %v5847, 0
    %v6005 = vsel %vm2511, %v5848, 0
    %v6008 = vsel %vm2511, %v5849, 0
    %v6011 = vsel %vm2511, %v5850, 0
    %v6014 = vsel %vm2511, %v5851, 0
    %v6017 = vsel %vm2511, %v5852, 0
    %v6020 = vsel %vm2511, %v5853, 0
    %v6023 = vsel %vm2511, %v5854, 0
    %v6026 = vsel %vm2511, %v5855, 0
    %v6029 = vsel %vm2511, %v5856, 0
    %v6032 = vsel %vm2511, %v5857, 0
    %v6035 = vsel %vm2511, %v5858, 0
    %v6038 = vsel %vm2511, %v5859, 0
    %v6041 = vsel %vm2511, %v5860, 0
    %v6044 = vsel %vm2511, %v5861, 0
    %v6047 = vsel %vm2511, %v5862, 0
    %v6050 = vsel %vm2511, %v5863, 0
    %v6053 = vsel %vm2511, %v5864, 0
    %v6056 = vsel %vm2511, %v5865, 0
    %v6059 = vsel %vm2511, %v5866, 0
    %v6062 = vsel %vm2511, %v5867, 0
    %v6065 = vsel %vm2511, %v5868, 0
    %v6068 = vsel %vm2511, %v5869, 0
    %v6071 = vsel %vm2511, %v5870, 0
    %v6074 = vsel %vm2511, %v5871, 0
    %v6077 = vsel %vm2511, %v5872, 0
    %v6080 = vsel %vm2511, %v5873, 0
    %v6083 = vsel %vm2511, %v5874, 0
    %v6086 = vsel %vm2511, %v5875, 0
    %v6089 = vsel %vm2511, %v5876, 0
    %v6092 = vsel %vm2511, %v5877, 0
    %v6095 = vsel %vm2511, %v5878, 0
    %v6098 = vsel %vm2511, %v5879, 0
    %v6101 = vsel %vm2511, %v5880, 0
    %v6104 = vsel %vm2511, %v5881, 0
    %v6107 = vsel %vm2511, %v5882, 0
    %v6110 = vsel %vm2511, %v5883, 0
    %6112 = vmatprep.subr.bf16.mxu0 0
    %6113 = vmatpush1.bf16.msra.mxu0 0
    %6114 = vmatprep.subr.bf16.mxu0 0
    %6115 = vmatpush1.bf16.msra.mxu0 0
    %6116 = vmatprep.subr.bf16.mxu0 0
    %6117 = vmatpush1.bf16.msra.mxu0 0
    %6118 = vmatprep.subr.bf16.mxu0 0
    %6119 = vmatpush1.bf16.msra.mxu0 0
    %6120 = vmatprep.subr.bf16.mxu0 0
    %6121 = vmatpush1.bf16.msra.mxu0 %v5915
    %6122 = vmatprep.subr.bf16.mxu0 0
    %6123 = vmatpush1.bf16.msra.mxu0 %v5914
    %6124 = vmatprep.subr.bf16.mxu0 0
    %6125 = vmatpush1.bf16.msra.mxu0 %v5913
    %6126 = vmatprep.subr.bf16.mxu0 0
    %6127 = vmatpush1.bf16.msra.mxu0 %v5912
    %6128 = vmatprep.subr.bf16.mxu0 0
    %6129 = vmatpush2.bf16.msra.mxu0 0
    %6130 = vmatprep.subr.bf16.mxu0 0
    %6131 = vmatpush2.bf16.msra.mxu0 0
    %6132 = vmatprep.subr.bf16.mxu0 0
    %6133 = vmatpush2.bf16.msra.mxu0 0
    %6134 = vmatprep.subr.bf16.mxu0 0
    %6135 = vmatpush2.bf16.msra.mxu0 0
    %6136 = vmatprep.subr.bf16.mxu0 0
    %6137 = vmatpush2.bf16.msra.mxu0 0
    %6138 = vmatprep.subr.bf16.mxu0 0
    %6139 = vmatpush2.bf16.msra.mxu0 0
    %6140 = vmatprep.subr.bf16.mxu0 0
    %6141 = vmatpush2.bf16.msra.mxu0 0
    %6142 = vmatprep.subr.bf16.mxu0 0
    %6143 = vmatpush2.bf16.msra.mxu0 0
    %6144 = vmatprep.mubr.bf16.mxu0 0
    %6145 = vmatmul.mubr.bf16.gmra.mxu0 %v5921
    %v6146 = vpop.f32.mrf.mxu0
    %v6147 = vadd.f32 %v5895, %v6146
    %v6148 = vpop.f32.mrf.mxu0
    %v6149 = vpop.f32.mrf.mxu0
    %v6150 = vadd.f32 %v5895, %v6149
    %v6151 = vpop.f32.mrf.mxu0
    %6152 = vmatprep.mubr.bf16.mxu0 0
    %6153 = vmatmul.mubr.bf16.gmra.mxu0 %v5924
    %v6154 = vpop.f32.mrf.mxu0
    %v6155 = vadd.f32 %v5895, %v6154
    %v6156 = vpop.f32.mrf.mxu0
    %v6157 = vpop.f32.mrf.mxu0
    %v6158 = vadd.f32 %v5895, %v6157
    %v6159 = vpop.f32.mrf.mxu0
    %6160 = vmatprep.mubr.bf16.mxu0 0
    %6161 = vmatmul.mubr.bf16.gmra.mxu0 %v5927
    %v6162 = vpop.f32.mrf.mxu0
    %v6163 = vadd.f32 %v5895, %v6162
    %v6164 = vpop.f32.mrf.mxu0
    %v6165 = vpop.f32.mrf.mxu0
    %v6166 = vadd.f32 %v5895, %v6165
    %v6167 = vpop.f32.mrf.mxu0
    %6168 = vmatprep.mubr.bf16.mxu0 0
    %6169 = vmatmul.mubr.bf16.gmra.mxu0 %v5930
    %v6170 = vpop.f32.mrf.mxu0
    %v6171 = vadd.f32 %v5895, %v6170
    %v6172 = vpop.f32.mrf.mxu0
    %v6173 = vpop.f32.mrf.mxu0
    %v6174 = vadd.f32 %v5895, %v6173
    %v6175 = vpop.f32.mrf.mxu0
    %6176 = vmatprep.mubr.bf16.mxu0 0
    %6177 = vmatmul.mubr.bf16.gmra.mxu0 %v5933
    %v6178 = vpop.f32.mrf.mxu0
    %v6179 = vadd.f32 %v5895, %v6178
    %v6180 = vpop.f32.mrf.mxu0
    %v6181 = vpop.f32.mrf.mxu0
    %v6182 = vadd.f32 %v5895, %v6181
    %v6183 = vpop.f32.mrf.mxu0
    %6184 = vmatprep.mubr.bf16.mxu0 0
    %6185 = vmatmul.mubr.bf16.gmra.mxu0 %v5936
    %v6186 = vpop.f32.mrf.mxu0
    %v6187 = vadd.f32 %v5895, %v6186
    %v6188 = vpop.f32.mrf.mxu0
    %v6189 = vpop.f32.mrf.mxu0
    %v6190 = vadd.f32 %v5895, %v6189
    %v6191 = vpop.f32.mrf.mxu0
    %6192 = vmatprep.mubr.bf16.mxu0 0
    %6193 = vmatmul.mubr.bf16.gmra.mxu0 %v5939
    %v6194 = vpop.f32.mrf.mxu0
    %v6195 = vadd.f32 %v5895, %v6194
    %v6196 = vpop.f32.mrf.mxu0
    %v6197 = vpop.f32.mrf.mxu0
    %v6198 = vadd.f32 %v5895, %v6197
    %v6199 = vpop.f32.mrf.mxu0
    %6200 = vmatprep.mubr.bf16.mxu0 0
    %6201 = vmatmul.mubr.bf16.gmra.mxu0 %v5942
    %v6202 = vpop.f32.mrf.mxu0
    %v6203 = vadd.f32 %v5895, %v6202
    %v6204 = vpop.f32.mrf.mxu0
    %v6205 = vpop.f32.mrf.mxu0
    %v6206 = vadd.f32 %v5895, %v6205
    %v6207 = vpop.f32.mrf.mxu0
    %6208 = vmatprep.mubr.bf16.mxu0 0
    %6209 = vmatmul.mubr.bf16.gmra.mxu0 %v5945
    %v6210 = vpop.f32.mrf.mxu0
    %v6211 = vadd.f32 %v5895, %v6210
    %v6212 = vpop.f32.mrf.mxu0
    %v6213 = vpop.f32.mrf.mxu0
    %v6214 = vadd.f32 %v5895, %v6213
    %v6215 = vpop.f32.mrf.mxu0
    %6216 = vmatprep.mubr.bf16.mxu0 0
    %6217 = vmatmul.mubr.bf16.gmra.mxu0 %v5948
    %v6218 = vpop.f32.mrf.mxu0
    %v6219 = vadd.f32 %v5895, %v6218
    %v6220 = vpop.f32.mrf.mxu0
    %v6221 = vpop.f32.mrf.mxu0
    %v6222 = vadd.f32 %v5895, %v6221
    %v6223 = vpop.f32.mrf.mxu0
    %6224 = vmatprep.mubr.bf16.mxu0 0
    %6225 = vmatmul.mubr.bf16.gmra.mxu0 %v5951
    %v6226 = vpop.f32.mrf.mxu0
    %v6227 = vadd.f32 %v5895, %v6226
    %v6228 = vpop.f32.mrf.mxu0
    %v6229 = vpop.f32.mrf.mxu0
    %v6230 = vadd.f32 %v5895, %v6229
    %v6231 = vpop.f32.mrf.mxu0
    %6232 = vmatprep.mubr.bf16.mxu0 0
    %6233 = vmatmul.mubr.bf16.gmra.mxu0 %v5954
    %v6234 = vpop.f32.mrf.mxu0
    %v6235 = vadd.f32 %v5895, %v6234
    %v6236 = vpop.f32.mrf.mxu0
    %v6237 = vpop.f32.mrf.mxu0
    %v6238 = vadd.f32 %v5895, %v6237
    %v6239 = vpop.f32.mrf.mxu0
    %6240 = vmatprep.mubr.bf16.mxu0 0
    %6241 = vmatmul.mubr.bf16.gmra.mxu0 %v5957
    %v6242 = vpop.f32.mrf.mxu0
    %v6243 = vadd.f32 %v5895, %v6242
    %v6244 = vpop.f32.mrf.mxu0
    %v6245 = vpop.f32.mrf.mxu0
    %v6246 = vadd.f32 %v5895, %v6245
    %v6247 = vpop.f32.mrf.mxu0
    %6248 = vmatprep.mubr.bf16.mxu0 0
    %6249 = vmatmul.mubr.bf16.gmra.mxu0 %v5960
    %v6250 = vpop.f32.mrf.mxu0
    %v6251 = vadd.f32 %v5895, %v6250
    %v6252 = vpop.f32.mrf.mxu0
    %v6253 = vpop.f32.mrf.mxu0
    %v6254 = vadd.f32 %v5895, %v6253
    %v6255 = vpop.f32.mrf.mxu0
    %6256 = vmatprep.mubr.bf16.mxu0 0
    %6257 = vmatmul.mubr.bf16.gmra.mxu0 %v5963
    %v6258 = vpop.f32.mrf.mxu0
    %v6259 = vadd.f32 %v5895, %v6258
    %v6260 = vpop.f32.mrf.mxu0
    %v6261 = vpop.f32.mrf.mxu0
    %v6262 = vadd.f32 %v5895, %v6261
    %v6263 = vpop.f32.mrf.mxu0
    %6264 = vmatprep.mubr.bf16.mxu0 0
    %6265 = vmatmul.mubr.bf16.gmra.mxu0 %v5966
    %v6266 = vpop.f32.mrf.mxu0
    %v6267 = vadd.f32 %v5895, %v6266
    %v6268 = vpop.f32.mrf.mxu0
    %v6269 = vpop.f32.mrf.mxu0
    %v6270 = vadd.f32 %v5895, %v6269
    %v6271 = vpop.f32.mrf.mxu0
    %6272 = vmatprep.mubr.bf16.mxu0 0
    %6273 = vmatmul.mubr.bf16.gmra.mxu0 %v5969
    %v6274 = vpop.f32.mrf.mxu0
    %v6275 = vadd.f32 %v5895, %v6274
    %v6276 = vpop.f32.mrf.mxu0
    %v6277 = vpop.f32.mrf.mxu0
    %v6278 = vadd.f32 %v5895, %v6277
    %v6279 = vpop.f32.mrf.mxu0
    %6280 = vmatprep.mubr.bf16.mxu0 0
    %6281 = vmatmul.mubr.bf16.gmra.mxu0 %v5972
    %v6282 = vpop.f32.mrf.mxu0
    %v6283 = vadd.f32 %v5895, %v6282
    %v6284 = vpop.f32.mrf.mxu0
    %v6285 = vpop.f32.mrf.mxu0
    %v6286 = vadd.f32 %v5895, %v6285
    %v6287 = vpop.f32.mrf.mxu0
    %6288 = vmatprep.mubr.bf16.mxu0 0
    %6289 = vmatmul.mubr.bf16.gmra.mxu0 %v5975
    %v6290 = vpop.f32.mrf.mxu0
    %v6291 = vadd.f32 %v5895, %v6290
    %v6292 = vpop.f32.mrf.mxu0
    %v6293 = vpop.f32.mrf.mxu0
    %v6294 = vadd.f32 %v5895, %v6293
    %v6295 = vpop.f32.mrf.mxu0
    %6296 = vmatprep.mubr.bf16.mxu0 0
    %6297 = vmatmul.mubr.bf16.gmra.mxu0 %v5978
    %v6298 = vpop.f32.mrf.mxu0
    %v6299 = vadd.f32 %v5895, %v6298
    %v6300 = vpop.f32.mrf.mxu0
    %v6301 = vpop.f32.mrf.mxu0
    %v6302 = vadd.f32 %v5895, %v6301
    %v6303 = vpop.f32.mrf.mxu0
    %6304 = vmatprep.mubr.bf16.mxu0 0
    %6305 = vmatmul.mubr.bf16.gmra.mxu0 %v5981
    %v6306 = vpop.f32.mrf.mxu0
    %v6307 = vadd.f32 %v5895, %v6306
    %v6308 = vpop.f32.mrf.mxu0
    %v6309 = vpop.f32.mrf.mxu0
    %v6310 = vadd.f32 %v5895, %v6309
    %v6311 = vpop.f32.mrf.mxu0
    %6312 = vmatprep.mubr.bf16.mxu0 0
    %6313 = vmatmul.mubr.bf16.gmra.mxu0 %v5984
    %v6314 = vpop.f32.mrf.mxu0
    %v6315 = vadd.f32 %v5895, %v6314
    %v6316 = vpop.f32.mrf.mxu0
    %v6317 = vpop.f32.mrf.mxu0
    %v6318 = vadd.f32 %v5895, %v6317
    %v6319 = vpop.f32.mrf.mxu0
    %6320 = vmatprep.mubr.bf16.mxu0 0
    %6321 = vmatmul.mubr.bf16.gmra.mxu0 %v5987
    %v6322 = vpop.f32.mrf.mxu0
    %v6323 = vadd.f32 %v5895, %v6322
    %v6324 = vpop.f32.mrf.mxu0
    %v6325 = vpop.f32.mrf.mxu0
    %v6326 = vadd.f32 %v5895, %v6325
    %v6327 = vpop.f32.mrf.mxu0
    %6328 = vmatprep.mubr.bf16.mxu0 0
    %6329 = vmatmul.mubr.bf16.gmra.mxu0 %v5990
    %v6330 = vpop.f32.mrf.mxu0
    %v6331 = vadd.f32 %v5895, %v6330
    %v6332 = vpop.f32.mrf.mxu0
    %v6333 = vpop.f32.mrf.mxu0
    %v6334 = vadd.f32 %v5895, %v6333
    %v6335 = vpop.f32.mrf.mxu0
    %6336 = vmatprep.mubr.bf16.mxu0 0
    %6337 = vmatmul.mubr.bf16.gmra.mxu0 %v5993
    %v6338 = vpop.f32.mrf.mxu0
    %v6339 = vadd.f32 %v5895, %v6338
    %v6340 = vpop.f32.mrf.mxu0
    %v6341 = vpop.f32.mrf.mxu0
    %v6342 = vadd.f32 %v5895, %v6341
    %v6343 = vpop.f32.mrf.mxu0
    %6344 = vmatprep.mubr.bf16.mxu0 0
    %6345 = vmatmul.mubr.bf16.gmra.mxu0 %v5996
    %v6346 = vpop.f32.mrf.mxu0
    %v6347 = vadd.f32 %v5895, %v6346
    %v6348 = vpop.f32.mrf.mxu0
    %v6349 = vpop.f32.mrf.mxu0
    %v6350 = vadd.f32 %v5895, %v6349
    %v6351 = vpop.f32.mrf.mxu0
    %6352 = vmatprep.mubr.bf16.mxu0 0
    %6353 = vmatmul.mubr.bf16.gmra.mxu0 %v5999
    %v6354 = vpop.f32.mrf.mxu0
    %v6355 = vadd.f32 %v5895, %v6354
    %v6356 = vpop.f32.mrf.mxu0
    %v6357 = vpop.f32.mrf.mxu0
    %v6358 = vadd.f32 %v5895, %v6357
    %v6359 = vpop.f32.mrf.mxu0
    %6360 = vmatprep.mubr.bf16.mxu0 0
    %6361 = vmatmul.mubr.bf16.gmra.mxu0 %v6002
    %v6362 = vpop.f32.mrf.mxu0
    %v6363 = vadd.f32 %v5895, %v6362
    %v6364 = vpop.f32.mrf.mxu0
    %v6365 = vpop.f32.mrf.mxu0
    %v6366 = vadd.f32 %v5895, %v6365
    %v6367 = vpop.f32.mrf.mxu0
    %6368 = vmatprep.mubr.bf16.mxu0 0
    %6369 = vmatmul.mubr.bf16.gmra.mxu0 %v6005
    %v6370 = vpop.f32.mrf.mxu0
    %v6371 = vadd.f32 %v5895, %v6370
    %v6372 = vpop.f32.mrf.mxu0
    %v6373 = vpop.f32.mrf.mxu0
    %v6374 = vadd.f32 %v5895, %v6373
    %v6375 = vpop.f32.mrf.mxu0
    %6376 = vmatprep.mubr.bf16.mxu0 0
    %6377 = vmatmul.mubr.bf16.gmra.mxu0 %v6008
    %v6378 = vpop.f32.mrf.mxu0
    %v6379 = vadd.f32 %v5895, %v6378
    %v6380 = vpop.f32.mrf.mxu0
    %v6381 = vpop.f32.mrf.mxu0
    %v6382 = vadd.f32 %v5895, %v6381
    %v6383 = vpop.f32.mrf.mxu0
    %6384 = vmatprep.mubr.bf16.mxu0 0
    %6385 = vmatmul.mubr.bf16.gmra.mxu0 %v6011
    %v6386 = vpop.f32.mrf.mxu0
    %v6387 = vadd.f32 %v5895, %v6386
    %v6388 = vpop.f32.mrf.mxu0
    %v6389 = vpop.f32.mrf.mxu0
    %v6390 = vadd.f32 %v5895, %v6389
    %v6391 = vpop.f32.mrf.mxu0
    %6392 = vmatprep.mubr.bf16.mxu0 0
    %6393 = vmatmul.mubr.bf16.gmra.mxu0 %v6014
    %v6394 = vpop.f32.mrf.mxu0
    %v6395 = vadd.f32 %v5895, %v6394
    %v6396 = vpop.f32.mrf.mxu0
    %v6397 = vpop.f32.mrf.mxu0
    %v6398 = vadd.f32 %v5895, %v6397
    %v6399 = vpop.f32.mrf.mxu0
    %6400 = vmatprep.mubr.bf16.mxu0 0
    %6401 = vmatmul.mubr.bf16.gmra.mxu0 %v6017
    %v6402 = vpop.f32.mrf.mxu0
    %v6403 = vadd.f32 %v5895, %v6402
    %v6404 = vpop.f32.mrf.mxu0
    %v6405 = vpop.f32.mrf.mxu0
    %v6406 = vadd.f32 %v5895, %v6405
    %v6407 = vpop.f32.mrf.mxu0
    %6408 = vmatprep.mubr.bf16.mxu0 0
    %6409 = vmatmul.mubr.bf16.gmra.mxu0 %v6020
    %v6410 = vpop.f32.mrf.mxu0
    %v6411 = vadd.f32 %v5895, %v6410
    %v6412 = vpop.f32.mrf.mxu0
    %v6413 = vpop.f32.mrf.mxu0
    %v6414 = vadd.f32 %v5895, %v6413
    %v6415 = vpop.f32.mrf.mxu0
    %6416 = vmatprep.mubr.bf16.mxu0 0
    %6417 = vmatmul.mubr.bf16.gmra.mxu0 %v6023
    %v6418 = vpop.f32.mrf.mxu0
    %v6419 = vadd.f32 %v5895, %v6418
    %v6420 = vpop.f32.mrf.mxu0
    %v6421 = vpop.f32.mrf.mxu0
    %v6422 = vadd.f32 %v5895, %v6421
    %v6423 = vpop.f32.mrf.mxu0
    %6424 = vmatprep.mubr.bf16.mxu0 0
    %6425 = vmatmul.mubr.bf16.gmra.mxu0 %v6026
    %v6426 = vpop.f32.mrf.mxu0
    %v6427 = vadd.f32 %v5895, %v6426
    %v6428 = vpop.f32.mrf.mxu0
    %v6429 = vpop.f32.mrf.mxu0
    %v6430 = vadd.f32 %v5895, %v6429
    %v6431 = vpop.f32.mrf.mxu0
    %6432 = vmatprep.mubr.bf16.mxu0 0
    %6433 = vmatmul.mubr.bf16.gmra.mxu0 %v6029
    %v6434 = vpop.f32.mrf.mxu0
    %v6435 = vadd.f32 %v5895, %v6434
    %v6436 = vpop.f32.mrf.mxu0
    %v6437 = vpop.f32.mrf.mxu0
    %v6438 = vadd.f32 %v5895, %v6437
    %v6439 = vpop.f32.mrf.mxu0
    %6440 = vmatprep.mubr.bf16.mxu0 0
    %6441 = vmatmul.mubr.bf16.gmra.mxu0 %v6032
    %v6442 = vpop.f32.mrf.mxu0
    %v6443 = vadd.f32 %v5895, %v6442
    %v6444 = vpop.f32.mrf.mxu0
    %v6445 = vpop.f32.mrf.mxu0
    %v6446 = vadd.f32 %v5895, %v6445
    %v6447 = vpop.f32.mrf.mxu0
    %6448 = vmatprep.mubr.bf16.mxu0 0
    %6449 = vmatmul.mubr.bf16.gmra.mxu0 %v6035
    %v6450 = vpop.f32.mrf.mxu0
    %v6451 = vadd.f32 %v5895, %v6450
    %v6452 = vpop.f32.mrf.mxu0
    %v6453 = vpop.f32.mrf.mxu0
    %v6454 = vadd.f32 %v5895, %v6453
    %v6455 = vpop.f32.mrf.mxu0
    %6456 = vmatprep.mubr.bf16.mxu0 0
    %6457 = vmatmul.mubr.bf16.gmra.mxu0 %v6038
    %v6458 = vpop.f32.mrf.mxu0
    %v6459 = vadd.f32 %v5895, %v6458
    %v6460 = vpop.f32.mrf.mxu0
    %v6461 = vpop.f32.mrf.mxu0
    %v6462 = vadd.f32 %v5895, %v6461
    %v6463 = vpop.f32.mrf.mxu0
    %6464 = vmatprep.mubr.bf16.mxu0 0
    %6465 = vmatmul.mubr.bf16.gmra.mxu0 %v6041
    %v6466 = vpop.f32.mrf.mxu0
    %v6467 = vadd.f32 %v5895, %v6466
    %v6468 = vpop.f32.mrf.mxu0
    %v6469 = vpop.f32.mrf.mxu0
    %v6470 = vadd.f32 %v5895, %v6469
    %v6471 = vpop.f32.mrf.mxu0
    %6472 = vmatprep.mubr.bf16.mxu0 0
    %6473 = vmatmul.mubr.bf16.gmra.mxu0 %v6044
    %v6474 = vpop.f32.mrf.mxu0
    %v6475 = vadd.f32 %v5895, %v6474
    %v6476 = vpop.f32.mrf.mxu0
    %v6477 = vpop.f32.mrf.mxu0
    %v6478 = vadd.f32 %v5895, %v6477
    %v6479 = vpop.f32.mrf.mxu0
    %6480 = vmatprep.mubr.bf16.mxu0 0
    %6481 = vmatmul.mubr.bf16.gmra.mxu0 %v6047
    %v6482 = vpop.f32.mrf.mxu0
    %v6483 = vadd.f32 %v5895, %v6482
    %v6484 = vpop.f32.mrf.mxu0
    %v6485 = vpop.f32.mrf.mxu0
    %v6486 = vadd.f32 %v5895, %v6485
    %v6487 = vpop.f32.mrf.mxu0
    %6488 = vmatprep.mubr.bf16.mxu0 0
    %6489 = vmatmul.mubr.bf16.gmra.mxu0 %v6050
    %v6490 = vpop.f32.mrf.mxu0
    %v6491 = vadd.f32 %v5895, %v6490
    %v6492 = vpop.f32.mrf.mxu0
    %v6493 = vpop.f32.mrf.mxu0
    %v6494 = vadd.f32 %v5895, %v6493
    %v6495 = vpop.f32.mrf.mxu0
    %6496 = vmatprep.mubr.bf16.mxu0 0
    %6497 = vmatmul.mubr.bf16.gmra.mxu0 %v6053
    %v6498 = vpop.f32.mrf.mxu0
    %v6499 = vadd.f32 %v5895, %v6498
    %v6500 = vpop.f32.mrf.mxu0
    %v6501 = vpop.f32.mrf.mxu0
    %v6502 = vadd.f32 %v5895, %v6501
    %v6503 = vpop.f32.mrf.mxu0
    %6504 = vmatprep.mubr.bf16.mxu0 0
    %6505 = vmatmul.mubr.bf16.gmra.mxu0 %v6056
    %v6506 = vpop.f32.mrf.mxu0
    %v6507 = vadd.f32 %v5895, %v6506
    %v6508 = vpop.f32.mrf.mxu0
    %v6509 = vpop.f32.mrf.mxu0
    %v6510 = vadd.f32 %v5895, %v6509
    %v6511 = vpop.f32.mrf.mxu0
    %6512 = vmatprep.mubr.bf16.mxu0 0
    %6513 = vmatmul.mubr.bf16.gmra.mxu0 %v6059
    %v6514 = vpop.f32.mrf.mxu0
    %v6515 = vadd.f32 %v5895, %v6514
    %v6516 = vpop.f32.mrf.mxu0
    %v6517 = vpop.f32.mrf.mxu0
    %v6518 = vadd.f32 %v5895, %v6517
    %v6519 = vpop.f32.mrf.mxu0
    %6520 = vmatprep.mubr.bf16.mxu0 0
    %6521 = vmatmul.mubr.bf16.gmra.mxu0 %v6062
    %v6522 = vpop.f32.mrf.mxu0
    %v6523 = vadd.f32 %v5895, %v6522
    %v6524 = vpop.f32.mrf.mxu0
    %v6525 = vpop.f32.mrf.mxu0
    %v6526 = vadd.f32 %v5895, %v6525
    %v6527 = vpop.f32.mrf.mxu0
    %6528 = vmatprep.mubr.bf16.mxu0 0
    %6529 = vmatmul.mubr.bf16.gmra.mxu0 %v6065
    %v6530 = vpop.f32.mrf.mxu0
    %v6531 = vadd.f32 %v5895, %v6530
    %v6532 = vpop.f32.mrf.mxu0
    %v6533 = vpop.f32.mrf.mxu0
    %v6534 = vadd.f32 %v5895, %v6533
    %v6535 = vpop.f32.mrf.mxu0
    %6536 = vmatprep.mubr.bf16.mxu0 0
    %6537 = vmatmul.mubr.bf16.gmra.mxu0 %v6068
    %v6538 = vpop.f32.mrf.mxu0
    %v6539 = vadd.f32 %v5895, %v6538
    %v6540 = vpop.f32.mrf.mxu0
    %v6541 = vpop.f32.mrf.mxu0
    %v6542 = vadd.f32 %v5895, %v6541
    %v6543 = vpop.f32.mrf.mxu0
    %6544 = vmatprep.mubr.bf16.mxu0 0
    %6545 = vmatmul.mubr.bf16.gmra.mxu0 %v6071
    %v6546 = vpop.f32.mrf.mxu0
    %v6547 = vadd.f32 %v5895, %v6546
    %v6548 = vpop.f32.mrf.mxu0
    %v6549 = vpop.f32.mrf.mxu0
    %v6550 = vadd.f32 %v5895, %v6549
    %v6551 = vpop.f32.mrf.mxu0
    %6552 = vmatprep.mubr.bf16.mxu0 0
    %6553 = vmatmul.mubr.bf16.gmra.mxu0 %v6074
    %v6554 = vpop.f32.mrf.mxu0
    %v6555 = vadd.f32 %v5895, %v6554
    %v6556 = vpop.f32.mrf.mxu0
    %v6557 = vpop.f32.mrf.mxu0
    %v6558 = vadd.f32 %v5895, %v6557
    %v6559 = vpop.f32.mrf.mxu0
    %6560 = vmatprep.mubr.bf16.mxu0 0
    %6561 = vmatmul.mubr.bf16.gmra.mxu0 %v6077
    %v6562 = vpop.f32.mrf.mxu0
    %v6563 = vadd.f32 %v5895, %v6562
    %v6564 = vpop.f32.mrf.mxu0
    %v6565 = vpop.f32.mrf.mxu0
    %v6566 = vadd.f32 %v5895, %v6565
    %v6567 = vpop.f32.mrf.mxu0
    %6568 = vmatprep.mubr.bf16.mxu0 0
    %6569 = vmatmul.mubr.bf16.gmra.mxu0 %v6080
    %v6570 = vpop.f32.mrf.mxu0
    %v6571 = vadd.f32 %v5895, %v6570
    %v6572 = vpop.f32.mrf.mxu0
    %v6573 = vpop.f32.mrf.mxu0
    %v6574 = vadd.f32 %v5895, %v6573
    %v6575 = vpop.f32.mrf.mxu0
    %6576 = vmatprep.mubr.bf16.mxu0 0
    %6577 = vmatmul.mubr.bf16.gmra.mxu0 %v6083
    %v6578 = vpop.f32.mrf.mxu0
    %v6579 = vadd.f32 %v5895, %v6578
    %v6580 = vpop.f32.mrf.mxu0
    %v6581 = vpop.f32.mrf.mxu0
    %v6582 = vadd.f32 %v5895, %v6581
    %v6583 = vpop.f32.mrf.mxu0
    %6584 = vmatprep.mubr.bf16.mxu0 0
    %6585 = vmatmul.mubr.bf16.gmra.mxu0 %v6086
    %v6586 = vpop.f32.mrf.mxu0
    %v6587 = vadd.f32 %v5895, %v6586
    %v6588 = vpop.f32.mrf.mxu0
    %v6589 = vpop.f32.mrf.mxu0
    %v6590 = vadd.f32 %v5895, %v6589
    %v6591 = vpop.f32.mrf.mxu0
    %6592 = vmatprep.mubr.bf16.mxu0 0
    %6593 = vmatmul.mubr.bf16.gmra.mxu0 %v6089
    %v6594 = vpop.f32.mrf.mxu0
    %v6595 = vadd.f32 %v5895, %v6594
    %v6596 = vpop.f32.mrf.mxu0
    %v6597 = vpop.f32.mrf.mxu0
    %v6598 = vadd.f32 %v5895, %v6597
    %v6599 = vpop.f32.mrf.mxu0
    %6600 = vmatprep.mubr.bf16.mxu0 0
    %6601 = vmatmul.mubr.bf16.gmra.mxu0 %v6092
    %v6602 = vpop.f32.mrf.mxu0
    %v6603 = vadd.f32 %v5895, %v6602
    %v6604 = vpop.f32.mrf.mxu0
    %v6605 = vpop.f32.mrf.mxu0
    %v6606 = vadd.f32 %v5895, %v6605
    %v6607 = vpop.f32.mrf.mxu0
    %6608 = vmatprep.mubr.bf16.mxu0 0
    %6609 = vmatmul.mubr.bf16.gmra.mxu0 %v6095
    %v6610 = vpop.f32.mrf.mxu0
    %v6611 = vadd.f32 %v5895, %v6610
    %v6612 = vpop.f32.mrf.mxu0
    %v6613 = vpop.f32.mrf.mxu0
    %v6614 = vadd.f32 %v5895, %v6613
    %v6615 = vpop.f32.mrf.mxu0
    %6616 = vmatprep.mubr.bf16.mxu0 0
    %6617 = vmatmul.mubr.bf16.gmra.mxu0 %v6098
    %v6618 = vpop.f32.mrf.mxu0
    %v6619 = vadd.f32 %v5895, %v6618
    %v6620 = vpop.f32.mrf.mxu0
    %v6621 = vpop.f32.mrf.mxu0
    %v6622 = vadd.f32 %v5895, %v6621
    %v6623 = vpop.f32.mrf.mxu0
    %6624 = vmatprep.mubr.bf16.mxu0 0
    %6625 = vmatmul.mubr.bf16.gmra.mxu0 %v6101
    %v6626 = vpop.f32.mrf.mxu0
    %v6627 = vadd.f32 %v5895, %v6626
    %v6628 = vpop.f32.mrf.mxu0
    %v6629 = vpop.f32.mrf.mxu0
    %v6630 = vadd.f32 %v5895, %v6629
    %v6631 = vpop.f32.mrf.mxu0
    %6632 = vmatprep.mubr.bf16.mxu0 0
    %6633 = vmatmul.mubr.bf16.gmra.mxu0 %v6104
    %v6634 = vpop.f32.mrf.mxu0
    %v6635 = vadd.f32 %v5895, %v6634
    %v6636 = vpop.f32.mrf.mxu0
    %v6637 = vpop.f32.mrf.mxu0
    %v6638 = vadd.f32 %v5895, %v6637
    %v6639 = vpop.f32.mrf.mxu0
    %6640 = vmatprep.mubr.bf16.mxu0 0
    %6641 = vmatmul.mubr.bf16.gmra.mxu0 %v6107
    %v6642 = vpop.f32.mrf.mxu0
    %v6643 = vadd.f32 %v5895, %v6642
    %v6644 = vpop.f32.mrf.mxu0
    %v6645 = vpop.f32.mrf.mxu0
    %v6646 = vadd.f32 %v5895, %v6645
    %v6647 = vpop.f32.mrf.mxu0
    %6648 = vmatprep.mubr.bf16.mxu0 0
    %6649 = vmatmul.mubr.bf16.gmra.mxu0 %v6110
    %v6650 = vpop.f32.mrf.mxu0
    %v6651 = vadd.f32 %v5895, %v6650
    %v6652 = vpop.f32.mrf.mxu0
    %v6653 = vpop.f32.mrf.mxu0
    %v6654 = vadd.f32 %v5895, %v6653
    %v6655 = vpop.f32.mrf.mxu0
    %6656 = vdwg.mxu0
    %v6657 = vmax.f32 %v6147, 0.0
    %v6658 = vmax.f32 %v6150, 0.0
    %v6659 = vmax.f32 %v6155, 0.0
    %v6660 = vmax.f32 %v6158, 0.0
    %v6661 = vmax.f32 %v6163, 0.0
    %v6662 = vmax.f32 %v6166, 0.0
    %v6663 = vmax.f32 %v6171, 0.0
    %v6664 = vmax.f32 %v6174, 0.0
    %v6665 = vmax.f32 %v6179, 0.0
    %v6666 = vmax.f32 %v6182, 0.0
    %v6667 = vmax.f32 %v6187, 0.0
    %v6668 = vmax.f32 %v6190, 0.0
    %v6669 = vmax.f32 %v6195, 0.0
    %v6670 = vmax.f32 %v6198, 0.0
    %v6671 = vmax.f32 %v6203, 0.0
    %v6672 = vmax.f32 %v6206, 0.0
    %v6673 = vmax.f32 %v6211, 0.0
    %v6674 = vmax.f32 %v6214, 0.0
    %v6675 = vmax.f32 %v6219, 0.0
    %v6676 = vmax.f32 %v6222, 0.0
    %v6677 = vmax.f32 %v6227, 0.0
    %v6678 = vmax.f32 %v6230, 0.0
    %v6679 = vmax.f32 %v6235, 0.0
    %v6680 = vmax.f32 %v6238, 0.0
    %v6681 = vmax.f32 %v6243, 0.0
    %v6682 = vmax.f32 %v6246, 0.0
    %v6683 = vmax.f32 %v6251, 0.0
    %v6684 = vmax.f32 %v6254, 0.0
    %v6685 = vmax.f32 %v6259, 0.0
    %v6686 = vmax.f32 %v6262, 0.0
    %v6687 = vmax.f32 %v6267, 0.0
    %v6688 = vmax.f32 %v6270, 0.0
    %v6689 = vmax.f32 %v6275, 0.0
    %v6690 = vmax.f32 %v6278, 0.0
    %v6691 = vmax.f32 %v6283, 0.0
    %v6692 = vmax.f32 %v6286, 0.0
    %v6693 = vmax.f32 %v6291, 0.0
    %v6694 = vmax.f32 %v6294, 0.0
    %v6695 = vmax.f32 %v6299, 0.0
    %v6696 = vmax.f32 %v6302, 0.0
    %v6697 = vmax.f32 %v6307, 0.0
    %v6698 = vmax.f32 %v6310, 0.0
    %v6699 = vmax.f32 %v6315, 0.0
    %v6700 = vmax.f32 %v6318, 0.0
    %v6701 = vmax.f32 %v6323, 0.0
    %v6702 = vmax.f32 %v6326, 0.0
    %v6703 = vmax.f32 %v6331, 0.0
    %v6704 = vmax.f32 %v6334, 0.0
    %v6705 = vmax.f32 %v6339, 0.0
    %v6706 = vmax.f32 %v6342, 0.0
    %v6707 = vmax.f32 %v6347, 0.0
    %v6708 = vmax.f32 %v6350, 0.0
    %v6709 = vmax.f32 %v6355, 0.0
    %v6710 = vmax.f32 %v6358, 0.0
    %v6711 = vmax.f32 %v6363, 0.0
    %v6712 = vmax.f32 %v6366, 0.0
    %v6713 = vmax.f32 %v6371, 0.0
    %v6714 = vmax.f32 %v6374, 0.0
    %v6715 = vmax.f32 %v6379, 0.0
    %v6716 = vmax.f32 %v6382, 0.0
    %v6717 = vmax.f32 %v6387, 0.0
    %v6718 = vmax.f32 %v6390, 0.0
    %v6719 = vmax.f32 %v6395, 0.0
    %v6720 = vmax.f32 %v6398, 0.0
    %v6721 = vmax.f32 %v6403, 0.0
    %v6722 = vmax.f32 %v6406, 0.0
    %v6723 = vmax.f32 %v6411, 0.0
    %v6724 = vmax.f32 %v6414, 0.0
    %v6725 = vmax.f32 %v6419, 0.0
    %v6726 = vmax.f32 %v6422, 0.0
    %v6727 = vmax.f32 %v6427, 0.0
    %v6728 = vmax.f32 %v6430, 0.0
    %v6729 = vmax.f32 %v6435, 0.0
    %v6730 = vmax.f32 %v6438, 0.0
    %v6731 = vmax.f32 %v6443, 0.0
    %v6732 = vmax.f32 %v6446, 0.0
    %v6733 = vmax.f32 %v6451, 0.0
    %v6734 = vmax.f32 %v6454, 0.0
    %v6735 = vmax.f32 %v6459, 0.0
    %v6736 = vmax.f32 %v6462, 0.0
    %v6737 = vmax.f32 %v6467, 0.0
    %v6738 = vmax.f32 %v6470, 0.0
    %v6739 = vmax.f32 %v6475, 0.0
    %v6740 = vmax.f32 %v6478, 0.0
    %v6741 = vmax.f32 %v6483, 0.0
    %v6742 = vmax.f32 %v6486, 0.0
    %v6743 = vmax.f32 %v6491, 0.0
    %v6744 = vmax.f32 %v6494, 0.0
    %v6745 = vmax.f32 %v6499, 0.0
    %v6746 = vmax.f32 %v6502, 0.0
    %v6747 = vmax.f32 %v6507, 0.0
    %v6748 = vmax.f32 %v6510, 0.0
    %v6749 = vmax.f32 %v6515, 0.0
    %v6750 = vmax.f32 %v6518, 0.0
    %v6751 = vmax.f32 %v6523, 0.0
    %v6752 = vmax.f32 %v6526, 0.0
    %v6753 = vmax.f32 %v6531, 0.0
    %v6754 = vmax.f32 %v6534, 0.0
    %v6755 = vmax.f32 %v6539, 0.0
    %v6756 = vmax.f32 %v6542, 0.0
    %v6757 = vmax.f32 %v6547, 0.0
    %v6758 = vmax.f32 %v6550, 0.0
    %v6759 = vmax.f32 %v6555, 0.0
    %v6760 = vmax.f32 %v6558, 0.0
    %v6761 = vmax.f32 %v6563, 0.0
    %v6762 = vmax.f32 %v6566, 0.0
    %v6763 = vmax.f32 %v6571, 0.0
    %v6764 = vmax.f32 %v6574, 0.0
    %v6765 = vmax.f32 %v6579, 0.0
    %v6766 = vmax.f32 %v6582, 0.0
    %v6767 = vmax.f32 %v6587, 0.0
    %v6768 = vmax.f32 %v6590, 0.0
    %v6769 = vmax.f32 %v6595, 0.0
    %v6770 = vmax.f32 %v6598, 0.0
    %v6771 = vmax.f32 %v6603, 0.0
    %v6772 = vmax.f32 %v6606, 0.0
    %v6773 = vmax.f32 %v6611, 0.0
    %v6774 = vmax.f32 %v6614, 0.0
    %v6775 = vmax.f32 %v6619, 0.0
    %v6776 = vmax.f32 %v6622, 0.0
    %v6777 = vmax.f32 %v6627, 0.0
    %v6778 = vmax.f32 %v6630, 0.0
    %v6779 = vmax.f32 %v6635, 0.0
    %v6780 = vmax.f32 %v6638, 0.0
    %v6781 = vmax.f32 %v6643, 0.0
    %v6782 = vmax.f32 %v6646, 0.0
    %v6783 = vmax.f32 %v6651, 0.0
    %v6784 = vmax.f32 %v6654, 0.0
    %v6785 = vlaneseq
    %v6786 = vshrl.u32 %v6785, 7
    %v6787 = vsub.s32 5, %v6786
    %v6788 = vrot.slane %v28, %v6787
    %v6789 = vmul.f32 %v6657, %v6788
    %v6790 = vmul.f32 %v6658, %v6788
    %v6791 = vmul.f32 %v6659, %v6788
    %v6792 = vmul.f32 %v6660, %v6788
    %v6793 = vmul.f32 %v6661, %v6788
    %v6794 = vmul.f32 %v6662, %v6788
    %v6795 = vmul.f32 %v6663, %v6788
    %v6796 = vmul.f32 %v6664, %v6788
    %v6797 = vmul.f32 %v6665, %v6788
    %v6798 = vmul.f32 %v6666, %v6788
    %v6799 = vmul.f32 %v6667, %v6788
    %v6800 = vmul.f32 %v6668, %v6788
    %v6801 = vmul.f32 %v6669, %v6788
    %v6802 = vmul.f32 %v6670, %v6788
    %v6803 = vmul.f32 %v6671, %v6788
    %v6804 = vmul.f32 %v6672, %v6788
    %v6805 = vmul.f32 %v6673, %v6788
    %v6806 = vmul.f32 %v6674, %v6788
    %v6807 = vmul.f32 %v6675, %v6788
    %v6808 = vmul.f32 %v6676, %v6788
    %v6809 = vmul.f32 %v6677, %v6788
    %v6810 = vmul.f32 %v6678, %v6788
    %v6811 = vmul.f32 %v6679, %v6788
    %v6812 = vmul.f32 %v6680, %v6788
    %v6813 = vmul.f32 %v6681, %v6788
    %v6814 = vmul.f32 %v6682, %v6788
    %v6815 = vmul.f32 %v6683, %v6788
    %v6816 = vmul.f32 %v6684, %v6788
    %v6817 = vmul.f32 %v6685, %v6788
    %v6818 = vmul.f32 %v6686, %v6788
    %v6819 = vmul.f32 %v6687, %v6788
    %v6820 = vmul.f32 %v6688, %v6788
    %v6821 = vmul.f32 %v6689, %v6788
    %v6822 = vmul.f32 %v6690, %v6788
    %v6823 = vmul.f32 %v6691, %v6788
    %v6824 = vmul.f32 %v6692, %v6788
    %v6825 = vmul.f32 %v6693, %v6788
    %v6826 = vmul.f32 %v6694, %v6788
    %v6827 = vmul.f32 %v6695, %v6788
    %v6828 = vmul.f32 %v6696, %v6788
    %v6829 = vmul.f32 %v6697, %v6788
    %v6830 = vmul.f32 %v6698, %v6788
    %v6831 = vmul.f32 %v6699, %v6788
    %v6832 = vmul.f32 %v6700, %v6788
    %v6833 = vmul.f32 %v6701, %v6788
    %v6834 = vmul.f32 %v6702, %v6788
    %v6835 = vmul.f32 %v6703, %v6788
    %v6836 = vmul.f32 %v6704, %v6788
    %v6837 = vmul.f32 %v6705, %v6788
    %v6838 = vmul.f32 %v6706, %v6788
    %v6839 = vmul.f32 %v6707, %v6788
    %v6840 = vmul.f32 %v6708, %v6788
    %v6841 = vmul.f32 %v6709, %v6788
    %v6842 = vmul.f32 %v6710, %v6788
    %v6843 = vmul.f32 %v6711, %v6788
    %v6844 = vmul.f32 %v6712, %v6788
    %v6845 = vmul.f32 %v6713, %v6788
    %v6846 = vmul.f32 %v6714, %v6788
    %v6847 = vmul.f32 %v6715, %v6788
    %v6848 = vmul.f32 %v6716, %v6788
    %v6849 = vmul.f32 %v6717, %v6788
    %v6850 = vmul.f32 %v6718, %v6788
    %v6851 = vmul.f32 %v6719, %v6788
    %v6852 = vmul.f32 %v6720, %v6788
    %v6853 = vmul.f32 %v6721, %v6788
    %v6854 = vmul.f32 %v6722, %v6788
    %v6855 = vmul.f32 %v6723, %v6788
    %v6856 = vmul.f32 %v6724, %v6788
    %v6857 = vmul.f32 %v6725, %v6788
    %v6858 = vmul.f32 %v6726, %v6788
    %v6859 = vmul.f32 %v6727, %v6788
    %v6860 = vmul.f32 %v6728, %v6788
    %v6861 = vmul.f32 %v6729, %v6788
    %v6862 = vmul.f32 %v6730, %v6788
    %v6863 = vmul.f32 %v6731, %v6788
    %v6864 = vmul.f32 %v6732, %v6788
    %v6865 = vmul.f32 %v6733, %v6788
    %v6866 = vmul.f32 %v6734, %v6788
    %v6867 = vmul.f32 %v6735, %v6788
    %v6868 = vmul.f32 %v6736, %v6788
    %v6869 = vmul.f32 %v6737, %v6788
    %v6870 = vmul.f32 %v6738, %v6788
    %v6871 = vmul.f32 %v6739, %v6788
    %v6872 = vmul.f32 %v6740, %v6788
    %v6873 = vmul.f32 %v6741, %v6788
    %v6874 = vmul.f32 %v6742, %v6788
    %v6875 = vmul.f32 %v6743, %v6788
    %v6876 = vmul.f32 %v6744, %v6788
    %v6877 = vmul.f32 %v6745, %v6788
    %v6878 = vmul.f32 %v6746, %v6788
    %v6879 = vmul.f32 %v6747, %v6788
    %v6880 = vmul.f32 %v6748, %v6788
    %v6881 = vmul.f32 %v6749, %v6788
    %v6882 = vmul.f32 %v6750, %v6788
    %v6883 = vmul.f32 %v6751, %v6788
    %v6884 = vmul.f32 %v6752, %v6788
    %v6885 = vmul.f32 %v6753, %v6788
    %v6886 = vmul.f32 %v6754, %v6788
    %v6887 = vmul.f32 %v6755, %v6788
    %v6888 = vmul.f32 %v6756, %v6788
    %v6889 = vmul.f32 %v6757, %v6788
    %v6890 = vmul.f32 %v6758, %v6788
    %v6891 = vmul.f32 %v6759, %v6788
    %v6892 = vmul.f32 %v6760, %v6788
    %v6893 = vmul.f32 %v6761, %v6788
    %v6894 = vmul.f32 %v6762, %v6788
    %v6895 = vmul.f32 %v6763, %v6788
    %v6896 = vmul.f32 %v6764, %v6788
    %v6897 = vmul.f32 %v6765, %v6788
    %v6898 = vmul.f32 %v6766, %v6788
    %v6899 = vmul.f32 %v6767, %v6788
    %v6900 = vmul.f32 %v6768, %v6788
    %v6901 = vmul.f32 %v6769, %v6788
    %v6902 = vmul.f32 %v6770, %v6788
    %v6903 = vmul.f32 %v6771, %v6788
    %v6904 = vmul.f32 %v6772, %v6788
    %v6905 = vmul.f32 %v6773, %v6788
    %v6906 = vmul.f32 %v6774, %v6788
    %v6907 = vmul.f32 %v6775, %v6788
    %v6908 = vmul.f32 %v6776, %v6788
    %v6909 = vmul.f32 %v6777, %v6788
    %v6910 = vmul.f32 %v6778, %v6788
    %v6911 = vmul.f32 %v6779, %v6788
    %v6912 = vmul.f32 %v6780, %v6788
    %v6913 = vmul.f32 %v6781, %v6788
    %v6914 = vmul.f32 %v6782, %v6788
    %v6915 = vmul.f32 %v6783, %v6788
    %v6916 = vmul.f32 %v6784, %v6788
    %vm6917 = vcmask 261120
    %v6918 = vsel %vm6917, %v6789, 0.0
    %6919 = vadd.xlane.f32.xlu0 %v6918
    %v6920 = vpop.xlane.xlu0 %6919
    %v6921 = vsel %vm6917, %v6790, 0.0
    %6922 = vadd.xlane.f32.xlu0 %v6921
    %v6923 = vpop.xlane.xlu0 %6922
    %v6924 = vsel %vm6917, %v6791, 0.0
    %6925 = vadd.xlane.f32.xlu0 %v6924
    %v6926 = vpop.xlane.xlu0 %6925
    %v6927 = vsel %vm6917, %v6792, 0.0
    %6928 = vadd.xlane.f32.xlu0 %v6927
    %v6929 = vpop.xlane.xlu0 %6928
    %v6930 = vsel %vm6917, %v6793, 0.0
    %6931 = vadd.xlane.f32.xlu0 %v6930
    %v6932 = vpop.xlane.xlu0 %6931
    %v6933 = vsel %vm6917, %v6794, 0.0
    %6934 = vadd.xlane.f32.xlu0 %v6933
    %v6935 = vpop.xlane.xlu0 %6934
    %v6936 = vsel %vm6917, %v6795, 0.0
    %6937 = vadd.xlane.f32.xlu0 %v6936
    %v6938 = vpop.xlane.xlu0 %6937
    %v6939 = vsel %vm6917, %v6796, 0.0
    %6940 = vadd.xlane.f32.xlu0 %v6939
    %v6941 = vpop.xlane.xlu0 %6940
    %v6942 = vsel %vm6917, %v6797, 0.0
    %6943 = vadd.xlane.f32.xlu0 %v6942
    %v6944 = vpop.xlane.xlu0 %6943
    %v6945 = vsel %vm6917, %v6798, 0.0
    %6946 = vadd.xlane.f32.xlu0 %v6945
    %v6947 = vpop.xlane.xlu0 %6946
    %v6948 = vsel %vm6917, %v6799, 0.0
    %6949 = vadd.xlane.f32.xlu0 %v6948
    %v6950 = vpop.xlane.xlu0 %6949
    %v6951 = vsel %vm6917, %v6800, 0.0
    %6952 = vadd.xlane.f32.xlu0 %v6951
    %v6953 = vpop.xlane.xlu0 %6952
    %v6954 = vsel %vm6917, %v6801, 0.0
    %6955 = vadd.xlane.f32.xlu0 %v6954
    %v6956 = vpop.xlane.xlu0 %6955
    %v6957 = vsel %vm6917, %v6802, 0.0
    %6958 = vadd.xlane.f32.xlu0 %v6957
    %v6959 = vpop.xlane.xlu0 %6958
    %v6960 = vsel %vm6917, %v6803, 0.0
    %6961 = vadd.xlane.f32.xlu0 %v6960
    %v6962 = vpop.xlane.xlu0 %6961
    %v6963 = vsel %vm6917, %v6804, 0.0
    %6964 = vadd.xlane.f32.xlu0 %v6963
    %v6965 = vpop.xlane.xlu0 %6964
    %v6966 = vsel %vm6917, %v6805, 0.0
    %6967 = vadd.xlane.f32.xlu0 %v6966
    %v6968 = vpop.xlane.xlu0 %6967
    %v6969 = vsel %vm6917, %v6806, 0.0
    %6970 = vadd.xlane.f32.xlu0 %v6969
    %v6971 = vpop.xlane.xlu0 %6970
    %v6972 = vsel %vm6917, %v6807, 0.0
    %6973 = vadd.xlane.f32.xlu0 %v6972
    %v6974 = vpop.xlane.xlu0 %6973
    %v6975 = vsel %vm6917, %v6808, 0.0
    %6976 = vadd.xlane.f32.xlu0 %v6975
    %v6977 = vpop.xlane.xlu0 %6976
    %v6978 = vsel %vm6917, %v6809, 0.0
    %6979 = vadd.xlane.f32.xlu0 %v6978
    %v6980 = vpop.xlane.xlu0 %6979
    %v6981 = vsel %vm6917, %v6810, 0.0
    %6982 = vadd.xlane.f32.xlu0 %v6981
    %v6983 = vpop.xlane.xlu0 %6982
    %v6984 = vsel %vm6917, %v6811, 0.0
    %6985 = vadd.xlane.f32.xlu0 %v6984
    %v6986 = vpop.xlane.xlu0 %6985
    %v6987 = vsel %vm6917, %v6812, 0.0
    %6988 = vadd.xlane.f32.xlu0 %v6987
    %v6989 = vpop.xlane.xlu0 %6988
    %v6990 = vsel %vm6917, %v6813, 0.0
    %6991 = vadd.xlane.f32.xlu0 %v6990
    %v6992 = vpop.xlane.xlu0 %6991
    %v6993 = vsel %vm6917, %v6814, 0.0
    %6994 = vadd.xlane.f32.xlu0 %v6993
    %v6995 = vpop.xlane.xlu0 %6994
    %v6996 = vsel %vm6917, %v6815, 0.0
    %6997 = vadd.xlane.f32.xlu0 %v6996
    %v6998 = vpop.xlane.xlu0 %6997
    %v6999 = vsel %vm6917, %v6816, 0.0
    %7000 = vadd.xlane.f32.xlu0 %v6999
    %v7001 = vpop.xlane.xlu0 %7000
    %v7002 = vsel %vm6917, %v6817, 0.0
    %7003 = vadd.xlane.f32.xlu0 %v7002
    %v7004 = vpop.xlane.xlu0 %7003
    %v7005 = vsel %vm6917, %v6818, 0.0
    %7006 = vadd.xlane.f32.xlu0 %v7005
    %v7007 = vpop.xlane.xlu0 %7006
    %v7008 = vsel %vm6917, %v6819, 0.0
    %7009 = vadd.xlane.f32.xlu0 %v7008
    %v7010 = vpop.xlane.xlu0 %7009
    %v7011 = vsel %vm6917, %v6820, 0.0
    %7012 = vadd.xlane.f32.xlu0 %v7011
    %v7013 = vpop.xlane.xlu0 %7012
    %v7014 = vsel %vm6917, %v6821, 0.0
    %7015 = vadd.xlane.f32.xlu0 %v7014
    %v7016 = vpop.xlane.xlu0 %7015
    %v7017 = vsel %vm6917, %v6822, 0.0
    %7018 = vadd.xlane.f32.xlu0 %v7017
    %v7019 = vpop.xlane.xlu0 %7018
    %v7020 = vsel %vm6917, %v6823, 0.0
    %7021 = vadd.xlane.f32.xlu0 %v7020
    %v7022 = vpop.xlane.xlu0 %7021
    %v7023 = vsel %vm6917, %v6824, 0.0
    %7024 = vadd.xlane.f32.xlu0 %v7023
    %v7025 = vpop.xlane.xlu0 %7024
    %v7026 = vsel %vm6917, %v6825, 0.0
    %7027 = vadd.xlane.f32.xlu0 %v7026
    %v7028 = vpop.xlane.xlu0 %7027
    %v7029 = vsel %vm6917, %v6826, 0.0
    %7030 = vadd.xlane.f32.xlu0 %v7029
    %v7031 = vpop.xlane.xlu0 %7030
    %v7032 = vsel %vm6917, %v6827, 0.0
    %7033 = vadd.xlane.f32.xlu0 %v7032
    %v7034 = vpop.xlane.xlu0 %7033
    %v7035 = vsel %vm6917, %v6828, 0.0
    %7036 = vadd.xlane.f32.xlu0 %v7035
    %v7037 = vpop.xlane.xlu0 %7036
    %v7038 = vsel %vm6917, %v6829, 0.0
    %7039 = vadd.xlane.f32.xlu0 %v7038
    %v7040 = vpop.xlane.xlu0 %7039
    %v7041 = vsel %vm6917, %v6830, 0.0
    %7042 = vadd.xlane.f32.xlu0 %v7041
    %v7043 = vpop.xlane.xlu0 %7042
    %v7044 = vsel %vm6917, %v6831, 0.0
    %7045 = vadd.xlane.f32.xlu0 %v7044
    %v7046 = vpop.xlane.xlu0 %7045
    %v7047 = vsel %vm6917, %v6832, 0.0
    %7048 = vadd.xlane.f32.xlu0 %v7047
    %v7049 = vpop.xlane.xlu0 %7048
    %v7050 = vsel %vm6917, %v6833, 0.0
    %7051 = vadd.xlane.f32.xlu0 %v7050
    %v7052 = vpop.xlane.xlu0 %7051
    %v7053 = vsel %vm6917, %v6834, 0.0
    %7054 = vadd.xlane.f32.xlu0 %v7053
    %v7055 = vpop.xlane.xlu0 %7054
    %v7056 = vsel %vm6917, %v6835, 0.0
    %7057 = vadd.xlane.f32.xlu0 %v7056
    %v7058 = vpop.xlane.xlu0 %7057
    %v7059 = vsel %vm6917, %v6836, 0.0
    %7060 = vadd.xlane.f32.xlu0 %v7059
    %v7061 = vpop.xlane.xlu0 %7060
    %v7062 = vsel %vm6917, %v6837, 0.0
    %7063 = vadd.xlane.f32.xlu0 %v7062
    %v7064 = vpop.xlane.xlu0 %7063
    %v7065 = vsel %vm6917, %v6838, 0.0
    %7066 = vadd.xlane.f32.xlu0 %v7065
    %v7067 = vpop.xlane.xlu0 %7066
    %v7068 = vsel %vm6917, %v6839, 0.0
    %7069 = vadd.xlane.f32.xlu0 %v7068
    %v7070 = vpop.xlane.xlu0 %7069
    %v7071 = vsel %vm6917, %v6840, 0.0
    %7072 = vadd.xlane.f32.xlu0 %v7071
    %v7073 = vpop.xlane.xlu0 %7072
    %v7074 = vsel %vm6917, %v6841, 0.0
    %7075 = vadd.xlane.f32.xlu0 %v7074
    %v7076 = vpop.xlane.xlu0 %7075
    %v7077 = vsel %vm6917, %v6842, 0.0
    %7078 = vadd.xlane.f32.xlu0 %v7077
    %v7079 = vpop.xlane.xlu0 %7078
    %v7080 = vsel %vm6917, %v6843, 0.0
    %7081 = vadd.xlane.f32.xlu0 %v7080
    %v7082 = vpop.xlane.xlu0 %7081
    %v7083 = vsel %vm6917, %v6844, 0.0
    %7084 = vadd.xlane.f32.xlu0 %v7083
    %v7085 = vpop.xlane.xlu0 %7084
    %v7086 = vsel %vm6917, %v6845, 0.0
    %7087 = vadd.xlane.f32.xlu0 %v7086
    %v7088 = vpop.xlane.xlu0 %7087
    %v7089 = vsel %vm6917, %v6846, 0.0
    %7090 = vadd.xlane.f32.xlu0 %v7089
    %v7091 = vpop.xlane.xlu0 %7090
    %v7092 = vsel %vm6917, %v6847, 0.0
    %7093 = vadd.xlane.f32.xlu0 %v7092
    %v7094 = vpop.xlane.xlu0 %7093
    %v7095 = vsel %vm6917, %v6848, 0.0
    %7096 = vadd.xlane.f32.xlu0 %v7095
    %v7097 = vpop.xlane.xlu0 %7096
    %v7098 = vsel %vm6917, %v6849, 0.0
    %7099 = vadd.xlane.f32.xlu0 %v7098
    %v7100 = vpop.xlane.xlu0 %7099
    %v7101 = vsel %vm6917, %v6850, 0.0
    %7102 = vadd.xlane.f32.xlu0 %v7101
    %v7103 = vpop.xlane.xlu0 %7102
    %v7104 = vsel %vm6917, %v6851, 0.0
    %7105 = vadd.xlane.f32.xlu0 %v7104
    %v7106 = vpop.xlane.xlu0 %7105
    %v7107 = vsel %vm6917, %v6852, 0.0
    %7108 = vadd.xlane.f32.xlu0 %v7107
    %v7109 = vpop.xlane.xlu0 %7108
    %v7110 = vsel %vm6917, %v6853, 0.0
    %7111 = vadd.xlane.f32.xlu0 %v7110
    %v7112 = vpop.xlane.xlu0 %7111
    %v7113 = vsel %vm6917, %v6854, 0.0
    %7114 = vadd.xlane.f32.xlu0 %v7113
    %v7115 = vpop.xlane.xlu0 %7114
    %v7116 = vsel %vm6917, %v6855, 0.0
    %7117 = vadd.xlane.f32.xlu0 %v7116
    %v7118 = vpop.xlane.xlu0 %7117
    %v7119 = vsel %vm6917, %v6856, 0.0
    %7120 = vadd.xlane.f32.xlu0 %v7119
    %v7121 = vpop.xlane.xlu0 %7120
    %v7122 = vsel %vm6917, %v6857, 0.0
    %7123 = vadd.xlane.f32.xlu0 %v7122
    %v7124 = vpop.xlane.xlu0 %7123
    %v7125 = vsel %vm6917, %v6858, 0.0
    %7126 = vadd.xlane.f32.xlu0 %v7125
    %v7127 = vpop.xlane.xlu0 %7126
    %v7128 = vsel %vm6917, %v6859, 0.0
    %7129 = vadd.xlane.f32.xlu0 %v7128
    %v7130 = vpop.xlane.xlu0 %7129
    %v7131 = vsel %vm6917, %v6860, 0.0
    %7132 = vadd.xlane.f32.xlu0 %v7131
    %v7133 = vpop.xlane.xlu0 %7132
    %v7134 = vsel %vm6917, %v6861, 0.0
    %7135 = vadd.xlane.f32.xlu0 %v7134
    %v7136 = vpop.xlane.xlu0 %7135
    %v7137 = vsel %vm6917, %v6862, 0.0
    %7138 = vadd.xlane.f32.xlu0 %v7137
    %v7139 = vpop.xlane.xlu0 %7138
    %v7140 = vsel %vm6917, %v6863, 0.0
    %7141 = vadd.xlane.f32.xlu0 %v7140
    %v7142 = vpop.xlane.xlu0 %7141
    %v7143 = vsel %vm6917, %v6864, 0.0
    %7144 = vadd.xlane.f32.xlu0 %v7143
    %v7145 = vpop.xlane.xlu0 %7144
    %v7146 = vsel %vm6917, %v6865, 0.0
    %7147 = vadd.xlane.f32.xlu0 %v7146
    %v7148 = vpop.xlane.xlu0 %7147
    %v7149 = vsel %vm6917, %v6866, 0.0
    %7150 = vadd.xlane.f32.xlu0 %v7149
    %v7151 = vpop.xlane.xlu0 %7150
    %v7152 = vsel %vm6917, %v6867, 0.0
    %7153 = vadd.xlane.f32.xlu0 %v7152
    %v7154 = vpop.xlane.xlu0 %7153
    %v7155 = vsel %vm6917, %v6868, 0.0
    %7156 = vadd.xlane.f32.xlu0 %v7155
    %v7157 = vpop.xlane.xlu0 %7156
    %v7158 = vsel %vm6917, %v6869, 0.0
    %7159 = vadd.xlane.f32.xlu0 %v7158
    %v7160 = vpop.xlane.xlu0 %7159
    %v7161 = vsel %vm6917, %v6870, 0.0
    %7162 = vadd.xlane.f32.xlu0 %v7161
    %v7163 = vpop.xlane.xlu0 %7162
    %v7164 = vsel %vm6917, %v6871, 0.0
    %7165 = vadd.xlane.f32.xlu0 %v7164
    %v7166 = vpop.xlane.xlu0 %7165
    %v7167 = vsel %vm6917, %v6872, 0.0
    %7168 = vadd.xlane.f32.xlu0 %v7167
    %v7169 = vpop.xlane.xlu0 %7168
    %v7170 = vsel %vm6917, %v6873, 0.0
    %7171 = vadd.xlane.f32.xlu0 %v7170
    %v7172 = vpop.xlane.xlu0 %7171
    %v7173 = vsel %vm6917, %v6874, 0.0
    %7174 = vadd.xlane.f32.xlu0 %v7173
    %v7175 = vpop.xlane.xlu0 %7174
    %v7176 = vsel %vm6917, %v6875, 0.0
    %7177 = vadd.xlane.f32.xlu0 %v7176
    %v7178 = vpop.xlane.xlu0 %7177
    %v7179 = vsel %vm6917, %v6876, 0.0
    %7180 = vadd.xlane.f32.xlu0 %v7179
    %v7181 = vpop.xlane.xlu0 %7180
    %v7182 = vsel %vm6917, %v6877, 0.0
    %7183 = vadd.xlane.f32.xlu0 %v7182
    %v7184 = vpop.xlane.xlu0 %7183
    %v7185 = vsel %vm6917, %v6878, 0.0
    %7186 = vadd.xlane.f32.xlu0 %v7185
    %v7187 = vpop.xlane.xlu0 %7186
    %v7188 = vsel %vm6917, %v6879, 0.0
    %7189 = vadd.xlane.f32.xlu0 %v7188
    %v7190 = vpop.xlane.xlu0 %7189
    %v7191 = vsel %vm6917, %v6880, 0.0
    %7192 = vadd.xlane.f32.xlu0 %v7191
    %v7193 = vpop.xlane.xlu0 %7192
    %v7194 = vsel %vm6917, %v6881, 0.0
    %7195 = vadd.xlane.f32.xlu0 %v7194
    %v7196 = vpop.xlane.xlu0 %7195
    %v7197 = vsel %vm6917, %v6882, 0.0
    %7198 = vadd.xlane.f32.xlu0 %v7197
    %v7199 = vpop.xlane.xlu0 %7198
    %v7200 = vsel %vm6917, %v6883, 0.0
    %7201 = vadd.xlane.f32.xlu0 %v7200
    %v7202 = vpop.xlane.xlu0 %7201
    %v7203 = vsel %vm6917, %v6884, 0.0
    %7204 = vadd.xlane.f32.xlu0 %v7203
    %v7205 = vpop.xlane.xlu0 %7204
    %v7206 = vsel %vm6917, %v6885, 0.0
    %7207 = vadd.xlane.f32.xlu0 %v7206
    %v7208 = vpop.xlane.xlu0 %7207
    %v7209 = vsel %vm6917, %v6886, 0.0
    %7210 = vadd.xlane.f32.xlu0 %v7209
    %v7211 = vpop.xlane.xlu0 %7210
    %v7212 = vsel %vm6917, %v6887, 0.0
    %7213 = vadd.xlane.f32.xlu0 %v7212
    %v7214 = vpop.xlane.xlu0 %7213
    %v7215 = vsel %vm6917, %v6888, 0.0
    %7216 = vadd.xlane.f32.xlu0 %v7215
    %v7217 = vpop.xlane.xlu0 %7216
    %v7218 = vsel %vm6917, %v6889, 0.0
    %7219 = vadd.xlane.f32.xlu0 %v7218
    %v7220 = vpop.xlane.xlu0 %7219
    %v7221 = vsel %vm6917, %v6890, 0.0
    %7222 = vadd.xlane.f32.xlu0 %v7221
    %v7223 = vpop.xlane.xlu0 %7222
    %v7224 = vsel %vm6917, %v6891, 0.0
    %7225 = vadd.xlane.f32.xlu0 %v7224
    %v7226 = vpop.xlane.xlu0 %7225
    %v7227 = vsel %vm6917, %v6892, 0.0
    %7228 = vadd.xlane.f32.xlu0 %v7227
    %v7229 = vpop.xlane.xlu0 %7228
    %v7230 = vsel %vm6917, %v6893, 0.0
    %7231 = vadd.xlane.f32.xlu0 %v7230
    %v7232 = vpop.xlane.xlu0 %7231
    %v7233 = vsel %vm6917, %v6894, 0.0
    %7234 = vadd.xlane.f32.xlu0 %v7233
    %v7235 = vpop.xlane.xlu0 %7234
    %v7236 = vsel %vm6917, %v6895, 0.0
    %7237 = vadd.xlane.f32.xlu0 %v7236
    %v7238 = vpop.xlane.xlu0 %7237
    %v7239 = vsel %vm6917, %v6896, 0.0
    %7240 = vadd.xlane.f32.xlu0 %v7239
    %v7241 = vpop.xlane.xlu0 %7240
    %v7242 = vsel %vm6917, %v6897, 0.0
    %7243 = vadd.xlane.f32.xlu0 %v7242
    %v7244 = vpop.xlane.xlu0 %7243
    %v7245 = vsel %vm6917, %v6898, 0.0
    %7246 = vadd.xlane.f32.xlu0 %v7245
    %v7247 = vpop.xlane.xlu0 %7246
    %v7248 = vsel %vm6917, %v6899, 0.0
    %7249 = vadd.xlane.f32.xlu0 %v7248
    %v7250 = vpop.xlane.xlu0 %7249
    %v7251 = vsel %vm6917, %v6900, 0.0
    %7252 = vadd.xlane.f32.xlu0 %v7251
    %v7253 = vpop.xlane.xlu0 %7252
    %v7254 = vsel %vm6917, %v6901, 0.0
    %7255 = vadd.xlane.f32.xlu0 %v7254
    %v7256 = vpop.xlane.xlu0 %7255
    %v7257 = vsel %vm6917, %v6902, 0.0
    %7258 = vadd.xlane.f32.xlu0 %v7257
    %v7259 = vpop.xlane.xlu0 %7258
    %v7260 = vsel %vm6917, %v6903, 0.0
    %7261 = vadd.xlane.f32.xlu0 %v7260
    %v7262 = vpop.xlane.xlu0 %7261
    %v7263 = vsel %vm6917, %v6904, 0.0
    %7264 = vadd.xlane.f32.xlu0 %v7263
    %v7265 = vpop.xlane.xlu0 %7264
    %v7266 = vsel %vm6917, %v6905, 0.0
    %7267 = vadd.xlane.f32.xlu0 %v7266
    %v7268 = vpop.xlane.xlu0 %7267
    %v7269 = vsel %vm6917, %v6906, 0.0
    %7270 = vadd.xlane.f32.xlu0 %v7269
    %v7271 = vpop.xlane.xlu0 %7270
    %v7272 = vsel %vm6917, %v6907, 0.0
    %7273 = vadd.xlane.f32.xlu0 %v7272
    %v7274 = vpop.xlane.xlu0 %7273
    %v7275 = vsel %vm6917, %v6908, 0.0
    %7276 = vadd.xlane.f32.xlu0 %v7275
    %v7277 = vpop.xlane.xlu0 %7276
    %v7278 = vsel %vm6917, %v6909, 0.0
    %7279 = vadd.xlane.f32.xlu0 %v7278
    %v7280 = vpop.xlane.xlu0 %7279
    %v7281 = vsel %vm6917, %v6910, 0.0
    %7282 = vadd.xlane.f32.xlu0 %v7281
    %v7283 = vpop.xlane.xlu0 %7282
    %v7284 = vsel %vm6917, %v6911, 0.0
    %7285 = vadd.xlane.f32.xlu0 %v7284
    %v7286 = vpop.xlane.xlu0 %7285
    %v7287 = vsel %vm6917, %v6912, 0.0
    %7288 = vadd.xlane.f32.xlu0 %v7287
    %v7289 = vpop.xlane.xlu0 %7288
    %v7290 = vsel %vm6917, %v6913, 0.0
    %7291 = vadd.xlane.f32.xlu0 %v7290
    %v7292 = vpop.xlane.xlu0 %7291
    %v7293 = vsel %vm6917, %v6914, 0.0
    %7294 = vadd.xlane.f32.xlu0 %v7293
    %v7295 = vpop.xlane.xlu0 %7294
    %v7296 = vsel %vm6917, %v6915, 0.0
    %7297 = vadd.xlane.f32.xlu0 %v7296
    %v7298 = vpop.xlane.xlu0 %7297
    %v7299 = vsel %vm6917, %v6916, 0.0
    %7300 = vadd.xlane.f32.xlu0 %v7299
    %v7301 = vpop.xlane.xlu0 %7300
    %v7303 = vrot.slane %v28, 6
    %s7304 = vtos %v7303
    %v7305 = vstv %s7304
    %v7307 = vadd.f32 %v6920, %v7305
    %v7308 = vadd.f32 %v6923, %v7305
    %v7309 = vadd.f32 %v6926, %v7305
    %v7310 = vadd.f32 %v6929, %v7305
    %v7311 = vadd.f32 %v6932, %v7305
    %v7312 = vadd.f32 %v6935, %v7305
    %v7313 = vadd.f32 %v6938, %v7305
    %v7314 = vadd.f32 %v6941, %v7305
    %v7315 = vadd.f32 %v6944, %v7305
    %v7316 = vadd.f32 %v6947, %v7305
    %v7317 = vadd.f32 %v6950, %v7305
    %v7318 = vadd.f32 %v6953, %v7305
    %v7319 = vadd.f32 %v6956, %v7305
    %v7320 = vadd.f32 %v6959, %v7305
    %v7321 = vadd.f32 %v6962, %v7305
    %v7322 = vadd.f32 %v6965, %v7305
    %v7323 = vadd.f32 %v6968, %v7305
    %v7324 = vadd.f32 %v6971, %v7305
    %v7325 = vadd.f32 %v6974, %v7305
    %v7326 = vadd.f32 %v6977, %v7305
    %v7327 = vadd.f32 %v6980, %v7305
    %v7328 = vadd.f32 %v6983, %v7305
    %v7329 = vadd.f32 %v6986, %v7305
    %v7330 = vadd.f32 %v6989, %v7305
    %v7331 = vadd.f32 %v6992, %v7305
    %v7332 = vadd.f32 %v6995, %v7305
    %v7333 = vadd.f32 %v6998, %v7305
    %v7334 = vadd.f32 %v7001, %v7305
    %v7335 = vadd.f32 %v7004, %v7305
    %v7336 = vadd.f32 %v7007, %v7305
    %v7337 = vadd.f32 %v7010, %v7305
    %v7338 = vadd.f32 %v7013, %v7305
    %v7339 = vadd.f32 %v7016, %v7305
    %v7340 = vadd.f32 %v7019, %v7305
    %v7341 = vadd.f32 %v7022, %v7305
    %v7342 = vadd.f32 %v7025, %v7305
    %v7343 = vadd.f32 %v7028, %v7305
    %v7344 = vadd.f32 %v7031, %v7305
    %v7345 = vadd.f32 %v7034, %v7305
    %v7346 = vadd.f32 %v7037, %v7305
    %v7347 = vadd.f32 %v7040, %v7305
    %v7348 = vadd.f32 %v7043, %v7305
    %v7349 = vadd.f32 %v7046, %v7305
    %v7350 = vadd.f32 %v7049, %v7305
    %v7351 = vadd.f32 %v7052, %v7305
    %v7352 = vadd.f32 %v7055, %v7305
    %v7353 = vadd.f32 %v7058, %v7305
    %v7354 = vadd.f32 %v7061, %v7305
    %v7355 = vadd.f32 %v7064, %v7305
    %v7356 = vadd.f32 %v7067, %v7305
    %v7357 = vadd.f32 %v7070, %v7305
    %v7358 = vadd.f32 %v7073, %v7305
    %v7359 = vadd.f32 %v7076, %v7305
    %v7360 = vadd.f32 %v7079, %v7305
    %v7361 = vadd.f32 %v7082, %v7305
    %v7362 = vadd.f32 %v7085, %v7305
    %v7363 = vadd.f32 %v7088, %v7305
    %v7364 = vadd.f32 %v7091, %v7305
    %v7365 = vadd.f32 %v7094, %v7305
    %v7366 = vadd.f32 %v7097, %v7305
    %v7367 = vadd.f32 %v7100, %v7305
    %v7368 = vadd.f32 %v7103, %v7305
    %v7369 = vadd.f32 %v7106, %v7305
    %v7370 = vadd.f32 %v7109, %v7305
    %v7371 = vadd.f32 %v7112, %v7305
    %v7372 = vadd.f32 %v7115, %v7305
    %v7373 = vadd.f32 %v7118, %v7305
    %v7374 = vadd.f32 %v7121, %v7305
    %v7375 = vadd.f32 %v7124, %v7305
    %v7376 = vadd.f32 %v7127, %v7305
    %v7377 = vadd.f32 %v7130, %v7305
    %v7378 = vadd.f32 %v7133, %v7305
    %v7379 = vadd.f32 %v7136, %v7305
    %v7380 = vadd.f32 %v7139, %v7305
    %v7381 = vadd.f32 %v7142, %v7305
    %v7382 = vadd.f32 %v7145, %v7305
    %v7383 = vadd.f32 %v7148, %v7305
    %v7384 = vadd.f32 %v7151, %v7305
    %v7385 = vadd.f32 %v7154, %v7305
    %v7386 = vadd.f32 %v7157, %v7305
    %v7387 = vadd.f32 %v7160, %v7305
    %v7388 = vadd.f32 %v7163, %v7305
    %v7389 = vadd.f32 %v7166, %v7305
    %v7390 = vadd.f32 %v7169, %v7305
    %v7391 = vadd.f32 %v7172, %v7305
    %v7392 = vadd.f32 %v7175, %v7305
    %v7393 = vadd.f32 %v7178, %v7305
    %v7394 = vadd.f32 %v7181, %v7305
    %v7395 = vadd.f32 %v7184, %v7305
    %v7396 = vadd.f32 %v7187, %v7305
    %v7397 = vadd.f32 %v7190, %v7305
    %v7398 = vadd.f32 %v7193, %v7305
    %v7399 = vadd.f32 %v7196, %v7305
    %v7400 = vadd.f32 %v7199, %v7305
    %v7401 = vadd.f32 %v7202, %v7305
    %v7402 = vadd.f32 %v7205, %v7305
    %v7403 = vadd.f32 %v7208, %v7305
    %v7404 = vadd.f32 %v7211, %v7305
    %v7405 = vadd.f32 %v7214, %v7305
    %v7406 = vadd.f32 %v7217, %v7305
    %v7407 = vadd.f32 %v7220, %v7305
    %v7408 = vadd.f32 %v7223, %v7305
    %v7409 = vadd.f32 %v7226, %v7305
    %v7410 = vadd.f32 %v7229, %v7305
    %v7411 = vadd.f32 %v7232, %v7305
    %v7412 = vadd.f32 %v7235, %v7305
    %v7413 = vadd.f32 %v7238, %v7305
    %v7414 = vadd.f32 %v7241, %v7305
    %v7415 = vadd.f32 %v7244, %v7305
    %v7416 = vadd.f32 %v7247, %v7305
    %v7417 = vadd.f32 %v7250, %v7305
    %v7418 = vadd.f32 %v7253, %v7305
    %v7419 = vadd.f32 %v7256, %v7305
    %v7420 = vadd.f32 %v7259, %v7305
    %v7421 = vadd.f32 %v7262, %v7305
    %v7422 = vadd.f32 %v7265, %v7305
    %v7423 = vadd.f32 %v7268, %v7305
    %v7424 = vadd.f32 %v7271, %v7305
    %v7425 = vadd.f32 %v7274, %v7305
    %v7426 = vadd.f32 %v7277, %v7305
    %v7427 = vadd.f32 %v7280, %v7305
    %v7428 = vadd.f32 %v7283, %v7305
    %v7429 = vadd.f32 %v7286, %v7305
    %v7430 = vadd.f32 %v7289, %v7305
    %v7431 = vadd.f32 %v7292, %v7305
    %v7432 = vadd.f32 %v7295, %v7305
    %v7433 = vadd.f32 %v7298, %v7305
    %v7434 = vadd.f32 %v7301, %v7305
    %v7435 = vmax.f32 %v7307, %v7323
    %v7436 = vmax.f32 %v7435, %v7339
    %v7437 = vmax.f32 %v7436, %v7355
    %v7438 = vmax.f32 %v7437, %v7371
    %v7439 = vmax.f32 %v7438, %v7387
    %v7440 = vmax.f32 %v7439, %v7403
    %v7441 = vmax.f32 %v7440, %v7419
    %v7442 = vmax.f32 %v7308, %v7324
    %v7443 = vmax.f32 %v7442, %v7340
    %v7444 = vmax.f32 %v7443, %v7356
    %v7445 = vmax.f32 %v7444, %v7372
    %v7446 = vmax.f32 %v7445, %v7388
    %v7447 = vmax.f32 %v7446, %v7404
    %v7448 = vmax.f32 %v7447, %v7420
    %v7449 = vmax.f32 %v7309, %v7325
    %v7450 = vmax.f32 %v7449, %v7341
    %v7451 = vmax.f32 %v7450, %v7357
    %v7452 = vmax.f32 %v7451, %v7373
    %v7453 = vmax.f32 %v7452, %v7389
    %v7454 = vmax.f32 %v7453, %v7405
    %v7455 = vmax.f32 %v7454, %v7421
    %v7456 = vmax.f32 %v7310, %v7326
    %v7457 = vmax.f32 %v7456, %v7342
    %v7458 = vmax.f32 %v7457, %v7358
    %v7459 = vmax.f32 %v7458, %v7374
    %v7460 = vmax.f32 %v7459, %v7390
    %v7461 = vmax.f32 %v7460, %v7406
    %v7462 = vmax.f32 %v7461, %v7422
    %v7463 = vmax.f32 %v7311, %v7327
    %v7464 = vmax.f32 %v7463, %v7343
    %v7465 = vmax.f32 %v7464, %v7359
    %v7466 = vmax.f32 %v7465, %v7375
    %v7467 = vmax.f32 %v7466, %v7391
    %v7468 = vmax.f32 %v7467, %v7407
    %v7469 = vmax.f32 %v7468, %v7423
    %v7470 = vmax.f32 %v7312, %v7328
    %v7471 = vmax.f32 %v7470, %v7344
    %v7472 = vmax.f32 %v7471, %v7360
    %v7473 = vmax.f32 %v7472, %v7376
    %v7474 = vmax.f32 %v7473, %v7392
    %v7475 = vmax.f32 %v7474, %v7408
    %v7476 = vmax.f32 %v7475, %v7424
    %v7477 = vmax.f32 %v7313, %v7329
    %v7478 = vmax.f32 %v7477, %v7345
    %v7479 = vmax.f32 %v7478, %v7361
    %v7480 = vmax.f32 %v7479, %v7377
    %v7481 = vmax.f32 %v7480, %v7393
    %v7482 = vmax.f32 %v7481, %v7409
    %v7483 = vmax.f32 %v7482, %v7425
    %v7484 = vmax.f32 %v7314, %v7330
    %v7485 = vmax.f32 %v7484, %v7346
    %v7486 = vmax.f32 %v7485, %v7362
    %v7487 = vmax.f32 %v7486, %v7378
    %v7488 = vmax.f32 %v7487, %v7394
    %v7489 = vmax.f32 %v7488, %v7410
    %v7490 = vmax.f32 %v7489, %v7426
    %v7491 = vmax.f32 %v7315, %v7331
    %v7492 = vmax.f32 %v7491, %v7347
    %v7493 = vmax.f32 %v7492, %v7363
    %v7494 = vmax.f32 %v7493, %v7379
    %v7495 = vmax.f32 %v7494, %v7395
    %v7496 = vmax.f32 %v7495, %v7411
    %v7497 = vmax.f32 %v7496, %v7427
    %v7498 = vmax.f32 %v7316, %v7332
    %v7499 = vmax.f32 %v7498, %v7348
    %v7500 = vmax.f32 %v7499, %v7364
    %v7501 = vmax.f32 %v7500, %v7380
    %v7502 = vmax.f32 %v7501, %v7396
    %v7503 = vmax.f32 %v7502, %v7412
    %v7504 = vmax.f32 %v7503, %v7428
    %v7505 = vmax.f32 %v7317, %v7333
    %v7506 = vmax.f32 %v7505, %v7349
    %v7507 = vmax.f32 %v7506, %v7365
    %v7508 = vmax.f32 %v7507, %v7381
    %v7509 = vmax.f32 %v7508, %v7397
    %v7510 = vmax.f32 %v7509, %v7413
    %v7511 = vmax.f32 %v7510, %v7429
    %v7512 = vmax.f32 %v7318, %v7334
    %v7513 = vmax.f32 %v7512, %v7350
    %v7514 = vmax.f32 %v7513, %v7366
    %v7515 = vmax.f32 %v7514, %v7382
    %v7516 = vmax.f32 %v7515, %v7398
    %v7517 = vmax.f32 %v7516, %v7414
    %v7518 = vmax.f32 %v7517, %v7430
    %v7519 = vmax.f32 %v7319, %v7335
    %v7520 = vmax.f32 %v7519, %v7351
    %v7521 = vmax.f32 %v7520, %v7367
    %v7522 = vmax.f32 %v7521, %v7383
    %v7523 = vmax.f32 %v7522, %v7399
    %v7524 = vmax.f32 %v7523, %v7415
    %v7525 = vmax.f32 %v7524, %v7431
    %v7526 = vmax.f32 %v7320, %v7336
    %v7527 = vmax.f32 %v7526, %v7352
    %v7528 = vmax.f32 %v7527, %v7368
    %v7529 = vmax.f32 %v7528, %v7384
    %v7530 = vmax.f32 %v7529, %v7400
    %v7531 = vmax.f32 %v7530, %v7416
    %v7532 = vmax.f32 %v7531, %v7432
    %v7533 = vmax.f32 %v7321, %v7337
    %v7534 = vmax.f32 %v7533, %v7353
    %v7535 = vmax.f32 %v7534, %v7369
    %v7536 = vmax.f32 %v7535, %v7385
    %v7537 = vmax.f32 %v7536, %v7401
    %v7538 = vmax.f32 %v7537, %v7417
    %v7539 = vmax.f32 %v7538, %v7433
    %v7540 = vmax.f32 %v7322, %v7338
    %v7541 = vmax.f32 %v7540, %v7354
    %v7542 = vmax.f32 %v7541, %v7370
    %v7543 = vmax.f32 %v7542, %v7386
    %v7544 = vmax.f32 %v7543, %v7402
    %v7545 = vmax.f32 %v7544, %v7418
    %v7546 = vmax.f32 %v7545, %v7434
    %v7563 = vlaneseq
    %v7564 = vand.u32 %v7563, 127
    %v7565 = vlaneseq
    %v7566 = vshrl.u32 %v7565, 7
    %v7567 = vsub.s32 %v7564, %v7566
    %v7568 = vrot.slane %v7441, %v7567
    %v7569 = vadd.s32 %v7564, 4294967288
    %v7570 = vlaneseq
    %v7571 = vshrl.u32 %v7570, 7
    %v7572 = vsub.s32 %v7569, %v7571
    %v7573 = vrot.slane %v7448, %v7572
    %vm7574 = vcmask 130112
    %v7575 = vsel %vm7574, %v7573, %v7568
    %v7576 = vadd.s32 %v7564, 4294967280
    %v7577 = vlaneseq
    %v7578 = vshrl.u32 %v7577, 7
    %v7579 = vsub.s32 %v7576, %v7578
    %v7580 = vrot.slane %v7455, %v7579
    %vm7581 = vcmask 195712
    %v7582 = vsel %vm7581, %v7580, %v7575
    %v7583 = vadd.s32 %v7564, 4294967272
    %v7584 = vlaneseq
    %v7585 = vshrl.u32 %v7584, 7
    %v7586 = vsub.s32 %v7583, %v7585
    %v7587 = vrot.slane %v7462, %v7586
    %vm7588 = vcmask 261312
    %v7589 = vsel %vm7588, %v7587, %v7582
    %v7590 = vadd.s32 %v7564, 4294967264
    %v7591 = vlaneseq
    %v7592 = vshrl.u32 %v7591, 7
    %v7593 = vsub.s32 %v7590, %v7592
    %v7594 = vrot.slane %v7469, %v7593
    %vm7595 = vcmask 326912
    %v7596 = vsel %vm7595, %v7594, %v7589
    %v7597 = vadd.s32 %v7564, 4294967256
    %v7598 = vlaneseq
    %v7599 = vshrl.u32 %v7598, 7
    %v7600 = vsub.s32 %v7597, %v7599
    %v7601 = vrot.slane %v7476, %v7600
    %vm7602 = vcmask 392512
    %v7603 = vsel %vm7602, %v7601, %v7596
    %v7604 = vadd.s32 %v7564, 4294967248
    %v7605 = vlaneseq
    %v7606 = vshrl.u32 %v7605, 7
    %v7607 = vsub.s32 %v7604, %v7606
    %v7608 = vrot.slane %v7483, %v7607
    %vm7609 = vcmask 458112
    %v7610 = vsel %vm7609, %v7608, %v7603
    %v7611 = vadd.s32 %v7564, 4294967240
    %v7612 = vlaneseq
    %v7613 = vshrl.u32 %v7612, 7
    %v7614 = vsub.s32 %v7611, %v7613
    %v7615 = vrot.slane %v7490, %v7614
    %vm7616 = vcmask 523712
    %v7617 = vsel %vm7616, %v7615, %v7610
    %v7618 = vadd.s32 %v7564, 4294967232
    %v7619 = vlaneseq
    %v7620 = vshrl.u32 %v7619, 7
    %v7621 = vsub.s32 %v7618, %v7620
    %v7622 = vrot.slane %v7497, %v7621
    %vm7623 = vcmask 589312
    %v7624 = vsel %vm7623, %v7622, %v7617
    %v7625 = vadd.s32 %v7564, 4294967224
    %v7626 = vlaneseq
    %v7627 = vshrl.u32 %v7626, 7
    %v7628 = vsub.s32 %v7625, %v7627
    %v7629 = vrot.slane %v7504, %v7628
    %vm7630 = vcmask 654912
    %v7631 = vsel %vm7630, %v7629, %v7624
    %v7632 = vadd.s32 %v7564, 4294967216
    %v7633 = vlaneseq
    %v7634 = vshrl.u32 %v7633, 7
    %v7635 = vsub.s32 %v7632, %v7634
    %v7636 = vrot.slane %v7511, %v7635
    %vm7637 = vcmask 720512
    %v7638 = vsel %vm7637, %v7636, %v7631
    %v7639 = vadd.s32 %v7564, 4294967208
    %v7640 = vlaneseq
    %v7641 = vshrl.u32 %v7640, 7
    %v7642 = vsub.s32 %v7639, %v7641
    %v7643 = vrot.slane %v7518, %v7642
    %vm7644 = vcmask 786112
    %v7645 = vsel %vm7644, %v7643, %v7638
    %v7646 = vadd.s32 %v7564, 4294967200
    %v7647 = vlaneseq
    %v7648 = vshrl.u32 %v7647, 7
    %v7649 = vsub.s32 %v7646, %v7648
    %v7650 = vrot.slane %v7525, %v7649
    %vm7651 = vcmask 851712
    %v7652 = vsel %vm7651, %v7650, %v7645
    %v7653 = vadd.s32 %v7564, 4294967192
    %v7654 = vlaneseq
    %v7655 = vshrl.u32 %v7654, 7
    %v7656 = vsub.s32 %v7653, %v7655
    %v7657 = vrot.slane %v7532, %v7656
    %vm7658 = vcmask 917312
    %v7659 = vsel %vm7658, %v7657, %v7652
    %v7660 = vadd.s32 %v7564, 4294967184
    %v7661 = vlaneseq
    %v7662 = vshrl.u32 %v7661, 7
    %v7663 = vsub.s32 %v7660, %v7662
    %v7664 = vrot.slane %v7539, %v7663
    %vm7665 = vcmask 982912
    %v7666 = vsel %vm7665, %v7664, %v7659
    %v7667 = vadd.s32 %v7564, 4294967176
    %v7668 = vlaneseq
    %v7669 = vshrl.u32 %v7668, 7
    %v7670 = vsub.s32 %v7667, %v7669
    %v7671 = vrot.slane %v7546, %v7670
    %vm7672 = vcmask 1048512
    %v7673 = vsel %vm7672, %v7671, %v7666
    %7675 = vst [vmem:[#allocation2] sm:$0x1] %v7673
    // Predicated region
    $region30: #{tpu_custom_call.1} parent=1 // pred_check
      _
    $region31: #{tpu_custom_call.1} parent=1 // pred_check_branch
      %7677 = sbr.rel (0) target = $region33
    $region32: #{tpu_custom_call.1} parent=1 // pred_region
      %s7679 = ssub.s32 16, 16
      %7680 = vsyncadd [#allocation3], %s7679
      %s7682 = sshll.u32 [#allocation2], 4
      %s7683 = int_to_ptr.vmem [resolvable:$true] %s7682
      %7685 = dma.vmem_to_hbm [thread:$0]  %s7683, 16, %s7, [#allocation3]
    $region33: #{tpu_custom_call.1} parent=1 // pred_fallthru
      _
    // Predicated region
    $region34: #{tpu_custom_call.1} parent=1 // pred_check
      _
    $region35: #{tpu_custom_call.1} parent=1 // pred_check_branch
      %7687 = sbr.rel (0) target = $region37
    $region36: #{tpu_custom_call.1} parent=1 // pred_region
      %7688 = dma.done [#allocation3], 16
    $region37: #{tpu_custom_call.1} parent=1 // pred_fallthru
      _
    %7689 = vsyncpa [#allocation3], 1

</llo_original>
